<compile_context>
chip_gen: v7x
topology: tpu7x:2x2x1
jax: 0.10.0
libtpu: 0.0.40
codegen_flags: <defaults>
</compile_context>

<pallas_src>
import numpy as np
import jax
import jax.numpy as jnp
from jax.experimental import pallas as pl
from jax.experimental.pallas import tpu as pltpu

_VMEM_LIMIT = 48 * 1024 * 1024


def _round_up(x, m):
    return (x + m - 1) // m * m


def _flat_rows(h):
    """#rows of the flat padded-raster buffer for an h x h image (incl. tap over-read)."""
    wp = h + 2
    return _round_up((h + 2) * wp + 2, 8)


def _col_mask(h):
    """(h*(h+2), 1) f32 mask: 1 for valid raster columns, 0 for the 2 junk columns."""
    wp = h + 2
    cols = np.arange(h * wp) % wp
    return (cols < h).astype(np.float32).reshape(h * wp, 1)


def _pool_scatter(h):
    """One-hot matrix: 2x2-subsample a flat (h*(h+2), C) conv output and scatter it
    into the next block's zero-padded flat raster ( _flat_rows(h//2), C )."""
    wp = h + 2
    ho = h // 2
    wpn = ho + 2
    p_out = _flat_rows(ho)
    s = np.zeros((p_out, h * wp), np.float32)
    for hp in range(ho):
        for wq in range(ho):
            s[(hp + 1) * wpn + (wq + 1), (2 * hp) * wp + 2 * wq] = 1.0
    return s


def _conv9(load, w_ref, wp, hwp):
    """3x3 conv as 9 flat-slab matmuls: out[j] = sum_taps x[j + ky*wp + kx] @ W[tap]."""
    acc = None
    for ky in range(3):
        for kx in range(3):
            slab = load(ky * wp + kx).astype(jnp.bfloat16)        # (hwp, cin)
            part = jnp.dot(slab, w_ref[ky * 3 + kx],
                           preferred_element_type=jnp.float32)    # (hwp, cout) f32
            acc = part if acc is None else acc + part
    return acc


# -----------------------------------------------------------------------------
# Fused block kernel: conv+BN+ReLU -> conv+BN+ReLU -> maxpool(2x2, stride 2)
# -----------------------------------------------------------------------------
def _make_block_kernel(H):
    Wp = H + 2
    HWp = H * Wp

    def kernel(x_ref, w1_ref, s1_ref, w2_ref, s2_ref, mask_ref, sc_ref,
               o_ref, p2_ref, y2_ref):
        mask = mask_ref[...]                                      # (HWp, 1)

        # conv1 + folded BN + ReLU, placed (with zero halo) into VMEM scratch.
        p2_ref[...] = jnp.zeros_like(p2_ref)
        acc1 = _conv9(lambda off: x_ref[0, pl.ds(off, HWp), :], w1_ref, Wp, HWp)
        y1 = jnp.maximum(acc1 + s1_ref[...], 0.0) * mask
        p2_ref[pl.ds(Wp + 1, HWp), :] = y1

        # conv2 + folded BN + ReLU.
        y2_ref[...] = jnp.zeros_like(y2_ref)
        acc2 = _conv9(lambda off: p2_ref[pl.ds(off, HWp), :], w2_ref, Wp, HWp)
        y2_ref[pl.ds(0, HWp), :] = jnp.maximum(acc2 + s2_ref[...], 0.0)

        # 2x2/2 max pool: 4 shifted contiguous slab maxes, then a one-hot matmul
        # that subsamples and scatters into the next block's padded flat layout.
        b = jnp.maximum(
            jnp.maximum(y2_ref[pl.ds(0, HWp), :], y2_ref[pl.ds(1, HWp), :]),
            jnp.maximum(y2_ref[pl.ds(Wp, HWp), :], y2_ref[pl.ds(Wp + 1, HWp), :]))
        o_ref[0, :, :] = jnp.dot(sc_ref[...], b, preferred_element_type=jnp.float32)

    return kernel


def conv_block_pool(x_flat, w1, s1, w2, s2, H):
    N, P_in, Cin = x_flat.shape
    C = w1.shape[-1]
    Wp = H + 2
    HWp = H * Wp
    Ho = H // 2
    P_out = _flat_rows(Ho)
    assert P_in == _flat_rows(H)

    mask = jnp.asarray(_col_mask(H))
    sc = jnp.asarray(_pool_scatter(H))
    kernel = _make_block_kernel(H)

    return pl.pallas_call(
        kernel,
        out_shape=jax.ShapeDtypeStruct((N, P_out, C), jnp.float32),
        grid=(N,),
        in_specs=[
            pl.BlockSpec((1, P_in, Cin), lambda n: (n, 0, 0)),
            pl.BlockSpec((9, Cin, C), lambda n: (0, 0, 0)),
            pl.BlockSpec((1, C), lambda n: (0, 0)),
            pl.BlockSpec((9, C, C), lambda n: (0, 0, 0)),
            pl.BlockSpec((1, C), lambda n: (0, 0)),
            pl.BlockSpec((HWp, 1), lambda n: (0, 0)),
            pl.BlockSpec((P_out, HWp), lambda n: (0, 0)),
        ],
        out_specs=pl.BlockSpec((1, P_out, C), lambda n: (n, 0, 0)),
        scratch_shapes=[
            pltpu.VMEM((P_in, C), jnp.float32),   # padded conv1 output (conv2 input)
            pltpu.VMEM((P_in, C), jnp.float32),   # conv2 output (pre-pool)
        ],
        compiler_params=pltpu.CompilerParams(
            dimension_semantics=("parallel",),
            vmem_limit_bytes=_VMEM_LIMIT,
        ),
    )(x_flat, w1, s1, w2, s2, mask, sc)


# -----------------------------------------------------------------------------
# Final fused kernel: conv+BN+ReLU -> conv+BN+ReLU -> global avg pool
#                     -> Linear(512,256) -> ReLU -> [Dropout=id] -> Linear(256,nc)
# -----------------------------------------------------------------------------
def _make_final_kernel(H):
    Wp = H + 2
    HWp = H * Wp
    inv_hw = 1.0 / float(H * H)

    def kernel(x_ref, w1_ref, s1_ref, w2_ref, s2_ref, mask_ref,
               w3_ref, b3_ref, w4_ref, b4_ref, o_ref, p2_ref):
        mask = mask_ref[...]

        p2_ref[...] = jnp.zeros_like(p2_ref)
        acc1 = _conv9(lambda off: x_ref[0, pl.ds(off, HWp), :], w1_ref, Wp, HWp)
        y1 = jnp.maximum(acc1 + s1_ref[...], 0.0) * mask
        p2_ref[pl.ds(Wp + 1, HWp), :] = y1

        acc2 = _conv9(lambda off: p2_ref[pl.ds(off, HWp), :], w2_ref, Wp, HWp)
        y2 = jnp.maximum(acc2 + s2_ref[...], 0.0) * mask          # zero junk columns

        # AdaptiveAvgPool2d((1,1)) == mean over the H*W valid pixels.
        pooled = jnp.sum(y2, axis=0, keepdims=True) * inv_hw      # (1, 512)

        h = jnp.dot(pooled.astype(jnp.bfloat16), w3_ref[...],
                    preferred_element_type=jnp.float32) + b3_ref[...]
        h = jnp.maximum(h, 0.0)
        # Dropout(p=0.4) -> identity in inference mode.
        logits = jnp.dot(h.astype(jnp.bfloat16), w4_ref[...],
                         preferred_element_type=jnp.float32) + b4_ref[...]
        o_ref[0] = logits

    return kernel


def final_block_head(x_flat, w1, s1, w2, s2, w3, b3, w4, b4, H):
    N, P_in, Cin = x_flat.shape
    C = w1.shape[-1]
    Wp = H + 2
    HWp = H * Wp
    nc = w4.shape[-1]
    assert P_in == _flat_rows(H)

    mask = jnp.asarray(_col_mask(H))
    kernel = _make_final_kernel(H)

    out = pl.pallas_call(
        kernel,
        out_shape=jax.ShapeDtypeStruct((N, 1, nc), jnp.float32),
        grid=(N,),
        in_specs=[
            pl.BlockSpec((1, P_in, Cin), lambda n: (n, 0, 0)),
            pl.BlockSpec((9, Cin, C), lambda n: (0, 0, 0)),
            pl.BlockSpec((1, C), lambda n: (0, 0)),
            pl.BlockSpec((9, C, C), lambda n: (0, 0, 0)),
            pl.BlockSpec((1, C), lambda n: (0, 0)),
            pl.BlockSpec((HWp, 1), lambda n: (0, 0)),
            pl.BlockSpec(w3.shape, lambda n: (0, 0)),
            pl.BlockSpec(b3.shape, lambda n: (0, 0)),
            pl.BlockSpec(w4.shape, lambda n: (0, 0)),
            pl.BlockSpec(b4.shape, lambda n: (0, 0)),
        ],
        out_specs=pl.BlockSpec((1, 1, nc), lambda n: (n, 0, 0)),
        scratch_shapes=[pltpu.VMEM((P_in, C), jnp.float32)],
        compiler_params=pltpu.CompilerParams(
            dimension_semantics=("parallel",),
            vmem_limit_bytes=_VMEM_LIMIT,
        ),
    )(x_flat, w1, s1, w2, s2, mask, w3, b3, w4, b4)
    return out[:, 0, :]


# -----------------------------------------------------------------------------
# Deterministic parameter initialization (synthetic; shapes follow __init__).
# BN (eval) is folded: scale into the conv weights, shift kept separately.
# -----------------------------------------------------------------------------
_CONV_CHANNELS = [(3, 64), (64, 64), (64, 128), (128, 128),
                  (128, 256), (256, 256), (256, 512), (512, 512)]


def init_params(key, num_classes=10):
    conv_params = []
    eps = 1e-5
    for cin, cout in _CONV_CHANNELS:
        key, k1, k2, k3, k4, k5, k6 = jax.random.split(key, 7)
        w = jax.random.normal(k1, (9, cin, cout), jnp.float32) / jnp.sqrt(9.0 * cin)
        b_conv = 0.01 * jax.random.normal(k2, (cout,), jnp.float32)
        gamma = 1.0 + 0.1 * jax.random.normal(k3, (cout,), jnp.float32)
        beta = 0.1 * jax.random.normal(k4, (cout,), jnp.float32)
        run_mean = 0.01 * jax.random.normal(k5, (cout,), jnp.float32)
        run_var = 1.0 + 0.1 * jax.random.uniform(k6, (cout,), jnp.float32)
        scale = gamma / jnp.sqrt(run_var + eps)          # BN folded into weights
        shift = (b_conv - run_mean) * scale + beta
        w_folded = (w * scale[None, None, :]).astype(jnp.bfloat16)
        conv_params.append((w_folded, shift.reshape(1, cout)))

    key, k1, k2, k3, k4 = jax.random.split(key, 5)
    w3 = (jax.random.normal(k1, (512, 256), jnp.float32) / jnp.sqrt(512.0)).astype(jnp.bfloat16)
    b3 = 0.01 * jax.random.normal(k2, (1, 256), jnp.float32)
    w4 = (jax.random.normal(k3, (256, num_classes), jnp.float32) / jnp.sqrt(256.0)).astype(jnp.bfloat16)
    b4 = 0.01 * jax.random.normal(k4, (1, num_classes), jnp.float32)
    return conv_params, (w3, b3, w4, b4)


# -----------------------------------------------------------------------------
# Full forward pass (mirrors CIFAR10CNNBP.forward; returns (logits, None)).
# -----------------------------------------------------------------------------
def forward(x_nchw, conv_params, head_params):
    # PyTorch conv input is NCHW; convert to NHWC and pad ONCE, then flatten to the
    # padded-raster layout used by every kernel.
    x = jnp.transpose(x_nchw, (0, 2, 3, 1)).astype(jnp.float32)
    N, H, W, Cin = x.shape
    assert H == W
    xp = jnp.pad(x, ((0, 0), (1, 1), (1, 1), (0, 0)))
    x_flat = xp.reshape(N, (H + 2) * (W + 2), Cin)
    x_flat = jnp.pad(x_flat, ((0, 0), (0, _flat_rows(H) - (H + 2) * (W + 2)), (0, 0)))

    spatial = H
    layer = 0
    for _ in range(3):                 # blocks 1-3: conv, conv, maxpool (fused)
        (w1, s1), (w2, s2) = conv_params[layer], conv_params[layer + 1]
        layer += 2
        x_flat = conv_block_pool(x_flat, w1, s1, w2, s2, spatial)
        spatial //= 2

    (w1, s1), (w2, s2) = conv_params[layer], conv_params[layer + 1]
    w3, b3, w4, b4 = head_params       # block 4 + avgpool + classifier (fused)
    logits = final_block_head(x_flat, w1, s1, w2, s2, w3, b3, w4, b4, spatial)
    return logits, None


if __name__ == "__main__":
    key = jax.random.PRNGKey(0)
    kp, kx = jax.random.split(key)
    conv_params, head_params = init_params(kp, num_classes=10)

    # Small input consistent with the module: NCHW, 3 input channels, 16x16 spatial.
    x = jax.random.normal(kx, (2, 3, 16, 16), jnp.float32)

    logits, aux = forward(x, conv_params, head_params)
    logits = jax.block_until_ready(logits)
    assert logits.shape == (2, 10)
    assert aux is None
    assert bool(jnp.all(jnp.isfinite(logits)))
    print("KERNEL_OK")
</pallas_src>

<mosaic_0001>
module attributes {stable_mosaic.version = 11 : i64} {
  func.func @kernel(%arg0: i32, %arg1: memref<1x328x3xf32, #tpu.memory_space<vmem>>, %arg2: memref<9x3x64xbf16, #tpu.memory_space<vmem>>, %arg3: memref<1x64xf32, #tpu.memory_space<vmem>>, %arg4: memref<9x64x64xbf16, #tpu.memory_space<vmem>>, %arg5: memref<1x64xf32, #tpu.memory_space<vmem>>, %arg6: memref<288x1xf32, #tpu.memory_space<vmem>>, %arg7: memref<104x288xf32, #tpu.memory_space<vmem>>, %arg8: memref<1x104x64xf32, #tpu.memory_space<vmem>>, %arg9: memref<328x64xf32, #tpu.memory_space<vmem>>, %arg10: memref<328x64xf32, #tpu.memory_space<vmem>>) attributes {dimension_semantics = [#tpu.dimension_semantics<parallel>], iteration_bounds = array<i64: 2>, scalar_prefetch = 0 : i64, scratch_operands = 2 : i64, tpu.core_type = #tpu.core_type<tc>, window_params = [{transform_indices = @transform_0, window_bounds = array<i64: 1, 328, 3>}, {pipeline_mode = #tpu.pipeline_mode<synchronous>, transform_indices = @transform_1, window_bounds = array<i64: 9, 3, 64>}, {pipeline_mode = #tpu.pipeline_mode<synchronous>, transform_indices = @transform_2, window_bounds = array<i64: 1, 64>}, {pipeline_mode = #tpu.pipeline_mode<synchronous>, transform_indices = @transform_3, window_bounds = array<i64: 9, 64, 64>}, {pipeline_mode = #tpu.pipeline_mode<synchronous>, transform_indices = @transform_4, window_bounds = array<i64: 1, 64>}, {pipeline_mode = #tpu.pipeline_mode<synchronous>, transform_indices = @transform_5, window_bounds = array<i64: 288, 1>}, {pipeline_mode = #tpu.pipeline_mode<synchronous>, transform_indices = @transform_6, window_bounds = array<i64: 104, 288>}, {transform_indices = @transform_7, window_bounds = array<i64: 1, 104, 64>}]} {
    %c0 = arith.constant 0 : index
    %c0_0 = arith.constant 0 : index
    %0 = vector.load %arg6[%c0, %c0_0] : memref<288x1xf32, #tpu.memory_space<vmem>>, vector<288x1xf32>
    %cst = arith.constant 0.000000e+00 : f32
    %1 = vector.broadcast %cst : f32 to vector<328x64xf32>
    %c0_1 = arith.constant 0 : index
    %c0_2 = arith.constant 0 : index
    %2 = vector.load %arg9[%c0_1, %c0_2] : memref<328x64xf32, #tpu.memory_space<vmem>>, vector<328x64xf32>
    tpu.vector_store %arg9[%c0_1, %c0_2], %1 {strides = array<i32>} : memref<328x64xf32, #tpu.memory_space<vmem>>, vector<328x64xf32>,
    %c0_3 = arith.constant 0 : index
    %c0_4 = arith.constant 0 : index
    %c0_5 = arith.constant 0 : index
    %3 = vector.load %arg1[%c0_3, %c0_4, %c0_5] : memref<1x328x3xf32, #tpu.memory_space<vmem>>, vector<1x288x3xf32>
    %4 = vector.shape_cast %3 : vector<1x288x3xf32> to vector<288x3xf32>
    %5 = arith.truncf %4 : vector<288x3xf32> to vector<288x3xbf16>
    %c0_6 = arith.constant 0 : index
    %c0_7 = arith.constant 0 : index
    %c0_8 = arith.constant 0 : index
    %6 = vector.load %arg2[%c0_6, %c0_7, %c0_8] : memref<9x3x64xbf16, #tpu.memory_space<vmem>>, vector<1x3x64xbf16>
    %7 = vector.shape_cast %6 : vector<1x3x64xbf16> to vector<3x64xbf16>
    %cst_9 = arith.constant dense<0.000000e+00> : vector<288x64xf32>
    %8 = tpu.matmul %5, %7, %cst_9 {dimension_numbers = #tpu.dot_dimension_numbers<[1], [0], [0], [1], [0, 0, 1, 1], [], []>} : vector<288x3xbf16>, vector<3x64xbf16>, vector<288x64xf32> -> vector<288x64xf32>
    %c0_10 = arith.constant 0 : index
    %c1 = arith.constant 1 : index
    %c0_11 = arith.constant 0 : index
    %9 = vector.load %arg1[%c0_10, %c1, %c0_11] : memref<1x328x3xf32, #tpu.memory_space<vmem>>, vector<1x288x3xf32>
    %10 = vector.shape_cast %9 : vector<1x288x3xf32> to vector<288x3xf32>
    %11 = arith.truncf %10 : vector<288x3xf32> to vector<288x3xbf16>
    %c1_12 = arith.constant 1 : index
    %c0_13 = arith.constant 0 : index
    %c0_14 = arith.constant 0 : index
    %12 = vector.load %arg2[%c1_12, %c0_13, %c0_14] : memref<9x3x64xbf16, #tpu.memory_space<vmem>>, vector<1x3x64xbf16>
    %13 = vector.shape_cast %12 : vector<1x3x64xbf16> to vector<3x64xbf16>
    %cst_15 = arith.constant dense<0.000000e+00> : vector<288x64xf32>
    %14 = tpu.matmul %11, %13, %cst_15 {dimension_numbers = #tpu.dot_dimension_numbers<[1], [0], [0], [1], [0, 0, 1, 1], [], []>} : vector<288x3xbf16>, vector<3x64xbf16>, vector<288x64xf32> -> vector<288x64xf32>
    %15 = arith.addf %8, %14 : vector<288x64xf32>
    %c0_16 = arith.constant 0 : index
    %c2 = arith.constant 2 : index
    %c0_17 = arith.constant 0 : index
    %16 = vector.load %arg1[%c0_16, %c2, %c0_17] : memref<1x328x3xf32, #tpu.memory_space<vmem>>, vector<1x288x3xf32>
    %17 = vector.shape_cast %16 : vector<1x288x3xf32> to vector<288x3xf32>
    %18 = arith.truncf %17 : vector<288x3xf32> to vector<288x3xbf16>
    %c2_18 = arith.constant 2 : index
    %c0_19 = arith.constant 0 : index
    %c0_20 = arith.constant 0 : index
    %19 = vector.load %arg2[%c2_18, %c0_19, %c0_20] : memref<9x3x64xbf16, #tpu.memory_space<vmem>>, vector<1x3x64xbf16>
    %20 = vector.shape_cast %19 : vector<1x3x64xbf16> to vector<3x64xbf16>
    %cst_21 = arith.constant dense<0.000000e+00> : vector<288x64xf32>
    %21 = tpu.matmul %18, %20, %cst_21 {dimension_numbers = #tpu.dot_dimension_numbers<[1], [0], [0], [1], [0, 0, 1, 1], [], []>} : vector<288x3xbf16>, vector<3x64xbf16>, vector<288x64xf32> -> vector<288x64xf32>
    %22 = arith.addf %15, %21 : vector<288x64xf32>
    %c0_22 = arith.constant 0 : index
    %c18 = arith.constant 18 : index
    %c0_23 = arith.constant 0 : index
    %23 = vector.load %arg1[%c0_22, %c18, %c0_23] : memref<1x328x3xf32, #tpu.memory_space<vmem>>, vector<1x288x3xf32>
    %24 = vector.shape_cast %23 : vector<1x288x3xf32> to vector<288x3xf32>
    %25 = arith.truncf %24 : vector<288x3xf32> to vector<288x3xbf16>
    %c3 = arith.constant 3 : index
    %c0_24 = arith.constant 0 : index
    %c0_25 = arith.constant 0 : index
    %26 = vector.load %arg2[%c3, %c0_24, %c0_25] : memref<9x3x64xbf16, #tpu.memory_space<vmem>>, vector<1x3x64xbf16>
    %27 = vector.shape_cast %26 : vector<1x3x64xbf16> to vector<3x64xbf16>
    %cst_26 = arith.constant dense<0.000000e+00> : vector<288x64xf32>
    %28 = tpu.matmul %25, %27, %cst_26 {dimension_numbers = #tpu.dot_dimension_numbers<[1], [0], [0], [1], [0, 0, 1, 1], [], []>} : vector<288x3xbf16>, vector<3x64xbf16>, vector<288x64xf32> -> vector<288x64xf32>
    %29 = arith.addf %22, %28 : vector<288x64xf32>
    %c0_27 = arith.constant 0 : index
    %c19 = arith.constant 19 : index
    %c0_28 = arith.constant 0 : index
    %30 = vector.load %arg1[%c0_27, %c19, %c0_28] : memref<1x328x3xf32, #tpu.memory_space<vmem>>, vector<1x288x3xf32>
    %31 = vector.shape_cast %30 : vector<1x288x3xf32> to vector<288x3xf32>
    %32 = arith.truncf %31 : vector<288x3xf32> to vector<288x3xbf16>
    %c4 = arith.constant 4 : index
    %c0_29 = arith.constant 0 : index
    %c0_30 = arith.constant 0 : index
    %33 = vector.load %arg2[%c4, %c0_29, %c0_30] : memref<9x3x64xbf16, #tpu.memory_space<vmem>>, vector<1x3x64xbf16>
    %34 = vector.shape_cast %33 : vector<1x3x64xbf16> to vector<3x64xbf16>
    %cst_31 = arith.constant dense<0.000000e+00> : vector<288x64xf32>
    %35 = tpu.matmul %32, %34, %cst_31 {dimension_numbers = #tpu.dot_dimension_numbers<[1], [0], [0], [1], [0, 0, 1, 1], [], []>} : vector<288x3xbf16>, vector<3x64xbf16>, vector<288x64xf32> -> vector<288x64xf32>
    %36 = arith.addf %29, %35 : vector<288x64xf32>
    %c0_32 = arith.constant 0 : index
    %c20 = arith.constant 20 : index
    %c0_33 = arith.constant 0 : index
    %37 = vector.load %arg1[%c0_32, %c20, %c0_33] : memref<1x328x3xf32, #tpu.memory_space<vmem>>, vector<1x288x3xf32>
    %38 = vector.shape_cast %37 : vector<1x288x3xf32> to vector<288x3xf32>
    %39 = arith.truncf %38 : vector<288x3xf32> to vector<288x3xbf16>
    %c5 = arith.constant 5 : index
    %c0_34 = arith.constant 0 : index
    %c0_35 = arith.constant 0 : index
    %40 = vector.load %arg2[%c5, %c0_34, %c0_35] : memref<9x3x64xbf16, #tpu.memory_space<vmem>>, vector<1x3x64xbf16>
    %41 = vector.shape_cast %40 : vector<1x3x64xbf16> to vector<3x64xbf16>
    %cst_36 = arith.constant dense<0.000000e+00> : vector<288x64xf32>
    %42 = tpu.matmul %39, %41, %cst_36 {dimension_numbers = #tpu.dot_dimension_numbers<[1], [0], [0], [1], [0, 0, 1, 1], [], []>} : vector<288x3xbf16>, vector<3x64xbf16>, vector<288x64xf32> -> vector<288x64xf32>
    %43 = arith.addf %36, %42 : vector<288x64xf32>
    %c0_37 = arith.constant 0 : index
    %c36 = arith.constant 36 : index
    %c0_38 = arith.constant 0 : index
    %44 = vector.load %arg1[%c0_37, %c36, %c0_38] : memref<1x328x3xf32, #tpu.memory_space<vmem>>, vector<1x288x3xf32>
    %45 = vector.shape_cast %44 : vector<1x288x3xf32> to vector<288x3xf32>
    %46 = arith.truncf %45 : vector<288x3xf32> to vector<288x3xbf16>
    %c6 = arith.constant 6 : index
    %c0_39 = arith.constant 0 : index
    %c0_40 = arith.constant 0 : index
    %47 = vector.load %arg2[%c6, %c0_39, %c0_40] : memref<9x3x64xbf16, #tpu.memory_space<vmem>>, vector<1x3x64xbf16>
    %48 = vector.shape_cast %47 : vector<1x3x64xbf16> to vector<3x64xbf16>
    %cst_41 = arith.constant dense<0.000000e+00> : vector<288x64xf32>
    %49 = tpu.matmul %46, %48, %cst_41 {dimension_numbers = #tpu.dot_dimension_numbers<[1], [0], [0], [1], [0, 0, 1, 1], [], []>} : vector<288x3xbf16>, vector<3x64xbf16>, vector<288x64xf32> -> vector<288x64xf32>
    %50 = arith.addf %43, %49 : vector<288x64xf32>
    %c0_42 = arith.constant 0 : index
    %c37 = arith.constant 37 : index
    %c0_43 = arith.constant 0 : index
    %51 = vector.load %arg1[%c0_42, %c37, %c0_43] : memref<1x328x3xf32, #tpu.memory_space<vmem>>, vector<1x288x3xf32>
    %52 = vector.shape_cast %51 : vector<1x288x3xf32> to vector<288x3xf32>
    %53 = arith.truncf %52 : vector<288x3xf32> to vector<288x3xbf16>
    %c7 = arith.constant 7 : index
    %c0_44 = arith.constant 0 : index
    %c0_45 = arith.constant 0 : index
    %54 = vector.load %arg2[%c7, %c0_44, %c0_45] : memref<9x3x64xbf16, #tpu.memory_space<vmem>>, vector<1x3x64xbf16>
    %55 = vector.shape_cast %54 : vector<1x3x64xbf16> to vector<3x64xbf16>
    %cst_46 = arith.constant dense<0.000000e+00> : vector<288x64xf32>
    %56 = tpu.matmul %53, %55, %cst_46 {dimension_numbers = #tpu.dot_dimension_numbers<[1], [0], [0], [1], [0, 0, 1, 1], [], []>} : vector<288x3xbf16>, vector<3x64xbf16>, vector<288x64xf32> -> vector<288x64xf32>
    %57 = arith.addf %50, %56 : vector<288x64xf32>
    %c0_47 = arith.constant 0 : index
    %c38 = arith.constant 38 : index
    %c0_48 = arith.constant 0 : index
    %58 = vector.load %arg1[%c0_47, %c38, %c0_48] : memref<1x328x3xf32, #tpu.memory_space<vmem>>, vector<1x288x3xf32>
    %59 = vector.shape_cast %58 : vector<1x288x3xf32> to vector<288x3xf32>
    %60 = arith.truncf %59 : vector<288x3xf32> to vector<288x3xbf16>
    %c8 = arith.constant 8 : index
    %c0_49 = arith.constant 0 : index
    %c0_50 = arith.constant 0 : index
    %61 = vector.load %arg2[%c8, %c0_49, %c0_50] : memref<9x3x64xbf16, #tpu.memory_space<vmem>>, vector<1x3x64xbf16>
    %62 = vector.shape_cast %61 : vector<1x3x64xbf16> to vector<3x64xbf16>
    %cst_51 = arith.constant dense<0.000000e+00> : vector<288x64xf32>
    %63 = tpu.matmul %60, %62, %cst_51 {dimension_numbers = #tpu.dot_dimension_numbers<[1], [0], [0], [1], [0, 0, 1, 1], [], []>} : vector<288x3xbf16>, vector<3x64xbf16>, vector<288x64xf32> -> vector<288x64xf32>
    %64 = arith.addf %57, %63 : vector<288x64xf32>
    %c0_52 = arith.constant 0 : index
    %c0_53 = arith.constant 0 : index
    %65 = vector.load %arg3[%c0_52, %c0_53] : memref<1x64xf32, #tpu.memory_space<vmem>>, vector<1x64xf32>
    %66 = vector.broadcast %65 : vector<1x64xf32> to vector<288x64xf32>
    %67 = arith.addf %64, %66 : vector<288x64xf32>
    %cst_54 = arith.constant 0.000000e+00 : f32
    %68 = vector.broadcast %cst_54 : f32 to vector<288x64xf32>
    %69 = arith.maximumf %67, %68 : vector<288x64xf32>
    %70 = vector.broadcast %0 : vector<288x1xf32> to vector<288x64xf32>
    %71 = arith.mulf %69, %70 : vector<288x64xf32>
    %c19_55 = arith.constant 19 : index
    %c0_56 = arith.constant 0 : index
    %72 = vector.load %arg9[%c19_55, %c0_56] : memref<328x64xf32, #tpu.memory_space<vmem>>, vector<288x64xf32>
    tpu.vector_store %arg9[%c19_55, %c0_56], %71 {strides = array<i32>} : memref<328x64xf32, #tpu.memory_space<vmem>>, vector<288x64xf32>,
    %cst_57 = arith.constant 0.000000e+00 : f32
    %73 = vector.broadcast %cst_57 : f32 to vector<328x64xf32>
    %c0_58 = arith.constant 0 : index
    %c0_59 = arith.constant 0 : index
    %74 = vector.load %arg10[%c0_58, %c0_59] : memref<328x64xf32, #tpu.memory_space<vmem>>, vector<328x64xf32>
    tpu.vector_store %arg10[%c0_58, %c0_59], %73 {strides = array<i32>} : memref<328x64xf32, #tpu.memory_space<vmem>>, vector<328x64xf32>,
    %c0_60 = arith.constant 0 : index
    %c0_61 = arith.constant 0 : index
    %75 = vector.load %arg9[%c0_60, %c0_61] : memref<328x64xf32, #tpu.memory_space<vmem>>, vector<288x64xf32>
    %76 = arith.truncf %75 : vector<288x64xf32> to vector<288x64xbf16>
    %c0_62 = arith.constant 0 : index
    %c0_63 = arith.constant 0 : index
    %c0_64 = arith.constant 0 : index
    %77 = vector.load %arg4[%c0_62, %c0_63, %c0_64] : memref<9x64x64xbf16, #tpu.memory_space<vmem>>, vector<1x64x64xbf16>
    %78 = vector.shape_cast %77 : vector<1x64x64xbf16> to vector<64x64xbf16>
    %cst_65 = arith.constant dense<0.000000e+00> : vector<288x64xf32>
    %79 = tpu.matmul %76, %78, %cst_65 {dimension_numbers = #tpu.dot_dimension_numbers<[1], [0], [0], [1], [0, 0, 1, 1], [], []>} : vector<288x64xbf16>, vector<64x64xbf16>, vector<288x64xf32> -> vector<288x64xf32>
    %c1_66 = arith.constant 1 : index
    %c0_67 = arith.constant 0 : index
    %80 = vector.load %arg9[%c1_66, %c0_67] : memref<328x64xf32, #tpu.memory_space<vmem>>, vector<288x64xf32>
    %81 = arith.truncf %80 : vector<288x64xf32> to vector<288x64xbf16>
    %c1_68 = arith.constant 1 : index
    %c0_69 = arith.constant 0 : index
    %c0_70 = arith.constant 0 : index
    %82 = vector.load %arg4[%c1_68, %c0_69, %c0_70] : memref<9x64x64xbf16, #tpu.memory_space<vmem>>, vector<1x64x64xbf16>
    %83 = vector.shape_cast %82 : vector<1x64x64xbf16> to vector<64x64xbf16>
    %cst_71 = arith.constant dense<0.000000e+00> : vector<288x64xf32>
    %84 = tpu.matmul %81, %83, %cst_71 {dimension_numbers = #tpu.dot_dimension_numbers<[1], [0], [0], [1], [0, 0, 1, 1], [], []>} : vector<288x64xbf16>, vector<64x64xbf16>, vector<288x64xf32> -> vector<288x64xf32>
    %85 = arith.addf %79, %84 : vector<288x64xf32>
    %c2_72 = arith.constant 2 : index
    %c0_73 = arith.constant 0 : index
    %86 = vector.load %arg9[%c2_72, %c0_73] : memref<328x64xf32, #tpu.memory_space<vmem>>, vector<288x64xf32>
    %87 = arith.truncf %86 : vector<288x64xf32> to vector<288x64xbf16>
    %c2_74 = arith.constant 2 : index
    %c0_75 = arith.constant 0 : index
    %c0_76 = arith.constant 0 : index
    %88 = vector.load %arg4[%c2_74, %c0_75, %c0_76] : memref<9x64x64xbf16, #tpu.memory_space<vmem>>, vector<1x64x64xbf16>
    %89 = vector.shape_cast %88 : vector<1x64x64xbf16> to vector<64x64xbf16>
    %cst_77 = arith.constant dense<0.000000e+00> : vector<288x64xf32>
    %90 = tpu.matmul %87, %89, %cst_77 {dimension_numbers = #tpu.dot_dimension_numbers<[1], [0], [0], [1], [0, 0, 1, 1], [], []>} : vector<288x64xbf16>, vector<64x64xbf16>, vector<288x64xf32> -> vector<288x64xf32>
    %91 = arith.addf %85, %90 : vector<288x64xf32>
    %c18_78 = arith.constant 18 : index
    %c0_79 = arith.constant 0 : index
    %92 = vector.load %arg9[%c18_78, %c0_79] : memref<328x64xf32, #tpu.memory_space<vmem>>, vector<288x64xf32>
    %93 = arith.truncf %92 : vector<288x64xf32> to vector<288x64xbf16>
    %c3_80 = arith.constant 3 : index
    %c0_81 = arith.constant 0 : index
    %c0_82 = arith.constant 0 : index
    %94 = vector.load %arg4[%c3_80, %c0_81, %c0_82] : memref<9x64x64xbf16, #tpu.memory_space<vmem>>, vector<1x64x64xbf16>
    %95 = vector.shape_cast %94 : vector<1x64x64xbf16> to vector<64x64xbf16>
    %cst_83 = arith.constant dense<0.000000e+00> : vector<288x64xf32>
    %96 = tpu.matmul %93, %95, %cst_83 {dimension_numbers = #tpu.dot_dimension_numbers<[1], [0], [0], [1], [0, 0, 1, 1], [], []>} : vector<288x64xbf16>, vector<64x64xbf16>, vector<288x64xf32> -> vector<288x64xf32>
    %97 = arith.addf %91, %96 : vector<288x64xf32>
    %c19_84 = arith.constant 19 : index
    %c0_85 = arith.constant 0 : index
    %98 = vector.load %arg9[%c19_84, %c0_85] : memref<328x64xf32, #tpu.memory_space<vmem>>, vector<288x64xf32>
    %99 = arith.truncf %98 : vector<288x64xf32> to vector<288x64xbf16>
    %c4_86 = arith.constant 4 : index
    %c0_87 = arith.constant 0 : index
    %c0_88 = arith.constant 0 : index
    %100 = vector.load %arg4[%c4_86, %c0_87, %c0_88] : memref<9x64x64xbf16, #tpu.memory_space<vmem>>, vector<1x64x64xbf16>
    %101 = vector.shape_cast %100 : vector<1x64x64xbf16> to vector<64x64xbf16>
    %cst_89 = arith.constant dense<0.000000e+00> : vector<288x64xf32>
    %102 = tpu.matmul %99, %101, %cst_89 {dimension_numbers = #tpu.dot_dimension_numbers<[1], [0], [0], [1], [0, 0, 1, 1], [], []>} : vector<288x64xbf16>, vector<64x64xbf16>, vector<288x64xf32> -> vector<288x64xf32>
    %103 = arith.addf %97, %102 : vector<288x64xf32>
    %c20_90 = arith.constant 20 : index
    %c0_91 = arith.constant 0 : index
    %104 = vector.load %arg9[%c20_90, %c0_91] : memref<328x64xf32, #tpu.memory_space<vmem>>, vector<288x64xf32>
    %105 = arith.truncf %104 : vector<288x64xf32> to vector<288x64xbf16>
    %c5_92 = arith.constant 5 : index
    %c0_93 = arith.constant 0 : index
    %c0_94 = arith.constant 0 : index
    %106 = vector.load %arg4[%c5_92, %c0_93, %c0_94] : memref<9x64x64xbf16, #tpu.memory_space<vmem>>, vector<1x64x64xbf16>
    %107 = vector.shape_cast %106 : vector<1x64x64xbf16> to vector<64x64xbf16>
    %cst_95 = arith.constant dense<0.000000e+00> : vector<288x64xf32>
    %108 = tpu.matmul %105, %107, %cst_95 {dimension_numbers = #tpu.dot_dimension_numbers<[1], [0], [0], [1], [0, 0, 1, 1], [], []>} : vector<288x64xbf16>, vector<64x64xbf16>, vector<288x64xf32> -> vector<288x64xf32>
    %109 = arith.addf %103, %108 : vector<288x64xf32>
    %c36_96 = arith.constant 36 : index
    %c0_97 = arith.constant 0 : index
    %110 = vector.load %arg9[%c36_96, %c0_97] : memref<328x64xf32, #tpu.memory_space<vmem>>, vector<288x64xf32>
    %111 = arith.truncf %110 : vector<288x64xf32> to vector<288x64xbf16>
    %c6_98 = arith.constant 6 : index
    %c0_99 = arith.constant 0 : index
    %c0_100 = arith.constant 0 : index
    %112 = vector.load %arg4[%c6_98, %c0_99, %c0_100] : memref<9x64x64xbf16, #tpu.memory_space<vmem>>, vector<1x64x64xbf16>
    %113 = vector.shape_cast %112 : vector<1x64x64xbf16> to vector<64x64xbf16>
    %cst_101 = arith.constant dense<0.000000e+00> : vector<288x64xf32>
    %114 = tpu.matmul %111, %113, %cst_101 {dimension_numbers = #tpu.dot_dimension_numbers<[1], [0], [0], [1], [0, 0, 1, 1], [], []>} : vector<288x64xbf16>, vector<64x64xbf16>, vector<288x64xf32> -> vector<288x64xf32>
    %115 = arith.addf %109, %114 : vector<288x64xf32>
    %c37_102 = arith.constant 37 : index
    %c0_103 = arith.constant 0 : index
    %116 = vector.load %arg9[%c37_102, %c0_103] : memref<328x64xf32, #tpu.memory_space<vmem>>, vector<288x64xf32>
    %117 = arith.truncf %116 : vector<288x64xf32> to vector<288x64xbf16>
    %c7_104 = arith.constant 7 : index
    %c0_105 = arith.constant 0 : index
    %c0_106 = arith.constant 0 : index
    %118 = vector.load %arg4[%c7_104, %c0_105, %c0_106] : memref<9x64x64xbf16, #tpu.memory_space<vmem>>, vector<1x64x64xbf16>
    %119 = vector.shape_cast %118 : vector<1x64x64xbf16> to vector<64x64xbf16>
    %cst_107 = arith.constant dense<0.000000e+00> : vector<288x64xf32>
    %120 = tpu.matmul %117, %119, %cst_107 {dimension_numbers = #tpu.dot_dimension_numbers<[1], [0], [0], [1], [0, 0, 1, 1], [], []>} : vector<288x64xbf16>, vector<64x64xbf16>, vector<288x64xf32> -> vector<288x64xf32>
    %121 = arith.addf %115, %120 : vector<288x64xf32>
    %c38_108 = arith.constant 38 : index
    %c0_109 = arith.constant 0 : index
    %122 = vector.load %arg9[%c38_108, %c0_109] : memref<328x64xf32, #tpu.memory_space<vmem>>, vector<288x64xf32>
    %123 = arith.truncf %122 : vector<288x64xf32> to vector<288x64xbf16>
    %c8_110 = arith.constant 8 : index
    %c0_111 = arith.constant 0 : index
    %c0_112 = arith.constant 0 : index
    %124 = vector.load %arg4[%c8_110, %c0_111, %c0_112] : memref<9x64x64xbf16, #tpu.memory_space<vmem>>, vector<1x64x64xbf16>
    %125 = vector.shape_cast %124 : vector<1x64x64xbf16> to vector<64x64xbf16>
    %cst_113 = arith.constant dense<0.000000e+00> : vector<288x64xf32>
    %126 = tpu.matmul %123, %125, %cst_113 {dimension_numbers = #tpu.dot_dimension_numbers<[1], [0], [0], [1], [0, 0, 1, 1], [], []>} : vector<288x64xbf16>, vector<64x64xbf16>, vector<288x64xf32> -> vector<288x64xf32>
    %127 = arith.addf %121, %126 : vector<288x64xf32>
    %c0_114 = arith.constant 0 : index
    %c0_115 = arith.constant 0 : index
    %128 = vector.load %arg5[%c0_114, %c0_115] : memref<1x64xf32, #tpu.memory_space<vmem>>, vector<1x64xf32>
    %129 = vector.broadcast %128 : vector<1x64xf32> to vector<288x64xf32>
    %130 = arith.addf %127, %129 : vector<288x64xf32>
    %cst_116 = arith.constant 0.000000e+00 : f32
    %131 = vector.broadcast %cst_116 : f32 to vector<288x64xf32>
    %132 = arith.maximumf %130, %131 : vector<288x64xf32>
    %c0_117 = arith.constant 0 : index
    %c0_118 = arith.constant 0 : index
    %133 = vector.load %arg10[%c0_117, %c0_118] : memref<328x64xf32, #tpu.memory_space<vmem>>, vector<288x64xf32>
    tpu.vector_store %arg10[%c0_117, %c0_118], %132 {strides = array<i32>} : memref<328x64xf32, #tpu.memory_space<vmem>>, vector<288x64xf32>,
    %c0_119 = arith.constant 0 : index
    %c0_120 = arith.constant 0 : index
    %134 = vector.load %arg10[%c0_119, %c0_120] : memref<328x64xf32, #tpu.memory_space<vmem>>, vector<288x64xf32>
    %c1_121 = arith.constant 1 : index
    %c0_122 = arith.constant 0 : index
    %135 = vector.load %arg10[%c1_121, %c0_122] : memref<328x64xf32, #tpu.memory_space<vmem>>, vector<288x64xf32>
    %136 = arith.maximumf %134, %135 : vector<288x64xf32>
    %c18_123 = arith.constant 18 : index
    %c0_124 = arith.constant 0 : index
    %137 = vector.load %arg10[%c18_123, %c0_124] : memref<328x64xf32, #tpu.memory_space<vmem>>, vector<288x64xf32>
    %c19_125 = arith.constant 19 : index
    %c0_126 = arith.constant 0 : index
    %138 = vector.load %arg10[%c19_125, %c0_126] : memref<328x64xf32, #tpu.memory_space<vmem>>, vector<288x64xf32>
    %139 = arith.maximumf %137, %138 : vector<288x64xf32>
    %140 = arith.maximumf %136, %139 : vector<288x64xf32>
    %c0_127 = arith.constant 0 : index
    %c0_128 = arith.constant 0 : index
    %141 = vector.load %arg7[%c0_127, %c0_128] : memref<104x288xf32, #tpu.memory_space<vmem>>, vector<104x288xf32>
    %cst_129 = arith.constant dense<0.000000e+00> : vector<104x64xf32>
    %142 = tpu.matmul %141, %140, %cst_129 {dimension_numbers = #tpu.dot_dimension_numbers<[1], [0], [0], [1], [0, 0, 1, 1], [], []>} : vector<104x288xf32>, vector<288x64xf32>, vector<104x64xf32> -> vector<104x64xf32>
    %c0_130 = arith.constant 0 : index
    %c0_131 = arith.constant 0 : index
    %c0_132 = arith.constant 0 : index
    %143 = vector.load %arg8[%c0_130, %c0_131, %c0_132] : memref<1x104x64xf32, #tpu.memory_space<vmem>>, vector<1x104x64xf32>
    %144 = vector.shape_cast %143 : vector<1x104x64xf32> to vector<104x64xf32>
    %145 = vector.shape_cast %142 : vector<104x64xf32> to vector<1x104x64xf32>
    tpu.vector_store %arg8[%c0_130, %c0_131, %c0_132], %145 {strides = array<i32>} : memref<1x104x64xf32, #tpu.memory_space<vmem>>, vector<1x104x64xf32>,
    return
  }
  func.func @transform_0(%arg0: i32) -> (i32, i32, i32) {
    %c0_i32 = arith.constant 0 : i32
    %c0_i32_0 = arith.constant 0 : i32
    %c0_i32_1 = arith.constant 0 : i32
    return %arg0, %c0_i32, %c0_i32_0 : i32, i32, i32
  }
  func.func @transform_1(%arg0: i32) -> (i32, i32, i32) {
    %c0_i32 = arith.constant 0 : i32
    %c0_i32_0 = arith.constant 0 : i32
    %c0_i32_1 = arith.constant 0 : i32
    %c0_i32_2 = arith.constant 0 : i32
    return %c0_i32, %c0_i32_0, %c0_i32_1 : i32, i32, i32
  }
  func.func @transform_2(%arg0: i32) -> (i32, i32) {
    %c0_i32 = arith.constant 0 : i32
    %c0_i32_0 = arith.constant 0 : i32
    %c0_i32_1 = arith.constant 0 : i32
    return %c0_i32, %c0_i32_0 : i32, i32
  }
  func.func @transform_3(%arg0: i32) -> (i32, i32, i32) {
    %c0_i32 = arith.constant 0 : i32
    %c0_i32_0 = arith.constant 0 : i32
    %c0_i32_1 = arith.constant 0 : i32
    %c0_i32_2 = arith.constant 0 : i32
    return %c0_i32, %c0_i32_0, %c0_i32_1 : i32, i32, i32
  }
  func.func @transform_4(%arg0: i32) -> (i32, i32) {
    %c0_i32 = arith.constant 0 : i32
    %c0_i32_0 = arith.constant 0 : i32
    %c0_i32_1 = arith.constant 0 : i32
    return %c0_i32, %c0_i32_0 : i32, i32
  }
  func.func @transform_5(%arg0: i32) -> (i32, i32) {
    %c0_i32 = arith.constant 0 : i32
    %c0_i32_0 = arith.constant 0 : i32
    %c0_i32_1 = arith.constant 0 : i32
    return %c0_i32, %c0_i32_0 : i32, i32
  }
  func.func @transform_6(%arg0: i32) -> (i32, i32) {
    %c0_i32 = arith.constant 0 : i32
    %c0_i32_0 = arith.constant 0 : i32
    %c0_i32_1 = arith.constant 0 : i32
    return %c0_i32, %c0_i32_0 : i32, i32
  }
  func.func @transform_7(%arg0: i32) -> (i32, i32, i32) {
    %c0_i32 = arith.constant 0 : i32
    %c0_i32_0 = arith.constant 0 : i32
    %c0_i32_1 = arith.constant 0 : i32
    return %arg0, %c0_i32, %c0_i32_0 : i32, i32, i32
  }
}

</mosaic_0001>

<llo_original>
// kernel: tpu_custom_call.1
$region0: #{tpu_custom_call.1}
  #allocation0 [shape = 'u32[]', space=smem, size = 0x4, offset = 0x4, fixed_abs, tag = 'smem constant byte address 0x4 - core index']
  #allocation1 [shape = 'u32[144,128]{1,0:T(1,128)}', space=vmem, size = 0x12000, scoped, tag = 'internal scratch']
  #allocation2 [shape = 'f32[328,64]{1,0:T(8,128)}', space=vmem, size = 0x29000, scoped, tag = 'scratch operand']
  #allocation3 [shape = 'f32[328,64]{1,0:T(8,128)}', space=vmem, size = 0x29000, scoped, tag = 'scratch operand']
  %s0 = inlined_call_operand.vmem [shape: f32[2,328,3], index: 0, kind: input, shape index: {}]
  %s1 = inlined_call_operand.vmem [shape: bf16[9,3,64], index: 1, kind: input, shape index: {}]
  %s2 = inlined_call_operand.vmem [shape: f32[1,64], index: 2, kind: input, shape index: {}]
  %s3 = inlined_call_operand.vmem [shape: bf16[9,64,64], index: 3, kind: input, shape index: {}]
  %s4 = inlined_call_operand.vmem [shape: f32[1,64], index: 4, kind: input, shape index: {}]
  %s5 = inlined_call_operand.vmem [shape: f32[288,1], index: 5, kind: input, shape index: {}]
  %s6 = inlined_call_operand.vmem [shape: f32[104,288], index: 6, kind: input, shape index: {}]
  %s7 = inlined_call_operand.vmem [shape: f32[2,104,64], index: 7, kind: output, shape index: {}]
  %s8 = sld [smem:[#allocation0]]
  $region61: #{tpu_custom_call.1} parent=0
    _
  %s10 = ssub.s32 1, %s8
  %s11 = scalar_select 0, %s10, %s8
  loop: start=0, step=1, limit=4
  $region2: #{tpu_custom_call.1} parent=0 // loop_pre_header
    _
  $region3: #{tpu_custom_call.1} parent=0 // loop_header
    %s13 = sphi 0, %s17
    %p14 = scmp.ge.s32.totalorder %s13, 4
    %s23 = sphi 0, %s25
    %s26 = sphi 0, %s23
    %s27 = sphi 0, %s26
    %s43 = sphi 0, %s27
    %s47 = sphi 0, %s47
    %s49 = sphi 0, %s47
    %s50 = sphi 0, %s49
    %s64 = sphi 0, %s50
    %s68 = sphi 0, %s68
    %s70 = sphi 0, %s68
    %s71 = sphi 0, %s70
    %s85 = sphi 0, %s71
    %s89 = sphi 0, %s89
    %s91 = sphi 0, %s89
    %s92 = sphi 0, %s91
    %s106 = sphi 0, %s92
    %s110 = sphi 0, %s110
    %s112 = sphi 0, %s110
    %s113 = sphi 0, %s112
    %s127 = sphi 0, %s113
    %s131 = sphi 0, %s131
    %s133 = sphi 0, %s131
    %s134 = sphi 0, %s133
    %s148 = sphi 0, %s134
    %s152 = sphi 0, %s152
    %s154 = sphi 0, %s152
    %s155 = sphi 0, %s154
    %s169 = sphi 0, %s155
    %s175 = sphi 0, %s177
    %s178 = sphi 0, %s175
    %s179 = sphi 0, %s178
    %s195 = sphi 0, %s179
  $region4: #{tpu_custom_call.1} parent=0 // loop_header_branch
    %16 = sbr.rel (%p14) target = $region8
  $region5: #{tpu_custom_call.1} parent=0 // loop_body
    %s18 = ssub.s32 %s13, 1
    %s19 = ssub.s32 %s13, 2
    %s20 = sadd.s32 %s13, 1
    %s21 = ssub.s32 %s13, %s20
    %p22 = scmp.eq.s32.totalorder %s21, 0
    %s24 = sadd.s32 %s23, 1
    %s25 = scalar_select %p22, %s23, %s24
    %p28 = pneg %p22
    %p29 = scmp.eq.s32.totalorder %s13, 1
    %p30 = por %p28, %p29
    %p31 = scmp.ne.s32.totalorder %s23, %s26
    %p32 = scmp.eq.s32.totalorder %s13, 0
    %p33 = por %p31, %p32
    %p34 = scmp.ne.s32.totalorder %s23, %s26
    %p35 = scmp.eq.s32.totalorder %s18, 1
    %p36 = por %p34, %p35
    %p37 = scmp.ne.s32.totalorder %s26, %s27
    %p38 = scmp.eq.s32.totalorder %s18, 0
    %p39 = por %p37, %p38
    %p40 = scmp.ne.s32.totalorder %s26, %s27
    %p41 = scmp.eq.s32.totalorder %s19, 1
    %p42 = por %p40, %p41
    %p44 = scmp.ne.s32.totalorder %s27, %s43
    %p45 = scmp.eq.s32.totalorder %s19, 0
    %p46 = por %p44, %p45
    %s48 = sadd.s32 %s47, 1
    %p51 = scmp.eq.s32.totalorder %s13, 1
    %p52 = scmp.ne.s32.totalorder %s47, %s49
    %p53 = scmp.eq.s32.totalorder %s13, 0
    %p54 = por %p52, %p53
    %p55 = scmp.ne.s32.totalorder %s47, %s49
    %p56 = scmp.eq.s32.totalorder %s18, 1
    %p57 = por %p55, %p56
    %p58 = scmp.ne.s32.totalorder %s49, %s50
    %p59 = scmp.eq.s32.totalorder %s18, 0
    %p60 = por %p58, %p59
    %p61 = scmp.ne.s32.totalorder %s49, %s50
    %p62 = scmp.eq.s32.totalorder %s19, 1
    %p63 = por %p61, %p62
    %p65 = scmp.ne.s32.totalorder %s50, %s64
    %p66 = scmp.eq.s32.totalorder %s19, 0
    %p67 = por %p65, %p66
    %s69 = sadd.s32 %s68, 1
    %p72 = scmp.eq.s32.totalorder %s13, 1
    %p73 = scmp.ne.s32.totalorder %s68, %s70
    %p74 = scmp.eq.s32.totalorder %s13, 0
    %p75 = por %p73, %p74
    %p76 = scmp.ne.s32.totalorder %s68, %s70
    %p77 = scmp.eq.s32.totalorder %s18, 1
    %p78 = por %p76, %p77
    %p79 = scmp.ne.s32.totalorder %s70, %s71
    %p80 = scmp.eq.s32.totalorder %s18, 0
    %p81 = por %p79, %p80
    %p82 = scmp.ne.s32.totalorder %s70, %s71
    %p83 = scmp.eq.s32.totalorder %s19, 1
    %p84 = por %p82, %p83
    %p86 = scmp.ne.s32.totalorder %s71, %s85
    %p87 = scmp.eq.s32.totalorder %s19, 0
    %p88 = por %p86, %p87
    %s90 = sadd.s32 %s89, 1
    %p93 = scmp.eq.s32.totalorder %s13, 1
    %p94 = scmp.ne.s32.totalorder %s89, %s91
    %p95 = scmp.eq.s32.totalorder %s13, 0
    %p96 = por %p94, %p95
    %p97 = scmp.ne.s32.totalorder %s89, %s91
    %p98 = scmp.eq.s32.totalorder %s18, 1
    %p99 = por %p97, %p98
    %p100 = scmp.ne.s32.totalorder %s91, %s92
    %p101 = scmp.eq.s32.totalorder %s18, 0
    %p102 = por %p100, %p101
    %p103 = scmp.ne.s32.totalorder %s91, %s92
    %p104 = scmp.eq.s32.totalorder %s19, 1
    %p105 = por %p103, %p104
    %p107 = scmp.ne.s32.totalorder %s92, %s106
    %p108 = scmp.eq.s32.totalorder %s19, 0
    %p109 = por %p107, %p108
    %s111 = sadd.s32 %s110, 1
    %p114 = scmp.eq.s32.totalorder %s13, 1
    %p115 = scmp.ne.s32.totalorder %s110, %s112
    %p116 = scmp.eq.s32.totalorder %s13, 0
    %p117 = por %p115, %p116
    %p118 = scmp.ne.s32.totalorder %s110, %s112
    %p119 = scmp.eq.s32.totalorder %s18, 1
    %p120 = por %p118, %p119
    %p121 = scmp.ne.s32.totalorder %s112, %s113
    %p122 = scmp.eq.s32.totalorder %s18, 0
    %p123 = por %p121, %p122
    %p124 = scmp.ne.s32.totalorder %s112, %s113
    %p125 = scmp.eq.s32.totalorder %s19, 1
    %p126 = por %p124, %p125
    %p128 = scmp.ne.s32.totalorder %s113, %s127
    %p129 = scmp.eq.s32.totalorder %s19, 0
    %p130 = por %p128, %p129
    %s132 = sadd.s32 %s131, 1
    %p135 = scmp.eq.s32.totalorder %s13, 1
    %p136 = scmp.ne.s32.totalorder %s131, %s133
    %p137 = scmp.eq.s32.totalorder %s13, 0
    %p138 = por %p136, %p137
    %p139 = scmp.ne.s32.totalorder %s131, %s133
    %p140 = scmp.eq.s32.totalorder %s18, 1
    %p141 = por %p139, %p140
    %p142 = scmp.ne.s32.totalorder %s133, %s134
    %p143 = scmp.eq.s32.totalorder %s18, 0
    %p144 = por %p142, %p143
    %p145 = scmp.ne.s32.totalorder %s133, %s134
    %p146 = scmp.eq.s32.totalorder %s19, 1
    %p147 = por %p145, %p146
    %p149 = scmp.ne.s32.totalorder %s134, %s148
    %p150 = scmp.eq.s32.totalorder %s19, 0
    %p151 = por %p149, %p150
    %s153 = sadd.s32 %s152, 1
    %p156 = scmp.eq.s32.totalorder %s13, 1
    %p157 = scmp.ne.s32.totalorder %s152, %s154
    %p158 = scmp.eq.s32.totalorder %s13, 0
    %p159 = por %p157, %p158
    %p160 = scmp.ne.s32.totalorder %s152, %s154
    %p161 = scmp.eq.s32.totalorder %s18, 1
    %p162 = por %p160, %p161
    %p163 = scmp.ne.s32.totalorder %s154, %s155
    %p164 = scmp.eq.s32.totalorder %s18, 0
    %p165 = por %p163, %p164
    %p166 = scmp.ne.s32.totalorder %s154, %s155
    %p167 = scmp.eq.s32.totalorder %s19, 1
    %p168 = por %p166, %p167
    %p170 = scmp.ne.s32.totalorder %s155, %s169
    %p171 = scmp.eq.s32.totalorder %s19, 0
    %p172 = por %p170, %p171
    %s173 = ssub.s32 %s13, %s20
    %p174 = scmp.eq.s32.totalorder %s173, 0
    %s176 = sadd.s32 %s175, 1
    %s177 = scalar_select %p174, %s175, %s176
    %p180 = pneg %p174
    %p181 = scmp.eq.s32.totalorder %s13, 1
    %p182 = por %p180, %p181
    %p183 = scmp.ne.s32.totalorder %s175, %s178
    %p184 = scmp.eq.s32.totalorder %s13, 0
    %p185 = por %p183, %p184
    %p186 = scmp.ne.s32.totalorder %s175, %s178
    %p187 = scmp.eq.s32.totalorder %s18, 1
    %p188 = por %p186, %p187
    %p189 = scmp.ne.s32.totalorder %s178, %s179
    %p190 = scmp.eq.s32.totalorder %s18, 0
    %p191 = por %p189, %p190
    %p192 = scmp.ne.s32.totalorder %s178, %s179
    %p193 = scmp.eq.s32.totalorder %s19, 1
    %p194 = por %p192, %p193
    %p196 = scmp.ne.s32.totalorder %s179, %s195
    %p197 = scmp.eq.s32.totalorder %s19, 0
    %p198 = por %p196, %p197
    %p199 = scmp.le.s32.totalorder 1, %s13
    %p200 = scmp.lt.s32.totalorder %s13, 3
    %p201 = pnand %p199, %p200
    %p202 = pneg %p201
    // Predicated region
    $region9: #{tpu_custom_call.1} parent=5 // pred_check
      _
    $region10: #{tpu_custom_call.1} parent=5 // pred_check_branch
      %204 = sbr.rel (%p201) target = $region12
    $region11: #{tpu_custom_call.1} parent=5 // pred_region
      %s205 = ssub.s32 %s13, 1
      // Predicated region
      $region13: #{tpu_custom_call.1} parent=11 // pred_check
        %p206 = pneg %p60
      $region14: #{tpu_custom_call.1} parent=11 // pred_check_branch
        %208 = sbr.rel (%p206) target = $region16
      $region15: #{tpu_custom_call.1} parent=11 // pred_region
        _
      $region16: #{tpu_custom_call.1} parent=11 // pred_fallthru
        _
      // Predicated region
      $region17: #{tpu_custom_call.1} parent=11 // pred_check
        %p209 = pneg %p81
      $region18: #{tpu_custom_call.1} parent=11 // pred_check_branch
        %211 = sbr.rel (%p209) target = $region20
      $region19: #{tpu_custom_call.1} parent=11 // pred_region
        _
      $region20: #{tpu_custom_call.1} parent=11 // pred_fallthru
        _
      // Predicated region
      $region21: #{tpu_custom_call.1} parent=11 // pred_check
        %p212 = pneg %p102
      $region22: #{tpu_custom_call.1} parent=11 // pred_check_branch
        %214 = sbr.rel (%p212) target = $region24
      $region23: #{tpu_custom_call.1} parent=11 // pred_region
        _
      $region24: #{tpu_custom_call.1} parent=11 // pred_fallthru
        _
      // Predicated region
      $region25: #{tpu_custom_call.1} parent=11 // pred_check
        %p215 = pneg %p123
      $region26: #{tpu_custom_call.1} parent=11 // pred_check_branch
        %217 = sbr.rel (%p215) target = $region28
      $region27: #{tpu_custom_call.1} parent=11 // pred_region
        _
      $region28: #{tpu_custom_call.1} parent=11 // pred_fallthru
        _
      // Predicated region
      $region29: #{tpu_custom_call.1} parent=11 // pred_check
        %p218 = pneg %p144
      $region30: #{tpu_custom_call.1} parent=11 // pred_check_branch
        %220 = sbr.rel (%p218) target = $region32
      $region31: #{tpu_custom_call.1} parent=11 // pred_region
        _
      $region32: #{tpu_custom_call.1} parent=11 // pred_fallthru
        _
      // Predicated region
      $region33: #{tpu_custom_call.1} parent=11 // pred_check
        %p221 = pneg %p165
      $region34: #{tpu_custom_call.1} parent=11 // pred_check_branch
        %223 = sbr.rel (%p221) target = $region36
      $region35: #{tpu_custom_call.1} parent=11 // pred_region
        _
      $region36: #{tpu_custom_call.1} parent=11 // pred_fallthru
        _
    $region12: #{tpu_custom_call.1} parent=5 // pred_fallthru
      _
    %p224 = scmp.lt.s32.totalorder %s13, 2
    // Predicated region
    $region37: #{tpu_custom_call.1} parent=5 // pred_check
      %p225 = pneg %p224
    $region38: #{tpu_custom_call.1} parent=5 // pred_check_branch
      %227 = sbr.rel (%p225) target = $region40
    $region39: #{tpu_custom_call.1} parent=5 // pred_region
      // Predicated region
      $region41: #{tpu_custom_call.1} parent=39 // pred_check
        %p228 = pneg %p33
      $region42: #{tpu_custom_call.1} parent=39 // pred_check_branch
        %230 = sbr.rel (%p228) target = $region44
      $region43: #{tpu_custom_call.1} parent=39 // pred_region
        %p231 = scmp.lt.s32.totalorder %s13, 1
        %s232 = scalar_select %p231, %s13, 1
        %s233 = smul.addr %s232, 41
        %s234 = smul.addr %s233, 8
        %s235 = scalar_lea.vmem %s0, %s234
      $region44: #{tpu_custom_call.1} parent=39 // pred_fallthru
        _
    $region40: #{tpu_custom_call.1} parent=5 // pred_fallthru
      _
    %p236 = scmp.le.s32.totalorder 1, %s13
    %p237 = scmp.lt.s32.totalorder %s13, 3
    %p238 = pnand %p236, %p237
    %p239 = pneg %p238
    // Predicated region
    $region45: #{tpu_custom_call.1} parent=5 // pred_check
      _
    $region46: #{tpu_custom_call.1} parent=5 // pred_check_branch
      %241 = sbr.rel (%p238) target = $region48
    $region47: #{tpu_custom_call.1} parent=5 // pred_region
      %s242 = ssub.s32 %s13, 1
      %p243 = scmp.lt.s32.totalorder %s18, 1
      %s244 = scalar_select %p243, %s18, 1
      %s245 = smul.addr %s244, 41
      %s246 = smul.addr %s245, 8
      %s247 = scalar_lea.vmem %s0, %s246
      %p248 = pneg %p39
      %p249 = pneg %p36
      %p250 = pneg %p60
      %p251 = pneg %p57
      %p252 = pneg %p81
      %p253 = pneg %p78
      %p254 = pneg %p102
      %p255 = pneg %p99
      %p256 = pneg %p123
      %p257 = pneg %p120
      %p258 = pneg %p144
      %p259 = pneg %p141
      %p260 = pneg %p165
      %p261 = pneg %p162
      %p262 = pneg %p191
      %p263 = pneg %p188
      %p264 = scmp.lt.s32.totalorder %s18, 1
      %s265 = scalar_select %p264, %s18, 1
      %s266 = smul.addr %s265, 13
      %s267 = smul.addr %s266, 8
      %s268 = scalar_lea.vmem %s7, %s267
      %p269 = scmp.lt.s32.totalorder %s18, 1
      %s270 = scalar_select %p269, %s18, 1
      %s271 = smul.addr %s270, 41
      %s272 = smul.addr %s271, 8
      %s273 = scalar_lea.vmem %s0, %s272
      %p274 = scmp.lt.s32.totalorder %s18, 1
      %s275 = scalar_select %p274, %s18, 1
      %s276 = smul.addr %s275, 13
      %s277 = smul.addr %s276, 8
      %s278 = scalar_lea.vmem %s7, %s277
      %v280 = vld [vmem:[%s5] sm:$0xff]
      %v281 = vld [vmem:[%s5 + $0x8] sm:$0xff]
      %v282 = vld [vmem:[%s5 + $0x10] sm:$0xff]
      %v283 = vld [vmem:[%s5 + $0x18] sm:$0xff]
      %v284 = vld [vmem:[%s5 + $0x20] sm:$0xff]
      %v285 = vld [vmem:[%s5 + $0x28] sm:$0xff]
      %v286 = vld [vmem:[%s5 + $0x30] sm:$0xff]
      %v287 = vld [vmem:[%s5 + $0x38] sm:$0xff]
      %v288 = vld [vmem:[%s5 + $0x40] sm:$0xff]
      %v289 = vld [vmem:[%s5 + $0x48] sm:$0xff]
      %v290 = vld [vmem:[%s5 + $0x50] sm:$0xff]
      %v291 = vld [vmem:[%s5 + $0x58] sm:$0xff]
      %v292 = vld [vmem:[%s5 + $0x60] sm:$0xff]
      %v293 = vld [vmem:[%s5 + $0x68] sm:$0xff]
      %v294 = vld [vmem:[%s5 + $0x70] sm:$0xff]
      %v295 = vld [vmem:[%s5 + $0x78] sm:$0xff]
      %v296 = vld [vmem:[%s5 + $0x80] sm:$0xff]
      %v297 = vld [vmem:[%s5 + $0x88] sm:$0xff]
      %v298 = vld [vmem:[%s5 + $0x90] sm:$0xff]
      %v299 = vld [vmem:[%s5 + $0x98] sm:$0xff]
      %v300 = vld [vmem:[%s5 + $0xa0] sm:$0xff]
      %v301 = vld [vmem:[%s5 + $0xa8] sm:$0xff]
      %v302 = vld [vmem:[%s5 + $0xb0] sm:$0xff]
      %v303 = vld [vmem:[%s5 + $0xb8] sm:$0xff]
      %v304 = vld [vmem:[%s5 + $0xc0] sm:$0xff]
      %v305 = vld [vmem:[%s5 + $0xc8] sm:$0xff]
      %v306 = vld [vmem:[%s5 + $0xd0] sm:$0xff]
      %v307 = vld [vmem:[%s5 + $0xd8] sm:$0xff]
      %v308 = vld [vmem:[%s5 + $0xe0] sm:$0xff]
      %v309 = vld [vmem:[%s5 + $0xe8] sm:$0xff]
      %v310 = vld [vmem:[%s5 + $0xf0] sm:$0xff]
      %v311 = vld [vmem:[%s5 + $0xf8] sm:$0xff]
      %v312 = vld [vmem:[%s5 + $0x100] sm:$0xff]
      %v313 = vld [vmem:[%s5 + $0x108] sm:$0xff]
      %v314 = vld [vmem:[%s5 + $0x110] sm:$0xff]
      %v315 = vld [vmem:[%s5 + $0x118] sm:$0xff]
      %vm316 = vcmask 523264
      %317 = vst.msk [vmem:[#allocation2] sm:$0xff] %vm316, 0.0
      %318 = vst.msk [vmem:[#allocation2 + $0x8] sm:$0xff] %vm316, 0.0
      %319 = vst.msk [vmem:[#allocation2 + $0x10] sm:$0xff] %vm316, 0.0
      %320 = vst.msk [vmem:[#allocation2 + $0x18] sm:$0xff] %vm316, 0.0
      %321 = vst.msk [vmem:[#allocation2 + $0x20] sm:$0xff] %vm316, 0.0
      %322 = vst.msk [vmem:[#allocation2 + $0x28] sm:$0xff] %vm316, 0.0
      %323 = vst.msk [vmem:[#allocation2 + $0x30] sm:$0xff] %vm316, 0.0
      %324 = vst.msk [vmem:[#allocation2 + $0x38] sm:$0xff] %vm316, 0.0
      %325 = vst.msk [vmem:[#allocation2 + $0x40] sm:$0xff] %vm316, 0.0
      %326 = vst.msk [vmem:[#allocation2 + $0x48] sm:$0xff] %vm316, 0.0
      %327 = vst.msk [vmem:[#allocation2 + $0x50] sm:$0xff] %vm316, 0.0
      %328 = vst.msk [vmem:[#allocation2 + $0x58] sm:$0xff] %vm316, 0.0
      %329 = vst.msk [vmem:[#allocation2 + $0x60] sm:$0xff] %vm316, 0.0
      %330 = vst.msk [vmem:[#allocation2 + $0x68] sm:$0xff] %vm316, 0.0
      %331 = vst.msk [vmem:[#allocation2 + $0x70] sm:$0xff] %vm316, 0.0
      %332 = vst.msk [vmem:[#allocation2 + $0x78] sm:$0xff] %vm316, 0.0
      %333 = vst.msk [vmem:[#allocation2 + $0x80] sm:$0xff] %vm316, 0.0
      %334 = vst.msk [vmem:[#allocation2 + $0x88] sm:$0xff] %vm316, 0.0
      %335 = vst.msk [vmem:[#allocation2 + $0x90] sm:$0xff] %vm316, 0.0
      %336 = vst.msk [vmem:[#allocation2 + $0x98] sm:$0xff] %vm316, 0.0
      %337 = vst.msk [vmem:[#allocation2 + $0xa0] sm:$0xff] %vm316, 0.0
      %338 = vst.msk [vmem:[#allocation2 + $0xa8] sm:$0xff] %vm316, 0.0
      %339 = vst.msk [vmem:[#allocation2 + $0xb0] sm:$0xff] %vm316, 0.0
      %340 = vst.msk [vmem:[#allocation2 + $0xb8] sm:$0xff] %vm316, 0.0
      %341 = vst.msk [vmem:[#allocation2 + $0xc0] sm:$0xff] %vm316, 0.0
      %342 = vst.msk [vmem:[#allocation2 + $0xc8] sm:$0xff] %vm316, 0.0
      %343 = vst.msk [vmem:[#allocation2 + $0xd0] sm:$0xff] %vm316, 0.0
      %344 = vst.msk [vmem:[#allocation2 + $0xd8] sm:$0xff] %vm316, 0.0
      %345 = vst.msk [vmem:[#allocation2 + $0xe0] sm:$0xff] %vm316, 0.0
      %346 = vst.msk [vmem:[#allocation2 + $0xe8] sm:$0xff] %vm316, 0.0
      %347 = vst.msk [vmem:[#allocation2 + $0xf0] sm:$0xff] %vm316, 0.0
      %348 = vst.msk [vmem:[#allocation2 + $0xf8] sm:$0xff] %vm316, 0.0
      %349 = vst.msk [vmem:[#allocation2 + $0x100] sm:$0xff] %vm316, 0.0
      %350 = vst.msk [vmem:[#allocation2 + $0x108] sm:$0xff] %vm316, 0.0
      %351 = vst.msk [vmem:[#allocation2 + $0x110] sm:$0xff] %vm316, 0.0
      %352 = vst.msk [vmem:[#allocation2 + $0x118] sm:$0xff] %vm316, 0.0
      %353 = vst.msk [vmem:[#allocation2 + $0x120] sm:$0xff] %vm316, 0.0
      %354 = vst.msk [vmem:[#allocation2 + $0x128] sm:$0xff] %vm316, 0.0
      %355 = vst.msk [vmem:[#allocation2 + $0x130] sm:$0xff] %vm316, 0.0
      %356 = vst.msk [vmem:[#allocation2 + $0x138] sm:$0xff] %vm316, 0.0
      %357 = vst.msk [vmem:[#allocation2 + $0x140] sm:$0xff] %vm316, 0.0
      %v358 = vld [vmem:[%s273] sm:$0xff]
      %v359 = vld [vmem:[%s273 + $0x8] sm:$0xff]
      %v360 = vld [vmem:[%s273 + $0x10] sm:$0xff]
      %v361 = vld [vmem:[%s273 + $0x18] sm:$0xff]
      %v362 = vld [vmem:[%s273 + $0x20] sm:$0xff]
      %v363 = vld [vmem:[%s273 + $0x28] sm:$0xff]
      %v364 = vld [vmem:[%s273 + $0x30] sm:$0xff]
      %v365 = vld [vmem:[%s273 + $0x38] sm:$0xff]
      %v366 = vld [vmem:[%s273 + $0x40] sm:$0xff]
      %v367 = vld [vmem:[%s273 + $0x48] sm:$0xff]
      %v368 = vld [vmem:[%s273 + $0x50] sm:$0xff]
      %v369 = vld [vmem:[%s273 + $0x58] sm:$0xff]
      %v370 = vld [vmem:[%s273 + $0x60] sm:$0xff]
      %v371 = vld [vmem:[%s273 + $0x68] sm:$0xff]
      %v372 = vld [vmem:[%s273 + $0x70] sm:$0xff]
      %v373 = vld [vmem:[%s273 + $0x78] sm:$0xff]
      %v374 = vld [vmem:[%s273 + $0x80] sm:$0xff]
      %v375 = vld [vmem:[%s273 + $0x88] sm:$0xff]
      %v376 = vld [vmem:[%s273 + $0x90] sm:$0xff]
      %v377 = vld [vmem:[%s273 + $0x98] sm:$0xff]
      %v378 = vld [vmem:[%s273 + $0xa0] sm:$0xff]
      %v379 = vld [vmem:[%s273 + $0xa8] sm:$0xff]
      %v380 = vld [vmem:[%s273 + $0xb0] sm:$0xff]
      %v381 = vld [vmem:[%s273 + $0xb8] sm:$0xff]
      %v382 = vld [vmem:[%s273 + $0xc0] sm:$0xff]
      %v383 = vld [vmem:[%s273 + $0xc8] sm:$0xff]
      %v384 = vld [vmem:[%s273 + $0xd0] sm:$0xff]
      %v385 = vld [vmem:[%s273 + $0xd8] sm:$0xff]
      %v386 = vld [vmem:[%s273 + $0xe0] sm:$0xff]
      %v387 = vld [vmem:[%s273 + $0xe8] sm:$0xff]
      %v388 = vld [vmem:[%s273 + $0xf0] sm:$0xff]
      %v389 = vld [vmem:[%s273 + $0xf8] sm:$0xff]
      %v390 = vld [vmem:[%s273 + $0x100] sm:$0xff]
      %v391 = vld [vmem:[%s273 + $0x108] sm:$0xff]
      %v392 = vld [vmem:[%s273 + $0x110] sm:$0xff]
      %v393 = vld [vmem:[%s273 + $0x118] sm:$0xff]
      %v394 = vpack.c.bf16 %v359, %v358
      %v395 = vpack.c.bf16 %v361, %v360
      %v396 = vpack.c.bf16 %v363, %v362
      %v397 = vpack.c.bf16 %v365, %v364
      %v398 = vpack.c.bf16 %v367, %v366
      %v399 = vpack.c.bf16 %v369, %v368
      %v400 = vpack.c.bf16 %v371, %v370
      %v401 = vpack.c.bf16 %v373, %v372
      %v402 = vpack.c.bf16 %v375, %v374
      %v403 = vpack.c.bf16 %v377, %v376
      %v404 = vpack.c.bf16 %v379, %v378
      %v405 = vpack.c.bf16 %v381, %v380
      %v406 = vpack.c.bf16 %v383, %v382
      %v407 = vpack.c.bf16 %v385, %v384
      %v408 = vpack.c.bf16 %v387, %v386
      %v409 = vpack.c.bf16 %v389, %v388
      %v410 = vpack.c.bf16 %v391, %v390
      %v411 = vpack.c.bf16 %v393, %v392
      %v412 = vld [vmem:[%s1] sm:$0x3]
      %v413 = vld [vmem:[%s273 + $0x1] sm:$0xff]
      %v414 = vld [vmem:[%s273 + $0x9] sm:$0xff]
      %v415 = vld [vmem:[%s273 + $0x11] sm:$0xff]
      %v416 = vld [vmem:[%s273 + $0x19] sm:$0xff]
      %v417 = vld [vmem:[%s273 + $0x21] sm:$0xff]
      %v418 = vld [vmem:[%s273 + $0x29] sm:$0xff]
      %v419 = vld [vmem:[%s273 + $0x31] sm:$0xff]
      %v420 = vld [vmem:[%s273 + $0x39] sm:$0xff]
      %v421 = vld [vmem:[%s273 + $0x41] sm:$0xff]
      %v422 = vld [vmem:[%s273 + $0x49] sm:$0xff]
      %v423 = vld [vmem:[%s273 + $0x51] sm:$0xff]
      %v424 = vld [vmem:[%s273 + $0x59] sm:$0xff]
      %v425 = vld [vmem:[%s273 + $0x61] sm:$0xff]
      %v426 = vld [vmem:[%s273 + $0x69] sm:$0xff]
      %v427 = vld [vmem:[%s273 + $0x71] sm:$0xff]
      %v428 = vld [vmem:[%s273 + $0x79] sm:$0xff]
      %v429 = vld [vmem:[%s273 + $0x81] sm:$0xff]
      %v430 = vld [vmem:[%s273 + $0x89] sm:$0xff]
      %v431 = vld [vmem:[%s273 + $0x91] sm:$0xff]
      %v432 = vld [vmem:[%s273 + $0x99] sm:$0xff]
      %v433 = vld [vmem:[%s273 + $0xa1] sm:$0xff]
      %v434 = vld [vmem:[%s273 + $0xa9] sm:$0xff]
      %v435 = vld [vmem:[%s273 + $0xb1] sm:$0xff]
      %v436 = vld [vmem:[%s273 + $0xb9] sm:$0xff]
      %v437 = vld [vmem:[%s273 + $0xc1] sm:$0xff]
      %v438 = vld [vmem:[%s273 + $0xc9] sm:$0xff]
      %v439 = vld [vmem:[%s273 + $0xd1] sm:$0xff]
      %v440 = vld [vmem:[%s273 + $0xd9] sm:$0xff]
      %v441 = vld [vmem:[%s273 + $0xe1] sm:$0xff]
      %v442 = vld [vmem:[%s273 + $0xe9] sm:$0xff]
      %v443 = vld [vmem:[%s273 + $0xf1] sm:$0xff]
      %v444 = vld [vmem:[%s273 + $0xf9] sm:$0xff]
      %v445 = vld [vmem:[%s273 + $0x101] sm:$0xff]
      %v446 = vld [vmem:[%s273 + $0x109] sm:$0xff]
      %v447 = vld [vmem:[%s273 + $0x111] sm:$0xff]
      %v448 = vld [vmem:[%s273 + $0x119] sm:$0xff]
      %v449 = vpack.c.bf16 %v414, %v413
      %v450 = vpack.c.bf16 %v416, %v415
      %v451 = vpack.c.bf16 %v418, %v417
      %v452 = vpack.c.bf16 %v420, %v419
      %v453 = vpack.c.bf16 %v422, %v421
      %v454 = vpack.c.bf16 %v424, %v423
      %v455 = vpack.c.bf16 %v426, %v425
      %v456 = vpack.c.bf16 %v428, %v427
      %v457 = vpack.c.bf16 %v430, %v429
      %v458 = vpack.c.bf16 %v432, %v431
      %v459 = vpack.c.bf16 %v434, %v433
      %v460 = vpack.c.bf16 %v436, %v435
      %v461 = vpack.c.bf16 %v438, %v437
      %v462 = vpack.c.bf16 %v440, %v439
      %v463 = vpack.c.bf16 %v442, %v441
      %v464 = vpack.c.bf16 %v444, %v443
      %v465 = vpack.c.bf16 %v446, %v445
      %v466 = vpack.c.bf16 %v448, %v447
      %s467 = scalar_lea.vmem %s1, 2
      %v468 = vld [vmem:[%s467] sm:$0x3]
      %vm469 = vcmask 23552
      %v471 = vsel %vm469, %v449, 0
      %v474 = vsel %vm469, %v450, 0
      %v477 = vsel %vm469, %v451, 0
      %v480 = vsel %vm469, %v452, 0
      %v483 = vsel %vm469, %v453, 0
      %v486 = vsel %vm469, %v454, 0
      %v489 = vsel %vm469, %v455, 0
      %v492 = vsel %vm469, %v456, 0
      %v495 = vsel %vm469, %v457, 0
      %v498 = vsel %vm469, %v458, 0
      %v501 = vsel %vm469, %v459, 0
      %v504 = vsel %vm469, %v460, 0
      %v507 = vsel %vm469, %v461, 0
      %v510 = vsel %vm469, %v462, 0
      %v513 = vsel %vm469, %v463, 0
      %v516 = vsel %vm469, %v464, 0
      %v519 = vsel %vm469, %v465, 0
      %v522 = vsel %vm469, %v466, 0
      %vm524 = vcmask 1040384
      %vm525 = vcmask 1041408
      %v526 = vsel %vm524, 4294967295, 65535
      %v527 = vsel %vm525, %v526, 0
      %v529 = vand.u32 %v468, %v527
      %531 = vmatprep.subr.bf16.mxu0 0
      %532 = vmatpush1.bf16.msra.mxu0 %v529
      %533 = vmatprep.subr.bf16.mxu0 0
      %534 = vmatpush1.bf16.msra.mxu0 0
      %535 = vmatprep.subr.bf16.mxu0 0
      %536 = vmatpush1.bf16.msra.mxu0 0
      %537 = vmatprep.subr.bf16.mxu0 0
      %538 = vmatpush1.bf16.msra.mxu0 0
      %539 = vmatprep.subr.bf16.mxu0 0
      %540 = vmatpush1.bf16.msra.mxu0 0
      %541 = vmatprep.subr.bf16.mxu0 0
      %542 = vmatpush1.bf16.msra.mxu0 0
      %543 = vmatprep.subr.bf16.mxu0 0
      %544 = vmatpush1.bf16.msra.mxu0 0
      %545 = vmatprep.subr.bf16.mxu0 0
      %546 = vmatpush1.bf16.msra.mxu0 0
      %547 = vmatprep.subr.bf16.mxu0 0
      %548 = vmatpush1.bf16.msra.mxu0 0
      %549 = vmatprep.subr.bf16.mxu0 0
      %550 = vmatpush1.bf16.msra.mxu0 0
      %551 = vmatprep.subr.bf16.mxu0 0
      %552 = vmatpush1.bf16.msra.mxu0 0
      %553 = vmatprep.subr.bf16.mxu0 0
      %554 = vmatpush1.bf16.msra.mxu0 0
      %555 = vmatprep.subr.bf16.mxu0 0
      %556 = vmatpush1.bf16.msra.mxu0 0
      %557 = vmatprep.subr.bf16.mxu0 0
      %558 = vmatpush1.bf16.msra.mxu0 0
      %559 = vmatprep.subr.bf16.mxu0 0
      %560 = vmatpush1.bf16.msra.mxu0 0
      %561 = vmatprep.subr.bf16.mxu0 0
      %562 = vmatpush1.bf16.msra.mxu0 0
      %563 = vmatprep.mubr.bf16.mxu0 0
      %564 = vmatmul.mubr.bf16.gmra.mrb[0].mxu0 %v471
      %v565 = vpop.f32.mrb[0].mxu0
      %v566 = vadd.f32 0.0, %v565
      %v567 = vpop.f32.mrb[0].mxu0
      %v568 = vpop.f32.mrb[0].mxu0
      %v569 = vadd.f32 0.0, %v568
      %v570 = vpop.f32.mrb[0].mxu0
      %571 = vmatprep.mubr.bf16.mxu0 0
      %572 = vmatmul.mubr.bf16.gmra.mrb[0].mxu0 %v474
      %v573 = vpop.f32.mrb[0].mxu0
      %v574 = vadd.f32 0.0, %v573
      %v575 = vpop.f32.mrb[0].mxu0
      %v576 = vpop.f32.mrb[0].mxu0
      %v577 = vadd.f32 0.0, %v576
      %v578 = vpop.f32.mrb[0].mxu0
      %579 = vmatprep.mubr.bf16.mxu0 0
      %580 = vmatmul.mubr.bf16.gmra.mrb[0].mxu0 %v477
      %v581 = vpop.f32.mrb[0].mxu0
      %v582 = vadd.f32 0.0, %v581
      %v583 = vpop.f32.mrb[0].mxu0
      %v584 = vpop.f32.mrb[0].mxu0
      %v585 = vadd.f32 0.0, %v584
      %v586 = vpop.f32.mrb[0].mxu0
      %587 = vmatprep.mubr.bf16.mxu0 0
      %588 = vmatmul.mubr.bf16.gmra.mrb[0].mxu0 %v480
      %v589 = vpop.f32.mrb[0].mxu0
      %v590 = vadd.f32 0.0, %v589
      %v591 = vpop.f32.mrb[0].mxu0
      %v592 = vpop.f32.mrb[0].mxu0
      %v593 = vadd.f32 0.0, %v592
      %v594 = vpop.f32.mrb[0].mxu0
      %595 = vmatprep.mubr.bf16.mxu0 0
      %596 = vmatmul.mubr.bf16.gmra.mrb[0].mxu0 %v483
      %v597 = vpop.f32.mrb[0].mxu0
      %v598 = vadd.f32 0.0, %v597
      %v599 = vpop.f32.mrb[0].mxu0
      %v600 = vpop.f32.mrb[0].mxu0
      %v601 = vadd.f32 0.0, %v600
      %v602 = vpop.f32.mrb[0].mxu0
      %603 = vmatprep.mubr.bf16.mxu0 0
      %604 = vmatmul.mubr.bf16.gmra.mrb[0].mxu0 %v486
      %v605 = vpop.f32.mrb[0].mxu0
      %v606 = vadd.f32 0.0, %v605
      %v607 = vpop.f32.mrb[0].mxu0
      %v608 = vpop.f32.mrb[0].mxu0
      %v609 = vadd.f32 0.0, %v608
      %v610 = vpop.f32.mrb[0].mxu0
      %611 = vmatprep.mubr.bf16.mxu0 0
      %612 = vmatmul.mubr.bf16.gmra.mrb[0].mxu0 %v489
      %v613 = vpop.f32.mrb[0].mxu0
      %v614 = vadd.f32 0.0, %v613
      %v615 = vpop.f32.mrb[0].mxu0
      %v616 = vpop.f32.mrb[0].mxu0
      %v617 = vadd.f32 0.0, %v616
      %v618 = vpop.f32.mrb[0].mxu0
      %619 = vmatprep.mubr.bf16.mxu0 0
      %620 = vmatmul.mubr.bf16.gmra.mrb[0].mxu0 %v492
      %v621 = vpop.f32.mrb[0].mxu0
      %v622 = vadd.f32 0.0, %v621
      %v623 = vpop.f32.mrb[0].mxu0
      %v624 = vpop.f32.mrb[0].mxu0
      %v625 = vadd.f32 0.0, %v624
      %v626 = vpop.f32.mrb[0].mxu0
      %627 = vmatprep.mubr.bf16.mxu0 0
      %628 = vmatmul.mubr.bf16.gmra.mrb[0].mxu0 %v495
      %v629 = vpop.f32.mrb[0].mxu0
      %v630 = vadd.f32 0.0, %v629
      %v631 = vpop.f32.mrb[0].mxu0
      %v632 = vpop.f32.mrb[0].mxu0
      %v633 = vadd.f32 0.0, %v632
      %v634 = vpop.f32.mrb[0].mxu0
      %635 = vmatprep.mubr.bf16.mxu0 0
      %636 = vmatmul.mubr.bf16.gmra.mrb[0].mxu0 %v498
      %v637 = vpop.f32.mrb[0].mxu0
      %v638 = vadd.f32 0.0, %v637
      %v639 = vpop.f32.mrb[0].mxu0
      %v640 = vpop.f32.mrb[0].mxu0
      %v641 = vadd.f32 0.0, %v640
      %v642 = vpop.f32.mrb[0].mxu0
      %643 = vmatprep.mubr.bf16.mxu0 0
      %644 = vmatmul.mubr.bf16.gmra.mrb[0].mxu0 %v501
      %v645 = vpop.f32.mrb[0].mxu0
      %v646 = vadd.f32 0.0, %v645
      %v647 = vpop.f32.mrb[0].mxu0
      %v648 = vpop.f32.mrb[0].mxu0
      %v649 = vadd.f32 0.0, %v648
      %v650 = vpop.f32.mrb[0].mxu0
      %651 = vmatprep.mubr.bf16.mxu0 0
      %652 = vmatmul.mubr.bf16.gmra.mrb[0].mxu0 %v504
      %v653 = vpop.f32.mrb[0].mxu0
      %v654 = vadd.f32 0.0, %v653
      %v655 = vpop.f32.mrb[0].mxu0
      %v656 = vpop.f32.mrb[0].mxu0
      %v657 = vadd.f32 0.0, %v656
      %v658 = vpop.f32.mrb[0].mxu0
      %659 = vmatprep.mubr.bf16.mxu0 0
      %660 = vmatmul.mubr.bf16.gmra.mrb[0].mxu0 %v507
      %v661 = vpop.f32.mrb[0].mxu0
      %v662 = vadd.f32 0.0, %v661
      %v663 = vpop.f32.mrb[0].mxu0
      %v664 = vpop.f32.mrb[0].mxu0
      %v665 = vadd.f32 0.0, %v664
      %v666 = vpop.f32.mrb[0].mxu0
      %667 = vmatprep.mubr.bf16.mxu0 0
      %668 = vmatmul.mubr.bf16.gmra.mrb[0].mxu0 %v510
      %v669 = vpop.f32.mrb[0].mxu0
      %v670 = vadd.f32 0.0, %v669
      %v671 = vpop.f32.mrb[0].mxu0
      %v672 = vpop.f32.mrb[0].mxu0
      %v673 = vadd.f32 0.0, %v672
      %v674 = vpop.f32.mrb[0].mxu0
      %675 = vmatprep.mubr.bf16.mxu0 0
      %676 = vmatmul.mubr.bf16.gmra.mrb[0].mxu0 %v513
      %v677 = vpop.f32.mrb[0].mxu0
      %v678 = vadd.f32 0.0, %v677
      %v679 = vpop.f32.mrb[0].mxu0
      %v680 = vpop.f32.mrb[0].mxu0
      %v681 = vadd.f32 0.0, %v680
      %v682 = vpop.f32.mrb[0].mxu0
      %683 = vmatprep.mubr.bf16.mxu0 0
      %684 = vmatmul.mubr.bf16.gmra.mrb[0].mxu0 %v516
      %v685 = vpop.f32.mrb[0].mxu0
      %v686 = vadd.f32 0.0, %v685
      %v687 = vpop.f32.mrb[0].mxu0
      %v688 = vpop.f32.mrb[0].mxu0
      %v689 = vadd.f32 0.0, %v688
      %v690 = vpop.f32.mrb[0].mxu0
      %691 = vmatprep.mubr.bf16.mxu0 0
      %692 = vmatmul.mubr.bf16.gmra.mrb[0].mxu0 %v519
      %v693 = vpop.f32.mrb[0].mxu0
      %v694 = vadd.f32 0.0, %v693
      %v695 = vpop.f32.mrb[0].mxu0
      %v696 = vpop.f32.mrb[0].mxu0
      %v697 = vadd.f32 0.0, %v696
      %v698 = vpop.f32.mrb[0].mxu0
      %699 = vmatprep.mubr.bf16.mxu0 0
      %700 = vmatmul.mubr.bf16.gmra.mrb[0].mxu0 %v522
      %v701 = vpop.f32.mrb[0].mxu0
      %v702 = vadd.f32 0.0, %v701
      %v703 = vpop.f32.mrb[0].mxu0
      %v704 = vpop.f32.mrb[0].mxu0
      %v705 = vadd.f32 0.0, %v704
      %v706 = vpop.f32.mrb[0].mxu0
      %707 = vdwg.mxu0
      %v709 = vsel %vm469, %v394, 0
      %v712 = vsel %vm469, %v395, 0
      %v715 = vsel %vm469, %v396, 0
      %v718 = vsel %vm469, %v397, 0
      %v721 = vsel %vm469, %v398, 0
      %v724 = vsel %vm469, %v399, 0
      %v727 = vsel %vm469, %v400, 0
      %v730 = vsel %vm469, %v401, 0
      %v733 = vsel %vm469, %v402, 0
      %v736 = vsel %vm469, %v403, 0
      %v739 = vsel %vm469, %v404, 0
      %v742 = vsel %vm469, %v405, 0
      %v745 = vsel %vm469, %v406, 0
      %v748 = vsel %vm469, %v407, 0
      %v751 = vsel %vm469, %v408, 0
      %v754 = vsel %vm469, %v409, 0
      %v757 = vsel %vm469, %v410, 0
      %v760 = vsel %vm469, %v411, 0
      %v763 = vand.u32 %v412, %v527
      %765 = vmatprep.subr.bf16.mxu0 0
      %766 = vmatpush1.bf16.msra.mxu0 %v763
      %767 = vmatprep.subr.bf16.mxu0 0
      %768 = vmatpush1.bf16.msra.mxu0 0
      %769 = vmatprep.subr.bf16.mxu0 0
      %770 = vmatpush1.bf16.msra.mxu0 0
      %771 = vmatprep.subr.bf16.mxu0 0
      %772 = vmatpush1.bf16.msra.mxu0 0
      %773 = vmatprep.subr.bf16.mxu0 0
      %774 = vmatpush1.bf16.msra.mxu0 0
      %775 = vmatprep.subr.bf16.mxu0 0
      %776 = vmatpush1.bf16.msra.mxu0 0
      %777 = vmatprep.subr.bf16.mxu0 0
      %778 = vmatpush1.bf16.msra.mxu0 0
      %779 = vmatprep.subr.bf16.mxu0 0
      %780 = vmatpush1.bf16.msra.mxu0 0
      %781 = vmatprep.subr.bf16.mxu0 0
      %782 = vmatpush1.bf16.msra.mxu0 0
      %783 = vmatprep.subr.bf16.mxu0 0
      %784 = vmatpush1.bf16.msra.mxu0 0
      %785 = vmatprep.subr.bf16.mxu0 0
      %786 = vmatpush1.bf16.msra.mxu0 0
      %787 = vmatprep.subr.bf16.mxu0 0
      %788 = vmatpush1.bf16.msra.mxu0 0
      %789 = vmatprep.subr.bf16.mxu0 0
      %790 = vmatpush1.bf16.msra.mxu0 0
      %791 = vmatprep.subr.bf16.mxu0 0
      %792 = vmatpush1.bf16.msra.mxu0 0
      %793 = vmatprep.subr.bf16.mxu0 0
      %794 = vmatpush1.bf16.msra.mxu0 0
      %795 = vmatprep.subr.bf16.mxu0 0
      %796 = vmatpush1.bf16.msra.mxu0 0
      %797 = vmatprep.mubr.bf16.mxu0 0
      %798 = vmatmul.mubr.bf16.gmra.mrb[0].mxu0 %v709
      %v799 = vpop.f32.mrb[0].mxu0
      %v800 = vadd.f32 %v566, %v799
      %v801 = vpop.f32.mrb[0].mxu0
      %v802 = vpop.f32.mrb[0].mxu0
      %v803 = vadd.f32 %v569, %v802
      %v804 = vpop.f32.mrb[0].mxu0
      %805 = vmatprep.mubr.bf16.mxu0 0
      %806 = vmatmul.mubr.bf16.gmra.mrb[0].mxu0 %v712
      %v807 = vpop.f32.mrb[0].mxu0
      %v808 = vadd.f32 %v574, %v807
      %v809 = vpop.f32.mrb[0].mxu0
      %v810 = vpop.f32.mrb[0].mxu0
      %v811 = vadd.f32 %v577, %v810
      %v812 = vpop.f32.mrb[0].mxu0
      %813 = vmatprep.mubr.bf16.mxu0 0
      %814 = vmatmul.mubr.bf16.gmra.mrb[0].mxu0 %v715
      %v815 = vpop.f32.mrb[0].mxu0
      %v816 = vadd.f32 %v582, %v815
      %v817 = vpop.f32.mrb[0].mxu0
      %v818 = vpop.f32.mrb[0].mxu0
      %v819 = vadd.f32 %v585, %v818
      %v820 = vpop.f32.mrb[0].mxu0
      %821 = vmatprep.mubr.bf16.mxu0 0
      %822 = vmatmul.mubr.bf16.gmra.mrb[0].mxu0 %v718
      %v823 = vpop.f32.mrb[0].mxu0
      %v824 = vadd.f32 %v590, %v823
      %v825 = vpop.f32.mrb[0].mxu0
      %v826 = vpop.f32.mrb[0].mxu0
      %v827 = vadd.f32 %v593, %v826
      %v828 = vpop.f32.mrb[0].mxu0
      %829 = vmatprep.mubr.bf16.mxu0 0
      %830 = vmatmul.mubr.bf16.gmra.mrb[0].mxu0 %v721
      %v831 = vpop.f32.mrb[0].mxu0
      %v832 = vadd.f32 %v598, %v831
      %v833 = vpop.f32.mrb[0].mxu0
      %v834 = vpop.f32.mrb[0].mxu0
      %v835 = vadd.f32 %v601, %v834
      %v836 = vpop.f32.mrb[0].mxu0
      %837 = vmatprep.mubr.bf16.mxu0 0
      %838 = vmatmul.mubr.bf16.gmra.mrb[0].mxu0 %v724
      %v839 = vpop.f32.mrb[0].mxu0
      %v840 = vadd.f32 %v606, %v839
      %v841 = vpop.f32.mrb[0].mxu0
      %v842 = vpop.f32.mrb[0].mxu0
      %v843 = vadd.f32 %v609, %v842
      %v844 = vpop.f32.mrb[0].mxu0
      %845 = vmatprep.mubr.bf16.mxu0 0
      %846 = vmatmul.mubr.bf16.gmra.mrb[0].mxu0 %v727
      %v847 = vpop.f32.mrb[0].mxu0
      %v848 = vadd.f32 %v614, %v847
      %v849 = vpop.f32.mrb[0].mxu0
      %v850 = vpop.f32.mrb[0].mxu0
      %v851 = vadd.f32 %v617, %v850
      %v852 = vpop.f32.mrb[0].mxu0
      %853 = vmatprep.mubr.bf16.mxu0 0
      %854 = vmatmul.mubr.bf16.gmra.mrb[0].mxu0 %v730
      %v855 = vpop.f32.mrb[0].mxu0
      %v856 = vadd.f32 %v622, %v855
      %v857 = vpop.f32.mrb[0].mxu0
      %v858 = vpop.f32.mrb[0].mxu0
      %v859 = vadd.f32 %v625, %v858
      %v860 = vpop.f32.mrb[0].mxu0
      %861 = vmatprep.mubr.bf16.mxu0 0
      %862 = vmatmul.mubr.bf16.gmra.mrb[0].mxu0 %v733
      %v863 = vpop.f32.mrb[0].mxu0
      %v864 = vadd.f32 %v630, %v863
      %v865 = vpop.f32.mrb[0].mxu0
      %v866 = vpop.f32.mrb[0].mxu0
      %v867 = vadd.f32 %v633, %v866
      %v868 = vpop.f32.mrb[0].mxu0
      %869 = vmatprep.mubr.bf16.mxu0 0
      %870 = vmatmul.mubr.bf16.gmra.mrb[0].mxu0 %v736
      %v871 = vpop.f32.mrb[0].mxu0
      %v872 = vadd.f32 %v638, %v871
      %v873 = vpop.f32.mrb[0].mxu0
      %v874 = vpop.f32.mrb[0].mxu0
      %v875 = vadd.f32 %v641, %v874
      %v876 = vpop.f32.mrb[0].mxu0
      %877 = vmatprep.mubr.bf16.mxu0 0
      %878 = vmatmul.mubr.bf16.gmra.mrb[0].mxu0 %v739
      %v879 = vpop.f32.mrb[0].mxu0
      %v880 = vadd.f32 %v646, %v879
      %v881 = vpop.f32.mrb[0].mxu0
      %v882 = vpop.f32.mrb[0].mxu0
      %v883 = vadd.f32 %v649, %v882
      %v884 = vpop.f32.mrb[0].mxu0
      %885 = vmatprep.mubr.bf16.mxu0 0
      %886 = vmatmul.mubr.bf16.gmra.mrb[0].mxu0 %v742
      %v887 = vpop.f32.mrb[0].mxu0
      %v888 = vadd.f32 %v654, %v887
      %v889 = vpop.f32.mrb[0].mxu0
      %v890 = vpop.f32.mrb[0].mxu0
      %v891 = vadd.f32 %v657, %v890
      %v892 = vpop.f32.mrb[0].mxu0
      %893 = vmatprep.mubr.bf16.mxu0 0
      %894 = vmatmul.mubr.bf16.gmra.mrb[0].mxu0 %v745
      %v895 = vpop.f32.mrb[0].mxu0
      %v896 = vadd.f32 %v662, %v895
      %v897 = vpop.f32.mrb[0].mxu0
      %v898 = vpop.f32.mrb[0].mxu0
      %v899 = vadd.f32 %v665, %v898
      %v900 = vpop.f32.mrb[0].mxu0
      %901 = vmatprep.mubr.bf16.mxu0 0
      %902 = vmatmul.mubr.bf16.gmra.mrb[0].mxu0 %v748
      %v903 = vpop.f32.mrb[0].mxu0
      %v904 = vadd.f32 %v670, %v903
      %v905 = vpop.f32.mrb[0].mxu0
      %v906 = vpop.f32.mrb[0].mxu0
      %v907 = vadd.f32 %v673, %v906
      %v908 = vpop.f32.mrb[0].mxu0
      %909 = vmatprep.mubr.bf16.mxu0 0
      %910 = vmatmul.mubr.bf16.gmra.mrb[0].mxu0 %v751
      %v911 = vpop.f32.mrb[0].mxu0
      %v912 = vadd.f32 %v678, %v911
      %v913 = vpop.f32.mrb[0].mxu0
      %v914 = vpop.f32.mrb[0].mxu0
      %v915 = vadd.f32 %v681, %v914
      %v916 = vpop.f32.mrb[0].mxu0
      %917 = vmatprep.mubr.bf16.mxu0 0
      %918 = vmatmul.mubr.bf16.gmra.mrb[0].mxu0 %v754
      %v919 = vpop.f32.mrb[0].mxu0
      %v920 = vadd.f32 %v686, %v919
      %v921 = vpop.f32.mrb[0].mxu0
      %v922 = vpop.f32.mrb[0].mxu0
      %v923 = vadd.f32 %v689, %v922
      %v924 = vpop.f32.mrb[0].mxu0
      %925 = vmatprep.mubr.bf16.mxu0 0
      %926 = vmatmul.mubr.bf16.gmra.mrb[0].mxu0 %v757
      %v927 = vpop.f32.mrb[0].mxu0
      %v928 = vadd.f32 %v694, %v927
      %v929 = vpop.f32.mrb[0].mxu0
      %v930 = vpop.f32.mrb[0].mxu0
      %v931 = vadd.f32 %v697, %v930
      %v932 = vpop.f32.mrb[0].mxu0
      %933 = vmatprep.mubr.bf16.mxu0 0
      %934 = vmatmul.mubr.bf16.gmra.mrb[0].mxu0 %v760
      %v935 = vpop.f32.mrb[0].mxu0
      %v936 = vadd.f32 %v702, %v935
      %v937 = vpop.f32.mrb[0].mxu0
      %v938 = vpop.f32.mrb[0].mxu0
      %v939 = vadd.f32 %v705, %v938
      %v940 = vpop.f32.mrb[0].mxu0
      %941 = vdwg.mxu0
      %v942 = vld [vmem:[%s273 + $0x2] sm:$0xff]
      %v943 = vld [vmem:[%s273 + $0xa] sm:$0xff]
      %v944 = vld [vmem:[%s273 + $0x12] sm:$0xff]
      %v945 = vld [vmem:[%s273 + $0x1a] sm:$0xff]
      %v946 = vld [vmem:[%s273 + $0x22] sm:$0xff]
      %v947 = vld [vmem:[%s273 + $0x2a] sm:$0xff]
      %v948 = vld [vmem:[%s273 + $0x32] sm:$0xff]
      %v949 = vld [vmem:[%s273 + $0x3a] sm:$0xff]
      %v950 = vld [vmem:[%s273 + $0x42] sm:$0xff]
      %v951 = vld [vmem:[%s273 + $0x4a] sm:$0xff]
      %v952 = vld [vmem:[%s273 + $0x52] sm:$0xff]
      %v953 = vld [vmem:[%s273 + $0x5a] sm:$0xff]
      %v954 = vld [vmem:[%s273 + $0x62] sm:$0xff]
      %v955 = vld [vmem:[%s273 + $0x6a] sm:$0xff]
      %v956 = vld [vmem:[%s273 + $0x72] sm:$0xff]
      %v957 = vld [vmem:[%s273 + $0x7a] sm:$0xff]
      %v958 = vld [vmem:[%s273 + $0x82] sm:$0xff]
      %v959 = vld [vmem:[%s273 + $0x8a] sm:$0xff]
      %v960 = vld [vmem:[%s273 + $0x92] sm:$0xff]
      %v961 = vld [vmem:[%s273 + $0x9a] sm:$0xff]
      %v962 = vld [vmem:[%s273 + $0xa2] sm:$0xff]
      %v963 = vld [vmem:[%s273 + $0xaa] sm:$0xff]
      %v964 = vld [vmem:[%s273 + $0xb2] sm:$0xff]
      %v965 = vld [vmem:[%s273 + $0xba] sm:$0xff]
      %v966 = vld [vmem:[%s273 + $0xc2] sm:$0xff]
      %v967 = vld [vmem:[%s273 + $0xca] sm:$0xff]
      %v968 = vld [vmem:[%s273 + $0xd2] sm:$0xff]
      %v969 = vld [vmem:[%s273 + $0xda] sm:$0xff]
      %v970 = vld [vmem:[%s273 + $0xe2] sm:$0xff]
      %v971 = vld [vmem:[%s273 + $0xea] sm:$0xff]
      %v972 = vld [vmem:[%s273 + $0xf2] sm:$0xff]
      %v973 = vld [vmem:[%s273 + $0xfa] sm:$0xff]
      %v974 = vld [vmem:[%s273 + $0x102] sm:$0xff]
      %v975 = vld [vmem:[%s273 + $0x10a] sm:$0xff]
      %v976 = vld [vmem:[%s273 + $0x112] sm:$0xff]
      %v977 = vld [vmem:[%s273 + $0x11a] sm:$0xff]
      %v978 = vpack.c.bf16 %v943, %v942
      %v979 = vpack.c.bf16 %v945, %v944
      %v980 = vpack.c.bf16 %v947, %v946
      %v981 = vpack.c.bf16 %v949, %v948
      %v982 = vpack.c.bf16 %v951, %v950
      %v983 = vpack.c.bf16 %v953, %v952
      %v984 = vpack.c.bf16 %v955, %v954
      %v985 = vpack.c.bf16 %v957, %v956
      %v986 = vpack.c.bf16 %v959, %v958
      %v987 = vpack.c.bf16 %v961, %v960
      %v988 = vpack.c.bf16 %v963, %v962
      %v989 = vpack.c.bf16 %v965, %v964
      %v990 = vpack.c.bf16 %v967, %v966
      %v991 = vpack.c.bf16 %v969, %v968
      %v992 = vpack.c.bf16 %v971, %v970
      %v993 = vpack.c.bf16 %v973, %v972
      %v994 = vpack.c.bf16 %v975, %v974
      %v995 = vpack.c.bf16 %v977, %v976
      %s996 = scalar_lea.vmem %s1, 4
      %v997 = vld [vmem:[%s996] sm:$0x3]
      %v999 = vsel %vm469, %v978, 0
      %v1002 = vsel %vm469, %v979, 0
      %v1005 = vsel %vm469, %v980, 0
      %v1008 = vsel %vm469, %v981, 0
      %v1011 = vsel %vm469, %v982, 0
      %v1014 = vsel %vm469, %v983, 0
      %v1017 = vsel %vm469, %v984, 0
      %v1020 = vsel %vm469, %v985, 0
      %v1023 = vsel %vm469, %v986, 0
      %v1026 = vsel %vm469, %v987, 0
      %v1029 = vsel %vm469, %v988, 0
      %v1032 = vsel %vm469, %v989, 0
      %v1035 = vsel %vm469, %v990, 0
      %v1038 = vsel %vm469, %v991, 0
      %v1041 = vsel %vm469, %v992, 0
      %v1044 = vsel %vm469, %v993, 0
      %v1047 = vsel %vm469, %v994, 0
      %v1050 = vsel %vm469, %v995, 0
      %v1053 = vand.u32 %v997, %v527
      %1055 = vmatprep.subr.bf16.mxu0 0
      %1056 = vmatpush1.bf16.msra.mxu0 %v1053
      %1057 = vmatprep.subr.bf16.mxu0 0
      %1058 = vmatpush1.bf16.msra.mxu0 0
      %1059 = vmatprep.subr.bf16.mxu0 0
      %1060 = vmatpush1.bf16.msra.mxu0 0
      %1061 = vmatprep.subr.bf16.mxu0 0
      %1062 = vmatpush1.bf16.msra.mxu0 0
      %1063 = vmatprep.subr.bf16.mxu0 0
      %1064 = vmatpush1.bf16.msra.mxu0 0
      %1065 = vmatprep.subr.bf16.mxu0 0
      %1066 = vmatpush1.bf16.msra.mxu0 0
      %1067 = vmatprep.subr.bf16.mxu0 0
      %1068 = vmatpush1.bf16.msra.mxu0 0
      %1069 = vmatprep.subr.bf16.mxu0 0
      %1070 = vmatpush1.bf16.msra.mxu0 0
      %1071 = vmatprep.subr.bf16.mxu0 0
      %1072 = vmatpush1.bf16.msra.mxu0 0
      %1073 = vmatprep.subr.bf16.mxu0 0
      %1074 = vmatpush1.bf16.msra.mxu0 0
      %1075 = vmatprep.subr.bf16.mxu0 0
      %1076 = vmatpush1.bf16.msra.mxu0 0
      %1077 = vmatprep.subr.bf16.mxu0 0
      %1078 = vmatpush1.bf16.msra.mxu0 0
      %1079 = vmatprep.subr.bf16.mxu0 0
      %1080 = vmatpush1.bf16.msra.mxu0 0
      %1081 = vmatprep.subr.bf16.mxu0 0
      %1082 = vmatpush1.bf16.msra.mxu0 0
      %1083 = vmatprep.subr.bf16.mxu0 0
      %1084 = vmatpush1.bf16.msra.mxu0 0
      %1085 = vmatprep.subr.bf16.mxu0 0
      %1086 = vmatpush1.bf16.msra.mxu0 0
      %1087 = vmatprep.mubr.bf16.mxu0 0
      %1088 = vmatmul.mubr.bf16.gmra.mrb[0].mxu0 %v999
      %v1089 = vpop.f32.mrb[0].mxu0
      %v1090 = vadd.f32 0.0, %v1089
      %v1091 = vpop.f32.mrb[0].mxu0
      %v1092 = vpop.f32.mrb[0].mxu0
      %v1093 = vadd.f32 0.0, %v1092
      %v1094 = vpop.f32.mrb[0].mxu0
      %1095 = vmatprep.mubr.bf16.mxu0 0
      %1096 = vmatmul.mubr.bf16.gmra.mrb[0].mxu0 %v1002
      %v1097 = vpop.f32.mrb[0].mxu0
      %v1098 = vadd.f32 0.0, %v1097
      %v1099 = vpop.f32.mrb[0].mxu0
      %v1100 = vpop.f32.mrb[0].mxu0
      %v1101 = vadd.f32 0.0, %v1100
      %v1102 = vpop.f32.mrb[0].mxu0
      %1103 = vmatprep.mubr.bf16.mxu0 0
      %1104 = vmatmul.mubr.bf16.gmra.mrb[0].mxu0 %v1005
      %v1105 = vpop.f32.mrb[0].mxu0
      %v1106 = vadd.f32 0.0, %v1105
      %v1107 = vpop.f32.mrb[0].mxu0
      %v1108 = vpop.f32.mrb[0].mxu0
      %v1109 = vadd.f32 0.0, %v1108
      %v1110 = vpop.f32.mrb[0].mxu0
      %1111 = vmatprep.mubr.bf16.mxu0 0
      %1112 = vmatmul.mubr.bf16.gmra.mrb[0].mxu0 %v1008
      %v1113 = vpop.f32.mrb[0].mxu0
      %v1114 = vadd.f32 0.0, %v1113
      %v1115 = vpop.f32.mrb[0].mxu0
      %v1116 = vpop.f32.mrb[0].mxu0
      %v1117 = vadd.f32 0.0, %v1116
      %v1118 = vpop.f32.mrb[0].mxu0
      %1119 = vmatprep.mubr.bf16.mxu0 0
      %1120 = vmatmul.mubr.bf16.gmra.mrb[0].mxu0 %v1011
      %v1121 = vpop.f32.mrb[0].mxu0
      %v1122 = vadd.f32 0.0, %v1121
      %v1123 = vpop.f32.mrb[0].mxu0
      %v1124 = vpop.f32.mrb[0].mxu0
      %v1125 = vadd.f32 0.0, %v1124
      %v1126 = vpop.f32.mrb[0].mxu0
      %1127 = vmatprep.mubr.bf16.mxu0 0
      %1128 = vmatmul.mubr.bf16.gmra.mrb[0].mxu0 %v1014
      %v1129 = vpop.f32.mrb[0].mxu0
      %v1130 = vadd.f32 0.0, %v1129
      %v1131 = vpop.f32.mrb[0].mxu0
      %v1132 = vpop.f32.mrb[0].mxu0
      %v1133 = vadd.f32 0.0, %v1132
      %v1134 = vpop.f32.mrb[0].mxu0
      %1135 = vmatprep.mubr.bf16.mxu0 0
      %1136 = vmatmul.mubr.bf16.gmra.mrb[0].mxu0 %v1017
      %v1137 = vpop.f32.mrb[0].mxu0
      %v1138 = vadd.f32 0.0, %v1137
      %v1139 = vpop.f32.mrb[0].mxu0
      %v1140 = vpop.f32.mrb[0].mxu0
      %v1141 = vadd.f32 0.0, %v1140
      %v1142 = vpop.f32.mrb[0].mxu0
      %1143 = vmatprep.mubr.bf16.mxu0 0
      %1144 = vmatmul.mubr.bf16.gmra.mrb[0].mxu0 %v1020
      %v1145 = vpop.f32.mrb[0].mxu0
      %v1146 = vadd.f32 0.0, %v1145
      %v1147 = vpop.f32.mrb[0].mxu0
      %v1148 = vpop.f32.mrb[0].mxu0
      %v1149 = vadd.f32 0.0, %v1148
      %v1150 = vpop.f32.mrb[0].mxu0
      %1151 = vmatprep.mubr.bf16.mxu0 0
      %1152 = vmatmul.mubr.bf16.gmra.mrb[0].mxu0 %v1023
      %v1153 = vpop.f32.mrb[0].mxu0
      %v1154 = vadd.f32 0.0, %v1153
      %v1155 = vpop.f32.mrb[0].mxu0
      %v1156 = vpop.f32.mrb[0].mxu0
      %v1157 = vadd.f32 0.0, %v1156
      %v1158 = vpop.f32.mrb[0].mxu0
      %1159 = vmatprep.mubr.bf16.mxu0 0
      %1160 = vmatmul.mubr.bf16.gmra.mrb[0].mxu0 %v1026
      %v1161 = vpop.f32.mrb[0].mxu0
      %v1162 = vadd.f32 0.0, %v1161
      %v1163 = vpop.f32.mrb[0].mxu0
      %v1164 = vpop.f32.mrb[0].mxu0
      %v1165 = vadd.f32 0.0, %v1164
      %v1166 = vpop.f32.mrb[0].mxu0
      %1167 = vmatprep.mubr.bf16.mxu0 0
      %1168 = vmatmul.mubr.bf16.gmra.mrb[0].mxu0 %v1029
      %v1169 = vpop.f32.mrb[0].mxu0
      %v1170 = vadd.f32 0.0, %v1169
      %v1171 = vpop.f32.mrb[0].mxu0
      %v1172 = vpop.f32.mrb[0].mxu0
      %v1173 = vadd.f32 0.0, %v1172
      %v1174 = vpop.f32.mrb[0].mxu0
      %1175 = vmatprep.mubr.bf16.mxu0 0
      %1176 = vmatmul.mubr.bf16.gmra.mrb[0].mxu0 %v1032
      %v1177 = vpop.f32.mrb[0].mxu0
      %v1178 = vadd.f32 0.0, %v1177
      %v1179 = vpop.f32.mrb[0].mxu0
      %v1180 = vpop.f32.mrb[0].mxu0
      %v1181 = vadd.f32 0.0, %v1180
      %v1182 = vpop.f32.mrb[0].mxu0
      %1183 = vmatprep.mubr.bf16.mxu0 0
      %1184 = vmatmul.mubr.bf16.gmra.mrb[0].mxu0 %v1035
      %v1185 = vpop.f32.mrb[0].mxu0
      %v1186 = vadd.f32 0.0, %v1185
      %v1187 = vpop.f32.mrb[0].mxu0
      %v1188 = vpop.f32.mrb[0].mxu0
      %v1189 = vadd.f32 0.0, %v1188
      %v1190 = vpop.f32.mrb[0].mxu0
      %1191 = vmatprep.mubr.bf16.mxu0 0
      %1192 = vmatmul.mubr.bf16.gmra.mrb[0].mxu0 %v1038
      %v1193 = vpop.f32.mrb[0].mxu0
      %v1194 = vadd.f32 0.0, %v1193
      %v1195 = vpop.f32.mrb[0].mxu0
      %v1196 = vpop.f32.mrb[0].mxu0
      %v1197 = vadd.f32 0.0, %v1196
      %v1198 = vpop.f32.mrb[0].mxu0
      %1199 = vmatprep.mubr.bf16.mxu0 0
      %1200 = vmatmul.mubr.bf16.gmra.mrb[0].mxu0 %v1041
      %v1201 = vpop.f32.mrb[0].mxu0
      %v1202 = vadd.f32 0.0, %v1201
      %v1203 = vpop.f32.mrb[0].mxu0
      %v1204 = vpop.f32.mrb[0].mxu0
      %v1205 = vadd.f32 0.0, %v1204
      %v1206 = vpop.f32.mrb[0].mxu0
      %1207 = vmatprep.mubr.bf16.mxu0 0
      %1208 = vmatmul.mubr.bf16.gmra.mrb[0].mxu0 %v1044
      %v1209 = vpop.f32.mrb[0].mxu0
      %v1210 = vadd.f32 0.0, %v1209
      %v1211 = vpop.f32.mrb[0].mxu0
      %v1212 = vpop.f32.mrb[0].mxu0
      %v1213 = vadd.f32 0.0, %v1212
      %v1214 = vpop.f32.mrb[0].mxu0
      %1215 = vmatprep.mubr.bf16.mxu0 0
      %1216 = vmatmul.mubr.bf16.gmra.mrb[0].mxu0 %v1047
      %v1217 = vpop.f32.mrb[0].mxu0
      %v1218 = vadd.f32 0.0, %v1217
      %v1219 = vpop.f32.mrb[0].mxu0
      %v1220 = vpop.f32.mrb[0].mxu0
      %v1221 = vadd.f32 0.0, %v1220
      %v1222 = vpop.f32.mrb[0].mxu0
      %1223 = vmatprep.mubr.bf16.mxu0 0
      %1224 = vmatmul.mubr.bf16.gmra.mrb[0].mxu0 %v1050
      %v1225 = vpop.f32.mrb[0].mxu0
      %v1226 = vadd.f32 0.0, %v1225
      %v1227 = vpop.f32.mrb[0].mxu0
      %v1228 = vpop.f32.mrb[0].mxu0
      %v1229 = vadd.f32 0.0, %v1228
      %v1230 = vpop.f32.mrb[0].mxu0
      %1231 = vdwg.mxu0
      %v1232 = vadd.f32 %v800, %v1090
      %v1233 = vadd.f32 %v803, %v1093
      %v1234 = vadd.f32 %v808, %v1098
      %v1235 = vadd.f32 %v811, %v1101
      %v1236 = vadd.f32 %v816, %v1106
      %v1237 = vadd.f32 %v819, %v1109
      %v1238 = vadd.f32 %v824, %v1114
      %v1239 = vadd.f32 %v827, %v1117
      %v1240 = vadd.f32 %v832, %v1122
      %v1241 = vadd.f32 %v835, %v1125
      %v1242 = vadd.f32 %v840, %v1130
      %v1243 = vadd.f32 %v843, %v1133
      %v1244 = vadd.f32 %v848, %v1138
      %v1245 = vadd.f32 %v851, %v1141
      %v1246 = vadd.f32 %v856, %v1146
      %v1247 = vadd.f32 %v859, %v1149
      %v1248 = vadd.f32 %v864, %v1154
      %v1249 = vadd.f32 %v867, %v1157
      %v1250 = vadd.f32 %v872, %v1162
      %v1251 = vadd.f32 %v875, %v1165
      %v1252 = vadd.f32 %v880, %v1170
      %v1253 = vadd.f32 %v883, %v1173
      %v1254 = vadd.f32 %v888, %v1178
      %v1255 = vadd.f32 %v891, %v1181
      %v1256 = vadd.f32 %v896, %v1186
      %v1257 = vadd.f32 %v899, %v1189
      %v1258 = vadd.f32 %v904, %v1194
      %v1259 = vadd.f32 %v907, %v1197
      %v1260 = vadd.f32 %v912, %v1202
      %v1261 = vadd.f32 %v915, %v1205
      %v1262 = vadd.f32 %v920, %v1210
      %v1263 = vadd.f32 %v923, %v1213
      %v1264 = vadd.f32 %v928, %v1218
      %v1265 = vadd.f32 %v931, %v1221
      %v1266 = vadd.f32 %v936, %v1226
      %v1267 = vadd.f32 %v939, %v1229
      %v1268 = vld [vmem:[%s273 + $0x12] sm:$0xff]
      %v1269 = vld [vmem:[%s273 + $0x1a] sm:$0xff]
      %v1270 = vld [vmem:[%s273 + $0x22] sm:$0xff]
      %v1271 = vld [vmem:[%s273 + $0x2a] sm:$0xff]
      %v1272 = vld [vmem:[%s273 + $0x32] sm:$0xff]
      %v1273 = vld [vmem:[%s273 + $0x3a] sm:$0xff]
      %v1274 = vld [vmem:[%s273 + $0x42] sm:$0xff]
      %v1275 = vld [vmem:[%s273 + $0x4a] sm:$0xff]
      %v1276 = vld [vmem:[%s273 + $0x52] sm:$0xff]
      %v1277 = vld [vmem:[%s273 + $0x5a] sm:$0xff]
      %v1278 = vld [vmem:[%s273 + $0x62] sm:$0xff]
      %v1279 = vld [vmem:[%s273 + $0x6a] sm:$0xff]
      %v1280 = vld [vmem:[%s273 + $0x72] sm:$0xff]
      %v1281 = vld [vmem:[%s273 + $0x7a] sm:$0xff]
      %v1282 = vld [vmem:[%s273 + $0x82] sm:$0xff]
      %v1283 = vld [vmem:[%s273 + $0x8a] sm:$0xff]
      %v1284 = vld [vmem:[%s273 + $0x92] sm:$0xff]
      %v1285 = vld [vmem:[%s273 + $0x9a] sm:$0xff]
      %v1286 = vld [vmem:[%s273 + $0xa2] sm:$0xff]
      %v1287 = vld [vmem:[%s273 + $0xaa] sm:$0xff]
      %v1288 = vld [vmem:[%s273 + $0xb2] sm:$0xff]
      %v1289 = vld [vmem:[%s273 + $0xba] sm:$0xff]
      %v1290 = vld [vmem:[%s273 + $0xc2] sm:$0xff]
      %v1291 = vld [vmem:[%s273 + $0xca] sm:$0xff]
      %v1292 = vld [vmem:[%s273 + $0xd2] sm:$0xff]
      %v1293 = vld [vmem:[%s273 + $0xda] sm:$0xff]
      %v1294 = vld [vmem:[%s273 + $0xe2] sm:$0xff]
      %v1295 = vld [vmem:[%s273 + $0xea] sm:$0xff]
      %v1296 = vld [vmem:[%s273 + $0xf2] sm:$0xff]
      %v1297 = vld [vmem:[%s273 + $0xfa] sm:$0xff]
      %v1298 = vld [vmem:[%s273 + $0x102] sm:$0xff]
      %v1299 = vld [vmem:[%s273 + $0x10a] sm:$0xff]
      %v1300 = vld [vmem:[%s273 + $0x112] sm:$0xff]
      %v1301 = vld [vmem:[%s273 + $0x11a] sm:$0xff]
      %v1302 = vld [vmem:[%s273 + $0x122] sm:$0xff]
      %v1303 = vld [vmem:[%s273 + $0x12a] sm:$0xff]
      %v1304 = vpack.c.bf16 %v1269, %v1268
      %v1305 = vpack.c.bf16 %v1271, %v1270
      %v1306 = vpack.c.bf16 %v1273, %v1272
      %v1307 = vpack.c.bf16 %v1275, %v1274
      %v1308 = vpack.c.bf16 %v1277, %v1276
      %v1309 = vpack.c.bf16 %v1279, %v1278
      %v1310 = vpack.c.bf16 %v1281, %v1280
      %v1311 = vpack.c.bf16 %v1283, %v1282
      %v1312 = vpack.c.bf16 %v1285, %v1284
      %v1313 = vpack.c.bf16 %v1287, %v1286
      %v1314 = vpack.c.bf16 %v1289, %v1288
      %v1315 = vpack.c.bf16 %v1291, %v1290
      %v1316 = vpack.c.bf16 %v1293, %v1292
      %v1317 = vpack.c.bf16 %v1295, %v1294
      %v1318 = vpack.c.bf16 %v1297, %v1296
      %v1319 = vpack.c.bf16 %v1299, %v1298
      %v1320 = vpack.c.bf16 %v1301, %v1300
      %v1321 = vpack.c.bf16 %v1303, %v1302
      %s1322 = scalar_lea.vmem %s1, 6
      %v1323 = vld [vmem:[%s1322] sm:$0x3]
      %v1325 = vsel %vm469, %v1304, 0
      %v1328 = vsel %vm469, %v1305, 0
      %v1331 = vsel %vm469, %v1306, 0
      %v1334 = vsel %vm469, %v1307, 0
      %v1337 = vsel %vm469, %v1308, 0
      %v1340 = vsel %vm469, %v1309, 0
      %v1343 = vsel %vm469, %v1310, 0
      %v1346 = vsel %vm469, %v1311, 0
      %v1349 = vsel %vm469, %v1312, 0
      %v1352 = vsel %vm469, %v1313, 0
      %v1355 = vsel %vm469, %v1314, 0
      %v1358 = vsel %vm469, %v1315, 0
      %v1361 = vsel %vm469, %v1316, 0
      %v1364 = vsel %vm469, %v1317, 0
      %v1367 = vsel %vm469, %v1318, 0
      %v1370 = vsel %vm469, %v1319, 0
      %v1373 = vsel %vm469, %v1320, 0
      %v1376 = vsel %vm469, %v1321, 0
      %v1379 = vand.u32 %v1323, %v527
      %1381 = vmatprep.subr.bf16.mxu0 0
      %1382 = vmatpush1.bf16.msra.mxu0 %v1379
      %1383 = vmatprep.subr.bf16.mxu0 0
      %1384 = vmatpush1.bf16.msra.mxu0 0
      %1385 = vmatprep.subr.bf16.mxu0 0
      %1386 = vmatpush1.bf16.msra.mxu0 0
      %1387 = vmatprep.subr.bf16.mxu0 0
      %1388 = vmatpush1.bf16.msra.mxu0 0
      %1389 = vmatprep.subr.bf16.mxu0 0
      %1390 = vmatpush1.bf16.msra.mxu0 0
      %1391 = vmatprep.subr.bf16.mxu0 0
      %1392 = vmatpush1.bf16.msra.mxu0 0
      %1393 = vmatprep.subr.bf16.mxu0 0
      %1394 = vmatpush1.bf16.msra.mxu0 0
      %1395 = vmatprep.subr.bf16.mxu0 0
      %1396 = vmatpush1.bf16.msra.mxu0 0
      %1397 = vmatprep.subr.bf16.mxu0 0
      %1398 = vmatpush1.bf16.msra.mxu0 0
      %1399 = vmatprep.subr.bf16.mxu0 0
      %1400 = vmatpush1.bf16.msra.mxu0 0
      %1401 = vmatprep.subr.bf16.mxu0 0
      %1402 = vmatpush1.bf16.msra.mxu0 0
      %1403 = vmatprep.subr.bf16.mxu0 0
      %1404 = vmatpush1.bf16.msra.mxu0 0
      %1405 = vmatprep.subr.bf16.mxu0 0
      %1406 = vmatpush1.bf16.msra.mxu0 0
      %1407 = vmatprep.subr.bf16.mxu0 0
      %1408 = vmatpush1.bf16.msra.mxu0 0
      %1409 = vmatprep.subr.bf16.mxu0 0
      %1410 = vmatpush1.bf16.msra.mxu0 0
      %1411 = vmatprep.subr.bf16.mxu0 0
      %1412 = vmatpush1.bf16.msra.mxu0 0
      %1413 = vmatprep.mubr.bf16.mxu0 0
      %1414 = vmatmul.mubr.bf16.gmra.mrb[0].mxu0 %v1325
      %v1415 = vpop.f32.mrb[0].mxu0
      %v1416 = vadd.f32 0.0, %v1415
      %v1417 = vpop.f32.mrb[0].mxu0
      %v1418 = vpop.f32.mrb[0].mxu0
      %v1419 = vadd.f32 0.0, %v1418
      %v1420 = vpop.f32.mrb[0].mxu0
      %1421 = vmatprep.mubr.bf16.mxu0 0
      %1422 = vmatmul.mubr.bf16.gmra.mrb[0].mxu0 %v1328
      %v1423 = vpop.f32.mrb[0].mxu0
      %v1424 = vadd.f32 0.0, %v1423
      %v1425 = vpop.f32.mrb[0].mxu0
      %v1426 = vpop.f32.mrb[0].mxu0
      %v1427 = vadd.f32 0.0, %v1426
      %v1428 = vpop.f32.mrb[0].mxu0
      %1429 = vmatprep.mubr.bf16.mxu0 0
      %1430 = vmatmul.mubr.bf16.gmra.mrb[0].mxu0 %v1331
      %v1431 = vpop.f32.mrb[0].mxu0
      %v1432 = vadd.f32 0.0, %v1431
      %v1433 = vpop.f32.mrb[0].mxu0
      %v1434 = vpop.f32.mrb[0].mxu0
      %v1435 = vadd.f32 0.0, %v1434
      %v1436 = vpop.f32.mrb[0].mxu0
      %1437 = vmatprep.mubr.bf16.mxu0 0
      %1438 = vmatmul.mubr.bf16.gmra.mrb[0].mxu0 %v1334
      %v1439 = vpop.f32.mrb[0].mxu0
      %v1440 = vadd.f32 0.0, %v1439
      %v1441 = vpop.f32.mrb[0].mxu0
      %v1442 = vpop.f32.mrb[0].mxu0
      %v1443 = vadd.f32 0.0, %v1442
      %v1444 = vpop.f32.mrb[0].mxu0
      %1445 = vmatprep.mubr.bf16.mxu0 0
      %1446 = vmatmul.mubr.bf16.gmra.mrb[0].mxu0 %v1337
      %v1447 = vpop.f32.mrb[0].mxu0
      %v1448 = vadd.f32 0.0, %v1447
      %v1449 = vpop.f32.mrb[0].mxu0
      %v1450 = vpop.f32.mrb[0].mxu0
      %v1451 = vadd.f32 0.0, %v1450
      %v1452 = vpop.f32.mrb[0].mxu0
      %1453 = vmatprep.mubr.bf16.mxu0 0
      %1454 = vmatmul.mubr.bf16.gmra.mrb[0].mxu0 %v1340
      %v1455 = vpop.f32.mrb[0].mxu0
      %v1456 = vadd.f32 0.0, %v1455
      %v1457 = vpop.f32.mrb[0].mxu0
      %v1458 = vpop.f32.mrb[0].mxu0
      %v1459 = vadd.f32 0.0, %v1458
      %v1460 = vpop.f32.mrb[0].mxu0
      %1461 = vmatprep.mubr.bf16.mxu0 0
      %1462 = vmatmul.mubr.bf16.gmra.mrb[0].mxu0 %v1343
      %v1463 = vpop.f32.mrb[0].mxu0
      %v1464 = vadd.f32 0.0, %v1463
      %v1465 = vpop.f32.mrb[0].mxu0
      %v1466 = vpop.f32.mrb[0].mxu0
      %v1467 = vadd.f32 0.0, %v1466
      %v1468 = vpop.f32.mrb[0].mxu0
      %1469 = vmatprep.mubr.bf16.mxu0 0
      %1470 = vmatmul.mubr.bf16.gmra.mrb[0].mxu0 %v1346
      %v1471 = vpop.f32.mrb[0].mxu0
      %v1472 = vadd.f32 0.0, %v1471
      %v1473 = vpop.f32.mrb[0].mxu0
      %v1474 = vpop.f32.mrb[0].mxu0
      %v1475 = vadd.f32 0.0, %v1474
      %v1476 = vpop.f32.mrb[0].mxu0
      %1477 = vmatprep.mubr.bf16.mxu0 0
      %1478 = vmatmul.mubr.bf16.gmra.mrb[0].mxu0 %v1349
      %v1479 = vpop.f32.mrb[0].mxu0
      %v1480 = vadd.f32 0.0, %v1479
      %v1481 = vpop.f32.mrb[0].mxu0
      %v1482 = vpop.f32.mrb[0].mxu0
      %v1483 = vadd.f32 0.0, %v1482
      %v1484 = vpop.f32.mrb[0].mxu0
      %1485 = vmatprep.mubr.bf16.mxu0 0
      %1486 = vmatmul.mubr.bf16.gmra.mrb[0].mxu0 %v1352
      %v1487 = vpop.f32.mrb[0].mxu0
      %v1488 = vadd.f32 0.0, %v1487
      %v1489 = vpop.f32.mrb[0].mxu0
      %v1490 = vpop.f32.mrb[0].mxu0
      %v1491 = vadd.f32 0.0, %v1490
      %v1492 = vpop.f32.mrb[0].mxu0
      %1493 = vmatprep.mubr.bf16.mxu0 0
      %1494 = vmatmul.mubr.bf16.gmra.mrb[0].mxu0 %v1355
      %v1495 = vpop.f32.mrb[0].mxu0
      %v1496 = vadd.f32 0.0, %v1495
      %v1497 = vpop.f32.mrb[0].mxu0
      %v1498 = vpop.f32.mrb[0].mxu0
      %v1499 = vadd.f32 0.0, %v1498
      %v1500 = vpop.f32.mrb[0].mxu0
      %1501 = vmatprep.mubr.bf16.mxu0 0
      %1502 = vmatmul.mubr.bf16.gmra.mrb[0].mxu0 %v1358
      %v1503 = vpop.f32.mrb[0].mxu0
      %v1504 = vadd.f32 0.0, %v1503
      %v1505 = vpop.f32.mrb[0].mxu0
      %v1506 = vpop.f32.mrb[0].mxu0
      %v1507 = vadd.f32 0.0, %v1506
      %v1508 = vpop.f32.mrb[0].mxu0
      %1509 = vmatprep.mubr.bf16.mxu0 0
      %1510 = vmatmul.mubr.bf16.gmra.mrb[0].mxu0 %v1361
      %v1511 = vpop.f32.mrb[0].mxu0
      %v1512 = vadd.f32 0.0, %v1511
      %v1513 = vpop.f32.mrb[0].mxu0
      %v1514 = vpop.f32.mrb[0].mxu0
      %v1515 = vadd.f32 0.0, %v1514
      %v1516 = vpop.f32.mrb[0].mxu0
      %1517 = vmatprep.mubr.bf16.mxu0 0
      %1518 = vmatmul.mubr.bf16.gmra.mrb[0].mxu0 %v1364
      %v1519 = vpop.f32.mrb[0].mxu0
      %v1520 = vadd.f32 0.0, %v1519
      %v1521 = vpop.f32.mrb[0].mxu0
      %v1522 = vpop.f32.mrb[0].mxu0
      %v1523 = vadd.f32 0.0, %v1522
      %v1524 = vpop.f32.mrb[0].mxu0
      %1525 = vmatprep.mubr.bf16.mxu0 0
      %1526 = vmatmul.mubr.bf16.gmra.mrb[0].mxu0 %v1367
      %v1527 = vpop.f32.mrb[0].mxu0
      %v1528 = vadd.f32 0.0, %v1527
      %v1529 = vpop.f32.mrb[0].mxu0
      %v1530 = vpop.f32.mrb[0].mxu0
      %v1531 = vadd.f32 0.0, %v1530
      %v1532 = vpop.f32.mrb[0].mxu0
      %1533 = vmatprep.mubr.bf16.mxu0 0
      %1534 = vmatmul.mubr.bf16.gmra.mrb[0].mxu0 %v1370
      %v1535 = vpop.f32.mrb[0].mxu0
      %v1536 = vadd.f32 0.0, %v1535
      %v1537 = vpop.f32.mrb[0].mxu0
      %v1538 = vpop.f32.mrb[0].mxu0
      %v1539 = vadd.f32 0.0, %v1538
      %v1540 = vpop.f32.mrb[0].mxu0
      %1541 = vmatprep.mubr.bf16.mxu0 0
      %1542 = vmatmul.mubr.bf16.gmra.mrb[0].mxu0 %v1373
      %v1543 = vpop.f32.mrb[0].mxu0
      %v1544 = vadd.f32 0.0, %v1543
      %v1545 = vpop.f32.mrb[0].mxu0
      %v1546 = vpop.f32.mrb[0].mxu0
      %v1547 = vadd.f32 0.0, %v1546
      %v1548 = vpop.f32.mrb[0].mxu0
      %1549 = vmatprep.mubr.bf16.mxu0 0
      %1550 = vmatmul.mubr.bf16.gmra.mrb[0].mxu0 %v1376
      %v1551 = vpop.f32.mrb[0].mxu0
      %v1552 = vadd.f32 0.0, %v1551
      %v1553 = vpop.f32.mrb[0].mxu0
      %v1554 = vpop.f32.mrb[0].mxu0
      %v1555 = vadd.f32 0.0, %v1554
      %v1556 = vpop.f32.mrb[0].mxu0
      %1557 = vdwg.mxu0
      %v1558 = vadd.f32 %v1232, %v1416
      %v1559 = vadd.f32 %v1233, %v1419
      %v1560 = vadd.f32 %v1234, %v1424
      %v1561 = vadd.f32 %v1235, %v1427
      %v1562 = vadd.f32 %v1236, %v1432
      %v1563 = vadd.f32 %v1237, %v1435
      %v1564 = vadd.f32 %v1238, %v1440
      %v1565 = vadd.f32 %v1239, %v1443
      %v1566 = vadd.f32 %v1240, %v1448
      %v1567 = vadd.f32 %v1241, %v1451
      %v1568 = vadd.f32 %v1242, %v1456
      %v1569 = vadd.f32 %v1243, %v1459
      %v1570 = vadd.f32 %v1244, %v1464
      %v1571 = vadd.f32 %v1245, %v1467
      %v1572 = vadd.f32 %v1246, %v1472
      %v1573 = vadd.f32 %v1247, %v1475
      %v1574 = vadd.f32 %v1248, %v1480
      %v1575 = vadd.f32 %v1249, %v1483
      %v1576 = vadd.f32 %v1250, %v1488
      %v1577 = vadd.f32 %v1251, %v1491
      %v1578 = vadd.f32 %v1252, %v1496
      %v1579 = vadd.f32 %v1253, %v1499
      %v1580 = vadd.f32 %v1254, %v1504
      %v1581 = vadd.f32 %v1255, %v1507
      %v1582 = vadd.f32 %v1256, %v1512
      %v1583 = vadd.f32 %v1257, %v1515
      %v1584 = vadd.f32 %v1258, %v1520
      %v1585 = vadd.f32 %v1259, %v1523
      %v1586 = vadd.f32 %v1260, %v1528
      %v1587 = vadd.f32 %v1261, %v1531
      %v1588 = vadd.f32 %v1262, %v1536
      %v1589 = vadd.f32 %v1263, %v1539
      %v1590 = vadd.f32 %v1264, %v1544
      %v1591 = vadd.f32 %v1265, %v1547
      %v1592 = vadd.f32 %v1266, %v1552
      %v1593 = vadd.f32 %v1267, %v1555
      %v1594 = vld [vmem:[%s273 + $0x13] sm:$0xff]
      %v1595 = vld [vmem:[%s273 + $0x1b] sm:$0xff]
      %v1596 = vld [vmem:[%s273 + $0x23] sm:$0xff]
      %v1597 = vld [vmem:[%s273 + $0x2b] sm:$0xff]
      %v1598 = vld [vmem:[%s273 + $0x33] sm:$0xff]
      %v1599 = vld [vmem:[%s273 + $0x3b] sm:$0xff]
      %v1600 = vld [vmem:[%s273 + $0x43] sm:$0xff]
      %v1601 = vld [vmem:[%s273 + $0x4b] sm:$0xff]
      %v1602 = vld [vmem:[%s273 + $0x53] sm:$0xff]
      %v1603 = vld [vmem:[%s273 + $0x5b] sm:$0xff]
      %v1604 = vld [vmem:[%s273 + $0x63] sm:$0xff]
      %v1605 = vld [vmem:[%s273 + $0x6b] sm:$0xff]
      %v1606 = vld [vmem:[%s273 + $0x73] sm:$0xff]
      %v1607 = vld [vmem:[%s273 + $0x7b] sm:$0xff]
      %v1608 = vld [vmem:[%s273 + $0x83] sm:$0xff]
      %v1609 = vld [vmem:[%s273 + $0x8b] sm:$0xff]
      %v1610 = vld [vmem:[%s273 + $0x93] sm:$0xff]
      %v1611 = vld [vmem:[%s273 + $0x9b] sm:$0xff]
      %v1612 = vld [vmem:[%s273 + $0xa3] sm:$0xff]
      %v1613 = vld [vmem:[%s273 + $0xab] sm:$0xff]
      %v1614 = vld [vmem:[%s273 + $0xb3] sm:$0xff]
      %v1615 = vld [vmem:[%s273 + $0xbb] sm:$0xff]
      %v1616 = vld [vmem:[%s273 + $0xc3] sm:$0xff]
      %v1617 = vld [vmem:[%s273 + $0xcb] sm:$0xff]
      %v1618 = vld [vmem:[%s273 + $0xd3] sm:$0xff]
      %v1619 = vld [vmem:[%s273 + $0xdb] sm:$0xff]
      %v1620 = vld [vmem:[%s273 + $0xe3] sm:$0xff]
      %v1621 = vld [vmem:[%s273 + $0xeb] sm:$0xff]
      %v1622 = vld [vmem:[%s273 + $0xf3] sm:$0xff]
      %v1623 = vld [vmem:[%s273 + $0xfb] sm:$0xff]
      %v1624 = vld [vmem:[%s273 + $0x103] sm:$0xff]
      %v1625 = vld [vmem:[%s273 + $0x10b] sm:$0xff]
      %v1626 = vld [vmem:[%s273 + $0x113] sm:$0xff]
      %v1627 = vld [vmem:[%s273 + $0x11b] sm:$0xff]
      %v1628 = vld [vmem:[%s273 + $0x123] sm:$0xff]
      %v1629 = vld [vmem:[%s273 + $0x12b] sm:$0xff]
      %v1630 = vpack.c.bf16 %v1595, %v1594
      %v1631 = vpack.c.bf16 %v1597, %v1596
      %v1632 = vpack.c.bf16 %v1599, %v1598
      %v1633 = vpack.c.bf16 %v1601, %v1600
      %v1634 = vpack.c.bf16 %v1603, %v1602
      %v1635 = vpack.c.bf16 %v1605, %v1604
      %v1636 = vpack.c.bf16 %v1607, %v1606
      %v1637 = vpack.c.bf16 %v1609, %v1608
      %v1638 = vpack.c.bf16 %v1611, %v1610
      %v1639 = vpack.c.bf16 %v1613, %v1612
      %v1640 = vpack.c.bf16 %v1615, %v1614
      %v1641 = vpack.c.bf16 %v1617, %v1616
      %v1642 = vpack.c.bf16 %v1619, %v1618
      %v1643 = vpack.c.bf16 %v1621, %v1620
      %v1644 = vpack.c.bf16 %v1623, %v1622
      %v1645 = vpack.c.bf16 %v1625, %v1624
      %v1646 = vpack.c.bf16 %v1627, %v1626
      %v1647 = vpack.c.bf16 %v1629, %v1628
      %s1648 = scalar_lea.vmem %s1, 8
      %v1649 = vld [vmem:[%s1648] sm:$0x3]
      %v1651 = vsel %vm469, %v1630, 0
      %v1654 = vsel %vm469, %v1631, 0
      %v1657 = vsel %vm469, %v1632, 0
      %v1660 = vsel %vm469, %v1633, 0
      %v1663 = vsel %vm469, %v1634, 0
      %v1666 = vsel %vm469, %v1635, 0
      %v1669 = vsel %vm469, %v1636, 0
      %v1672 = vsel %vm469, %v1637, 0
      %v1675 = vsel %vm469, %v1638, 0
      %v1678 = vsel %vm469, %v1639, 0
      %v1681 = vsel %vm469, %v1640, 0
      %v1684 = vsel %vm469, %v1641, 0
      %v1687 = vsel %vm469, %v1642, 0
      %v1690 = vsel %vm469, %v1643, 0
      %v1693 = vsel %vm469, %v1644, 0
      %v1696 = vsel %vm469, %v1645, 0
      %v1699 = vsel %vm469, %v1646, 0
      %v1702 = vsel %vm469, %v1647, 0
      %v1705 = vand.u32 %v1649, %v527
      %1707 = vmatprep.subr.bf16.mxu0 0
      %1708 = vmatpush1.bf16.msra.mxu0 %v1705
      %1709 = vmatprep.subr.bf16.mxu0 0
      %1710 = vmatpush1.bf16.msra.mxu0 0
      %1711 = vmatprep.subr.bf16.mxu0 0
      %1712 = vmatpush1.bf16.msra.mxu0 0
      %1713 = vmatprep.subr.bf16.mxu0 0
      %1714 = vmatpush1.bf16.msra.mxu0 0
      %1715 = vmatprep.subr.bf16.mxu0 0
      %1716 = vmatpush1.bf16.msra.mxu0 0
      %1717 = vmatprep.subr.bf16.mxu0 0
      %1718 = vmatpush1.bf16.msra.mxu0 0
      %1719 = vmatprep.subr.bf16.mxu0 0
      %1720 = vmatpush1.bf16.msra.mxu0 0
      %1721 = vmatprep.subr.bf16.mxu0 0
      %1722 = vmatpush1.bf16.msra.mxu0 0
      %1723 = vmatprep.subr.bf16.mxu0 0
      %1724 = vmatpush1.bf16.msra.mxu0 0
      %1725 = vmatprep.subr.bf16.mxu0 0
      %1726 = vmatpush1.bf16.msra.mxu0 0
      %1727 = vmatprep.subr.bf16.mxu0 0
      %1728 = vmatpush1.bf16.msra.mxu0 0
      %1729 = vmatprep.subr.bf16.mxu0 0
      %1730 = vmatpush1.bf16.msra.mxu0 0
      %1731 = vmatprep.subr.bf16.mxu0 0
      %1732 = vmatpush1.bf16.msra.mxu0 0
      %1733 = vmatprep.subr.bf16.mxu0 0
      %1734 = vmatpush1.bf16.msra.mxu0 0
      %1735 = vmatprep.subr.bf16.mxu0 0
      %1736 = vmatpush1.bf16.msra.mxu0 0
      %1737 = vmatprep.subr.bf16.mxu0 0
      %1738 = vmatpush1.bf16.msra.mxu0 0
      %1739 = vmatprep.mubr.bf16.mxu0 0
      %1740 = vmatmul.mubr.bf16.gmra.mrb[0].mxu0 %v1651
      %v1741 = vpop.f32.mrb[0].mxu0
      %v1742 = vadd.f32 0.0, %v1741
      %v1743 = vpop.f32.mrb[0].mxu0
      %v1744 = vpop.f32.mrb[0].mxu0
      %v1745 = vadd.f32 0.0, %v1744
      %v1746 = vpop.f32.mrb[0].mxu0
      %1747 = vmatprep.mubr.bf16.mxu0 0
      %1748 = vmatmul.mubr.bf16.gmra.mrb[0].mxu0 %v1654
      %v1749 = vpop.f32.mrb[0].mxu0
      %v1750 = vadd.f32 0.0, %v1749
      %v1751 = vpop.f32.mrb[0].mxu0
      %v1752 = vpop.f32.mrb[0].mxu0
      %v1753 = vadd.f32 0.0, %v1752
      %v1754 = vpop.f32.mrb[0].mxu0
      %1755 = vmatprep.mubr.bf16.mxu0 0
      %1756 = vmatmul.mubr.bf16.gmra.mrb[0].mxu0 %v1657
      %v1757 = vpop.f32.mrb[0].mxu0
      %v1758 = vadd.f32 0.0, %v1757
      %v1759 = vpop.f32.mrb[0].mxu0
      %v1760 = vpop.f32.mrb[0].mxu0
      %v1761 = vadd.f32 0.0, %v1760
      %v1762 = vpop.f32.mrb[0].mxu0
      %1763 = vmatprep.mubr.bf16.mxu0 0
      %1764 = vmatmul.mubr.bf16.gmra.mrb[0].mxu0 %v1660
      %v1765 = vpop.f32.mrb[0].mxu0
      %v1766 = vadd.f32 0.0, %v1765
      %v1767 = vpop.f32.mrb[0].mxu0
      %v1768 = vpop.f32.mrb[0].mxu0
      %v1769 = vadd.f32 0.0, %v1768
      %v1770 = vpop.f32.mrb[0].mxu0
      %1771 = vmatprep.mubr.bf16.mxu0 0
      %1772 = vmatmul.mubr.bf16.gmra.mrb[0].mxu0 %v1663
      %v1773 = vpop.f32.mrb[0].mxu0
      %v1774 = vadd.f32 0.0, %v1773
      %v1775 = vpop.f32.mrb[0].mxu0
      %v1776 = vpop.f32.mrb[0].mxu0
      %v1777 = vadd.f32 0.0, %v1776
      %v1778 = vpop.f32.mrb[0].mxu0
      %1779 = vmatprep.mubr.bf16.mxu0 0
      %1780 = vmatmul.mubr.bf16.gmra.mrb[0].mxu0 %v1666
      %v1781 = vpop.f32.mrb[0].mxu0
      %v1782 = vadd.f32 0.0, %v1781
      %v1783 = vpop.f32.mrb[0].mxu0
      %v1784 = vpop.f32.mrb[0].mxu0
      %v1785 = vadd.f32 0.0, %v1784
      %v1786 = vpop.f32.mrb[0].mxu0
      %1787 = vmatprep.mubr.bf16.mxu0 0
      %1788 = vmatmul.mubr.bf16.gmra.mrb[0].mxu0 %v1669
      %v1789 = vpop.f32.mrb[0].mxu0
      %v1790 = vadd.f32 0.0, %v1789
      %v1791 = vpop.f32.mrb[0].mxu0
      %v1792 = vpop.f32.mrb[0].mxu0
      %v1793 = vadd.f32 0.0, %v1792
      %v1794 = vpop.f32.mrb[0].mxu0
      %1795 = vmatprep.mubr.bf16.mxu0 0
      %1796 = vmatmul.mubr.bf16.gmra.mrb[0].mxu0 %v1672
      %v1797 = vpop.f32.mrb[0].mxu0
      %v1798 = vadd.f32 0.0, %v1797
      %v1799 = vpop.f32.mrb[0].mxu0
      %v1800 = vpop.f32.mrb[0].mxu0
      %v1801 = vadd.f32 0.0, %v1800
      %v1802 = vpop.f32.mrb[0].mxu0
      %1803 = vmatprep.mubr.bf16.mxu0 0
      %1804 = vmatmul.mubr.bf16.gmra.mrb[0].mxu0 %v1675
      %v1805 = vpop.f32.mrb[0].mxu0
      %v1806 = vadd.f32 0.0, %v1805
      %v1807 = vpop.f32.mrb[0].mxu0
      %v1808 = vpop.f32.mrb[0].mxu0
      %v1809 = vadd.f32 0.0, %v1808
      %v1810 = vpop.f32.mrb[0].mxu0
      %1811 = vmatprep.mubr.bf16.mxu0 0
      %1812 = vmatmul.mubr.bf16.gmra.mrb[0].mxu0 %v1678
      %v1813 = vpop.f32.mrb[0].mxu0
      %v1814 = vadd.f32 0.0, %v1813
      %v1815 = vpop.f32.mrb[0].mxu0
      %v1816 = vpop.f32.mrb[0].mxu0
      %v1817 = vadd.f32 0.0, %v1816
      %v1818 = vpop.f32.mrb[0].mxu0
      %1819 = vmatprep.mubr.bf16.mxu0 0
      %1820 = vmatmul.mubr.bf16.gmra.mrb[0].mxu0 %v1681
      %v1821 = vpop.f32.mrb[0].mxu0
      %v1822 = vadd.f32 0.0, %v1821
      %v1823 = vpop.f32.mrb[0].mxu0
      %v1824 = vpop.f32.mrb[0].mxu0
      %v1825 = vadd.f32 0.0, %v1824
      %v1826 = vpop.f32.mrb[0].mxu0
      %1827 = vmatprep.mubr.bf16.mxu0 0
      %1828 = vmatmul.mubr.bf16.gmra.mrb[0].mxu0 %v1684
      %v1829 = vpop.f32.mrb[0].mxu0
      %v1830 = vadd.f32 0.0, %v1829
      %v1831 = vpop.f32.mrb[0].mxu0
      %v1832 = vpop.f32.mrb[0].mxu0
      %v1833 = vadd.f32 0.0, %v1832
      %v1834 = vpop.f32.mrb[0].mxu0
      %1835 = vmatprep.mubr.bf16.mxu0 0
      %1836 = vmatmul.mubr.bf16.gmra.mrb[0].mxu0 %v1687
      %v1837 = vpop.f32.mrb[0].mxu0
      %v1838 = vadd.f32 0.0, %v1837
      %v1839 = vpop.f32.mrb[0].mxu0
      %v1840 = vpop.f32.mrb[0].mxu0
      %v1841 = vadd.f32 0.0, %v1840
      %v1842 = vpop.f32.mrb[0].mxu0
      %1843 = vmatprep.mubr.bf16.mxu0 0
      %1844 = vmatmul.mubr.bf16.gmra.mrb[0].mxu0 %v1690
      %v1845 = vpop.f32.mrb[0].mxu0
      %v1846 = vadd.f32 0.0, %v1845
      %v1847 = vpop.f32.mrb[0].mxu0
      %v1848 = vpop.f32.mrb[0].mxu0
      %v1849 = vadd.f32 0.0, %v1848
      %v1850 = vpop.f32.mrb[0].mxu0
      %1851 = vmatprep.mubr.bf16.mxu0 0
      %1852 = vmatmul.mubr.bf16.gmra.mrb[0].mxu0 %v1693
      %v1853 = vpop.f32.mrb[0].mxu0
      %v1854 = vadd.f32 0.0, %v1853
      %v1855 = vpop.f32.mrb[0].mxu0
      %v1856 = vpop.f32.mrb[0].mxu0
      %v1857 = vadd.f32 0.0, %v1856
      %v1858 = vpop.f32.mrb[0].mxu0
      %1859 = vmatprep.mubr.bf16.mxu0 0
      %1860 = vmatmul.mubr.bf16.gmra.mrb[0].mxu0 %v1696
      %v1861 = vpop.f32.mrb[0].mxu0
      %v1862 = vadd.f32 0.0, %v1861
      %v1863 = vpop.f32.mrb[0].mxu0
      %v1864 = vpop.f32.mrb[0].mxu0
      %v1865 = vadd.f32 0.0, %v1864
      %v1866 = vpop.f32.mrb[0].mxu0
      %1867 = vmatprep.mubr.bf16.mxu0 0
      %1868 = vmatmul.mubr.bf16.gmra.mrb[0].mxu0 %v1699
      %v1869 = vpop.f32.mrb[0].mxu0
      %v1870 = vadd.f32 0.0, %v1869
      %v1871 = vpop.f32.mrb[0].mxu0
      %v1872 = vpop.f32.mrb[0].mxu0
      %v1873 = vadd.f32 0.0, %v1872
      %v1874 = vpop.f32.mrb[0].mxu0
      %1875 = vmatprep.mubr.bf16.mxu0 0
      %1876 = vmatmul.mubr.bf16.gmra.mrb[0].mxu0 %v1702
      %v1877 = vpop.f32.mrb[0].mxu0
      %v1878 = vadd.f32 0.0, %v1877
      %v1879 = vpop.f32.mrb[0].mxu0
      %v1880 = vpop.f32.mrb[0].mxu0
      %v1881 = vadd.f32 0.0, %v1880
      %v1882 = vpop.f32.mrb[0].mxu0
      %1883 = vdwg.mxu0
      %v1884 = vadd.f32 %v1558, %v1742
      %v1885 = vadd.f32 %v1559, %v1745
      %v1886 = vadd.f32 %v1560, %v1750
      %v1887 = vadd.f32 %v1561, %v1753
      %v1888 = vadd.f32 %v1562, %v1758
      %v1889 = vadd.f32 %v1563, %v1761
      %v1890 = vadd.f32 %v1564, %v1766
      %v1891 = vadd.f32 %v1565, %v1769
      %v1892 = vadd.f32 %v1566, %v1774
      %v1893 = vadd.f32 %v1567, %v1777
      %v1894 = vadd.f32 %v1568, %v1782
      %v1895 = vadd.f32 %v1569, %v1785
      %v1896 = vadd.f32 %v1570, %v1790
      %v1897 = vadd.f32 %v1571, %v1793
      %v1898 = vadd.f32 %v1572, %v1798
      %v1899 = vadd.f32 %v1573, %v1801
      %v1900 = vadd.f32 %v1574, %v1806
      %v1901 = vadd.f32 %v1575, %v1809
      %v1902 = vadd.f32 %v1576, %v1814
      %v1903 = vadd.f32 %v1577, %v1817
      %v1904 = vadd.f32 %v1578, %v1822
      %v1905 = vadd.f32 %v1579, %v1825
      %v1906 = vadd.f32 %v1580, %v1830
      %v1907 = vadd.f32 %v1581, %v1833
      %v1908 = vadd.f32 %v1582, %v1838
      %v1909 = vadd.f32 %v1583, %v1841
      %v1910 = vadd.f32 %v1584, %v1846
      %v1911 = vadd.f32 %v1585, %v1849
      %v1912 = vadd.f32 %v1586, %v1854
      %v1913 = vadd.f32 %v1587, %v1857
      %v1914 = vadd.f32 %v1588, %v1862
      %v1915 = vadd.f32 %v1589, %v1865
      %v1916 = vadd.f32 %v1590, %v1870
      %v1917 = vadd.f32 %v1591, %v1873
      %v1918 = vadd.f32 %v1592, %v1878
      %v1919 = vadd.f32 %v1593, %v1881
      %v1920 = vld [vmem:[%s273 + $0x14] sm:$0xff]
      %v1921 = vld [vmem:[%s273 + $0x1c] sm:$0xff]
      %v1922 = vld [vmem:[%s273 + $0x24] sm:$0xff]
      %v1923 = vld [vmem:[%s273 + $0x2c] sm:$0xff]
      %v1924 = vld [vmem:[%s273 + $0x34] sm:$0xff]
      %v1925 = vld [vmem:[%s273 + $0x3c] sm:$0xff]
      %v1926 = vld [vmem:[%s273 + $0x44] sm:$0xff]
      %v1927 = vld [vmem:[%s273 + $0x4c] sm:$0xff]
      %v1928 = vld [vmem:[%s273 + $0x54] sm:$0xff]
      %v1929 = vld [vmem:[%s273 + $0x5c] sm:$0xff]
      %v1930 = vld [vmem:[%s273 + $0x64] sm:$0xff]
      %v1931 = vld [vmem:[%s273 + $0x6c] sm:$0xff]
      %v1932 = vld [vmem:[%s273 + $0x74] sm:$0xff]
      %v1933 = vld [vmem:[%s273 + $0x7c] sm:$0xff]
      %v1934 = vld [vmem:[%s273 + $0x84] sm:$0xff]
      %v1935 = vld [vmem:[%s273 + $0x8c] sm:$0xff]
      %v1936 = vld [vmem:[%s273 + $0x94] sm:$0xff]
      %v1937 = vld [vmem:[%s273 + $0x9c] sm:$0xff]
      %v1938 = vld [vmem:[%s273 + $0xa4] sm:$0xff]
      %v1939 = vld [vmem:[%s273 + $0xac] sm:$0xff]
      %v1940 = vld [vmem:[%s273 + $0xb4] sm:$0xff]
      %v1941 = vld [vmem:[%s273 + $0xbc] sm:$0xff]
      %v1942 = vld [vmem:[%s273 + $0xc4] sm:$0xff]
      %v1943 = vld [vmem:[%s273 + $0xcc] sm:$0xff]
      %v1944 = vld [vmem:[%s273 + $0xd4] sm:$0xff]
      %v1945 = vld [vmem:[%s273 + $0xdc] sm:$0xff]
      %v1946 = vld [vmem:[%s273 + $0xe4] sm:$0xff]
      %v1947 = vld [vmem:[%s273 + $0xec] sm:$0xff]
      %v1948 = vld [vmem:[%s273 + $0xf4] sm:$0xff]
      %v1949 = vld [vmem:[%s273 + $0xfc] sm:$0xff]
      %v1950 = vld [vmem:[%s273 + $0x104] sm:$0xff]
      %v1951 = vld [vmem:[%s273 + $0x10c] sm:$0xff]
      %v1952 = vld [vmem:[%s273 + $0x114] sm:$0xff]
      %v1953 = vld [vmem:[%s273 + $0x11c] sm:$0xff]
      %v1954 = vld [vmem:[%s273 + $0x124] sm:$0xff]
      %v1955 = vld [vmem:[%s273 + $0x12c] sm:$0xff]
      %v1956 = vpack.c.bf16 %v1921, %v1920
      %v1957 = vpack.c.bf16 %v1923, %v1922
      %v1958 = vpack.c.bf16 %v1925, %v1924
      %v1959 = vpack.c.bf16 %v1927, %v1926
      %v1960 = vpack.c.bf16 %v1929, %v1928
      %v1961 = vpack.c.bf16 %v1931, %v1930
      %v1962 = vpack.c.bf16 %v1933, %v1932
      %v1963 = vpack.c.bf16 %v1935, %v1934
      %v1964 = vpack.c.bf16 %v1937, %v1936
      %v1965 = vpack.c.bf16 %v1939, %v1938
      %v1966 = vpack.c.bf16 %v1941, %v1940
      %v1967 = vpack.c.bf16 %v1943, %v1942
      %v1968 = vpack.c.bf16 %v1945, %v1944
      %v1969 = vpack.c.bf16 %v1947, %v1946
      %v1970 = vpack.c.bf16 %v1949, %v1948
      %v1971 = vpack.c.bf16 %v1951, %v1950
      %v1972 = vpack.c.bf16 %v1953, %v1952
      %v1973 = vpack.c.bf16 %v1955, %v1954
      %s1974 = scalar_lea.vmem %s1, 10
      %v1975 = vld [vmem:[%s1974] sm:$0x3]
      %v1977 = vsel %vm469, %v1956, 0
      %v1980 = vsel %vm469, %v1957, 0
      %v1983 = vsel %vm469, %v1958, 0
      %v1986 = vsel %vm469, %v1959, 0
      %v1989 = vsel %vm469, %v1960, 0
      %v1992 = vsel %vm469, %v1961, 0
      %v1995 = vsel %vm469, %v1962, 0
      %v1998 = vsel %vm469, %v1963, 0
      %v2001 = vsel %vm469, %v1964, 0
      %v2004 = vsel %vm469, %v1965, 0
      %v2007 = vsel %vm469, %v1966, 0
      %v2010 = vsel %vm469, %v1967, 0
      %v2013 = vsel %vm469, %v1968, 0
      %v2016 = vsel %vm469, %v1969, 0
      %v2019 = vsel %vm469, %v1970, 0
      %v2022 = vsel %vm469, %v1971, 0
      %v2025 = vsel %vm469, %v1972, 0
      %v2028 = vsel %vm469, %v1973, 0
      %v2031 = vand.u32 %v1975, %v527
      %2033 = vmatprep.subr.bf16.mxu0 0
      %2034 = vmatpush1.bf16.msra.mxu0 %v2031
      %2035 = vmatprep.subr.bf16.mxu0 0
      %2036 = vmatpush1.bf16.msra.mxu0 0
      %2037 = vmatprep.subr.bf16.mxu0 0
      %2038 = vmatpush1.bf16.msra.mxu0 0
      %2039 = vmatprep.subr.bf16.mxu0 0
      %2040 = vmatpush1.bf16.msra.mxu0 0
      %2041 = vmatprep.subr.bf16.mxu0 0
      %2042 = vmatpush1.bf16.msra.mxu0 0
      %2043 = vmatprep.subr.bf16.mxu0 0
      %2044 = vmatpush1.bf16.msra.mxu0 0
      %2045 = vmatprep.subr.bf16.mxu0 0
      %2046 = vmatpush1.bf16.msra.mxu0 0
      %2047 = vmatprep.subr.bf16.mxu0 0
      %2048 = vmatpush1.bf16.msra.mxu0 0
      %2049 = vmatprep.subr.bf16.mxu0 0
      %2050 = vmatpush1.bf16.msra.mxu0 0
      %2051 = vmatprep.subr.bf16.mxu0 0
      %2052 = vmatpush1.bf16.msra.mxu0 0
      %2053 = vmatprep.subr.bf16.mxu0 0
      %2054 = vmatpush1.bf16.msra.mxu0 0
      %2055 = vmatprep.subr.bf16.mxu0 0
      %2056 = vmatpush1.bf16.msra.mxu0 0
      %2057 = vmatprep.subr.bf16.mxu0 0
      %2058 = vmatpush1.bf16.msra.mxu0 0
      %2059 = vmatprep.subr.bf16.mxu0 0
      %2060 = vmatpush1.bf16.msra.mxu0 0
      %2061 = vmatprep.subr.bf16.mxu0 0
      %2062 = vmatpush1.bf16.msra.mxu0 0
      %2063 = vmatprep.subr.bf16.mxu0 0
      %2064 = vmatpush1.bf16.msra.mxu0 0
      %2065 = vmatprep.mubr.bf16.mxu0 0
      %2066 = vmatmul.mubr.bf16.gmra.mrb[0].mxu0 %v1977
      %v2067 = vpop.f32.mrb[0].mxu0
      %v2068 = vadd.f32 0.0, %v2067
      %v2069 = vpop.f32.mrb[0].mxu0
      %v2070 = vpop.f32.mrb[0].mxu0
      %v2071 = vadd.f32 0.0, %v2070
      %v2072 = vpop.f32.mrb[0].mxu0
      %2073 = vmatprep.mubr.bf16.mxu0 0
      %2074 = vmatmul.mubr.bf16.gmra.mrb[0].mxu0 %v1980
      %v2075 = vpop.f32.mrb[0].mxu0
      %v2076 = vadd.f32 0.0, %v2075
      %v2077 = vpop.f32.mrb[0].mxu0
      %v2078 = vpop.f32.mrb[0].mxu0
      %v2079 = vadd.f32 0.0, %v2078
      %v2080 = vpop.f32.mrb[0].mxu0
      %2081 = vmatprep.mubr.bf16.mxu0 0
      %2082 = vmatmul.mubr.bf16.gmra.mrb[0].mxu0 %v1983
      %v2083 = vpop.f32.mrb[0].mxu0
      %v2084 = vadd.f32 0.0, %v2083
      %v2085 = vpop.f32.mrb[0].mxu0
      %v2086 = vpop.f32.mrb[0].mxu0
      %v2087 = vadd.f32 0.0, %v2086
      %v2088 = vpop.f32.mrb[0].mxu0
      %2089 = vmatprep.mubr.bf16.mxu0 0
      %2090 = vmatmul.mubr.bf16.gmra.mrb[0].mxu0 %v1986
      %v2091 = vpop.f32.mrb[0].mxu0
      %v2092 = vadd.f32 0.0, %v2091
      %v2093 = vpop.f32.mrb[0].mxu0
      %v2094 = vpop.f32.mrb[0].mxu0
      %v2095 = vadd.f32 0.0, %v2094
      %v2096 = vpop.f32.mrb[0].mxu0
      %2097 = vmatprep.mubr.bf16.mxu0 0
      %2098 = vmatmul.mubr.bf16.gmra.mrb[0].mxu0 %v1989
      %v2099 = vpop.f32.mrb[0].mxu0
      %v2100 = vadd.f32 0.0, %v2099
      %v2101 = vpop.f32.mrb[0].mxu0
      %v2102 = vpop.f32.mrb[0].mxu0
      %v2103 = vadd.f32 0.0, %v2102
      %v2104 = vpop.f32.mrb[0].mxu0
      %2105 = vmatprep.mubr.bf16.mxu0 0
      %2106 = vmatmul.mubr.bf16.gmra.mrb[0].mxu0 %v1992
      %v2107 = vpop.f32.mrb[0].mxu0
      %v2108 = vadd.f32 0.0, %v2107
      %v2109 = vpop.f32.mrb[0].mxu0
      %v2110 = vpop.f32.mrb[0].mxu0
      %v2111 = vadd.f32 0.0, %v2110
      %v2112 = vpop.f32.mrb[0].mxu0
      %2113 = vmatprep.mubr.bf16.mxu0 0
      %2114 = vmatmul.mubr.bf16.gmra.mrb[0].mxu0 %v1995
      %v2115 = vpop.f32.mrb[0].mxu0
      %v2116 = vadd.f32 0.0, %v2115
      %v2117 = vpop.f32.mrb[0].mxu0
      %v2118 = vpop.f32.mrb[0].mxu0
      %v2119 = vadd.f32 0.0, %v2118
      %v2120 = vpop.f32.mrb[0].mxu0
      %2121 = vmatprep.mubr.bf16.mxu0 0
      %2122 = vmatmul.mubr.bf16.gmra.mrb[0].mxu0 %v1998
      %v2123 = vpop.f32.mrb[0].mxu0
      %v2124 = vadd.f32 0.0, %v2123
      %v2125 = vpop.f32.mrb[0].mxu0
      %v2126 = vpop.f32.mrb[0].mxu0
      %v2127 = vadd.f32 0.0, %v2126
      %v2128 = vpop.f32.mrb[0].mxu0
      %2129 = vmatprep.mubr.bf16.mxu0 0
      %2130 = vmatmul.mubr.bf16.gmra.mrb[0].mxu0 %v2001
      %v2131 = vpop.f32.mrb[0].mxu0
      %v2132 = vadd.f32 0.0, %v2131
      %v2133 = vpop.f32.mrb[0].mxu0
      %v2134 = vpop.f32.mrb[0].mxu0
      %v2135 = vadd.f32 0.0, %v2134
      %v2136 = vpop.f32.mrb[0].mxu0
      %2137 = vmatprep.mubr.bf16.mxu0 0
      %2138 = vmatmul.mubr.bf16.gmra.mrb[0].mxu0 %v2004
      %v2139 = vpop.f32.mrb[0].mxu0
      %v2140 = vadd.f32 0.0, %v2139
      %v2141 = vpop.f32.mrb[0].mxu0
      %v2142 = vpop.f32.mrb[0].mxu0
      %v2143 = vadd.f32 0.0, %v2142
      %v2144 = vpop.f32.mrb[0].mxu0
      %2145 = vmatprep.mubr.bf16.mxu0 0
      %2146 = vmatmul.mubr.bf16.gmra.mrb[0].mxu0 %v2007
      %v2147 = vpop.f32.mrb[0].mxu0
      %v2148 = vadd.f32 0.0, %v2147
      %v2149 = vpop.f32.mrb[0].mxu0
      %v2150 = vpop.f32.mrb[0].mxu0
      %v2151 = vadd.f32 0.0, %v2150
      %v2152 = vpop.f32.mrb[0].mxu0
      %2153 = vmatprep.mubr.bf16.mxu0 0
      %2154 = vmatmul.mubr.bf16.gmra.mrb[0].mxu0 %v2010
      %v2155 = vpop.f32.mrb[0].mxu0
      %v2156 = vadd.f32 0.0, %v2155
      %v2157 = vpop.f32.mrb[0].mxu0
      %v2158 = vpop.f32.mrb[0].mxu0
      %v2159 = vadd.f32 0.0, %v2158
      %v2160 = vpop.f32.mrb[0].mxu0
      %2161 = vmatprep.mubr.bf16.mxu0 0
      %2162 = vmatmul.mubr.bf16.gmra.mrb[0].mxu0 %v2013
      %v2163 = vpop.f32.mrb[0].mxu0
      %v2164 = vadd.f32 0.0, %v2163
      %v2165 = vpop.f32.mrb[0].mxu0
      %v2166 = vpop.f32.mrb[0].mxu0
      %v2167 = vadd.f32 0.0, %v2166
      %v2168 = vpop.f32.mrb[0].mxu0
      %2169 = vmatprep.mubr.bf16.mxu0 0
      %2170 = vmatmul.mubr.bf16.gmra.mrb[0].mxu0 %v2016
      %v2171 = vpop.f32.mrb[0].mxu0
      %v2172 = vadd.f32 0.0, %v2171
      %v2173 = vpop.f32.mrb[0].mxu0
      %v2174 = vpop.f32.mrb[0].mxu0
      %v2175 = vadd.f32 0.0, %v2174
      %v2176 = vpop.f32.mrb[0].mxu0
      %2177 = vmatprep.mubr.bf16.mxu0 0
      %2178 = vmatmul.mubr.bf16.gmra.mrb[0].mxu0 %v2019
      %v2179 = vpop.f32.mrb[0].mxu0
      %v2180 = vadd.f32 0.0, %v2179
      %v2181 = vpop.f32.mrb[0].mxu0
      %v2182 = vpop.f32.mrb[0].mxu0
      %v2183 = vadd.f32 0.0, %v2182
      %v2184 = vpop.f32.mrb[0].mxu0
      %2185 = vmatprep.mubr.bf16.mxu0 0
      %2186 = vmatmul.mubr.bf16.gmra.mrb[0].mxu0 %v2022
      %v2187 = vpop.f32.mrb[0].mxu0
      %v2188 = vadd.f32 0.0, %v2187
      %v2189 = vpop.f32.mrb[0].mxu0
      %v2190 = vpop.f32.mrb[0].mxu0
      %v2191 = vadd.f32 0.0, %v2190
      %v2192 = vpop.f32.mrb[0].mxu0
      %2193 = vmatprep.mubr.bf16.mxu0 0
      %2194 = vmatmul.mubr.bf16.gmra.mrb[0].mxu0 %v2025
      %v2195 = vpop.f32.mrb[0].mxu0
      %v2196 = vadd.f32 0.0, %v2195
      %v2197 = vpop.f32.mrb[0].mxu0
      %v2198 = vpop.f32.mrb[0].mxu0
      %v2199 = vadd.f32 0.0, %v2198
      %v2200 = vpop.f32.mrb[0].mxu0
      %2201 = vmatprep.mubr.bf16.mxu0 0
      %2202 = vmatmul.mubr.bf16.gmra.mrb[0].mxu0 %v2028
      %v2203 = vpop.f32.mrb[0].mxu0
      %v2204 = vadd.f32 0.0, %v2203
      %v2205 = vpop.f32.mrb[0].mxu0
      %v2206 = vpop.f32.mrb[0].mxu0
      %v2207 = vadd.f32 0.0, %v2206
      %v2208 = vpop.f32.mrb[0].mxu0
      %2209 = vdwg.mxu0
      %v2210 = vadd.f32 %v1884, %v2068
      %v2211 = vadd.f32 %v1885, %v2071
      %v2212 = vadd.f32 %v1886, %v2076
      %v2213 = vadd.f32 %v1887, %v2079
      %v2214 = vadd.f32 %v1888, %v2084
      %v2215 = vadd.f32 %v1889, %v2087
      %v2216 = vadd.f32 %v1890, %v2092
      %v2217 = vadd.f32 %v1891, %v2095
      %v2218 = vadd.f32 %v1892, %v2100
      %v2219 = vadd.f32 %v1893, %v2103
      %v2220 = vadd.f32 %v1894, %v2108
      %v2221 = vadd.f32 %v1895, %v2111
      %v2222 = vadd.f32 %v1896, %v2116
      %v2223 = vadd.f32 %v1897, %v2119
      %v2224 = vadd.f32 %v1898, %v2124
      %v2225 = vadd.f32 %v1899, %v2127
      %v2226 = vadd.f32 %v1900, %v2132
      %v2227 = vadd.f32 %v1901, %v2135
      %v2228 = vadd.f32 %v1902, %v2140
      %v2229 = vadd.f32 %v1903, %v2143
      %v2230 = vadd.f32 %v1904, %v2148
      %v2231 = vadd.f32 %v1905, %v2151
      %v2232 = vadd.f32 %v1906, %v2156
      %v2233 = vadd.f32 %v1907, %v2159
      %v2234 = vadd.f32 %v1908, %v2164
      %v2235 = vadd.f32 %v1909, %v2167
      %v2236 = vadd.f32 %v1910, %v2172
      %v2237 = vadd.f32 %v1911, %v2175
      %v2238 = vadd.f32 %v1912, %v2180
      %v2239 = vadd.f32 %v1913, %v2183
      %v2240 = vadd.f32 %v1914, %v2188
      %v2241 = vadd.f32 %v1915, %v2191
      %v2242 = vadd.f32 %v1916, %v2196
      %v2243 = vadd.f32 %v1917, %v2199
      %v2244 = vadd.f32 %v1918, %v2204
      %v2245 = vadd.f32 %v1919, %v2207
      %v2246 = vld [vmem:[%s273 + $0x24] sm:$0xff]
      %v2247 = vld [vmem:[%s273 + $0x2c] sm:$0xff]
      %v2248 = vld [vmem:[%s273 + $0x34] sm:$0xff]
      %v2249 = vld [vmem:[%s273 + $0x3c] sm:$0xff]
      %v2250 = vld [vmem:[%s273 + $0x44] sm:$0xff]
      %v2251 = vld [vmem:[%s273 + $0x4c] sm:$0xff]
      %v2252 = vld [vmem:[%s273 + $0x54] sm:$0xff]
      %v2253 = vld [vmem:[%s273 + $0x5c] sm:$0xff]
      %v2254 = vld [vmem:[%s273 + $0x64] sm:$0xff]
      %v2255 = vld [vmem:[%s273 + $0x6c] sm:$0xff]
      %v2256 = vld [vmem:[%s273 + $0x74] sm:$0xff]
      %v2257 = vld [vmem:[%s273 + $0x7c] sm:$0xff]
      %v2258 = vld [vmem:[%s273 + $0x84] sm:$0xff]
      %v2259 = vld [vmem:[%s273 + $0x8c] sm:$0xff]
      %v2260 = vld [vmem:[%s273 + $0x94] sm:$0xff]
      %v2261 = vld [vmem:[%s273 + $0x9c] sm:$0xff]
      %v2262 = vld [vmem:[%s273 + $0xa4] sm:$0xff]
      %v2263 = vld [vmem:[%s273 + $0xac] sm:$0xff]
      %v2264 = vld [vmem:[%s273 + $0xb4] sm:$0xff]
      %v2265 = vld [vmem:[%s273 + $0xbc] sm:$0xff]
      %v2266 = vld [vmem:[%s273 + $0xc4] sm:$0xff]
      %v2267 = vld [vmem:[%s273 + $0xcc] sm:$0xff]
      %v2268 = vld [vmem:[%s273 + $0xd4] sm:$0xff]
      %v2269 = vld [vmem:[%s273 + $0xdc] sm:$0xff]
      %v2270 = vld [vmem:[%s273 + $0xe4] sm:$0xff]
      %v2271 = vld [vmem:[%s273 + $0xec] sm:$0xff]
      %v2272 = vld [vmem:[%s273 + $0xf4] sm:$0xff]
      %v2273 = vld [vmem:[%s273 + $0xfc] sm:$0xff]
      %v2274 = vld [vmem:[%s273 + $0x104] sm:$0xff]
      %v2275 = vld [vmem:[%s273 + $0x10c] sm:$0xff]
      %v2276 = vld [vmem:[%s273 + $0x114] sm:$0xff]
      %v2277 = vld [vmem:[%s273 + $0x11c] sm:$0xff]
      %v2278 = vld [vmem:[%s273 + $0x124] sm:$0xff]
      %v2279 = vld [vmem:[%s273 + $0x12c] sm:$0xff]
      %v2280 = vld [vmem:[%s273 + $0x134] sm:$0xff]
      %v2281 = vld [vmem:[%s273 + $0x13c] sm:$0xff]
      %v2282 = vpack.c.bf16 %v2247, %v2246
      %v2283 = vpack.c.bf16 %v2249, %v2248
      %v2284 = vpack.c.bf16 %v2251, %v2250
      %v2285 = vpack.c.bf16 %v2253, %v2252
      %v2286 = vpack.c.bf16 %v2255, %v2254
      %v2287 = vpack.c.bf16 %v2257, %v2256
      %v2288 = vpack.c.bf16 %v2259, %v2258
      %v2289 = vpack.c.bf16 %v2261, %v2260
      %v2290 = vpack.c.bf16 %v2263, %v2262
      %v2291 = vpack.c.bf16 %v2265, %v2264
      %v2292 = vpack.c.bf16 %v2267, %v2266
      %v2293 = vpack.c.bf16 %v2269, %v2268
      %v2294 = vpack.c.bf16 %v2271, %v2270
      %v2295 = vpack.c.bf16 %v2273, %v2272
      %v2296 = vpack.c.bf16 %v2275, %v2274
      %v2297 = vpack.c.bf16 %v2277, %v2276
      %v2298 = vpack.c.bf16 %v2279, %v2278
      %v2299 = vpack.c.bf16 %v2281, %v2280
      %s2300 = scalar_lea.vmem %s1, 12
      %v2301 = vld [vmem:[%s2300] sm:$0x3]
      %v2303 = vsel %vm469, %v2282, 0
      %v2306 = vsel %vm469, %v2283, 0
      %v2309 = vsel %vm469, %v2284, 0
      %v2312 = vsel %vm469, %v2285, 0
      %v2315 = vsel %vm469, %v2286, 0
      %v2318 = vsel %vm469, %v2287, 0
      %v2321 = vsel %vm469, %v2288, 0
      %v2324 = vsel %vm469, %v2289, 0
      %v2327 = vsel %vm469, %v2290, 0
      %v2330 = vsel %vm469, %v2291, 0
      %v2333 = vsel %vm469, %v2292, 0
      %v2336 = vsel %vm469, %v2293, 0
      %v2339 = vsel %vm469, %v2294, 0
      %v2342 = vsel %vm469, %v2295, 0
      %v2345 = vsel %vm469, %v2296, 0
      %v2348 = vsel %vm469, %v2297, 0
      %v2351 = vsel %vm469, %v2298, 0
      %v2354 = vsel %vm469, %v2299, 0
      %v2357 = vand.u32 %v2301, %v527
      %2359 = vmatprep.subr.bf16.mxu0 0
      %2360 = vmatpush1.bf16.msra.mxu0 %v2357
      %2361 = vmatprep.subr.bf16.mxu0 0
      %2362 = vmatpush1.bf16.msra.mxu0 0
      %2363 = vmatprep.subr.bf16.mxu0 0
      %2364 = vmatpush1.bf16.msra.mxu0 0
      %2365 = vmatprep.subr.bf16.mxu0 0
      %2366 = vmatpush1.bf16.msra.mxu0 0
      %2367 = vmatprep.subr.bf16.mxu0 0
      %2368 = vmatpush1.bf16.msra.mxu0 0
      %2369 = vmatprep.subr.bf16.mxu0 0
      %2370 = vmatpush1.bf16.msra.mxu0 0
      %2371 = vmatprep.subr.bf16.mxu0 0
      %2372 = vmatpush1.bf16.msra.mxu0 0
      %2373 = vmatprep.subr.bf16.mxu0 0
      %2374 = vmatpush1.bf16.msra.mxu0 0
      %2375 = vmatprep.subr.bf16.mxu0 0
      %2376 = vmatpush1.bf16.msra.mxu0 0
      %2377 = vmatprep.subr.bf16.mxu0 0
      %2378 = vmatpush1.bf16.msra.mxu0 0
      %2379 = vmatprep.subr.bf16.mxu0 0
      %2380 = vmatpush1.bf16.msra.mxu0 0
      %2381 = vmatprep.subr.bf16.mxu0 0
      %2382 = vmatpush1.bf16.msra.mxu0 0
      %2383 = vmatprep.subr.bf16.mxu0 0
      %2384 = vmatpush1.bf16.msra.mxu0 0
      %2385 = vmatprep.subr.bf16.mxu0 0
      %2386 = vmatpush1.bf16.msra.mxu0 0
      %2387 = vmatprep.subr.bf16.mxu0 0
      %2388 = vmatpush1.bf16.msra.mxu0 0
      %2389 = vmatprep.subr.bf16.mxu0 0
      %2390 = vmatpush1.bf16.msra.mxu0 0
      %2391 = vmatprep.mubr.bf16.mxu0 0
      %2392 = vmatmul.mubr.bf16.gmra.mrb[0].mxu0 %v2303
      %v2393 = vpop.f32.mrb[0].mxu0
      %v2394 = vadd.f32 0.0, %v2393
      %v2395 = vpop.f32.mrb[0].mxu0
      %v2396 = vpop.f32.mrb[0].mxu0
      %v2397 = vadd.f32 0.0, %v2396
      %v2398 = vpop.f32.mrb[0].mxu0
      %2399 = vmatprep.mubr.bf16.mxu0 0
      %2400 = vmatmul.mubr.bf16.gmra.mrb[0].mxu0 %v2306
      %v2401 = vpop.f32.mrb[0].mxu0
      %v2402 = vadd.f32 0.0, %v2401
      %v2403 = vpop.f32.mrb[0].mxu0
      %v2404 = vpop.f32.mrb[0].mxu0
      %v2405 = vadd.f32 0.0, %v2404
      %v2406 = vpop.f32.mrb[0].mxu0
      %2407 = vmatprep.mubr.bf16.mxu0 0
      %2408 = vmatmul.mubr.bf16.gmra.mrb[0].mxu0 %v2309
      %v2409 = vpop.f32.mrb[0].mxu0
      %v2410 = vadd.f32 0.0, %v2409
      %v2411 = vpop.f32.mrb[0].mxu0
      %v2412 = vpop.f32.mrb[0].mxu0
      %v2413 = vadd.f32 0.0, %v2412
      %v2414 = vpop.f32.mrb[0].mxu0
      %2415 = vmatprep.mubr.bf16.mxu0 0
      %2416 = vmatmul.mubr.bf16.gmra.mrb[0].mxu0 %v2312
      %v2417 = vpop.f32.mrb[0].mxu0
      %v2418 = vadd.f32 0.0, %v2417
      %v2419 = vpop.f32.mrb[0].mxu0
      %v2420 = vpop.f32.mrb[0].mxu0
      %v2421 = vadd.f32 0.0, %v2420
      %v2422 = vpop.f32.mrb[0].mxu0
      %2423 = vmatprep.mubr.bf16.mxu0 0
      %2424 = vmatmul.mubr.bf16.gmra.mrb[0].mxu0 %v2315
      %v2425 = vpop.f32.mrb[0].mxu0
      %v2426 = vadd.f32 0.0, %v2425
      %v2427 = vpop.f32.mrb[0].mxu0
      %v2428 = vpop.f32.mrb[0].mxu0
      %v2429 = vadd.f32 0.0, %v2428
      %v2430 = vpop.f32.mrb[0].mxu0
      %2431 = vmatprep.mubr.bf16.mxu0 0
      %2432 = vmatmul.mubr.bf16.gmra.mrb[0].mxu0 %v2318
      %v2433 = vpop.f32.mrb[0].mxu0
      %v2434 = vadd.f32 0.0, %v2433
      %v2435 = vpop.f32.mrb[0].mxu0
      %v2436 = vpop.f32.mrb[0].mxu0
      %v2437 = vadd.f32 0.0, %v2436
      %v2438 = vpop.f32.mrb[0].mxu0
      %2439 = vmatprep.mubr.bf16.mxu0 0
      %2440 = vmatmul.mubr.bf16.gmra.mrb[0].mxu0 %v2321
      %v2441 = vpop.f32.mrb[0].mxu0
      %v2442 = vadd.f32 0.0, %v2441
      %v2443 = vpop.f32.mrb[0].mxu0
      %v2444 = vpop.f32.mrb[0].mxu0
      %v2445 = vadd.f32 0.0, %v2444
      %v2446 = vpop.f32.mrb[0].mxu0
      %2447 = vmatprep.mubr.bf16.mxu0 0
      %2448 = vmatmul.mubr.bf16.gmra.mrb[0].mxu0 %v2324
      %v2449 = vpop.f32.mrb[0].mxu0
      %v2450 = vadd.f32 0.0, %v2449
      %v2451 = vpop.f32.mrb[0].mxu0
      %v2452 = vpop.f32.mrb[0].mxu0
      %v2453 = vadd.f32 0.0, %v2452
      %v2454 = vpop.f32.mrb[0].mxu0
      %2455 = vmatprep.mubr.bf16.mxu0 0
      %2456 = vmatmul.mubr.bf16.gmra.mrb[0].mxu0 %v2327
      %v2457 = vpop.f32.mrb[0].mxu0
      %v2458 = vadd.f32 0.0, %v2457
      %v2459 = vpop.f32.mrb[0].mxu0
      %v2460 = vpop.f32.mrb[0].mxu0
      %v2461 = vadd.f32 0.0, %v2460
      %v2462 = vpop.f32.mrb[0].mxu0
      %2463 = vmatprep.mubr.bf16.mxu0 0
      %2464 = vmatmul.mubr.bf16.gmra.mrb[0].mxu0 %v2330
      %v2465 = vpop.f32.mrb[0].mxu0
      %v2466 = vadd.f32 0.0, %v2465
      %v2467 = vpop.f32.mrb[0].mxu0
      %v2468 = vpop.f32.mrb[0].mxu0
      %v2469 = vadd.f32 0.0, %v2468
      %v2470 = vpop.f32.mrb[0].mxu0
      %2471 = vmatprep.mubr.bf16.mxu0 0
      %2472 = vmatmul.mubr.bf16.gmra.mrb[0].mxu0 %v2333
      %v2473 = vpop.f32.mrb[0].mxu0
      %v2474 = vadd.f32 0.0, %v2473
      %v2475 = vpop.f32.mrb[0].mxu0
      %v2476 = vpop.f32.mrb[0].mxu0
      %v2477 = vadd.f32 0.0, %v2476
      %v2478 = vpop.f32.mrb[0].mxu0
      %2479 = vmatprep.mubr.bf16.mxu0 0
      %2480 = vmatmul.mubr.bf16.gmra.mrb[0].mxu0 %v2336
      %v2481 = vpop.f32.mrb[0].mxu0
      %v2482 = vadd.f32 0.0, %v2481
      %v2483 = vpop.f32.mrb[0].mxu0
      %v2484 = vpop.f32.mrb[0].mxu0
      %v2485 = vadd.f32 0.0, %v2484
      %v2486 = vpop.f32.mrb[0].mxu0
      %2487 = vmatprep.mubr.bf16.mxu0 0
      %2488 = vmatmul.mubr.bf16.gmra.mrb[0].mxu0 %v2339
      %v2489 = vpop.f32.mrb[0].mxu0
      %v2490 = vadd.f32 0.0, %v2489
      %v2491 = vpop.f32.mrb[0].mxu0
      %v2492 = vpop.f32.mrb[0].mxu0
      %v2493 = vadd.f32 0.0, %v2492
      %v2494 = vpop.f32.mrb[0].mxu0
      %2495 = vmatprep.mubr.bf16.mxu0 0
      %2496 = vmatmul.mubr.bf16.gmra.mrb[0].mxu0 %v2342
      %v2497 = vpop.f32.mrb[0].mxu0
      %v2498 = vadd.f32 0.0, %v2497
      %v2499 = vpop.f32.mrb[0].mxu0
      %v2500 = vpop.f32.mrb[0].mxu0
      %v2501 = vadd.f32 0.0, %v2500
      %v2502 = vpop.f32.mrb[0].mxu0
      %2503 = vmatprep.mubr.bf16.mxu0 0
      %2504 = vmatmul.mubr.bf16.gmra.mrb[0].mxu0 %v2345
      %v2505 = vpop.f32.mrb[0].mxu0
      %v2506 = vadd.f32 0.0, %v2505
      %v2507 = vpop.f32.mrb[0].mxu0
      %v2508 = vpop.f32.mrb[0].mxu0
      %v2509 = vadd.f32 0.0, %v2508
      %v2510 = vpop.f32.mrb[0].mxu0
      %2511 = vmatprep.mubr.bf16.mxu0 0
      %2512 = vmatmul.mubr.bf16.gmra.mrb[0].mxu0 %v2348
      %v2513 = vpop.f32.mrb[0].mxu0
      %v2514 = vadd.f32 0.0, %v2513
      %v2515 = vpop.f32.mrb[0].mxu0
      %v2516 = vpop.f32.mrb[0].mxu0
      %v2517 = vadd.f32 0.0, %v2516
      %v2518 = vpop.f32.mrb[0].mxu0
      %2519 = vmatprep.mubr.bf16.mxu0 0
      %2520 = vmatmul.mubr.bf16.gmra.mrb[0].mxu0 %v2351
      %v2521 = vpop.f32.mrb[0].mxu0
      %v2522 = vadd.f32 0.0, %v2521
      %v2523 = vpop.f32.mrb[0].mxu0
      %v2524 = vpop.f32.mrb[0].mxu0
      %v2525 = vadd.f32 0.0, %v2524
      %v2526 = vpop.f32.mrb[0].mxu0
      %2527 = vmatprep.mubr.bf16.mxu0 0
      %2528 = vmatmul.mubr.bf16.gmra.mrb[0].mxu0 %v2354
      %v2529 = vpop.f32.mrb[0].mxu0
      %v2530 = vadd.f32 0.0, %v2529
      %v2531 = vpop.f32.mrb[0].mxu0
      %v2532 = vpop.f32.mrb[0].mxu0
      %v2533 = vadd.f32 0.0, %v2532
      %v2534 = vpop.f32.mrb[0].mxu0
      %2535 = vdwg.mxu0
      %v2536 = vadd.f32 %v2210, %v2394
      %v2537 = vadd.f32 %v2211, %v2397
      %v2538 = vadd.f32 %v2212, %v2402
      %v2539 = vadd.f32 %v2213, %v2405
      %v2540 = vadd.f32 %v2214, %v2410
      %v2541 = vadd.f32 %v2215, %v2413
      %v2542 = vadd.f32 %v2216, %v2418
      %v2543 = vadd.f32 %v2217, %v2421
      %v2544 = vadd.f32 %v2218, %v2426
      %v2545 = vadd.f32 %v2219, %v2429
      %v2546 = vadd.f32 %v2220, %v2434
      %v2547 = vadd.f32 %v2221, %v2437
      %v2548 = vadd.f32 %v2222, %v2442
      %v2549 = vadd.f32 %v2223, %v2445
      %v2550 = vadd.f32 %v2224, %v2450
      %v2551 = vadd.f32 %v2225, %v2453
      %v2552 = vadd.f32 %v2226, %v2458
      %v2553 = vadd.f32 %v2227, %v2461
      %v2554 = vadd.f32 %v2228, %v2466
      %v2555 = vadd.f32 %v2229, %v2469
      %v2556 = vadd.f32 %v2230, %v2474
      %v2557 = vadd.f32 %v2231, %v2477
      %v2558 = vadd.f32 %v2232, %v2482
      %v2559 = vadd.f32 %v2233, %v2485
      %v2560 = vadd.f32 %v2234, %v2490
      %v2561 = vadd.f32 %v2235, %v2493
      %v2562 = vadd.f32 %v2236, %v2498
      %v2563 = vadd.f32 %v2237, %v2501
      %v2564 = vadd.f32 %v2238, %v2506
      %v2565 = vadd.f32 %v2239, %v2509
      %v2566 = vadd.f32 %v2240, %v2514
      %v2567 = vadd.f32 %v2241, %v2517
      %v2568 = vadd.f32 %v2242, %v2522
      %v2569 = vadd.f32 %v2243, %v2525
      %v2570 = vadd.f32 %v2244, %v2530
      %v2571 = vadd.f32 %v2245, %v2533
      %v2572 = vld [vmem:[%s273 + $0x25] sm:$0xff]
      %v2573 = vld [vmem:[%s273 + $0x2d] sm:$0xff]
      %v2574 = vld [vmem:[%s273 + $0x35] sm:$0xff]
      %v2575 = vld [vmem:[%s273 + $0x3d] sm:$0xff]
      %v2576 = vld [vmem:[%s273 + $0x45] sm:$0xff]
      %v2577 = vld [vmem:[%s273 + $0x4d] sm:$0xff]
      %v2578 = vld [vmem:[%s273 + $0x55] sm:$0xff]
      %v2579 = vld [vmem:[%s273 + $0x5d] sm:$0xff]
      %v2580 = vld [vmem:[%s273 + $0x65] sm:$0xff]
      %v2581 = vld [vmem:[%s273 + $0x6d] sm:$0xff]
      %v2582 = vld [vmem:[%s273 + $0x75] sm:$0xff]
      %v2583 = vld [vmem:[%s273 + $0x7d] sm:$0xff]
      %v2584 = vld [vmem:[%s273 + $0x85] sm:$0xff]
      %v2585 = vld [vmem:[%s273 + $0x8d] sm:$0xff]
      %v2586 = vld [vmem:[%s273 + $0x95] sm:$0xff]
      %v2587 = vld [vmem:[%s273 + $0x9d] sm:$0xff]
      %v2588 = vld [vmem:[%s273 + $0xa5] sm:$0xff]
      %v2589 = vld [vmem:[%s273 + $0xad] sm:$0xff]
      %v2590 = vld [vmem:[%s273 + $0xb5] sm:$0xff]
      %v2591 = vld [vmem:[%s273 + $0xbd] sm:$0xff]
      %v2592 = vld [vmem:[%s273 + $0xc5] sm:$0xff]
      %v2593 = vld [vmem:[%s273 + $0xcd] sm:$0xff]
      %v2594 = vld [vmem:[%s273 + $0xd5] sm:$0xff]
      %v2595 = vld [vmem:[%s273 + $0xdd] sm:$0xff]
      %v2596 = vld [vmem:[%s273 + $0xe5] sm:$0xff]
      %v2597 = vld [vmem:[%s273 + $0xed] sm:$0xff]
      %v2598 = vld [vmem:[%s273 + $0xf5] sm:$0xff]
      %v2599 = vld [vmem:[%s273 + $0xfd] sm:$0xff]
      %v2600 = vld [vmem:[%s273 + $0x105] sm:$0xff]
      %v2601 = vld [vmem:[%s273 + $0x10d] sm:$0xff]
      %v2602 = vld [vmem:[%s273 + $0x115] sm:$0xff]
      %v2603 = vld [vmem:[%s273 + $0x11d] sm:$0xff]
      %v2604 = vld [vmem:[%s273 + $0x125] sm:$0xff]
      %v2605 = vld [vmem:[%s273 + $0x12d] sm:$0xff]
      %v2606 = vld [vmem:[%s273 + $0x135] sm:$0xff]
      %v2607 = vld [vmem:[%s273 + $0x13d] sm:$0xff]
      %v2608 = vpack.c.bf16 %v2573, %v2572
      %v2609 = vpack.c.bf16 %v2575, %v2574
      %v2610 = vpack.c.bf16 %v2577, %v2576
      %v2611 = vpack.c.bf16 %v2579, %v2578
      %v2612 = vpack.c.bf16 %v2581, %v2580
      %v2613 = vpack.c.bf16 %v2583, %v2582
      %v2614 = vpack.c.bf16 %v2585, %v2584
      %v2615 = vpack.c.bf16 %v2587, %v2586
      %v2616 = vpack.c.bf16 %v2589, %v2588
      %v2617 = vpack.c.bf16 %v2591, %v2590
      %v2618 = vpack.c.bf16 %v2593, %v2592
      %v2619 = vpack.c.bf16 %v2595, %v2594
      %v2620 = vpack.c.bf16 %v2597, %v2596
      %v2621 = vpack.c.bf16 %v2599, %v2598
      %v2622 = vpack.c.bf16 %v2601, %v2600
      %v2623 = vpack.c.bf16 %v2603, %v2602
      %v2624 = vpack.c.bf16 %v2605, %v2604
      %v2625 = vpack.c.bf16 %v2607, %v2606
      %s2626 = scalar_lea.vmem %s1, 14
      %v2627 = vld [vmem:[%s2626] sm:$0x3]
      %v2629 = vsel %vm469, %v2608, 0
      %v2632 = vsel %vm469, %v2609, 0
      %v2635 = vsel %vm469, %v2610, 0
      %v2638 = vsel %vm469, %v2611, 0
      %v2641 = vsel %vm469, %v2612, 0
      %v2644 = vsel %vm469, %v2613, 0
      %v2647 = vsel %vm469, %v2614, 0
      %v2650 = vsel %vm469, %v2615, 0
      %v2653 = vsel %vm469, %v2616, 0
      %v2656 = vsel %vm469, %v2617, 0
      %v2659 = vsel %vm469, %v2618, 0
      %v2662 = vsel %vm469, %v2619, 0
      %v2665 = vsel %vm469, %v2620, 0
      %v2668 = vsel %vm469, %v2621, 0
      %v2671 = vsel %vm469, %v2622, 0
      %v2674 = vsel %vm469, %v2623, 0
      %v2677 = vsel %vm469, %v2624, 0
      %v2680 = vsel %vm469, %v2625, 0
      %v2683 = vand.u32 %v2627, %v527
      %2685 = vmatprep.subr.bf16.mxu0 0
      %2686 = vmatpush1.bf16.msra.mxu0 %v2683
      %2687 = vmatprep.subr.bf16.mxu0 0
      %2688 = vmatpush1.bf16.msra.mxu0 0
      %2689 = vmatprep.subr.bf16.mxu0 0
      %2690 = vmatpush1.bf16.msra.mxu0 0
      %2691 = vmatprep.subr.bf16.mxu0 0
      %2692 = vmatpush1.bf16.msra.mxu0 0
      %2693 = vmatprep.subr.bf16.mxu0 0
      %2694 = vmatpush1.bf16.msra.mxu0 0
      %2695 = vmatprep.subr.bf16.mxu0 0
      %2696 = vmatpush1.bf16.msra.mxu0 0
      %2697 = vmatprep.subr.bf16.mxu0 0
      %2698 = vmatpush1.bf16.msra.mxu0 0
      %2699 = vmatprep.subr.bf16.mxu0 0
      %2700 = vmatpush1.bf16.msra.mxu0 0
      %2701 = vmatprep.subr.bf16.mxu0 0
      %2702 = vmatpush1.bf16.msra.mxu0 0
      %2703 = vmatprep.subr.bf16.mxu0 0
      %2704 = vmatpush1.bf16.msra.mxu0 0
      %2705 = vmatprep.subr.bf16.mxu0 0
      %2706 = vmatpush1.bf16.msra.mxu0 0
      %2707 = vmatprep.subr.bf16.mxu0 0
      %2708 = vmatpush1.bf16.msra.mxu0 0
      %2709 = vmatprep.subr.bf16.mxu0 0
      %2710 = vmatpush1.bf16.msra.mxu0 0
      %2711 = vmatprep.subr.bf16.mxu0 0
      %2712 = vmatpush1.bf16.msra.mxu0 0
      %2713 = vmatprep.subr.bf16.mxu0 0
      %2714 = vmatpush1.bf16.msra.mxu0 0
      %2715 = vmatprep.subr.bf16.mxu0 0
      %2716 = vmatpush1.bf16.msra.mxu0 0
      %2717 = vmatprep.mubr.bf16.mxu0 0
      %2718 = vmatmul.mubr.bf16.gmra.mrb[0].mxu0 %v2629
      %v2719 = vpop.f32.mrb[0].mxu0
      %v2720 = vadd.f32 0.0, %v2719
      %v2721 = vpop.f32.mrb[0].mxu0
      %v2722 = vpop.f32.mrb[0].mxu0
      %v2723 = vadd.f32 0.0, %v2722
      %v2724 = vpop.f32.mrb[0].mxu0
      %2725 = vmatprep.mubr.bf16.mxu0 0
      %2726 = vmatmul.mubr.bf16.gmra.mrb[0].mxu0 %v2632
      %v2727 = vpop.f32.mrb[0].mxu0
      %v2728 = vadd.f32 0.0, %v2727
      %v2729 = vpop.f32.mrb[0].mxu0
      %v2730 = vpop.f32.mrb[0].mxu0
      %v2731 = vadd.f32 0.0, %v2730
      %v2732 = vpop.f32.mrb[0].mxu0
      %2733 = vmatprep.mubr.bf16.mxu0 0
      %2734 = vmatmul.mubr.bf16.gmra.mrb[0].mxu0 %v2635
      %v2735 = vpop.f32.mrb[0].mxu0
      %v2736 = vadd.f32 0.0, %v2735
      %v2737 = vpop.f32.mrb[0].mxu0
      %v2738 = vpop.f32.mrb[0].mxu0
      %v2739 = vadd.f32 0.0, %v2738
      %v2740 = vpop.f32.mrb[0].mxu0
      %2741 = vmatprep.mubr.bf16.mxu0 0
      %2742 = vmatmul.mubr.bf16.gmra.mrb[0].mxu0 %v2638
      %v2743 = vpop.f32.mrb[0].mxu0
      %v2744 = vadd.f32 0.0, %v2743
      %v2745 = vpop.f32.mrb[0].mxu0
      %v2746 = vpop.f32.mrb[0].mxu0
      %v2747 = vadd.f32 0.0, %v2746
      %v2748 = vpop.f32.mrb[0].mxu0
      %2749 = vmatprep.mubr.bf16.mxu0 0
      %2750 = vmatmul.mubr.bf16.gmra.mrb[0].mxu0 %v2641
      %v2751 = vpop.f32.mrb[0].mxu0
      %v2752 = vadd.f32 0.0, %v2751
      %v2753 = vpop.f32.mrb[0].mxu0
      %v2754 = vpop.f32.mrb[0].mxu0
      %v2755 = vadd.f32 0.0, %v2754
      %v2756 = vpop.f32.mrb[0].mxu0
      %2757 = vmatprep.mubr.bf16.mxu0 0
      %2758 = vmatmul.mubr.bf16.gmra.mrb[0].mxu0 %v2644
      %v2759 = vpop.f32.mrb[0].mxu0
      %v2760 = vadd.f32 0.0, %v2759
      %v2761 = vpop.f32.mrb[0].mxu0
      %v2762 = vpop.f32.mrb[0].mxu0
      %v2763 = vadd.f32 0.0, %v2762
      %v2764 = vpop.f32.mrb[0].mxu0
      %2765 = vmatprep.mubr.bf16.mxu0 0
      %2766 = vmatmul.mubr.bf16.gmra.mrb[0].mxu0 %v2647
      %v2767 = vpop.f32.mrb[0].mxu0
      %v2768 = vadd.f32 0.0, %v2767
      %v2769 = vpop.f32.mrb[0].mxu0
      %v2770 = vpop.f32.mrb[0].mxu0
      %v2771 = vadd.f32 0.0, %v2770
      %v2772 = vpop.f32.mrb[0].mxu0
      %2773 = vmatprep.mubr.bf16.mxu0 0
      %2774 = vmatmul.mubr.bf16.gmra.mrb[0].mxu0 %v2650
      %v2775 = vpop.f32.mrb[0].mxu0
      %v2776 = vadd.f32 0.0, %v2775
      %v2777 = vpop.f32.mrb[0].mxu0
      %v2778 = vpop.f32.mrb[0].mxu0
      %v2779 = vadd.f32 0.0, %v2778
      %v2780 = vpop.f32.mrb[0].mxu0
      %2781 = vmatprep.mubr.bf16.mxu0 0
      %2782 = vmatmul.mubr.bf16.gmra.mrb[0].mxu0 %v2653
      %v2783 = vpop.f32.mrb[0].mxu0
      %v2784 = vadd.f32 0.0, %v2783
      %v2785 = vpop.f32.mrb[0].mxu0
      %v2786 = vpop.f32.mrb[0].mxu0
      %v2787 = vadd.f32 0.0, %v2786
      %v2788 = vpop.f32.mrb[0].mxu0
      %2789 = vmatprep.mubr.bf16.mxu0 0
      %2790 = vmatmul.mubr.bf16.gmra.mrb[0].mxu0 %v2656
      %v2791 = vpop.f32.mrb[0].mxu0
      %v2792 = vadd.f32 0.0, %v2791
      %v2793 = vpop.f32.mrb[0].mxu0
      %v2794 = vpop.f32.mrb[0].mxu0
      %v2795 = vadd.f32 0.0, %v2794
      %v2796 = vpop.f32.mrb[0].mxu0
      %2797 = vmatprep.mubr.bf16.mxu0 0
      %2798 = vmatmul.mubr.bf16.gmra.mrb[0].mxu0 %v2659
      %v2799 = vpop.f32.mrb[0].mxu0
      %v2800 = vadd.f32 0.0, %v2799
      %v2801 = vpop.f32.mrb[0].mxu0
      %v2802 = vpop.f32.mrb[0].mxu0
      %v2803 = vadd.f32 0.0, %v2802
      %v2804 = vpop.f32.mrb[0].mxu0
      %2805 = vmatprep.mubr.bf16.mxu0 0
      %2806 = vmatmul.mubr.bf16.gmra.mrb[0].mxu0 %v2662
      %v2807 = vpop.f32.mrb[0].mxu0
      %v2808 = vadd.f32 0.0, %v2807
      %v2809 = vpop.f32.mrb[0].mxu0
      %v2810 = vpop.f32.mrb[0].mxu0
      %v2811 = vadd.f32 0.0, %v2810
      %v2812 = vpop.f32.mrb[0].mxu0
      %2813 = vmatprep.mubr.bf16.mxu0 0
      %2814 = vmatmul.mubr.bf16.gmra.mrb[0].mxu0 %v2665
      %v2815 = vpop.f32.mrb[0].mxu0
      %v2816 = vadd.f32 0.0, %v2815
      %v2817 = vpop.f32.mrb[0].mxu0
      %v2818 = vpop.f32.mrb[0].mxu0
      %v2819 = vadd.f32 0.0, %v2818
      %v2820 = vpop.f32.mrb[0].mxu0
      %2821 = vmatprep.mubr.bf16.mxu0 0
      %2822 = vmatmul.mubr.bf16.gmra.mrb[0].mxu0 %v2668
      %v2823 = vpop.f32.mrb[0].mxu0
      %v2824 = vadd.f32 0.0, %v2823
      %v2825 = vpop.f32.mrb[0].mxu0
      %v2826 = vpop.f32.mrb[0].mxu0
      %v2827 = vadd.f32 0.0, %v2826
      %v2828 = vpop.f32.mrb[0].mxu0
      %2829 = vmatprep.mubr.bf16.mxu0 0
      %2830 = vmatmul.mubr.bf16.gmra.mrb[0].mxu0 %v2671
      %v2831 = vpop.f32.mrb[0].mxu0
      %v2832 = vadd.f32 0.0, %v2831
      %v2833 = vpop.f32.mrb[0].mxu0
      %v2834 = vpop.f32.mrb[0].mxu0
      %v2835 = vadd.f32 0.0, %v2834
      %v2836 = vpop.f32.mrb[0].mxu0
      %2837 = vmatprep.mubr.bf16.mxu0 0
      %2838 = vmatmul.mubr.bf16.gmra.mrb[0].mxu0 %v2674
      %v2839 = vpop.f32.mrb[0].mxu0
      %v2840 = vadd.f32 0.0, %v2839
      %v2841 = vpop.f32.mrb[0].mxu0
      %v2842 = vpop.f32.mrb[0].mxu0
      %v2843 = vadd.f32 0.0, %v2842
      %v2844 = vpop.f32.mrb[0].mxu0
      %2845 = vmatprep.mubr.bf16.mxu0 0
      %2846 = vmatmul.mubr.bf16.gmra.mrb[0].mxu0 %v2677
      %v2847 = vpop.f32.mrb[0].mxu0
      %v2848 = vadd.f32 0.0, %v2847
      %v2849 = vpop.f32.mrb[0].mxu0
      %v2850 = vpop.f32.mrb[0].mxu0
      %v2851 = vadd.f32 0.0, %v2850
      %v2852 = vpop.f32.mrb[0].mxu0
      %2853 = vmatprep.mubr.bf16.mxu0 0
      %2854 = vmatmul.mubr.bf16.gmra.mrb[0].mxu0 %v2680
      %v2855 = vpop.f32.mrb[0].mxu0
      %v2856 = vadd.f32 0.0, %v2855
      %v2857 = vpop.f32.mrb[0].mxu0
      %v2858 = vpop.f32.mrb[0].mxu0
      %v2859 = vadd.f32 0.0, %v2858
      %v2860 = vpop.f32.mrb[0].mxu0
      %2861 = vdwg.mxu0
      %v2862 = vadd.f32 %v2536, %v2720
      %v2863 = vadd.f32 %v2537, %v2723
      %v2864 = vadd.f32 %v2538, %v2728
      %v2865 = vadd.f32 %v2539, %v2731
      %v2866 = vadd.f32 %v2540, %v2736
      %v2867 = vadd.f32 %v2541, %v2739
      %v2868 = vadd.f32 %v2542, %v2744
      %v2869 = vadd.f32 %v2543, %v2747
      %v2870 = vadd.f32 %v2544, %v2752
      %v2871 = vadd.f32 %v2545, %v2755
      %v2872 = vadd.f32 %v2546, %v2760
      %v2873 = vadd.f32 %v2547, %v2763
      %v2874 = vadd.f32 %v2548, %v2768
      %v2875 = vadd.f32 %v2549, %v2771
      %v2876 = vadd.f32 %v2550, %v2776
      %v2877 = vadd.f32 %v2551, %v2779
      %v2878 = vadd.f32 %v2552, %v2784
      %v2879 = vadd.f32 %v2553, %v2787
      %v2880 = vadd.f32 %v2554, %v2792
      %v2881 = vadd.f32 %v2555, %v2795
      %v2882 = vadd.f32 %v2556, %v2800
      %v2883 = vadd.f32 %v2557, %v2803
      %v2884 = vadd.f32 %v2558, %v2808
      %v2885 = vadd.f32 %v2559, %v2811
      %v2886 = vadd.f32 %v2560, %v2816
      %v2887 = vadd.f32 %v2561, %v2819
      %v2888 = vadd.f32 %v2562, %v2824
      %v2889 = vadd.f32 %v2563, %v2827
      %v2890 = vadd.f32 %v2564, %v2832
      %v2891 = vadd.f32 %v2565, %v2835
      %v2892 = vadd.f32 %v2566, %v2840
      %v2893 = vadd.f32 %v2567, %v2843
      %v2894 = vadd.f32 %v2568, %v2848
      %v2895 = vadd.f32 %v2569, %v2851
      %v2896 = vadd.f32 %v2570, %v2856
      %v2897 = vadd.f32 %v2571, %v2859
      %v2898 = vld [vmem:[%s273 + $0x26] sm:$0xff]
      %v2899 = vld [vmem:[%s273 + $0x2e] sm:$0xff]
      %v2900 = vld [vmem:[%s273 + $0x36] sm:$0xff]
      %v2901 = vld [vmem:[%s273 + $0x3e] sm:$0xff]
      %v2902 = vld [vmem:[%s273 + $0x46] sm:$0xff]
      %v2903 = vld [vmem:[%s273 + $0x4e] sm:$0xff]
      %v2904 = vld [vmem:[%s273 + $0x56] sm:$0xff]
      %v2905 = vld [vmem:[%s273 + $0x5e] sm:$0xff]
      %v2906 = vld [vmem:[%s273 + $0x66] sm:$0xff]
      %v2907 = vld [vmem:[%s273 + $0x6e] sm:$0xff]
      %v2908 = vld [vmem:[%s273 + $0x76] sm:$0xff]
      %v2909 = vld [vmem:[%s273 + $0x7e] sm:$0xff]
      %v2910 = vld [vmem:[%s273 + $0x86] sm:$0xff]
      %v2911 = vld [vmem:[%s273 + $0x8e] sm:$0xff]
      %v2912 = vld [vmem:[%s273 + $0x96] sm:$0xff]
      %v2913 = vld [vmem:[%s273 + $0x9e] sm:$0xff]
      %v2914 = vld [vmem:[%s273 + $0xa6] sm:$0xff]
      %v2915 = vld [vmem:[%s273 + $0xae] sm:$0xff]
      %v2916 = vld [vmem:[%s273 + $0xb6] sm:$0xff]
      %v2917 = vld [vmem:[%s273 + $0xbe] sm:$0xff]
      %v2918 = vld [vmem:[%s273 + $0xc6] sm:$0xff]
      %v2919 = vld [vmem:[%s273 + $0xce] sm:$0xff]
      %v2920 = vld [vmem:[%s273 + $0xd6] sm:$0xff]
      %v2921 = vld [vmem:[%s273 + $0xde] sm:$0xff]
      %v2922 = vld [vmem:[%s273 + $0xe6] sm:$0xff]
      %v2923 = vld [vmem:[%s273 + $0xee] sm:$0xff]
      %v2924 = vld [vmem:[%s273 + $0xf6] sm:$0xff]
      %v2925 = vld [vmem:[%s273 + $0xfe] sm:$0xff]
      %v2926 = vld [vmem:[%s273 + $0x106] sm:$0xff]
      %v2927 = vld [vmem:[%s273 + $0x10e] sm:$0xff]
      %v2928 = vld [vmem:[%s273 + $0x116] sm:$0xff]
      %v2929 = vld [vmem:[%s273 + $0x11e] sm:$0xff]
      %v2930 = vld [vmem:[%s273 + $0x126] sm:$0xff]
      %v2931 = vld [vmem:[%s273 + $0x12e] sm:$0xff]
      %v2932 = vld [vmem:[%s273 + $0x136] sm:$0xff]
      %v2933 = vld [vmem:[%s273 + $0x13e] sm:$0xff]
      %v2934 = vpack.c.bf16 %v2899, %v2898
      %v2935 = vpack.c.bf16 %v2901, %v2900
      %v2936 = vpack.c.bf16 %v2903, %v2902
      %v2937 = vpack.c.bf16 %v2905, %v2904
      %v2938 = vpack.c.bf16 %v2907, %v2906
      %v2939 = vpack.c.bf16 %v2909, %v2908
      %v2940 = vpack.c.bf16 %v2911, %v2910
      %v2941 = vpack.c.bf16 %v2913, %v2912
      %v2942 = vpack.c.bf16 %v2915, %v2914
      %v2943 = vpack.c.bf16 %v2917, %v2916
      %v2944 = vpack.c.bf16 %v2919, %v2918
      %v2945 = vpack.c.bf16 %v2921, %v2920
      %v2946 = vpack.c.bf16 %v2923, %v2922
      %v2947 = vpack.c.bf16 %v2925, %v2924
      %v2948 = vpack.c.bf16 %v2927, %v2926
      %v2949 = vpack.c.bf16 %v2929, %v2928
      %v2950 = vpack.c.bf16 %v2931, %v2930
      %v2951 = vpack.c.bf16 %v2933, %v2932
      %s2952 = scalar_lea.vmem %s1, 16
      %v2953 = vld [vmem:[%s2952] sm:$0x3]
      %v2955 = vsel %vm469, %v2934, 0
      %v2958 = vsel %vm469, %v2935, 0
      %v2961 = vsel %vm469, %v2936, 0
      %v2964 = vsel %vm469, %v2937, 0
      %v2967 = vsel %vm469, %v2938, 0
      %v2970 = vsel %vm469, %v2939, 0
      %v2973 = vsel %vm469, %v2940, 0
      %v2976 = vsel %vm469, %v2941, 0
      %v2979 = vsel %vm469, %v2942, 0
      %v2982 = vsel %vm469, %v2943, 0
      %v2985 = vsel %vm469, %v2944, 0
      %v2988 = vsel %vm469, %v2945, 0
      %v2991 = vsel %vm469, %v2946, 0
      %v2994 = vsel %vm469, %v2947, 0
      %v2997 = vsel %vm469, %v2948, 0
      %v3000 = vsel %vm469, %v2949, 0
      %v3003 = vsel %vm469, %v2950, 0
      %v3006 = vsel %vm469, %v2951, 0
      %v3009 = vand.u32 %v2953, %v527
      %3011 = vmatprep.subr.bf16.mxu0 0
      %3012 = vmatpush1.bf16.msra.mxu0 %v3009
      %3013 = vmatprep.subr.bf16.mxu0 0
      %3014 = vmatpush1.bf16.msra.mxu0 0
      %3015 = vmatprep.subr.bf16.mxu0 0
      %3016 = vmatpush1.bf16.msra.mxu0 0
      %3017 = vmatprep.subr.bf16.mxu0 0
      %3018 = vmatpush1.bf16.msra.mxu0 0
      %3019 = vmatprep.subr.bf16.mxu0 0
      %3020 = vmatpush1.bf16.msra.mxu0 0
      %3021 = vmatprep.subr.bf16.mxu0 0
      %3022 = vmatpush1.bf16.msra.mxu0 0
      %3023 = vmatprep.subr.bf16.mxu0 0
      %3024 = vmatpush1.bf16.msra.mxu0 0
      %3025 = vmatprep.subr.bf16.mxu0 0
      %3026 = vmatpush1.bf16.msra.mxu0 0
      %3027 = vmatprep.subr.bf16.mxu0 0
      %3028 = vmatpush1.bf16.msra.mxu0 0
      %3029 = vmatprep.subr.bf16.mxu0 0
      %3030 = vmatpush1.bf16.msra.mxu0 0
      %3031 = vmatprep.subr.bf16.mxu0 0
      %3032 = vmatpush1.bf16.msra.mxu0 0
      %3033 = vmatprep.subr.bf16.mxu0 0
      %3034 = vmatpush1.bf16.msra.mxu0 0
      %3035 = vmatprep.subr.bf16.mxu0 0
      %3036 = vmatpush1.bf16.msra.mxu0 0
      %3037 = vmatprep.subr.bf16.mxu0 0
      %3038 = vmatpush1.bf16.msra.mxu0 0
      %3039 = vmatprep.subr.bf16.mxu0 0
      %3040 = vmatpush1.bf16.msra.mxu0 0
      %3041 = vmatprep.subr.bf16.mxu0 0
      %3042 = vmatpush1.bf16.msra.mxu0 0
      %3043 = vmatprep.mubr.bf16.mxu0 0
      %3044 = vmatmul.mubr.bf16.gmra.mrb[0].mxu0 %v2955
      %v3045 = vpop.f32.mrb[0].mxu0
      %v3046 = vadd.f32 0.0, %v3045
      %v3047 = vpop.f32.mrb[0].mxu0
      %v3048 = vpop.f32.mrb[0].mxu0
      %v3049 = vadd.f32 0.0, %v3048
      %v3050 = vpop.f32.mrb[0].mxu0
      %3051 = vmatprep.mubr.bf16.mxu0 0
      %3052 = vmatmul.mubr.bf16.gmra.mrb[0].mxu0 %v2958
      %v3053 = vpop.f32.mrb[0].mxu0
      %v3054 = vadd.f32 0.0, %v3053
      %v3055 = vpop.f32.mrb[0].mxu0
      %v3056 = vpop.f32.mrb[0].mxu0
      %v3057 = vadd.f32 0.0, %v3056
      %v3058 = vpop.f32.mrb[0].mxu0
      %3059 = vmatprep.mubr.bf16.mxu0 0
      %3060 = vmatmul.mubr.bf16.gmra.mrb[0].mxu0 %v2961
      %v3061 = vpop.f32.mrb[0].mxu0
      %v3062 = vadd.f32 0.0, %v3061
      %v3063 = vpop.f32.mrb[0].mxu0
      %v3064 = vpop.f32.mrb[0].mxu0
      %v3065 = vadd.f32 0.0, %v3064
      %v3066 = vpop.f32.mrb[0].mxu0
      %3067 = vmatprep.mubr.bf16.mxu0 0
      %3068 = vmatmul.mubr.bf16.gmra.mrb[0].mxu0 %v2964
      %v3069 = vpop.f32.mrb[0].mxu0
      %v3070 = vadd.f32 0.0, %v3069
      %v3071 = vpop.f32.mrb[0].mxu0
      %v3072 = vpop.f32.mrb[0].mxu0
      %v3073 = vadd.f32 0.0, %v3072
      %v3074 = vpop.f32.mrb[0].mxu0
      %3075 = vmatprep.mubr.bf16.mxu0 0
      %3076 = vmatmul.mubr.bf16.gmra.mrb[0].mxu0 %v2967
      %v3077 = vpop.f32.mrb[0].mxu0
      %v3078 = vadd.f32 0.0, %v3077
      %v3079 = vpop.f32.mrb[0].mxu0
      %v3080 = vpop.f32.mrb[0].mxu0
      %v3081 = vadd.f32 0.0, %v3080
      %v3082 = vpop.f32.mrb[0].mxu0
      %3083 = vmatprep.mubr.bf16.mxu0 0
      %3084 = vmatmul.mubr.bf16.gmra.mrb[0].mxu0 %v2970
      %v3085 = vpop.f32.mrb[0].mxu0
      %v3086 = vadd.f32 0.0, %v3085
      %v3087 = vpop.f32.mrb[0].mxu0
      %v3088 = vpop.f32.mrb[0].mxu0
      %v3089 = vadd.f32 0.0, %v3088
      %v3090 = vpop.f32.mrb[0].mxu0
      %3091 = vmatprep.mubr.bf16.mxu0 0
      %3092 = vmatmul.mubr.bf16.gmra.mrb[0].mxu0 %v2973
      %v3093 = vpop.f32.mrb[0].mxu0
      %v3094 = vadd.f32 0.0, %v3093
      %v3095 = vpop.f32.mrb[0].mxu0
      %v3096 = vpop.f32.mrb[0].mxu0
      %v3097 = vadd.f32 0.0, %v3096
      %v3098 = vpop.f32.mrb[0].mxu0
      %3099 = vmatprep.mubr.bf16.mxu0 0
      %3100 = vmatmul.mubr.bf16.gmra.mrb[0].mxu0 %v2976
      %v3101 = vpop.f32.mrb[0].mxu0
      %v3102 = vadd.f32 0.0, %v3101
      %v3103 = vpop.f32.mrb[0].mxu0
      %v3104 = vpop.f32.mrb[0].mxu0
      %v3105 = vadd.f32 0.0, %v3104
      %v3106 = vpop.f32.mrb[0].mxu0
      %3107 = vmatprep.mubr.bf16.mxu0 0
      %3108 = vmatmul.mubr.bf16.gmra.mrb[0].mxu0 %v2979
      %v3109 = vpop.f32.mrb[0].mxu0
      %v3110 = vadd.f32 0.0, %v3109
      %v3111 = vpop.f32.mrb[0].mxu0
      %v3112 = vpop.f32.mrb[0].mxu0
      %v3113 = vadd.f32 0.0, %v3112
      %v3114 = vpop.f32.mrb[0].mxu0
      %3115 = vmatprep.mubr.bf16.mxu0 0
      %3116 = vmatmul.mubr.bf16.gmra.mrb[0].mxu0 %v2982
      %v3117 = vpop.f32.mrb[0].mxu0
      %v3118 = vadd.f32 0.0, %v3117
      %v3119 = vpop.f32.mrb[0].mxu0
      %v3120 = vpop.f32.mrb[0].mxu0
      %v3121 = vadd.f32 0.0, %v3120
      %v3122 = vpop.f32.mrb[0].mxu0
      %3123 = vmatprep.mubr.bf16.mxu0 0
      %3124 = vmatmul.mubr.bf16.gmra.mrb[0].mxu0 %v2985
      %v3125 = vpop.f32.mrb[0].mxu0
      %v3126 = vadd.f32 0.0, %v3125
      %v3127 = vpop.f32.mrb[0].mxu0
      %v3128 = vpop.f32.mrb[0].mxu0
      %v3129 = vadd.f32 0.0, %v3128
      %v3130 = vpop.f32.mrb[0].mxu0
      %3131 = vmatprep.mubr.bf16.mxu0 0
      %3132 = vmatmul.mubr.bf16.gmra.mrb[0].mxu0 %v2988
      %v3133 = vpop.f32.mrb[0].mxu0
      %v3134 = vadd.f32 0.0, %v3133
      %v3135 = vpop.f32.mrb[0].mxu0
      %v3136 = vpop.f32.mrb[0].mxu0
      %v3137 = vadd.f32 0.0, %v3136
      %v3138 = vpop.f32.mrb[0].mxu0
      %3139 = vmatprep.mubr.bf16.mxu0 0
      %3140 = vmatmul.mubr.bf16.gmra.mrb[0].mxu0 %v2991
      %v3141 = vpop.f32.mrb[0].mxu0
      %v3142 = vadd.f32 0.0, %v3141
      %v3143 = vpop.f32.mrb[0].mxu0
      %v3144 = vpop.f32.mrb[0].mxu0
      %v3145 = vadd.f32 0.0, %v3144
      %v3146 = vpop.f32.mrb[0].mxu0
      %3147 = vmatprep.mubr.bf16.mxu0 0
      %3148 = vmatmul.mubr.bf16.gmra.mrb[0].mxu0 %v2994
      %v3149 = vpop.f32.mrb[0].mxu0
      %v3150 = vadd.f32 0.0, %v3149
      %v3151 = vpop.f32.mrb[0].mxu0
      %v3152 = vpop.f32.mrb[0].mxu0
      %v3153 = vadd.f32 0.0, %v3152
      %v3154 = vpop.f32.mrb[0].mxu0
      %3155 = vmatprep.mubr.bf16.mxu0 0
      %3156 = vmatmul.mubr.bf16.gmra.mrb[0].mxu0 %v2997
      %v3157 = vpop.f32.mrb[0].mxu0
      %v3158 = vadd.f32 0.0, %v3157
      %v3159 = vpop.f32.mrb[0].mxu0
      %v3160 = vpop.f32.mrb[0].mxu0
      %v3161 = vadd.f32 0.0, %v3160
      %v3162 = vpop.f32.mrb[0].mxu0
      %3163 = vmatprep.mubr.bf16.mxu0 0
      %3164 = vmatmul.mubr.bf16.gmra.mrb[0].mxu0 %v3000
      %v3165 = vpop.f32.mrb[0].mxu0
      %v3166 = vadd.f32 0.0, %v3165
      %v3167 = vpop.f32.mrb[0].mxu0
      %v3168 = vpop.f32.mrb[0].mxu0
      %v3169 = vadd.f32 0.0, %v3168
      %v3170 = vpop.f32.mrb[0].mxu0
      %3171 = vmatprep.mubr.bf16.mxu0 0
      %3172 = vmatmul.mubr.bf16.gmra.mrb[0].mxu0 %v3003
      %v3173 = vpop.f32.mrb[0].mxu0
      %v3174 = vadd.f32 0.0, %v3173
      %v3175 = vpop.f32.mrb[0].mxu0
      %v3176 = vpop.f32.mrb[0].mxu0
      %v3177 = vadd.f32 0.0, %v3176
      %v3178 = vpop.f32.mrb[0].mxu0
      %3179 = vmatprep.mubr.bf16.mxu0 0
      %3180 = vmatmul.mubr.bf16.gmra.mrb[0].mxu0 %v3006
      %v3181 = vpop.f32.mrb[0].mxu0
      %v3182 = vadd.f32 0.0, %v3181
      %v3183 = vpop.f32.mrb[0].mxu0
      %v3184 = vpop.f32.mrb[0].mxu0
      %v3185 = vadd.f32 0.0, %v3184
      %v3186 = vpop.f32.mrb[0].mxu0
      %3187 = vdwg.mxu0
      %v3188 = vadd.f32 %v2862, %v3046
      %v3189 = vadd.f32 %v2863, %v3049
      %v3190 = vadd.f32 %v2864, %v3054
      %v3191 = vadd.f32 %v2865, %v3057
      %v3192 = vadd.f32 %v2866, %v3062
      %v3193 = vadd.f32 %v2867, %v3065
      %v3194 = vadd.f32 %v2868, %v3070
      %v3195 = vadd.f32 %v2869, %v3073
      %v3196 = vadd.f32 %v2870, %v3078
      %v3197 = vadd.f32 %v2871, %v3081
      %v3198 = vadd.f32 %v2872, %v3086
      %v3199 = vadd.f32 %v2873, %v3089
      %v3200 = vadd.f32 %v2874, %v3094
      %v3201 = vadd.f32 %v2875, %v3097
      %v3202 = vadd.f32 %v2876, %v3102
      %v3203 = vadd.f32 %v2877, %v3105
      %v3204 = vadd.f32 %v2878, %v3110
      %v3205 = vadd.f32 %v2879, %v3113
      %v3206 = vadd.f32 %v2880, %v3118
      %v3207 = vadd.f32 %v2881, %v3121
      %v3208 = vadd.f32 %v2882, %v3126
      %v3209 = vadd.f32 %v2883, %v3129
      %v3210 = vadd.f32 %v2884, %v3134
      %v3211 = vadd.f32 %v2885, %v3137
      %v3212 = vadd.f32 %v2886, %v3142
      %v3213 = vadd.f32 %v2887, %v3145
      %v3214 = vadd.f32 %v2888, %v3150
      %v3215 = vadd.f32 %v2889, %v3153
      %v3216 = vadd.f32 %v2890, %v3158
      %v3217 = vadd.f32 %v2891, %v3161
      %v3218 = vadd.f32 %v2892, %v3166
      %v3219 = vadd.f32 %v2893, %v3169
      %v3220 = vadd.f32 %v2894, %v3174
      %v3221 = vadd.f32 %v2895, %v3177
      %v3222 = vadd.f32 %v2896, %v3182
      %v3223 = vadd.f32 %v2897, %v3185
      %v3224 = vld [vmem:[%s2] sm:$0x1]
      %v3226 = vlaneseq
      %v3227 = vshrl.u32 %v3226, 7
      %v3228 = vsub.s32 0, %v3227
      %v3229 = vrot.slane %v3224, %v3228
      %v3231 = vadd.f32 %v3188, %v3229
      %v3232 = vadd.f32 %v3189, %v3229
      %v3233 = vadd.f32 %v3190, %v3229
      %v3234 = vadd.f32 %v3191, %v3229
      %v3235 = vadd.f32 %v3192, %v3229
      %v3236 = vadd.f32 %v3193, %v3229
      %v3237 = vadd.f32 %v3194, %v3229
      %v3238 = vadd.f32 %v3195, %v3229
      %v3239 = vadd.f32 %v3196, %v3229
      %v3240 = vadd.f32 %v3197, %v3229
      %v3241 = vadd.f32 %v3198, %v3229
      %v3242 = vadd.f32 %v3199, %v3229
      %v3243 = vadd.f32 %v3200, %v3229
      %v3244 = vadd.f32 %v3201, %v3229
      %v3245 = vadd.f32 %v3202, %v3229
      %v3246 = vadd.f32 %v3203, %v3229
      %v3247 = vadd.f32 %v3204, %v3229
      %v3248 = vadd.f32 %v3205, %v3229
      %v3249 = vadd.f32 %v3206, %v3229
      %v3250 = vadd.f32 %v3207, %v3229
      %v3251 = vadd.f32 %v3208, %v3229
      %v3252 = vadd.f32 %v3209, %v3229
      %v3253 = vadd.f32 %v3210, %v3229
      %v3254 = vadd.f32 %v3211, %v3229
      %v3255 = vadd.f32 %v3212, %v3229
      %v3256 = vadd.f32 %v3213, %v3229
      %v3257 = vadd.f32 %v3214, %v3229
      %v3258 = vadd.f32 %v3215, %v3229
      %v3259 = vadd.f32 %v3216, %v3229
      %v3260 = vadd.f32 %v3217, %v3229
      %v3261 = vadd.f32 %v3218, %v3229
      %v3262 = vadd.f32 %v3219, %v3229
      %v3263 = vadd.f32 %v3220, %v3229
      %v3264 = vadd.f32 %v3221, %v3229
      %v3265 = vadd.f32 %v3222, %v3229
      %v3266 = vadd.f32 %v3223, %v3229
      %v3267 = vmax.f32 %v3231, 0.0
      %v3268 = vmax.f32 %v3232, 0.0
      %v3269 = vmax.f32 %v3233, 0.0
      %v3270 = vmax.f32 %v3234, 0.0
      %v3271 = vmax.f32 %v3235, 0.0
      %v3272 = vmax.f32 %v3236, 0.0
      %v3273 = vmax.f32 %v3237, 0.0
      %v3274 = vmax.f32 %v3238, 0.0
      %v3275 = vmax.f32 %v3239, 0.0
      %v3276 = vmax.f32 %v3240, 0.0
      %v3277 = vmax.f32 %v3241, 0.0
      %v3278 = vmax.f32 %v3242, 0.0
      %v3279 = vmax.f32 %v3243, 0.0
      %v3280 = vmax.f32 %v3244, 0.0
      %v3281 = vmax.f32 %v3245, 0.0
      %v3282 = vmax.f32 %v3246, 0.0
      %v3283 = vmax.f32 %v3247, 0.0
      %v3284 = vmax.f32 %v3248, 0.0
      %v3285 = vmax.f32 %v3249, 0.0
      %v3286 = vmax.f32 %v3250, 0.0
      %v3287 = vmax.f32 %v3251, 0.0
      %v3288 = vmax.f32 %v3252, 0.0
      %v3289 = vmax.f32 %v3253, 0.0
      %v3290 = vmax.f32 %v3254, 0.0
      %v3291 = vmax.f32 %v3255, 0.0
      %v3292 = vmax.f32 %v3256, 0.0
      %v3293 = vmax.f32 %v3257, 0.0
      %v3294 = vmax.f32 %v3258, 0.0
      %v3295 = vmax.f32 %v3259, 0.0
      %v3296 = vmax.f32 %v3260, 0.0
      %v3297 = vmax.f32 %v3261, 0.0
      %v3298 = vmax.f32 %v3262, 0.0
      %v3299 = vmax.f32 %v3263, 0.0
      %v3300 = vmax.f32 %v3264, 0.0
      %v3301 = vmax.f32 %v3265, 0.0
      %v3302 = vmax.f32 %v3266, 0.0
      %3304 = vset.pattern.permute.xlu0 0
      %3305 = vperm.xlu0 %3304, %v280
      %v3306 = vpop.permute.xlu0 %3305
      %3309 = vset.pattern.permute.xlu0 0
      %3310 = vperm.xlu0 %3309, %v281
      %v3311 = vpop.permute.xlu0 %3310
      %3314 = vset.pattern.permute.xlu0 0
      %3315 = vperm.xlu0 %3314, %v282
      %v3316 = vpop.permute.xlu0 %3315
      %3319 = vset.pattern.permute.xlu0 0
      %3320 = vperm.xlu0 %3319, %v283
      %v3321 = vpop.permute.xlu0 %3320
      %3324 = vset.pattern.permute.xlu0 0
      %3325 = vperm.xlu0 %3324, %v284
      %v3326 = vpop.permute.xlu0 %3325
      %3329 = vset.pattern.permute.xlu0 0
      %3330 = vperm.xlu0 %3329, %v285
      %v3331 = vpop.permute.xlu0 %3330
      %3334 = vset.pattern.permute.xlu0 0
      %3335 = vperm.xlu0 %3334, %v286
      %v3336 = vpop.permute.xlu0 %3335
      %3339 = vset.pattern.permute.xlu0 0
      %3340 = vperm.xlu0 %3339, %v287
      %v3341 = vpop.permute.xlu0 %3340
      %3344 = vset.pattern.permute.xlu0 0
      %3345 = vperm.xlu0 %3344, %v288
      %v3346 = vpop.permute.xlu0 %3345
      %3349 = vset.pattern.permute.xlu0 0
      %3350 = vperm.xlu0 %3349, %v289
      %v3351 = vpop.permute.xlu0 %3350
      %3354 = vset.pattern.permute.xlu0 0
      %3355 = vperm.xlu0 %3354, %v290
      %v3356 = vpop.permute.xlu0 %3355
      %3359 = vset.pattern.permute.xlu0 0
      %3360 = vperm.xlu0 %3359, %v291
      %v3361 = vpop.permute.xlu0 %3360
      %3364 = vset.pattern.permute.xlu0 0
      %3365 = vperm.xlu0 %3364, %v292
      %v3366 = vpop.permute.xlu0 %3365
      %3369 = vset.pattern.permute.xlu0 0
      %3370 = vperm.xlu0 %3369, %v293
      %v3371 = vpop.permute.xlu0 %3370
      %3374 = vset.pattern.permute.xlu0 0
      %3375 = vperm.xlu0 %3374, %v294
      %v3376 = vpop.permute.xlu0 %3375
      %3379 = vset.pattern.permute.xlu0 0
      %3380 = vperm.xlu0 %3379, %v295
      %v3381 = vpop.permute.xlu0 %3380
      %3384 = vset.pattern.permute.xlu0 0
      %3385 = vperm.xlu0 %3384, %v296
      %v3386 = vpop.permute.xlu0 %3385
      %3389 = vset.pattern.permute.xlu0 0
      %3390 = vperm.xlu0 %3389, %v297
      %v3391 = vpop.permute.xlu0 %3390
      %3394 = vset.pattern.permute.xlu0 0
      %3395 = vperm.xlu0 %3394, %v298
      %v3396 = vpop.permute.xlu0 %3395
      %3399 = vset.pattern.permute.xlu0 0
      %3400 = vperm.xlu0 %3399, %v299
      %v3401 = vpop.permute.xlu0 %3400
      %3404 = vset.pattern.permute.xlu0 0
      %3405 = vperm.xlu0 %3404, %v300
      %v3406 = vpop.permute.xlu0 %3405
      %3409 = vset.pattern.permute.xlu0 0
      %3410 = vperm.xlu0 %3409, %v301
      %v3411 = vpop.permute.xlu0 %3410
      %3414 = vset.pattern.permute.xlu0 0
      %3415 = vperm.xlu0 %3414, %v302
      %v3416 = vpop.permute.xlu0 %3415
      %3419 = vset.pattern.permute.xlu0 0
      %3420 = vperm.xlu0 %3419, %v303
      %v3421 = vpop.permute.xlu0 %3420
      %3424 = vset.pattern.permute.xlu0 0
      %3425 = vperm.xlu0 %3424, %v304
      %v3426 = vpop.permute.xlu0 %3425
      %3429 = vset.pattern.permute.xlu0 0
      %3430 = vperm.xlu0 %3429, %v305
      %v3431 = vpop.permute.xlu0 %3430
      %3434 = vset.pattern.permute.xlu0 0
      %3435 = vperm.xlu0 %3434, %v306
      %v3436 = vpop.permute.xlu0 %3435
      %3439 = vset.pattern.permute.xlu0 0
      %3440 = vperm.xlu0 %3439, %v307
      %v3441 = vpop.permute.xlu0 %3440
      %3444 = vset.pattern.permute.xlu0 0
      %3445 = vperm.xlu0 %3444, %v308
      %v3446 = vpop.permute.xlu0 %3445
      %3449 = vset.pattern.permute.xlu0 0
      %3450 = vperm.xlu0 %3449, %v309
      %v3451 = vpop.permute.xlu0 %3450
      %3454 = vset.pattern.permute.xlu0 0
      %3455 = vperm.xlu0 %3454, %v310
      %v3456 = vpop.permute.xlu0 %3455
      %3459 = vset.pattern.permute.xlu0 0
      %3460 = vperm.xlu0 %3459, %v311
      %v3461 = vpop.permute.xlu0 %3460
      %3464 = vset.pattern.permute.xlu0 0
      %3465 = vperm.xlu0 %3464, %v312
      %v3466 = vpop.permute.xlu0 %3465
      %3469 = vset.pattern.permute.xlu0 0
      %3470 = vperm.xlu0 %3469, %v313
      %v3471 = vpop.permute.xlu0 %3470
      %3474 = vset.pattern.permute.xlu0 0
      %3475 = vperm.xlu0 %3474, %v314
      %v3476 = vpop.permute.xlu0 %3475
      %3479 = vset.pattern.permute.xlu0 0
      %3480 = vperm.xlu0 %3479, %v315
      %v3481 = vpop.permute.xlu0 %3480
      %v3483 = vmul.f32 %v3267, %v3306
      %v3484 = vmul.f32 %v3268, %v3311
      %v3485 = vmul.f32 %v3269, %v3316
      %v3486 = vmul.f32 %v3270, %v3321
      %v3487 = vmul.f32 %v3271, %v3326
      %v3488 = vmul.f32 %v3272, %v3331
      %v3489 = vmul.f32 %v3273, %v3336
      %v3490 = vmul.f32 %v3274, %v3341
      %v3491 = vmul.f32 %v3275, %v3346
      %v3492 = vmul.f32 %v3276, %v3351
      %v3493 = vmul.f32 %v3277, %v3356
      %v3494 = vmul.f32 %v3278, %v3361
      %v3495 = vmul.f32 %v3279, %v3366
      %v3496 = vmul.f32 %v3280, %v3371
      %v3497 = vmul.f32 %v3281, %v3376
      %v3498 = vmul.f32 %v3282, %v3381
      %v3499 = vmul.f32 %v3283, %v3386
      %v3500 = vmul.f32 %v3284, %v3391
      %v3501 = vmul.f32 %v3285, %v3396
      %v3502 = vmul.f32 %v3286, %v3401
      %v3503 = vmul.f32 %v3287, %v3406
      %v3504 = vmul.f32 %v3288, %v3411
      %v3505 = vmul.f32 %v3289, %v3416
      %v3506 = vmul.f32 %v3290, %v3421
      %v3507 = vmul.f32 %v3291, %v3426
      %v3508 = vmul.f32 %v3292, %v3431
      %v3509 = vmul.f32 %v3293, %v3436
      %v3510 = vmul.f32 %v3294, %v3441
      %v3511 = vmul.f32 %v3295, %v3446
      %v3512 = vmul.f32 %v3296, %v3451
      %v3513 = vmul.f32 %v3297, %v3456
      %v3514 = vmul.f32 %v3298, %v3461
      %v3515 = vmul.f32 %v3299, %v3466
      %v3516 = vmul.f32 %v3300, %v3471
      %v3517 = vmul.f32 %v3301, %v3476
      %v3518 = vmul.f32 %v3302, %v3481
      %3519 = vst.msk [vmem:[#allocation2 + $0x13] sm:$0xff] %vm316, %v3483
      %3520 = vst.msk [vmem:[#allocation2 + $0x1b] sm:$0xff] %vm316, %v3484
      %3521 = vst.msk [vmem:[#allocation2 + $0x23] sm:$0xff] %vm316, %v3485
      %3522 = vst.msk [vmem:[#allocation2 + $0x2b] sm:$0xff] %vm316, %v3486
      %3523 = vst.msk [vmem:[#allocation2 + $0x33] sm:$0xff] %vm316, %v3487
      %3524 = vst.msk [vmem:[#allocation2 + $0x3b] sm:$0xff] %vm316, %v3488
      %3525 = vst.msk [vmem:[#allocation2 + $0x43] sm:$0xff] %vm316, %v3489
      %3526 = vst.msk [vmem:[#allocation2 + $0x4b] sm:$0xff] %vm316, %v3490
      %3527 = vst.msk [vmem:[#allocation2 + $0x53] sm:$0xff] %vm316, %v3491
      %3528 = vst.msk [vmem:[#allocation2 + $0x5b] sm:$0xff] %vm316, %v3492
      %3529 = vst.msk [vmem:[#allocation2 + $0x63] sm:$0xff] %vm316, %v3493
      %3530 = vst.msk [vmem:[#allocation2 + $0x6b] sm:$0xff] %vm316, %v3494
      %3531 = vst.msk [vmem:[#allocation2 + $0x73] sm:$0xff] %vm316, %v3495
      %3532 = vst.msk [vmem:[#allocation2 + $0x7b] sm:$0xff] %vm316, %v3496
      %3533 = vst.msk [vmem:[#allocation2 + $0x83] sm:$0xff] %vm316, %v3497
      %3534 = vst.msk [vmem:[#allocation2 + $0x8b] sm:$0xff] %vm316, %v3498
      %3535 = vst.msk [vmem:[#allocation2 + $0x93] sm:$0xff] %vm316, %v3499
      %3536 = vst.msk [vmem:[#allocation2 + $0x9b] sm:$0xff] %vm316, %v3500
      %3537 = vst.msk [vmem:[#allocation2 + $0xa3] sm:$0xff] %vm316, %v3501
      %3538 = vst.msk [vmem:[#allocation2 + $0xab] sm:$0xff] %vm316, %v3502
      %3539 = vst.msk [vmem:[#allocation2 + $0xb3] sm:$0xff] %vm316, %v3503
      %3540 = vst.msk [vmem:[#allocation2 + $0xbb] sm:$0xff] %vm316, %v3504
      %3541 = vst.msk [vmem:[#allocation2 + $0xc3] sm:$0xff] %vm316, %v3505
      %3542 = vst.msk [vmem:[#allocation2 + $0xcb] sm:$0xff] %vm316, %v3506
      %3543 = vst.msk [vmem:[#allocation2 + $0xd3] sm:$0xff] %vm316, %v3507
      %3544 = vst.msk [vmem:[#allocation2 + $0xdb] sm:$0xff] %vm316, %v3508
      %3545 = vst.msk [vmem:[#allocation2 + $0xe3] sm:$0xff] %vm316, %v3509
      %3546 = vst.msk [vmem:[#allocation2 + $0xeb] sm:$0xff] %vm316, %v3510
      %3547 = vst.msk [vmem:[#allocation2 + $0xf3] sm:$0xff] %vm316, %v3511
      %3548 = vst.msk [vmem:[#allocation2 + $0xfb] sm:$0xff] %vm316, %v3512
      %3549 = vst.msk [vmem:[#allocation2 + $0x103] sm:$0xff] %vm316, %v3513
      %3550 = vst.msk [vmem:[#allocation2 + $0x10b] sm:$0xff] %vm316, %v3514
      %3551 = vst.msk [vmem:[#allocation2 + $0x113] sm:$0xff] %vm316, %v3515
      %3552 = vst.msk [vmem:[#allocation2 + $0x11b] sm:$0xff] %vm316, %v3516
      %3553 = vst.msk [vmem:[#allocation2 + $0x123] sm:$0xff] %vm316, %v3517
      %3554 = vst.msk [vmem:[#allocation2 + $0x12b] sm:$0xff] %vm316, %v3518
      %3555 = vst.msk [vmem:[#allocation3] sm:$0xff] %vm316, 0.0
      %3556 = vst.msk [vmem:[#allocation3 + $0x8] sm:$0xff] %vm316, 0.0
      %3557 = vst.msk [vmem:[#allocation3 + $0x10] sm:$0xff] %vm316, 0.0
      %3558 = vst.msk [vmem:[#allocation3 + $0x18] sm:$0xff] %vm316, 0.0
      %3559 = vst.msk [vmem:[#allocation3 + $0x20] sm:$0xff] %vm316, 0.0
      %3560 = vst.msk [vmem:[#allocation3 + $0x28] sm:$0xff] %vm316, 0.0
      %3561 = vst.msk [vmem:[#allocation3 + $0x30] sm:$0xff] %vm316, 0.0
      %3562 = vst.msk [vmem:[#allocation3 + $0x38] sm:$0xff] %vm316, 0.0
      %3563 = vst.msk [vmem:[#allocation3 + $0x40] sm:$0xff] %vm316, 0.0
      %3564 = vst.msk [vmem:[#allocation3 + $0x48] sm:$0xff] %vm316, 0.0
      %3565 = vst.msk [vmem:[#allocation3 + $0x50] sm:$0xff] %vm316, 0.0
      %3566 = vst.msk [vmem:[#allocation3 + $0x58] sm:$0xff] %vm316, 0.0
      %3567 = vst.msk [vmem:[#allocation3 + $0x60] sm:$0xff] %vm316, 0.0
      %3568 = vst.msk [vmem:[#allocation3 + $0x68] sm:$0xff] %vm316, 0.0
      %3569 = vst.msk [vmem:[#allocation3 + $0x70] sm:$0xff] %vm316, 0.0
      %3570 = vst.msk [vmem:[#allocation3 + $0x78] sm:$0xff] %vm316, 0.0
      %3571 = vst.msk [vmem:[#allocation3 + $0x80] sm:$0xff] %vm316, 0.0
      %3572 = vst.msk [vmem:[#allocation3 + $0x88] sm:$0xff] %vm316, 0.0
      %3573 = vst.msk [vmem:[#allocation3 + $0x90] sm:$0xff] %vm316, 0.0
      %3574 = vst.msk [vmem:[#allocation3 + $0x98] sm:$0xff] %vm316, 0.0
      %3575 = vst.msk [vmem:[#allocation3 + $0xa0] sm:$0xff] %vm316, 0.0
      %3576 = vst.msk [vmem:[#allocation3 + $0xa8] sm:$0xff] %vm316, 0.0
      %3577 = vst.msk [vmem:[#allocation3 + $0xb0] sm:$0xff] %vm316, 0.0
      %3578 = vst.msk [vmem:[#allocation3 + $0xb8] sm:$0xff] %vm316, 0.0
      %3579 = vst.msk [vmem:[#allocation3 + $0xc0] sm:$0xff] %vm316, 0.0
      %3580 = vst.msk [vmem:[#allocation3 + $0xc8] sm:$0xff] %vm316, 0.0
      %3581 = vst.msk [vmem:[#allocation3 + $0xd0] sm:$0xff] %vm316, 0.0
      %3582 = vst.msk [vmem:[#allocation3 + $0xd8] sm:$0xff] %vm316, 0.0
      %3583 = vst.msk [vmem:[#allocation3 + $0xe0] sm:$0xff] %vm316, 0.0
      %3584 = vst.msk [vmem:[#allocation3 + $0xe8] sm:$0xff] %vm316, 0.0
      %3585 = vst.msk [vmem:[#allocation3 + $0xf0] sm:$0xff] %vm316, 0.0
      %3586 = vst.msk [vmem:[#allocation3 + $0xf8] sm:$0xff] %vm316, 0.0
      %3587 = vst.msk [vmem:[#allocation3 + $0x100] sm:$0xff] %vm316, 0.0
      %3588 = vst.msk [vmem:[#allocation3 + $0x108] sm:$0xff] %vm316, 0.0
      %3589 = vst.msk [vmem:[#allocation3 + $0x110] sm:$0xff] %vm316, 0.0
      %3590 = vst.msk [vmem:[#allocation3 + $0x118] sm:$0xff] %vm316, 0.0
      %3591 = vst.msk [vmem:[#allocation3 + $0x120] sm:$0xff] %vm316, 0.0
      %3592 = vst.msk [vmem:[#allocation3 + $0x128] sm:$0xff] %vm316, 0.0
      %3593 = vst.msk [vmem:[#allocation3 + $0x130] sm:$0xff] %vm316, 0.0
      %3594 = vst.msk [vmem:[#allocation3 + $0x138] sm:$0xff] %vm316, 0.0
      %3595 = vst.msk [vmem:[#allocation3 + $0x140] sm:$0xff] %vm316, 0.0
      %v3596 = vld [vmem:[#allocation2] sm:$0xff]
      %v3597 = vld [vmem:[#allocation2 + $0x8] sm:$0xff]
      %v3598 = vld [vmem:[#allocation2 + $0x10] sm:$0xff]
      %v3599 = vld [vmem:[#allocation2 + $0x18] sm:$0xff]
      %v3600 = vld [vmem:[#allocation2 + $0x20] sm:$0xff]
      %v3601 = vld [vmem:[#allocation2 + $0x28] sm:$0xff]
      %v3602 = vld [vmem:[#allocation2 + $0x30] sm:$0xff]
      %v3603 = vld [vmem:[#allocation2 + $0x38] sm:$0xff]
      %v3604 = vld [vmem:[#allocation2 + $0x40] sm:$0xff]
      %v3605 = vld [vmem:[#allocation2 + $0x48] sm:$0xff]
      %v3606 = vld [vmem:[#allocation2 + $0x50] sm:$0xff]
      %v3607 = vld [vmem:[#allocation2 + $0x58] sm:$0xff]
      %v3608 = vld [vmem:[#allocation2 + $0x60] sm:$0xff]
      %v3609 = vld [vmem:[#allocation2 + $0x68] sm:$0xff]
      %v3610 = vld [vmem:[#allocation2 + $0x70] sm:$0xff]
      %v3611 = vld [vmem:[#allocation2 + $0x78] sm:$0xff]
      %v3612 = vld [vmem:[#allocation2 + $0x80] sm:$0xff]
      %v3613 = vld [vmem:[#allocation2 + $0x88] sm:$0xff]
      %v3614 = vld [vmem:[#allocation2 + $0x90] sm:$0xff]
      %v3615 = vld [vmem:[#allocation2 + $0x98] sm:$0xff]
      %v3616 = vld [vmem:[#allocation2 + $0xa0] sm:$0xff]
      %v3617 = vld [vmem:[#allocation2 + $0xa8] sm:$0xff]
      %v3618 = vld [vmem:[#allocation2 + $0xb0] sm:$0xff]
      %v3619 = vld [vmem:[#allocation2 + $0xb8] sm:$0xff]
      %v3620 = vld [vmem:[#allocation2 + $0xc0] sm:$0xff]
      %v3621 = vld [vmem:[#allocation2 + $0xc8] sm:$0xff]
      %v3622 = vld [vmem:[#allocation2 + $0xd0] sm:$0xff]
      %v3623 = vld [vmem:[#allocation2 + $0xd8] sm:$0xff]
      %v3624 = vld [vmem:[#allocation2 + $0xe0] sm:$0xff]
      %v3625 = vld [vmem:[#allocation2 + $0xe8] sm:$0xff]
      %v3626 = vld [vmem:[#allocation2 + $0xf0] sm:$0xff]
      %v3627 = vld [vmem:[#allocation2 + $0xf8] sm:$0xff]
      %v3628 = vld [vmem:[#allocation2 + $0x100] sm:$0xff]
      %v3629 = vld [vmem:[#allocation2 + $0x108] sm:$0xff]
      %v3630 = vld [vmem:[#allocation2 + $0x110] sm:$0xff]
      %v3631 = vld [vmem:[#allocation2 + $0x118] sm:$0xff]
      %v3632 = vpack.c.bf16 %v3597, %v3596
      %v3633 = vpack.c.bf16 %v3599, %v3598
      %v3634 = vpack.c.bf16 %v3601, %v3600
      %v3635 = vpack.c.bf16 %v3603, %v3602
      %v3636 = vpack.c.bf16 %v3605, %v3604
      %v3637 = vpack.c.bf16 %v3607, %v3606
      %v3638 = vpack.c.bf16 %v3609, %v3608
      %v3639 = vpack.c.bf16 %v3611, %v3610
      %v3640 = vpack.c.bf16 %v3613, %v3612
      %v3641 = vpack.c.bf16 %v3615, %v3614
      %v3642 = vpack.c.bf16 %v3617, %v3616
      %v3643 = vpack.c.bf16 %v3619, %v3618
      %v3644 = vpack.c.bf16 %v3621, %v3620
      %v3645 = vpack.c.bf16 %v3623, %v3622
      %v3646 = vpack.c.bf16 %v3625, %v3624
      %v3647 = vpack.c.bf16 %v3627, %v3626
      %v3648 = vpack.c.bf16 %v3629, %v3628
      %v3649 = vpack.c.bf16 %v3631, %v3630
      %v3650 = vld [vmem:[%s3] sm:$0xf]
      %v3651 = vld [vmem:[%s3 + $0x4] sm:$0xf]
      %v3652 = vld [vmem:[%s3 + $0x8] sm:$0xf]
      %v3653 = vld [vmem:[%s3 + $0xc] sm:$0xf]
      %v3654 = vld [vmem:[%s3 + $0x10] sm:$0xf]
      %v3655 = vld [vmem:[%s3 + $0x14] sm:$0xf]
      %v3656 = vld [vmem:[%s3 + $0x18] sm:$0xf]
      %v3657 = vld [vmem:[%s3 + $0x1c] sm:$0xf]
      %v3658 = vld [vmem:[#allocation2 + $0x1] sm:$0xff]
      %v3659 = vld [vmem:[#allocation2 + $0x9] sm:$0xff]
      %v3660 = vld [vmem:[#allocation2 + $0x11] sm:$0xff]
      %v3661 = vld [vmem:[#allocation2 + $0x19] sm:$0xff]
      %v3662 = vld [vmem:[#allocation2 + $0x21] sm:$0xff]
      %v3663 = vld [vmem:[#allocation2 + $0x29] sm:$0xff]
      %v3664 = vld [vmem:[#allocation2 + $0x31] sm:$0xff]
      %v3665 = vld [vmem:[#allocation2 + $0x39] sm:$0xff]
      %v3666 = vld [vmem:[#allocation2 + $0x41] sm:$0xff]
      %v3667 = vld [vmem:[#allocation2 + $0x49] sm:$0xff]
      %v3668 = vld [vmem:[#allocation2 + $0x51] sm:$0xff]
      %v3669 = vld [vmem:[#allocation2 + $0x59] sm:$0xff]
      %v3670 = vld [vmem:[#allocation2 + $0x61] sm:$0xff]
      %v3671 = vld [vmem:[#allocation2 + $0x69] sm:$0xff]
      %v3672 = vld [vmem:[#allocation2 + $0x71] sm:$0xff]
      %v3673 = vld [vmem:[#allocation2 + $0x79] sm:$0xff]
      %v3674 = vld [vmem:[#allocation2 + $0x81] sm:$0xff]
      %v3675 = vld [vmem:[#allocation2 + $0x89] sm:$0xff]
      %v3676 = vld [vmem:[#allocation2 + $0x91] sm:$0xff]
      %v3677 = vld [vmem:[#allocation2 + $0x99] sm:$0xff]
      %v3678 = vld [vmem:[#allocation2 + $0xa1] sm:$0xff]
      %v3679 = vld [vmem:[#allocation2 + $0xa9] sm:$0xff]
      %v3680 = vld [vmem:[#allocation2 + $0xb1] sm:$0xff]
      %v3681 = vld [vmem:[#allocation2 + $0xb9] sm:$0xff]
      %v3682 = vld [vmem:[#allocation2 + $0xc1] sm:$0xff]
      %v3683 = vld [vmem:[#allocation2 + $0xc9] sm:$0xff]
      %v3684 = vld [vmem:[#allocation2 + $0xd1] sm:$0xff]
      %v3685 = vld [vmem:[#allocation2 + $0xd9] sm:$0xff]
      %v3686 = vld [vmem:[#allocation2 + $0xe1] sm:$0xff]
      %v3687 = vld [vmem:[#allocation2 + $0xe9] sm:$0xff]
      %v3688 = vld [vmem:[#allocation2 + $0xf1] sm:$0xff]
      %v3689 = vld [vmem:[#allocation2 + $0xf9] sm:$0xff]
      %v3690 = vld [vmem:[#allocation2 + $0x101] sm:$0xff]
      %v3691 = vld [vmem:[#allocation2 + $0x109] sm:$0xff]
      %v3692 = vld [vmem:[#allocation2 + $0x111] sm:$0xff]
      %v3693 = vld [vmem:[#allocation2 + $0x119] sm:$0xff]
      %v3694 = vpack.c.bf16 %v3659, %v3658
      %v3695 = vpack.c.bf16 %v3661, %v3660
      %v3696 = vpack.c.bf16 %v3663, %v3662
      %v3697 = vpack.c.bf16 %v3665, %v3664
      %v3698 = vpack.c.bf16 %v3667, %v3666
      %v3699 = vpack.c.bf16 %v3669, %v3668
      %v3700 = vpack.c.bf16 %v3671, %v3670
      %v3701 = vpack.c.bf16 %v3673, %v3672
      %v3702 = vpack.c.bf16 %v3675, %v3674
      %v3703 = vpack.c.bf16 %v3677, %v3676
      %v3704 = vpack.c.bf16 %v3679, %v3678
      %v3705 = vpack.c.bf16 %v3681, %v3680
      %v3706 = vpack.c.bf16 %v3683, %v3682
      %v3707 = vpack.c.bf16 %v3685, %v3684
      %v3708 = vpack.c.bf16 %v3687, %v3686
      %v3709 = vpack.c.bf16 %v3689, %v3688
      %v3710 = vpack.c.bf16 %v3691, %v3690
      %v3711 = vpack.c.bf16 %v3693, %v3692
      %s3712 = scalar_lea.vmem %s3, 32
      %v3713 = vld [vmem:[%s3712] sm:$0xf]
      %v3714 = vld [vmem:[%s3712 + $0x4] sm:$0xf]
      %v3715 = vld [vmem:[%s3712 + $0x8] sm:$0xf]
      %v3716 = vld [vmem:[%s3712 + $0xc] sm:$0xf]
      %v3717 = vld [vmem:[%s3712 + $0x10] sm:$0xf]
      %v3718 = vld [vmem:[%s3712 + $0x14] sm:$0xf]
      %v3719 = vld [vmem:[%s3712 + $0x18] sm:$0xf]
      %v3720 = vld [vmem:[%s3712 + $0x1c] sm:$0xf]
      %v3729 = vunpack.c.l.b16 %v3713
      %v3730 = vunpack.c.l.b16 %v3714
      %v3731 = vunpack.c.l.b16 %v3715
      %v3732 = vunpack.c.l.b16 %v3716
      %v3733 = vunpack.c.l.b16 %v3717
      %v3734 = vunpack.c.l.b16 %v3718
      %v3735 = vunpack.c.l.b16 %v3719
      %v3736 = vunpack.c.l.b16 %v3720
      %v3737 = vpack.c.b16 %v3730, %v3729
      %v3738 = vpack.c.b16 %v3732, %v3731
      %v3739 = vpack.c.b16 %v3734, %v3733
      %v3740 = vpack.c.b16 %v3736, %v3735
      %v3746 = vsel %vm316, %v3694, 0
      %v3749 = vsel %vm316, %v3695, 0
      %v3752 = vsel %vm316, %v3696, 0
      %v3755 = vsel %vm316, %v3697, 0
      %v3758 = vsel %vm316, %v3698, 0
      %v3761 = vsel %vm316, %v3699, 0
      %v3764 = vsel %vm316, %v3700, 0
      %v3767 = vsel %vm316, %v3701, 0
      %v3770 = vsel %vm316, %v3702, 0
      %v3773 = vsel %vm316, %v3703, 0
      %v3776 = vsel %vm316, %v3704, 0
      %v3779 = vsel %vm316, %v3705, 0
      %v3782 = vsel %vm316, %v3706, 0
      %v3785 = vsel %vm316, %v3707, 0
      %v3788 = vsel %vm316, %v3708, 0
      %v3791 = vsel %vm316, %v3709, 0
      %v3794 = vsel %vm316, %v3710, 0
      %v3797 = vsel %vm316, %v3711, 0
      %3799 = vmatprep.subr.bf16.mxu0 0
      %3800 = vmatpush1.bf16.msra.mxu0 %v3737
      %3801 = vmatprep.subr.bf16.mxu0 0
      %3802 = vmatpush1.bf16.msra.mxu0 %v3738
      %3803 = vmatprep.subr.bf16.mxu0 0
      %3804 = vmatpush1.bf16.msra.mxu0 %v3739
      %3805 = vmatprep.subr.bf16.mxu0 0
      %3806 = vmatpush1.bf16.msra.mxu0 %v3740
      %3807 = vmatprep.subr.bf16.mxu0 0
      %3808 = vmatpush1.bf16.msra.mxu0 0
      %3809 = vmatprep.subr.bf16.mxu0 0
      %3810 = vmatpush1.bf16.msra.mxu0 0
      %3811 = vmatprep.subr.bf16.mxu0 0
      %3812 = vmatpush1.bf16.msra.mxu0 0
      %3813 = vmatprep.subr.bf16.mxu0 0
      %3814 = vmatpush1.bf16.msra.mxu0 0
      %3815 = vmatprep.subr.bf16.mxu0 0
      %3816 = vmatpush1.bf16.msra.mxu0 0
      %3817 = vmatprep.subr.bf16.mxu0 0
      %3818 = vmatpush1.bf16.msra.mxu0 0
      %3819 = vmatprep.subr.bf16.mxu0 0
      %3820 = vmatpush1.bf16.msra.mxu0 0
      %3821 = vmatprep.subr.bf16.mxu0 0
      %3822 = vmatpush1.bf16.msra.mxu0 0
      %3823 = vmatprep.subr.bf16.mxu0 0
      %3824 = vmatpush1.bf16.msra.mxu0 0
      %3825 = vmatprep.subr.bf16.mxu0 0
      %3826 = vmatpush1.bf16.msra.mxu0 0
      %3827 = vmatprep.subr.bf16.mxu0 0
      %3828 = vmatpush1.bf16.msra.mxu0 0
      %3829 = vmatprep.subr.bf16.mxu0 0
      %3830 = vmatpush1.bf16.msra.mxu0 0
      %3831 = vmatprep.mubr.bf16.mxu0 0
      %3832 = vmatmul.mubr.bf16.gmra.mrb[0].mxu0 %v3746
      %v3833 = vpop.f32.mrb[0].mxu0
      %v3834 = vadd.f32 0.0, %v3833
      %v3835 = vpop.f32.mrb[0].mxu0
      %v3836 = vpop.f32.mrb[0].mxu0
      %v3837 = vadd.f32 0.0, %v3836
      %v3838 = vpop.f32.mrb[0].mxu0
      %3839 = vmatprep.mubr.bf16.mxu0 0
      %3840 = vmatmul.mubr.bf16.gmra.mrb[0].mxu0 %v3749
      %v3841 = vpop.f32.mrb[0].mxu0
      %v3842 = vadd.f32 0.0, %v3841
      %v3843 = vpop.f32.mrb[0].mxu0
      %v3844 = vpop.f32.mrb[0].mxu0
      %v3845 = vadd.f32 0.0, %v3844
      %v3846 = vpop.f32.mrb[0].mxu0
      %3847 = vmatprep.mubr.bf16.mxu0 0
      %3848 = vmatmul.mubr.bf16.gmra.mrb[0].mxu0 %v3752
      %v3849 = vpop.f32.mrb[0].mxu0
      %v3850 = vadd.f32 0.0, %v3849
      %v3851 = vpop.f32.mrb[0].mxu0
      %v3852 = vpop.f32.mrb[0].mxu0
      %v3853 = vadd.f32 0.0, %v3852
      %v3854 = vpop.f32.mrb[0].mxu0
      %3855 = vmatprep.mubr.bf16.mxu0 0
      %3856 = vmatmul.mubr.bf16.gmra.mrb[0].mxu0 %v3755
      %v3857 = vpop.f32.mrb[0].mxu0
      %v3858 = vadd.f32 0.0, %v3857
      %v3859 = vpop.f32.mrb[0].mxu0
      %v3860 = vpop.f32.mrb[0].mxu0
      %v3861 = vadd.f32 0.0, %v3860
      %v3862 = vpop.f32.mrb[0].mxu0
      %3863 = vmatprep.mubr.bf16.mxu0 0
      %3864 = vmatmul.mubr.bf16.gmra.mrb[0].mxu0 %v3758
      %v3865 = vpop.f32.mrb[0].mxu0
      %v3866 = vadd.f32 0.0, %v3865
      %v3867 = vpop.f32.mrb[0].mxu0
      %v3868 = vpop.f32.mrb[0].mxu0
      %v3869 = vadd.f32 0.0, %v3868
      %v3870 = vpop.f32.mrb[0].mxu0
      %3871 = vmatprep.mubr.bf16.mxu0 0
      %3872 = vmatmul.mubr.bf16.gmra.mrb[0].mxu0 %v3761
      %v3873 = vpop.f32.mrb[0].mxu0
      %v3874 = vadd.f32 0.0, %v3873
      %v3875 = vpop.f32.mrb[0].mxu0
      %v3876 = vpop.f32.mrb[0].mxu0
      %v3877 = vadd.f32 0.0, %v3876
      %v3878 = vpop.f32.mrb[0].mxu0
      %3879 = vmatprep.mubr.bf16.mxu0 0
      %3880 = vmatmul.mubr.bf16.gmra.mrb[0].mxu0 %v3764
      %v3881 = vpop.f32.mrb[0].mxu0
      %v3882 = vadd.f32 0.0, %v3881
      %v3883 = vpop.f32.mrb[0].mxu0
      %v3884 = vpop.f32.mrb[0].mxu0
      %v3885 = vadd.f32 0.0, %v3884
      %v3886 = vpop.f32.mrb[0].mxu0
      %3887 = vmatprep.mubr.bf16.mxu0 0
      %3888 = vmatmul.mubr.bf16.gmra.mrb[0].mxu0 %v3767
      %v3889 = vpop.f32.mrb[0].mxu0
      %v3890 = vadd.f32 0.0, %v3889
      %v3891 = vpop.f32.mrb[0].mxu0
      %v3892 = vpop.f32.mrb[0].mxu0
      %v3893 = vadd.f32 0.0, %v3892
      %v3894 = vpop.f32.mrb[0].mxu0
      %3895 = vmatprep.mubr.bf16.mxu0 0
      %3896 = vmatmul.mubr.bf16.gmra.mrb[0].mxu0 %v3770
      %v3897 = vpop.f32.mrb[0].mxu0
      %v3898 = vadd.f32 0.0, %v3897
      %v3899 = vpop.f32.mrb[0].mxu0
      %v3900 = vpop.f32.mrb[0].mxu0
      %v3901 = vadd.f32 0.0, %v3900
      %v3902 = vpop.f32.mrb[0].mxu0
      %3903 = vmatprep.mubr.bf16.mxu0 0
      %3904 = vmatmul.mubr.bf16.gmra.mrb[0].mxu0 %v3773
      %v3905 = vpop.f32.mrb[0].mxu0
      %v3906 = vadd.f32 0.0, %v3905
      %v3907 = vpop.f32.mrb[0].mxu0
      %v3908 = vpop.f32.mrb[0].mxu0
      %v3909 = vadd.f32 0.0, %v3908
      %v3910 = vpop.f32.mrb[0].mxu0
      %3911 = vmatprep.mubr.bf16.mxu0 0
      %3912 = vmatmul.mubr.bf16.gmra.mrb[0].mxu0 %v3776
      %v3913 = vpop.f32.mrb[0].mxu0
      %v3914 = vadd.f32 0.0, %v3913
      %v3915 = vpop.f32.mrb[0].mxu0
      %v3916 = vpop.f32.mrb[0].mxu0
      %v3917 = vadd.f32 0.0, %v3916
      %v3918 = vpop.f32.mrb[0].mxu0
      %3919 = vmatprep.mubr.bf16.mxu0 0
      %3920 = vmatmul.mubr.bf16.gmra.mrb[0].mxu0 %v3779
      %v3921 = vpop.f32.mrb[0].mxu0
      %v3922 = vadd.f32 0.0, %v3921
      %v3923 = vpop.f32.mrb[0].mxu0
      %v3924 = vpop.f32.mrb[0].mxu0
      %v3925 = vadd.f32 0.0, %v3924
      %v3926 = vpop.f32.mrb[0].mxu0
      %3927 = vmatprep.mubr.bf16.mxu0 0
      %3928 = vmatmul.mubr.bf16.gmra.mrb[0].mxu0 %v3782
      %v3929 = vpop.f32.mrb[0].mxu0
      %v3930 = vadd.f32 0.0, %v3929
      %v3931 = vpop.f32.mrb[0].mxu0
      %v3932 = vpop.f32.mrb[0].mxu0
      %v3933 = vadd.f32 0.0, %v3932
      %v3934 = vpop.f32.mrb[0].mxu0
      %3935 = vmatprep.mubr.bf16.mxu0 0
      %3936 = vmatmul.mubr.bf16.gmra.mrb[0].mxu0 %v3785
      %v3937 = vpop.f32.mrb[0].mxu0
      %v3938 = vadd.f32 0.0, %v3937
      %v3939 = vpop.f32.mrb[0].mxu0
      %v3940 = vpop.f32.mrb[0].mxu0
      %v3941 = vadd.f32 0.0, %v3940
      %v3942 = vpop.f32.mrb[0].mxu0
      %3943 = vmatprep.mubr.bf16.mxu0 0
      %3944 = vmatmul.mubr.bf16.gmra.mrb[0].mxu0 %v3788
      %v3945 = vpop.f32.mrb[0].mxu0
      %v3946 = vadd.f32 0.0, %v3945
      %v3947 = vpop.f32.mrb[0].mxu0
      %v3948 = vpop.f32.mrb[0].mxu0
      %v3949 = vadd.f32 0.0, %v3948
      %v3950 = vpop.f32.mrb[0].mxu0
      %3951 = vmatprep.mubr.bf16.mxu0 0
      %3952 = vmatmul.mubr.bf16.gmra.mrb[0].mxu0 %v3791
      %v3953 = vpop.f32.mrb[0].mxu0
      %v3954 = vadd.f32 0.0, %v3953
      %v3955 = vpop.f32.mrb[0].mxu0
      %v3956 = vpop.f32.mrb[0].mxu0
      %v3957 = vadd.f32 0.0, %v3956
      %v3958 = vpop.f32.mrb[0].mxu0
      %3959 = vmatprep.mubr.bf16.mxu0 0
      %3960 = vmatmul.mubr.bf16.gmra.mrb[0].mxu0 %v3794
      %v3961 = vpop.f32.mrb[0].mxu0
      %v3962 = vadd.f32 0.0, %v3961
      %v3963 = vpop.f32.mrb[0].mxu0
      %v3964 = vpop.f32.mrb[0].mxu0
      %v3965 = vadd.f32 0.0, %v3964
      %v3966 = vpop.f32.mrb[0].mxu0
      %3967 = vmatprep.mubr.bf16.mxu0 0
      %3968 = vmatmul.mubr.bf16.gmra.mrb[0].mxu0 %v3797
      %v3969 = vpop.f32.mrb[0].mxu0
      %v3970 = vadd.f32 0.0, %v3969
      %v3971 = vpop.f32.mrb[0].mxu0
      %v3972 = vpop.f32.mrb[0].mxu0
      %v3973 = vadd.f32 0.0, %v3972
      %v3974 = vpop.f32.mrb[0].mxu0
      %3975 = vdwg.mxu0
      %v3984 = vunpack.c.l.b16 %v3650
      %v3985 = vunpack.c.l.b16 %v3651
      %v3986 = vunpack.c.l.b16 %v3652
      %v3987 = vunpack.c.l.b16 %v3653
      %v3988 = vunpack.c.l.b16 %v3654
      %v3989 = vunpack.c.l.b16 %v3655
      %v3990 = vunpack.c.l.b16 %v3656
      %v3991 = vunpack.c.l.b16 %v3657
      %v3992 = vpack.c.b16 %v3985, %v3984
      %v3993 = vpack.c.b16 %v3987, %v3986
      %v3994 = vpack.c.b16 %v3989, %v3988
      %v3995 = vpack.c.b16 %v3991, %v3990
      %v4001 = vsel %vm316, %v3632, 0
      %v4004 = vsel %vm316, %v3633, 0
      %v4007 = vsel %vm316, %v3634, 0
      %v4010 = vsel %vm316, %v3635, 0
      %v4013 = vsel %vm316, %v3636, 0
      %v4016 = vsel %vm316, %v3637, 0
      %v4019 = vsel %vm316, %v3638, 0
      %v4022 = vsel %vm316, %v3639, 0
      %v4025 = vsel %vm316, %v3640, 0
      %v4028 = vsel %vm316, %v3641, 0
      %v4031 = vsel %vm316, %v3642, 0
      %v4034 = vsel %vm316, %v3643, 0
      %v4037 = vsel %vm316, %v3644, 0
      %v4040 = vsel %vm316, %v3645, 0
      %v4043 = vsel %vm316, %v3646, 0
      %v4046 = vsel %vm316, %v3647, 0
      %v4049 = vsel %vm316, %v3648, 0
      %v4052 = vsel %vm316, %v3649, 0
      %4054 = vmatprep.subr.bf16.mxu0 0
      %4055 = vmatpush1.bf16.msra.mxu0 %v3992
      %4056 = vmatprep.subr.bf16.mxu0 0
      %4057 = vmatpush1.bf16.msra.mxu0 %v3993
      %4058 = vmatprep.subr.bf16.mxu0 0
      %4059 = vmatpush1.bf16.msra.mxu0 %v3994
      %4060 = vmatprep.subr.bf16.mxu0 0
      %4061 = vmatpush1.bf16.msra.mxu0 %v3995
      %4062 = vmatprep.subr.bf16.mxu0 0
      %4063 = vmatpush1.bf16.msra.mxu0 0
      %4064 = vmatprep.subr.bf16.mxu0 0
      %4065 = vmatpush1.bf16.msra.mxu0 0
      %4066 = vmatprep.subr.bf16.mxu0 0
      %4067 = vmatpush1.bf16.msra.mxu0 0
      %4068 = vmatprep.subr.bf16.mxu0 0
      %4069 = vmatpush1.bf16.msra.mxu0 0
      %4070 = vmatprep.subr.bf16.mxu0 0
      %4071 = vmatpush1.bf16.msra.mxu0 0
      %4072 = vmatprep.subr.bf16.mxu0 0
      %4073 = vmatpush1.bf16.msra.mxu0 0
      %4074 = vmatprep.subr.bf16.mxu0 0
      %4075 = vmatpush1.bf16.msra.mxu0 0
      %4076 = vmatprep.subr.bf16.mxu0 0
      %4077 = vmatpush1.bf16.msra.mxu0 0
      %4078 = vmatprep.subr.bf16.mxu0 0
      %4079 = vmatpush1.bf16.msra.mxu0 0
      %4080 = vmatprep.subr.bf16.mxu0 0
      %4081 = vmatpush1.bf16.msra.mxu0 0
      %4082 = vmatprep.subr.bf16.mxu0 0
      %4083 = vmatpush1.bf16.msra.mxu0 0
      %4084 = vmatprep.subr.bf16.mxu0 0
      %4085 = vmatpush1.bf16.msra.mxu0 0
      %4086 = vmatprep.mubr.bf16.mxu0 0
      %4087 = vmatmul.mubr.bf16.gmra.mrb[0].mxu0 %v4001
      %v4088 = vpop.f32.mrb[0].mxu0
      %v4089 = vadd.f32 %v3834, %v4088
      %v4090 = vpop.f32.mrb[0].mxu0
      %v4091 = vpop.f32.mrb[0].mxu0
      %v4092 = vadd.f32 %v3837, %v4091
      %v4093 = vpop.f32.mrb[0].mxu0
      %4094 = vmatprep.mubr.bf16.mxu0 0
      %4095 = vmatmul.mubr.bf16.gmra.mrb[0].mxu0 %v4004
      %v4096 = vpop.f32.mrb[0].mxu0
      %v4097 = vadd.f32 %v3842, %v4096
      %v4098 = vpop.f32.mrb[0].mxu0
      %v4099 = vpop.f32.mrb[0].mxu0
      %v4100 = vadd.f32 %v3845, %v4099
      %v4101 = vpop.f32.mrb[0].mxu0
      %4102 = vmatprep.mubr.bf16.mxu0 0
      %4103 = vmatmul.mubr.bf16.gmra.mrb[0].mxu0 %v4007
      %v4104 = vpop.f32.mrb[0].mxu0
      %v4105 = vadd.f32 %v3850, %v4104
      %v4106 = vpop.f32.mrb[0].mxu0
      %v4107 = vpop.f32.mrb[0].mxu0
      %v4108 = vadd.f32 %v3853, %v4107
      %v4109 = vpop.f32.mrb[0].mxu0
      %4110 = vmatprep.mubr.bf16.mxu0 0
      %4111 = vmatmul.mubr.bf16.gmra.mrb[0].mxu0 %v4010
      %v4112 = vpop.f32.mrb[0].mxu0
      %v4113 = vadd.f32 %v3858, %v4112
      %v4114 = vpop.f32.mrb[0].mxu0
      %v4115 = vpop.f32.mrb[0].mxu0
      %v4116 = vadd.f32 %v3861, %v4115
      %v4117 = vpop.f32.mrb[0].mxu0
      %4118 = vmatprep.mubr.bf16.mxu0 0
      %4119 = vmatmul.mubr.bf16.gmra.mrb[0].mxu0 %v4013
      %v4120 = vpop.f32.mrb[0].mxu0
      %v4121 = vadd.f32 %v3866, %v4120
      %v4122 = vpop.f32.mrb[0].mxu0
      %v4123 = vpop.f32.mrb[0].mxu0
      %v4124 = vadd.f32 %v3869, %v4123
      %v4125 = vpop.f32.mrb[0].mxu0
      %4126 = vmatprep.mubr.bf16.mxu0 0
      %4127 = vmatmul.mubr.bf16.gmra.mrb[0].mxu0 %v4016
      %v4128 = vpop.f32.mrb[0].mxu0
      %v4129 = vadd.f32 %v3874, %v4128
      %v4130 = vpop.f32.mrb[0].mxu0
      %v4131 = vpop.f32.mrb[0].mxu0
      %v4132 = vadd.f32 %v3877, %v4131
      %v4133 = vpop.f32.mrb[0].mxu0
      %4134 = vmatprep.mubr.bf16.mxu0 0
      %4135 = vmatmul.mubr.bf16.gmra.mrb[0].mxu0 %v4019
      %v4136 = vpop.f32.mrb[0].mxu0
      %v4137 = vadd.f32 %v3882, %v4136
      %v4138 = vpop.f32.mrb[0].mxu0
      %v4139 = vpop.f32.mrb[0].mxu0
      %v4140 = vadd.f32 %v3885, %v4139
      %v4141 = vpop.f32.mrb[0].mxu0
      %4142 = vmatprep.mubr.bf16.mxu0 0
      %4143 = vmatmul.mubr.bf16.gmra.mrb[0].mxu0 %v4022
      %v4144 = vpop.f32.mrb[0].mxu0
      %v4145 = vadd.f32 %v3890, %v4144
      %v4146 = vpop.f32.mrb[0].mxu0
      %v4147 = vpop.f32.mrb[0].mxu0
      %v4148 = vadd.f32 %v3893, %v4147
      %v4149 = vpop.f32.mrb[0].mxu0
      %4150 = vmatprep.mubr.bf16.mxu0 0
      %4151 = vmatmul.mubr.bf16.gmra.mrb[0].mxu0 %v4025
      %v4152 = vpop.f32.mrb[0].mxu0
      %v4153 = vadd.f32 %v3898, %v4152
      %v4154 = vpop.f32.mrb[0].mxu0
      %v4155 = vpop.f32.mrb[0].mxu0
      %v4156 = vadd.f32 %v3901, %v4155
      %v4157 = vpop.f32.mrb[0].mxu0
      %4158 = vmatprep.mubr.bf16.mxu0 0
      %4159 = vmatmul.mubr.bf16.gmra.mrb[0].mxu0 %v4028
      %v4160 = vpop.f32.mrb[0].mxu0
      %v4161 = vadd.f32 %v3906, %v4160
      %v4162 = vpop.f32.mrb[0].mxu0
      %v4163 = vpop.f32.mrb[0].mxu0
      %v4164 = vadd.f32 %v3909, %v4163
      %v4165 = vpop.f32.mrb[0].mxu0
      %4166 = vmatprep.mubr.bf16.mxu0 0
      %4167 = vmatmul.mubr.bf16.gmra.mrb[0].mxu0 %v4031
      %v4168 = vpop.f32.mrb[0].mxu0
      %v4169 = vadd.f32 %v3914, %v4168
      %v4170 = vpop.f32.mrb[0].mxu0
      %v4171 = vpop.f32.mrb[0].mxu0
      %v4172 = vadd.f32 %v3917, %v4171
      %v4173 = vpop.f32.mrb[0].mxu0
      %4174 = vmatprep.mubr.bf16.mxu0 0
      %4175 = vmatmul.mubr.bf16.gmra.mrb[0].mxu0 %v4034
      %v4176 = vpop.f32.mrb[0].mxu0
      %v4177 = vadd.f32 %v3922, %v4176
      %v4178 = vpop.f32.mrb[0].mxu0
      %v4179 = vpop.f32.mrb[0].mxu0
      %v4180 = vadd.f32 %v3925, %v4179
      %v4181 = vpop.f32.mrb[0].mxu0
      %4182 = vmatprep.mubr.bf16.mxu0 0
      %4183 = vmatmul.mubr.bf16.gmra.mrb[0].mxu0 %v4037
      %v4184 = vpop.f32.mrb[0].mxu0
      %v4185 = vadd.f32 %v3930, %v4184
      %v4186 = vpop.f32.mrb[0].mxu0
      %v4187 = vpop.f32.mrb[0].mxu0
      %v4188 = vadd.f32 %v3933, %v4187
      %v4189 = vpop.f32.mrb[0].mxu0
      %4190 = vmatprep.mubr.bf16.mxu0 0
      %4191 = vmatmul.mubr.bf16.gmra.mrb[0].mxu0 %v4040
      %v4192 = vpop.f32.mrb[0].mxu0
      %v4193 = vadd.f32 %v3938, %v4192
      %v4194 = vpop.f32.mrb[0].mxu0
      %v4195 = vpop.f32.mrb[0].mxu0
      %v4196 = vadd.f32 %v3941, %v4195
      %v4197 = vpop.f32.mrb[0].mxu0
      %4198 = vmatprep.mubr.bf16.mxu0 0
      %4199 = vmatmul.mubr.bf16.gmra.mrb[0].mxu0 %v4043
      %v4200 = vpop.f32.mrb[0].mxu0
      %v4201 = vadd.f32 %v3946, %v4200
      %v4202 = vpop.f32.mrb[0].mxu0
      %v4203 = vpop.f32.mrb[0].mxu0
      %v4204 = vadd.f32 %v3949, %v4203
      %v4205 = vpop.f32.mrb[0].mxu0
      %4206 = vmatprep.mubr.bf16.mxu0 0
      %4207 = vmatmul.mubr.bf16.gmra.mrb[0].mxu0 %v4046
      %v4208 = vpop.f32.mrb[0].mxu0
      %v4209 = vadd.f32 %v3954, %v4208
      %v4210 = vpop.f32.mrb[0].mxu0
      %v4211 = vpop.f32.mrb[0].mxu0
      %v4212 = vadd.f32 %v3957, %v4211
      %v4213 = vpop.f32.mrb[0].mxu0
      %4214 = vmatprep.mubr.bf16.mxu0 0
      %4215 = vmatmul.mubr.bf16.gmra.mrb[0].mxu0 %v4049
      %v4216 = vpop.f32.mrb[0].mxu0
      %v4217 = vadd.f32 %v3962, %v4216
      %v4218 = vpop.f32.mrb[0].mxu0
      %v4219 = vpop.f32.mrb[0].mxu0
      %v4220 = vadd.f32 %v3965, %v4219
      %v4221 = vpop.f32.mrb[0].mxu0
      %4222 = vmatprep.mubr.bf16.mxu0 0
      %4223 = vmatmul.mubr.bf16.gmra.mrb[0].mxu0 %v4052
      %v4224 = vpop.f32.mrb[0].mxu0
      %v4225 = vadd.f32 %v3970, %v4224
      %v4226 = vpop.f32.mrb[0].mxu0
      %v4227 = vpop.f32.mrb[0].mxu0
      %v4228 = vadd.f32 %v3973, %v4227
      %v4229 = vpop.f32.mrb[0].mxu0
      %4230 = vdwg.mxu0
      %v4231 = vld [vmem:[#allocation2 + $0x2] sm:$0xff]
      %v4232 = vld [vmem:[#allocation2 + $0xa] sm:$0xff]
      %v4233 = vld [vmem:[#allocation2 + $0x12] sm:$0xff]
      %v4234 = vld [vmem:[#allocation2 + $0x1a] sm:$0xff]
      %v4235 = vld [vmem:[#allocation2 + $0x22] sm:$0xff]
      %v4236 = vld [vmem:[#allocation2 + $0x2a] sm:$0xff]
      %v4237 = vld [vmem:[#allocation2 + $0x32] sm:$0xff]
      %v4238 = vld [vmem:[#allocation2 + $0x3a] sm:$0xff]
      %v4239 = vld [vmem:[#allocation2 + $0x42] sm:$0xff]
      %v4240 = vld [vmem:[#allocation2 + $0x4a] sm:$0xff]
      %v4241 = vld [vmem:[#allocation2 + $0x52] sm:$0xff]
      %v4242 = vld [vmem:[#allocation2 + $0x5a] sm:$0xff]
      %v4243 = vld [vmem:[#allocation2 + $0x62] sm:$0xff]
      %v4244 = vld [vmem:[#allocation2 + $0x6a] sm:$0xff]
      %v4245 = vld [vmem:[#allocation2 + $0x72] sm:$0xff]
      %v4246 = vld [vmem:[#allocation2 + $0x7a] sm:$0xff]
      %v4247 = vld [vmem:[#allocation2 + $0x82] sm:$0xff]
      %v4248 = vld [vmem:[#allocation2 + $0x8a] sm:$0xff]
      %v4249 = vld [vmem:[#allocation2 + $0x92] sm:$0xff]
      %v4250 = vld [vmem:[#allocation2 + $0x9a] sm:$0xff]
      %v4251 = vld [vmem:[#allocation2 + $0xa2] sm:$0xff]
      %v4252 = vld [vmem:[#allocation2 + $0xaa] sm:$0xff]
      %v4253 = vld [vmem:[#allocation2 + $0xb2] sm:$0xff]
      %v4254 = vld [vmem:[#allocation2 + $0xba] sm:$0xff]
      %v4255 = vld [vmem:[#allocation2 + $0xc2] sm:$0xff]
      %v4256 = vld [vmem:[#allocation2 + $0xca] sm:$0xff]
      %v4257 = vld [vmem:[#allocation2 + $0xd2] sm:$0xff]
      %v4258 = vld [vmem:[#allocation2 + $0xda] sm:$0xff]
      %v4259 = vld [vmem:[#allocation2 + $0xe2] sm:$0xff]
      %v4260 = vld [vmem:[#allocation2 + $0xea] sm:$0xff]
      %v4261 = vld [vmem:[#allocation2 + $0xf2] sm:$0xff]
      %v4262 = vld [vmem:[#allocation2 + $0xfa] sm:$0xff]
      %v4263 = vld [vmem:[#allocation2 + $0x102] sm:$0xff]
      %v4264 = vld [vmem:[#allocation2 + $0x10a] sm:$0xff]
      %v4265 = vld [vmem:[#allocation2 + $0x112] sm:$0xff]
      %v4266 = vld [vmem:[#allocation2 + $0x11a] sm:$0xff]
      %v4267 = vpack.c.bf16 %v4232, %v4231
      %v4268 = vpack.c.bf16 %v4234, %v4233
      %v4269 = vpack.c.bf16 %v4236, %v4235
      %v4270 = vpack.c.bf16 %v4238, %v4237
      %v4271 = vpack.c.bf16 %v4240, %v4239
      %v4272 = vpack.c.bf16 %v4242, %v4241
      %v4273 = vpack.c.bf16 %v4244, %v4243
      %v4274 = vpack.c.bf16 %v4246, %v4245
      %v4275 = vpack.c.bf16 %v4248, %v4247
      %v4276 = vpack.c.bf16 %v4250, %v4249
      %v4277 = vpack.c.bf16 %v4252, %v4251
      %v4278 = vpack.c.bf16 %v4254, %v4253
      %v4279 = vpack.c.bf16 %v4256, %v4255
      %v4280 = vpack.c.bf16 %v4258, %v4257
      %v4281 = vpack.c.bf16 %v4260, %v4259
      %v4282 = vpack.c.bf16 %v4262, %v4261
      %v4283 = vpack.c.bf16 %v4264, %v4263
      %v4284 = vpack.c.bf16 %v4266, %v4265
      %s4285 = scalar_lea.vmem %s3, 64
      %v4286 = vld [vmem:[%s4285] sm:$0xf]
      %v4287 = vld [vmem:[%s4285 + $0x4] sm:$0xf]
      %v4288 = vld [vmem:[%s4285 + $0x8] sm:$0xf]
      %v4289 = vld [vmem:[%s4285 + $0xc] sm:$0xf]
      %v4290 = vld [vmem:[%s4285 + $0x10] sm:$0xf]
      %v4291 = vld [vmem:[%s4285 + $0x14] sm:$0xf]
      %v4292 = vld [vmem:[%s4285 + $0x18] sm:$0xf]
      %v4293 = vld [vmem:[%s4285 + $0x1c] sm:$0xf]
      %v4302 = vunpack.c.l.b16 %v4286
      %v4303 = vunpack.c.l.b16 %v4287
      %v4304 = vunpack.c.l.b16 %v4288
      %v4305 = vunpack.c.l.b16 %v4289
      %v4306 = vunpack.c.l.b16 %v4290
      %v4307 = vunpack.c.l.b16 %v4291
      %v4308 = vunpack.c.l.b16 %v4292
      %v4309 = vunpack.c.l.b16 %v4293
      %v4310 = vpack.c.b16 %v4303, %v4302
      %v4311 = vpack.c.b16 %v4305, %v4304
      %v4312 = vpack.c.b16 %v4307, %v4306
      %v4313 = vpack.c.b16 %v4309, %v4308
      %v4319 = vsel %vm316, %v4267, 0
      %v4322 = vsel %vm316, %v4268, 0
      %v4325 = vsel %vm316, %v4269, 0
      %v4328 = vsel %vm316, %v4270, 0
      %v4331 = vsel %vm316, %v4271, 0
      %v4334 = vsel %vm316, %v4272, 0
      %v4337 = vsel %vm316, %v4273, 0
      %v4340 = vsel %vm316, %v4274, 0
      %v4343 = vsel %vm316, %v4275, 0
      %v4346 = vsel %vm316, %v4276, 0
      %v4349 = vsel %vm316, %v4277, 0
      %v4352 = vsel %vm316, %v4278, 0
      %v4355 = vsel %vm316, %v4279, 0
      %v4358 = vsel %vm316, %v4280, 0
      %v4361 = vsel %vm316, %v4281, 0
      %v4364 = vsel %vm316, %v4282, 0
      %v4367 = vsel %vm316, %v4283, 0
      %v4370 = vsel %vm316, %v4284, 0
      %4372 = vmatprep.subr.bf16.mxu0 0
      %4373 = vmatpush1.bf16.msra.mxu0 %v4310
      %4374 = vmatprep.subr.bf16.mxu0 0
      %4375 = vmatpush1.bf16.msra.mxu0 %v4311
      %4376 = vmatprep.subr.bf16.mxu0 0
      %4377 = vmatpush1.bf16.msra.mxu0 %v4312
      %4378 = vmatprep.subr.bf16.mxu0 0
      %4379 = vmatpush1.bf16.msra.mxu0 %v4313
      %4380 = vmatprep.subr.bf16.mxu0 0
      %4381 = vmatpush1.bf16.msra.mxu0 0
      %4382 = vmatprep.subr.bf16.mxu0 0
      %4383 = vmatpush1.bf16.msra.mxu0 0
      %4384 = vmatprep.subr.bf16.mxu0 0
      %4385 = vmatpush1.bf16.msra.mxu0 0
      %4386 = vmatprep.subr.bf16.mxu0 0
      %4387 = vmatpush1.bf16.msra.mxu0 0
      %4388 = vmatprep.subr.bf16.mxu0 0
      %4389 = vmatpush1.bf16.msra.mxu0 0
      %4390 = vmatprep.subr.bf16.mxu0 0
      %4391 = vmatpush1.bf16.msra.mxu0 0
      %4392 = vmatprep.subr.bf16.mxu0 0
      %4393 = vmatpush1.bf16.msra.mxu0 0
      %4394 = vmatprep.subr.bf16.mxu0 0
      %4395 = vmatpush1.bf16.msra.mxu0 0
      %4396 = vmatprep.subr.bf16.mxu0 0
      %4397 = vmatpush1.bf16.msra.mxu0 0
      %4398 = vmatprep.subr.bf16.mxu0 0
      %4399 = vmatpush1.bf16.msra.mxu0 0
      %4400 = vmatprep.subr.bf16.mxu0 0
      %4401 = vmatpush1.bf16.msra.mxu0 0
      %4402 = vmatprep.subr.bf16.mxu0 0
      %4403 = vmatpush1.bf16.msra.mxu0 0
      %4404 = vmatprep.mubr.bf16.mxu0 0
      %4405 = vmatmul.mubr.bf16.gmra.mrb[0].mxu0 %v4319
      %v4406 = vpop.f32.mrb[0].mxu0
      %v4407 = vadd.f32 0.0, %v4406
      %v4408 = vpop.f32.mrb[0].mxu0
      %v4409 = vpop.f32.mrb[0].mxu0
      %v4410 = vadd.f32 0.0, %v4409
      %v4411 = vpop.f32.mrb[0].mxu0
      %4412 = vmatprep.mubr.bf16.mxu0 0
      %4413 = vmatmul.mubr.bf16.gmra.mrb[0].mxu0 %v4322
      %v4414 = vpop.f32.mrb[0].mxu0
      %v4415 = vadd.f32 0.0, %v4414
      %v4416 = vpop.f32.mrb[0].mxu0
      %v4417 = vpop.f32.mrb[0].mxu0
      %v4418 = vadd.f32 0.0, %v4417
      %v4419 = vpop.f32.mrb[0].mxu0
      %4420 = vmatprep.mubr.bf16.mxu0 0
      %4421 = vmatmul.mubr.bf16.gmra.mrb[0].mxu0 %v4325
      %v4422 = vpop.f32.mrb[0].mxu0
      %v4423 = vadd.f32 0.0, %v4422
      %v4424 = vpop.f32.mrb[0].mxu0
      %v4425 = vpop.f32.mrb[0].mxu0
      %v4426 = vadd.f32 0.0, %v4425
      %v4427 = vpop.f32.mrb[0].mxu0
      %4428 = vmatprep.mubr.bf16.mxu0 0
      %4429 = vmatmul.mubr.bf16.gmra.mrb[0].mxu0 %v4328
      %v4430 = vpop.f32.mrb[0].mxu0
      %v4431 = vadd.f32 0.0, %v4430
      %v4432 = vpop.f32.mrb[0].mxu0
      %v4433 = vpop.f32.mrb[0].mxu0
      %v4434 = vadd.f32 0.0, %v4433
      %v4435 = vpop.f32.mrb[0].mxu0
      %4436 = vmatprep.mubr.bf16.mxu0 0
      %4437 = vmatmul.mubr.bf16.gmra.mrb[0].mxu0 %v4331
      %v4438 = vpop.f32.mrb[0].mxu0
      %v4439 = vadd.f32 0.0, %v4438
      %v4440 = vpop.f32.mrb[0].mxu0
      %v4441 = vpop.f32.mrb[0].mxu0
      %v4442 = vadd.f32 0.0, %v4441
      %v4443 = vpop.f32.mrb[0].mxu0
      %4444 = vmatprep.mubr.bf16.mxu0 0
      %4445 = vmatmul.mubr.bf16.gmra.mrb[0].mxu0 %v4334
      %v4446 = vpop.f32.mrb[0].mxu0
      %v4447 = vadd.f32 0.0, %v4446
      %v4448 = vpop.f32.mrb[0].mxu0
      %v4449 = vpop.f32.mrb[0].mxu0
      %v4450 = vadd.f32 0.0, %v4449
      %v4451 = vpop.f32.mrb[0].mxu0
      %4452 = vmatprep.mubr.bf16.mxu0 0
      %4453 = vmatmul.mubr.bf16.gmra.mrb[0].mxu0 %v4337
      %v4454 = vpop.f32.mrb[0].mxu0
      %v4455 = vadd.f32 0.0, %v4454
      %v4456 = vpop.f32.mrb[0].mxu0
      %v4457 = vpop.f32.mrb[0].mxu0
      %v4458 = vadd.f32 0.0, %v4457
      %v4459 = vpop.f32.mrb[0].mxu0
      %4460 = vmatprep.mubr.bf16.mxu0 0
      %4461 = vmatmul.mubr.bf16.gmra.mrb[0].mxu0 %v4340
      %v4462 = vpop.f32.mrb[0].mxu0
      %v4463 = vadd.f32 0.0, %v4462
      %v4464 = vpop.f32.mrb[0].mxu0
      %v4465 = vpop.f32.mrb[0].mxu0
      %v4466 = vadd.f32 0.0, %v4465
      %v4467 = vpop.f32.mrb[0].mxu0
      %4468 = vmatprep.mubr.bf16.mxu0 0
      %4469 = vmatmul.mubr.bf16.gmra.mrb[0].mxu0 %v4343
      %v4470 = vpop.f32.mrb[0].mxu0
      %v4471 = vadd.f32 0.0, %v4470
      %v4472 = vpop.f32.mrb[0].mxu0
      %v4473 = vpop.f32.mrb[0].mxu0
      %v4474 = vadd.f32 0.0, %v4473
      %v4475 = vpop.f32.mrb[0].mxu0
      %4476 = vmatprep.mubr.bf16.mxu0 0
      %4477 = vmatmul.mubr.bf16.gmra.mrb[0].mxu0 %v4346
      %v4478 = vpop.f32.mrb[0].mxu0
      %v4479 = vadd.f32 0.0, %v4478
      %v4480 = vpop.f32.mrb[0].mxu0
      %v4481 = vpop.f32.mrb[0].mxu0
      %v4482 = vadd.f32 0.0, %v4481
      %v4483 = vpop.f32.mrb[0].mxu0
      %4484 = vmatprep.mubr.bf16.mxu0 0
      %4485 = vmatmul.mubr.bf16.gmra.mrb[0].mxu0 %v4349
      %v4486 = vpop.f32.mrb[0].mxu0
      %v4487 = vadd.f32 0.0, %v4486
      %v4488 = vpop.f32.mrb[0].mxu0
      %v4489 = vpop.f32.mrb[0].mxu0
      %v4490 = vadd.f32 0.0, %v4489
      %v4491 = vpop.f32.mrb[0].mxu0
      %4492 = vmatprep.mubr.bf16.mxu0 0
      %4493 = vmatmul.mubr.bf16.gmra.mrb[0].mxu0 %v4352
      %v4494 = vpop.f32.mrb[0].mxu0
      %v4495 = vadd.f32 0.0, %v4494
      %v4496 = vpop.f32.mrb[0].mxu0
      %v4497 = vpop.f32.mrb[0].mxu0
      %v4498 = vadd.f32 0.0, %v4497
      %v4499 = vpop.f32.mrb[0].mxu0
      %4500 = vmatprep.mubr.bf16.mxu0 0
      %4501 = vmatmul.mubr.bf16.gmra.mrb[0].mxu0 %v4355
      %v4502 = vpop.f32.mrb[0].mxu0
      %v4503 = vadd.f32 0.0, %v4502
      %v4504 = vpop.f32.mrb[0].mxu0
      %v4505 = vpop.f32.mrb[0].mxu0
      %v4506 = vadd.f32 0.0, %v4505
      %v4507 = vpop.f32.mrb[0].mxu0
      %4508 = vmatprep.mubr.bf16.mxu0 0
      %4509 = vmatmul.mubr.bf16.gmra.mrb[0].mxu0 %v4358
      %v4510 = vpop.f32.mrb[0].mxu0
      %v4511 = vadd.f32 0.0, %v4510
      %v4512 = vpop.f32.mrb[0].mxu0
      %v4513 = vpop.f32.mrb[0].mxu0
      %v4514 = vadd.f32 0.0, %v4513
      %v4515 = vpop.f32.mrb[0].mxu0
      %4516 = vmatprep.mubr.bf16.mxu0 0
      %4517 = vmatmul.mubr.bf16.gmra.mrb[0].mxu0 %v4361
      %v4518 = vpop.f32.mrb[0].mxu0
      %v4519 = vadd.f32 0.0, %v4518
      %v4520 = vpop.f32.mrb[0].mxu0
      %v4521 = vpop.f32.mrb[0].mxu0
      %v4522 = vadd.f32 0.0, %v4521
      %v4523 = vpop.f32.mrb[0].mxu0
      %4524 = vmatprep.mubr.bf16.mxu0 0
      %4525 = vmatmul.mubr.bf16.gmra.mrb[0].mxu0 %v4364
      %v4526 = vpop.f32.mrb[0].mxu0
      %v4527 = vadd.f32 0.0, %v4526
      %v4528 = vpop.f32.mrb[0].mxu0
      %v4529 = vpop.f32.mrb[0].mxu0
      %v4530 = vadd.f32 0.0, %v4529
      %v4531 = vpop.f32.mrb[0].mxu0
      %4532 = vmatprep.mubr.bf16.mxu0 0
      %4533 = vmatmul.mubr.bf16.gmra.mrb[0].mxu0 %v4367
      %v4534 = vpop.f32.mrb[0].mxu0
      %v4535 = vadd.f32 0.0, %v4534
      %v4536 = vpop.f32.mrb[0].mxu0
      %v4537 = vpop.f32.mrb[0].mxu0
      %v4538 = vadd.f32 0.0, %v4537
      %v4539 = vpop.f32.mrb[0].mxu0
      %4540 = vmatprep.mubr.bf16.mxu0 0
      %4541 = vmatmul.mubr.bf16.gmra.mrb[0].mxu0 %v4370
      %v4542 = vpop.f32.mrb[0].mxu0
      %v4543 = vadd.f32 0.0, %v4542
      %v4544 = vpop.f32.mrb[0].mxu0
      %v4545 = vpop.f32.mrb[0].mxu0
      %v4546 = vadd.f32 0.0, %v4545
      %v4547 = vpop.f32.mrb[0].mxu0
      %4548 = vdwg.mxu0
      %v4549 = vadd.f32 %v4089, %v4407
      %v4550 = vadd.f32 %v4092, %v4410
      %v4551 = vadd.f32 %v4097, %v4415
      %v4552 = vadd.f32 %v4100, %v4418
      %v4553 = vadd.f32 %v4105, %v4423
      %v4554 = vadd.f32 %v4108, %v4426
      %v4555 = vadd.f32 %v4113, %v4431
      %v4556 = vadd.f32 %v4116, %v4434
      %v4557 = vadd.f32 %v4121, %v4439
      %v4558 = vadd.f32 %v4124, %v4442
      %v4559 = vadd.f32 %v4129, %v4447
      %v4560 = vadd.f32 %v4132, %v4450
      %v4561 = vadd.f32 %v4137, %v4455
      %v4562 = vadd.f32 %v4140, %v4458
      %v4563 = vadd.f32 %v4145, %v4463
      %v4564 = vadd.f32 %v4148, %v4466
      %v4565 = vadd.f32 %v4153, %v4471
      %v4566 = vadd.f32 %v4156, %v4474
      %v4567 = vadd.f32 %v4161, %v4479
      %v4568 = vadd.f32 %v4164, %v4482
      %v4569 = vadd.f32 %v4169, %v4487
      %v4570 = vadd.f32 %v4172, %v4490
      %v4571 = vadd.f32 %v4177, %v4495
      %v4572 = vadd.f32 %v4180, %v4498
      %v4573 = vadd.f32 %v4185, %v4503
      %v4574 = vadd.f32 %v4188, %v4506
      %v4575 = vadd.f32 %v4193, %v4511
      %v4576 = vadd.f32 %v4196, %v4514
      %v4577 = vadd.f32 %v4201, %v4519
      %v4578 = vadd.f32 %v4204, %v4522
      %v4579 = vadd.f32 %v4209, %v4527
      %v4580 = vadd.f32 %v4212, %v4530
      %v4581 = vadd.f32 %v4217, %v4535
      %v4582 = vadd.f32 %v4220, %v4538
      %v4583 = vadd.f32 %v4225, %v4543
      %v4584 = vadd.f32 %v4228, %v4546
      %v4585 = vld [vmem:[#allocation2 + $0x12] sm:$0xff]
      %v4586 = vld [vmem:[#allocation2 + $0x1a] sm:$0xff]
      %v4587 = vld [vmem:[#allocation2 + $0x22] sm:$0xff]
      %v4588 = vld [vmem:[#allocation2 + $0x2a] sm:$0xff]
      %v4589 = vld [vmem:[#allocation2 + $0x32] sm:$0xff]
      %v4590 = vld [vmem:[#allocation2 + $0x3a] sm:$0xff]
      %v4591 = vld [vmem:[#allocation2 + $0x42] sm:$0xff]
      %v4592 = vld [vmem:[#allocation2 + $0x4a] sm:$0xff]
      %v4593 = vld [vmem:[#allocation2 + $0x52] sm:$0xff]
      %v4594 = vld [vmem:[#allocation2 + $0x5a] sm:$0xff]
      %v4595 = vld [vmem:[#allocation2 + $0x62] sm:$0xff]
      %v4596 = vld [vmem:[#allocation2 + $0x6a] sm:$0xff]
      %v4597 = vld [vmem:[#allocation2 + $0x72] sm:$0xff]
      %v4598 = vld [vmem:[#allocation2 + $0x7a] sm:$0xff]
      %v4599 = vld [vmem:[#allocation2 + $0x82] sm:$0xff]
      %v4600 = vld [vmem:[#allocation2 + $0x8a] sm:$0xff]
      %v4601 = vld [vmem:[#allocation2 + $0x92] sm:$0xff]
      %v4602 = vld [vmem:[#allocation2 + $0x9a] sm:$0xff]
      %v4603 = vld [vmem:[#allocation2 + $0xa2] sm:$0xff]
      %v4604 = vld [vmem:[#allocation2 + $0xaa] sm:$0xff]
      %v4605 = vld [vmem:[#allocation2 + $0xb2] sm:$0xff]
      %v4606 = vld [vmem:[#allocation2 + $0xba] sm:$0xff]
      %v4607 = vld [vmem:[#allocation2 + $0xc2] sm:$0xff]
      %v4608 = vld [vmem:[#allocation2 + $0xca] sm:$0xff]
      %v4609 = vld [vmem:[#allocation2 + $0xd2] sm:$0xff]
      %v4610 = vld [vmem:[#allocation2 + $0xda] sm:$0xff]
      %v4611 = vld [vmem:[#allocation2 + $0xe2] sm:$0xff]
      %v4612 = vld [vmem:[#allocation2 + $0xea] sm:$0xff]
      %v4613 = vld [vmem:[#allocation2 + $0xf2] sm:$0xff]
      %v4614 = vld [vmem:[#allocation2 + $0xfa] sm:$0xff]
      %v4615 = vld [vmem:[#allocation2 + $0x102] sm:$0xff]
      %v4616 = vld [vmem:[#allocation2 + $0x10a] sm:$0xff]
      %v4617 = vld [vmem:[#allocation2 + $0x112] sm:$0xff]
      %v4618 = vld [vmem:[#allocation2 + $0x11a] sm:$0xff]
      %v4619 = vld [vmem:[#allocation2 + $0x122] sm:$0xff]
      %v4620 = vld [vmem:[#allocation2 + $0x12a] sm:$0xff]
      %v4621 = vpack.c.bf16 %v4586, %v4585
      %v4622 = vpack.c.bf16 %v4588, %v4587
      %v4623 = vpack.c.bf16 %v4590, %v4589
      %v4624 = vpack.c.bf16 %v4592, %v4591
      %v4625 = vpack.c.bf16 %v4594, %v4593
      %v4626 = vpack.c.bf16 %v4596, %v4595
      %v4627 = vpack.c.bf16 %v4598, %v4597
      %v4628 = vpack.c.bf16 %v4600, %v4599
      %v4629 = vpack.c.bf16 %v4602, %v4601
      %v4630 = vpack.c.bf16 %v4604, %v4603
      %v4631 = vpack.c.bf16 %v4606, %v4605
      %v4632 = vpack.c.bf16 %v4608, %v4607
      %v4633 = vpack.c.bf16 %v4610, %v4609
      %v4634 = vpack.c.bf16 %v4612, %v4611
      %v4635 = vpack.c.bf16 %v4614, %v4613
      %v4636 = vpack.c.bf16 %v4616, %v4615
      %v4637 = vpack.c.bf16 %v4618, %v4617
      %v4638 = vpack.c.bf16 %v4620, %v4619
      %s4639 = scalar_lea.vmem %s3, 96
      %v4640 = vld [vmem:[%s4639] sm:$0xf]
      %v4641 = vld [vmem:[%s4639 + $0x4] sm:$0xf]
      %v4642 = vld [vmem:[%s4639 + $0x8] sm:$0xf]
      %v4643 = vld [vmem:[%s4639 + $0xc] sm:$0xf]
      %v4644 = vld [vmem:[%s4639 + $0x10] sm:$0xf]
      %v4645 = vld [vmem:[%s4639 + $0x14] sm:$0xf]
      %v4646 = vld [vmem:[%s4639 + $0x18] sm:$0xf]
      %v4647 = vld [vmem:[%s4639 + $0x1c] sm:$0xf]
      %v4656 = vunpack.c.l.b16 %v4640
      %v4657 = vunpack.c.l.b16 %v4641
      %v4658 = vunpack.c.l.b16 %v4642
      %v4659 = vunpack.c.l.b16 %v4643
      %v4660 = vunpack.c.l.b16 %v4644
      %v4661 = vunpack.c.l.b16 %v4645
      %v4662 = vunpack.c.l.b16 %v4646
      %v4663 = vunpack.c.l.b16 %v4647
      %v4664 = vpack.c.b16 %v4657, %v4656
      %v4665 = vpack.c.b16 %v4659, %v4658
      %v4666 = vpack.c.b16 %v4661, %v4660
      %v4667 = vpack.c.b16 %v4663, %v4662
      %v4673 = vsel %vm316, %v4621, 0
      %v4676 = vsel %vm316, %v4622, 0
      %v4679 = vsel %vm316, %v4623, 0
      %v4682 = vsel %vm316, %v4624, 0
      %v4685 = vsel %vm316, %v4625, 0
      %v4688 = vsel %vm316, %v4626, 0
      %v4691 = vsel %vm316, %v4627, 0
      %v4694 = vsel %vm316, %v4628, 0
      %v4697 = vsel %vm316, %v4629, 0
      %v4700 = vsel %vm316, %v4630, 0
      %v4703 = vsel %vm316, %v4631, 0
      %v4706 = vsel %vm316, %v4632, 0
      %v4709 = vsel %vm316, %v4633, 0
      %v4712 = vsel %vm316, %v4634, 0
      %v4715 = vsel %vm316, %v4635, 0
      %v4718 = vsel %vm316, %v4636, 0
      %v4721 = vsel %vm316, %v4637, 0
      %v4724 = vsel %vm316, %v4638, 0
      %4726 = vmatprep.subr.bf16.mxu0 0
      %4727 = vmatpush1.bf16.msra.mxu0 %v4664
      %4728 = vmatprep.subr.bf16.mxu0 0
      %4729 = vmatpush1.bf16.msra.mxu0 %v4665
      %4730 = vmatprep.subr.bf16.mxu0 0
      %4731 = vmatpush1.bf16.msra.mxu0 %v4666
      %4732 = vmatprep.subr.bf16.mxu0 0
      %4733 = vmatpush1.bf16.msra.mxu0 %v4667
      %4734 = vmatprep.subr.bf16.mxu0 0
      %4735 = vmatpush1.bf16.msra.mxu0 0
      %4736 = vmatprep.subr.bf16.mxu0 0
      %4737 = vmatpush1.bf16.msra.mxu0 0
      %4738 = vmatprep.subr.bf16.mxu0 0
      %4739 = vmatpush1.bf16.msra.mxu0 0
      %4740 = vmatprep.subr.bf16.mxu0 0
      %4741 = vmatpush1.bf16.msra.mxu0 0
      %4742 = vmatprep.subr.bf16.mxu0 0
      %4743 = vmatpush1.bf16.msra.mxu0 0
      %4744 = vmatprep.subr.bf16.mxu0 0
      %4745 = vmatpush1.bf16.msra.mxu0 0
      %4746 = vmatprep.subr.bf16.mxu0 0
      %4747 = vmatpush1.bf16.msra.mxu0 0
      %4748 = vmatprep.subr.bf16.mxu0 0
      %4749 = vmatpush1.bf16.msra.mxu0 0
      %4750 = vmatprep.subr.bf16.mxu0 0
      %4751 = vmatpush1.bf16.msra.mxu0 0
      %4752 = vmatprep.subr.bf16.mxu0 0
      %4753 = vmatpush1.bf16.msra.mxu0 0
      %4754 = vmatprep.subr.bf16.mxu0 0
      %4755 = vmatpush1.bf16.msra.mxu0 0
      %4756 = vmatprep.subr.bf16.mxu0 0
      %4757 = vmatpush1.bf16.msra.mxu0 0
      %4758 = vmatprep.mubr.bf16.mxu0 0
      %4759 = vmatmul.mubr.bf16.gmra.mrb[0].mxu0 %v4673
      %v4760 = vpop.f32.mrb[0].mxu0
      %v4761 = vadd.f32 0.0, %v4760
      %v4762 = vpop.f32.mrb[0].mxu0
      %v4763 = vpop.f32.mrb[0].mxu0
      %v4764 = vadd.f32 0.0, %v4763
      %v4765 = vpop.f32.mrb[0].mxu0
      %4766 = vmatprep.mubr.bf16.mxu0 0
      %4767 = vmatmul.mubr.bf16.gmra.mrb[0].mxu0 %v4676
      %v4768 = vpop.f32.mrb[0].mxu0
      %v4769 = vadd.f32 0.0, %v4768
      %v4770 = vpop.f32.mrb[0].mxu0
      %v4771 = vpop.f32.mrb[0].mxu0
      %v4772 = vadd.f32 0.0, %v4771
      %v4773 = vpop.f32.mrb[0].mxu0
      %4774 = vmatprep.mubr.bf16.mxu0 0
      %4775 = vmatmul.mubr.bf16.gmra.mrb[0].mxu0 %v4679
      %v4776 = vpop.f32.mrb[0].mxu0
      %v4777 = vadd.f32 0.0, %v4776
      %v4778 = vpop.f32.mrb[0].mxu0
      %v4779 = vpop.f32.mrb[0].mxu0
      %v4780 = vadd.f32 0.0, %v4779
      %v4781 = vpop.f32.mrb[0].mxu0
      %4782 = vmatprep.mubr.bf16.mxu0 0
      %4783 = vmatmul.mubr.bf16.gmra.mrb[0].mxu0 %v4682
      %v4784 = vpop.f32.mrb[0].mxu0
      %v4785 = vadd.f32 0.0, %v4784
      %v4786 = vpop.f32.mrb[0].mxu0
      %v4787 = vpop.f32.mrb[0].mxu0
      %v4788 = vadd.f32 0.0, %v4787
      %v4789 = vpop.f32.mrb[0].mxu0
      %4790 = vmatprep.mubr.bf16.mxu0 0
      %4791 = vmatmul.mubr.bf16.gmra.mrb[0].mxu0 %v4685
      %v4792 = vpop.f32.mrb[0].mxu0
      %v4793 = vadd.f32 0.0, %v4792
      %v4794 = vpop.f32.mrb[0].mxu0
      %v4795 = vpop.f32.mrb[0].mxu0
      %v4796 = vadd.f32 0.0, %v4795
      %v4797 = vpop.f32.mrb[0].mxu0
      %4798 = vmatprep.mubr.bf16.mxu0 0
      %4799 = vmatmul.mubr.bf16.gmra.mrb[0].mxu0 %v4688
      %v4800 = vpop.f32.mrb[0].mxu0
      %v4801 = vadd.f32 0.0, %v4800
      %v4802 = vpop.f32.mrb[0].mxu0
      %v4803 = vpop.f32.mrb[0].mxu0
      %v4804 = vadd.f32 0.0, %v4803
      %v4805 = vpop.f32.mrb[0].mxu0
      %4806 = vmatprep.mubr.bf16.mxu0 0
      %4807 = vmatmul.mubr.bf16.gmra.mrb[0].mxu0 %v4691
      %v4808 = vpop.f32.mrb[0].mxu0
      %v4809 = vadd.f32 0.0, %v4808
      %v4810 = vpop.f32.mrb[0].mxu0
      %v4811 = vpop.f32.mrb[0].mxu0
      %v4812 = vadd.f32 0.0, %v4811
      %v4813 = vpop.f32.mrb[0].mxu0
      %4814 = vmatprep.mubr.bf16.mxu0 0
      %4815 = vmatmul.mubr.bf16.gmra.mrb[0].mxu0 %v4694
      %v4816 = vpop.f32.mrb[0].mxu0
      %v4817 = vadd.f32 0.0, %v4816
      %v4818 = vpop.f32.mrb[0].mxu0
      %v4819 = vpop.f32.mrb[0].mxu0
      %v4820 = vadd.f32 0.0, %v4819
      %v4821 = vpop.f32.mrb[0].mxu0
      %4822 = vmatprep.mubr.bf16.mxu0 0
      %4823 = vmatmul.mubr.bf16.gmra.mrb[0].mxu0 %v4697
      %v4824 = vpop.f32.mrb[0].mxu0
      %v4825 = vadd.f32 0.0, %v4824
      %v4826 = vpop.f32.mrb[0].mxu0
      %v4827 = vpop.f32.mrb[0].mxu0
      %v4828 = vadd.f32 0.0, %v4827
      %v4829 = vpop.f32.mrb[0].mxu0
      %4830 = vmatprep.mubr.bf16.mxu0 0
      %4831 = vmatmul.mubr.bf16.gmra.mrb[0].mxu0 %v4700
      %v4832 = vpop.f32.mrb[0].mxu0
      %v4833 = vadd.f32 0.0, %v4832
      %v4834 = vpop.f32.mrb[0].mxu0
      %v4835 = vpop.f32.mrb[0].mxu0
      %v4836 = vadd.f32 0.0, %v4835
      %v4837 = vpop.f32.mrb[0].mxu0
      %4838 = vmatprep.mubr.bf16.mxu0 0
      %4839 = vmatmul.mubr.bf16.gmra.mrb[0].mxu0 %v4703
      %v4840 = vpop.f32.mrb[0].mxu0
      %v4841 = vadd.f32 0.0, %v4840
      %v4842 = vpop.f32.mrb[0].mxu0
      %v4843 = vpop.f32.mrb[0].mxu0
      %v4844 = vadd.f32 0.0, %v4843
      %v4845 = vpop.f32.mrb[0].mxu0
      %4846 = vmatprep.mubr.bf16.mxu0 0
      %4847 = vmatmul.mubr.bf16.gmra.mrb[0].mxu0 %v4706
      %v4848 = vpop.f32.mrb[0].mxu0
      %v4849 = vadd.f32 0.0, %v4848
      %v4850 = vpop.f32.mrb[0].mxu0
      %v4851 = vpop.f32.mrb[0].mxu0
      %v4852 = vadd.f32 0.0, %v4851
      %v4853 = vpop.f32.mrb[0].mxu0
      %4854 = vmatprep.mubr.bf16.mxu0 0
      %4855 = vmatmul.mubr.bf16.gmra.mrb[0].mxu0 %v4709
      %v4856 = vpop.f32.mrb[0].mxu0
      %v4857 = vadd.f32 0.0, %v4856
      %v4858 = vpop.f32.mrb[0].mxu0
      %v4859 = vpop.f32.mrb[0].mxu0
      %v4860 = vadd.f32 0.0, %v4859
      %v4861 = vpop.f32.mrb[0].mxu0
      %4862 = vmatprep.mubr.bf16.mxu0 0
      %4863 = vmatmul.mubr.bf16.gmra.mrb[0].mxu0 %v4712
      %v4864 = vpop.f32.mrb[0].mxu0
      %v4865 = vadd.f32 0.0, %v4864
      %v4866 = vpop.f32.mrb[0].mxu0
      %v4867 = vpop.f32.mrb[0].mxu0
      %v4868 = vadd.f32 0.0, %v4867
      %v4869 = vpop.f32.mrb[0].mxu0
      %4870 = vmatprep.mubr.bf16.mxu0 0
      %4871 = vmatmul.mubr.bf16.gmra.mrb[0].mxu0 %v4715
      %v4872 = vpop.f32.mrb[0].mxu0
      %v4873 = vadd.f32 0.0, %v4872
      %v4874 = vpop.f32.mrb[0].mxu0
      %v4875 = vpop.f32.mrb[0].mxu0
      %v4876 = vadd.f32 0.0, %v4875
      %v4877 = vpop.f32.mrb[0].mxu0
      %4878 = vmatprep.mubr.bf16.mxu0 0
      %4879 = vmatmul.mubr.bf16.gmra.mrb[0].mxu0 %v4718
      %v4880 = vpop.f32.mrb[0].mxu0
      %v4881 = vadd.f32 0.0, %v4880
      %v4882 = vpop.f32.mrb[0].mxu0
      %v4883 = vpop.f32.mrb[0].mxu0
      %v4884 = vadd.f32 0.0, %v4883
      %v4885 = vpop.f32.mrb[0].mxu0
      %4886 = vmatprep.mubr.bf16.mxu0 0
      %4887 = vmatmul.mubr.bf16.gmra.mrb[0].mxu0 %v4721
      %v4888 = vpop.f32.mrb[0].mxu0
      %v4889 = vadd.f32 0.0, %v4888
      %v4890 = vpop.f32.mrb[0].mxu0
      %v4891 = vpop.f32.mrb[0].mxu0
      %v4892 = vadd.f32 0.0, %v4891
      %v4893 = vpop.f32.mrb[0].mxu0
      %4894 = vmatprep.mubr.bf16.mxu0 0
      %4895 = vmatmul.mubr.bf16.gmra.mrb[0].mxu0 %v4724
      %v4896 = vpop.f32.mrb[0].mxu0
      %v4897 = vadd.f32 0.0, %v4896
      %v4898 = vpop.f32.mrb[0].mxu0
      %v4899 = vpop.f32.mrb[0].mxu0
      %v4900 = vadd.f32 0.0, %v4899
      %v4901 = vpop.f32.mrb[0].mxu0
      %4902 = vdwg.mxu0
      %v4903 = vadd.f32 %v4549, %v4761
      %v4904 = vadd.f32 %v4550, %v4764
      %v4905 = vadd.f32 %v4551, %v4769
      %v4906 = vadd.f32 %v4552, %v4772
      %v4907 = vadd.f32 %v4553, %v4777
      %v4908 = vadd.f32 %v4554, %v4780
      %v4909 = vadd.f32 %v4555, %v4785
      %v4910 = vadd.f32 %v4556, %v4788
      %v4911 = vadd.f32 %v4557, %v4793
      %v4912 = vadd.f32 %v4558, %v4796
      %v4913 = vadd.f32 %v4559, %v4801
      %v4914 = vadd.f32 %v4560, %v4804
      %v4915 = vadd.f32 %v4561, %v4809
      %v4916 = vadd.f32 %v4562, %v4812
      %v4917 = vadd.f32 %v4563, %v4817
      %v4918 = vadd.f32 %v4564, %v4820
      %v4919 = vadd.f32 %v4565, %v4825
      %v4920 = vadd.f32 %v4566, %v4828
      %v4921 = vadd.f32 %v4567, %v4833
      %v4922 = vadd.f32 %v4568, %v4836
      %v4923 = vadd.f32 %v4569, %v4841
      %v4924 = vadd.f32 %v4570, %v4844
      %v4925 = vadd.f32 %v4571, %v4849
      %v4926 = vadd.f32 %v4572, %v4852
      %v4927 = vadd.f32 %v4573, %v4857
      %v4928 = vadd.f32 %v4574, %v4860
      %v4929 = vadd.f32 %v4575, %v4865
      %v4930 = vadd.f32 %v4576, %v4868
      %v4931 = vadd.f32 %v4577, %v4873
      %v4932 = vadd.f32 %v4578, %v4876
      %v4933 = vadd.f32 %v4579, %v4881
      %v4934 = vadd.f32 %v4580, %v4884
      %v4935 = vadd.f32 %v4581, %v4889
      %v4936 = vadd.f32 %v4582, %v4892
      %v4937 = vadd.f32 %v4583, %v4897
      %v4938 = vadd.f32 %v4584, %v4900
      %v4939 = vld [vmem:[#allocation2 + $0x13] sm:$0xff]
      %v4940 = vld [vmem:[#allocation2 + $0x1b] sm:$0xff]
      %v4941 = vld [vmem:[#allocation2 + $0x23] sm:$0xff]
      %v4942 = vld [vmem:[#allocation2 + $0x2b] sm:$0xff]
      %v4943 = vld [vmem:[#allocation2 + $0x33] sm:$0xff]
      %v4944 = vld [vmem:[#allocation2 + $0x3b] sm:$0xff]
      %v4945 = vld [vmem:[#allocation2 + $0x43] sm:$0xff]
      %v4946 = vld [vmem:[#allocation2 + $0x4b] sm:$0xff]
      %v4947 = vld [vmem:[#allocation2 + $0x53] sm:$0xff]
      %v4948 = vld [vmem:[#allocation2 + $0x5b] sm:$0xff]
      %v4949 = vld [vmem:[#allocation2 + $0x63] sm:$0xff]
      %v4950 = vld [vmem:[#allocation2 + $0x6b] sm:$0xff]
      %v4951 = vld [vmem:[#allocation2 + $0x73] sm:$0xff]
      %v4952 = vld [vmem:[#allocation2 + $0x7b] sm:$0xff]
      %v4953 = vld [vmem:[#allocation2 + $0x83] sm:$0xff]
      %v4954 = vld [vmem:[#allocation2 + $0x8b] sm:$0xff]
      %v4955 = vld [vmem:[#allocation2 + $0x93] sm:$0xff]
      %v4956 = vld [vmem:[#allocation2 + $0x9b] sm:$0xff]
      %v4957 = vld [vmem:[#allocation2 + $0xa3] sm:$0xff]
      %v4958 = vld [vmem:[#allocation2 + $0xab] sm:$0xff]
      %v4959 = vld [vmem:[#allocation2 + $0xb3] sm:$0xff]
      %v4960 = vld [vmem:[#allocation2 + $0xbb] sm:$0xff]
      %v4961 = vld [vmem:[#allocation2 + $0xc3] sm:$0xff]
      %v4962 = vld [vmem:[#allocation2 + $0xcb] sm:$0xff]
      %v4963 = vld [vmem:[#allocation2 + $0xd3] sm:$0xff]
      %v4964 = vld [vmem:[#allocation2 + $0xdb] sm:$0xff]
      %v4965 = vld [vmem:[#allocation2 + $0xe3] sm:$0xff]
      %v4966 = vld [vmem:[#allocation2 + $0xeb] sm:$0xff]
      %v4967 = vld [vmem:[#allocation2 + $0xf3] sm:$0xff]
      %v4968 = vld [vmem:[#allocation2 + $0xfb] sm:$0xff]
      %v4969 = vld [vmem:[#allocation2 + $0x103] sm:$0xff]
      %v4970 = vld [vmem:[#allocation2 + $0x10b] sm:$0xff]
      %v4971 = vld [vmem:[#allocation2 + $0x113] sm:$0xff]
      %v4972 = vld [vmem:[#allocation2 + $0x11b] sm:$0xff]
      %v4973 = vld [vmem:[#allocation2 + $0x123] sm:$0xff]
      %v4974 = vld [vmem:[#allocation2 + $0x12b] sm:$0xff]
      %v4975 = vpack.c.bf16 %v4940, %v4939
      %v4976 = vpack.c.bf16 %v4942, %v4941
      %v4977 = vpack.c.bf16 %v4944, %v4943
      %v4978 = vpack.c.bf16 %v4946, %v4945
      %v4979 = vpack.c.bf16 %v4948, %v4947
      %v4980 = vpack.c.bf16 %v4950, %v4949
      %v4981 = vpack.c.bf16 %v4952, %v4951
      %v4982 = vpack.c.bf16 %v4954, %v4953
      %v4983 = vpack.c.bf16 %v4956, %v4955
      %v4984 = vpack.c.bf16 %v4958, %v4957
      %v4985 = vpack.c.bf16 %v4960, %v4959
      %v4986 = vpack.c.bf16 %v4962, %v4961
      %v4987 = vpack.c.bf16 %v4964, %v4963
      %v4988 = vpack.c.bf16 %v4966, %v4965
      %v4989 = vpack.c.bf16 %v4968, %v4967
      %v4990 = vpack.c.bf16 %v4970, %v4969
      %v4991 = vpack.c.bf16 %v4972, %v4971
      %v4992 = vpack.c.bf16 %v4974, %v4973
      %s4993 = scalar_lea.vmem %s3, 128
      %v4994 = vld [vmem:[%s4993] sm:$0xf]
      %v4995 = vld [vmem:[%s4993 + $0x4] sm:$0xf]
      %v4996 = vld [vmem:[%s4993 + $0x8] sm:$0xf]
      %v4997 = vld [vmem:[%s4993 + $0xc] sm:$0xf]
      %v4998 = vld [vmem:[%s4993 + $0x10] sm:$0xf]
      %v4999 = vld [vmem:[%s4993 + $0x14] sm:$0xf]
      %v5000 = vld [vmem:[%s4993 + $0x18] sm:$0xf]
      %v5001 = vld [vmem:[%s4993 + $0x1c] sm:$0xf]
      %v5010 = vunpack.c.l.b16 %v4994
      %v5011 = vunpack.c.l.b16 %v4995
      %v5012 = vunpack.c.l.b16 %v4996
      %v5013 = vunpack.c.l.b16 %v4997
      %v5014 = vunpack.c.l.b16 %v4998
      %v5015 = vunpack.c.l.b16 %v4999
      %v5016 = vunpack.c.l.b16 %v5000
      %v5017 = vunpack.c.l.b16 %v5001
      %v5018 = vpack.c.b16 %v5011, %v5010
      %v5019 = vpack.c.b16 %v5013, %v5012
      %v5020 = vpack.c.b16 %v5015, %v5014
      %v5021 = vpack.c.b16 %v5017, %v5016
      %v5027 = vsel %vm316, %v4975, 0
      %v5030 = vsel %vm316, %v4976, 0
      %v5033 = vsel %vm316, %v4977, 0
      %v5036 = vsel %vm316, %v4978, 0
      %v5039 = vsel %vm316, %v4979, 0
      %v5042 = vsel %vm316, %v4980, 0
      %v5045 = vsel %vm316, %v4981, 0
      %v5048 = vsel %vm316, %v4982, 0
      %v5051 = vsel %vm316, %v4983, 0
      %v5054 = vsel %vm316, %v4984, 0
      %v5057 = vsel %vm316, %v4985, 0
      %v5060 = vsel %vm316, %v4986, 0
      %v5063 = vsel %vm316, %v4987, 0
      %v5066 = vsel %vm316, %v4988, 0
      %v5069 = vsel %vm316, %v4989, 0
      %v5072 = vsel %vm316, %v4990, 0
      %v5075 = vsel %vm316, %v4991, 0
      %v5078 = vsel %vm316, %v4992, 0
      %5080 = vmatprep.subr.bf16.mxu0 0
      %5081 = vmatpush1.bf16.msra.mxu0 %v5018
      %5082 = vmatprep.subr.bf16.mxu0 0
      %5083 = vmatpush1.bf16.msra.mxu0 %v5019
      %5084 = vmatprep.subr.bf16.mxu0 0
      %5085 = vmatpush1.bf16.msra.mxu0 %v5020
      %5086 = vmatprep.subr.bf16.mxu0 0
      %5087 = vmatpush1.bf16.msra.mxu0 %v5021
      %5088 = vmatprep.subr.bf16.mxu0 0
      %5089 = vmatpush1.bf16.msra.mxu0 0
      %5090 = vmatprep.subr.bf16.mxu0 0
      %5091 = vmatpush1.bf16.msra.mxu0 0
      %5092 = vmatprep.subr.bf16.mxu0 0
      %5093 = vmatpush1.bf16.msra.mxu0 0
      %5094 = vmatprep.subr.bf16.mxu0 0
      %5095 = vmatpush1.bf16.msra.mxu0 0
      %5096 = vmatprep.subr.bf16.mxu0 0
      %5097 = vmatpush1.bf16.msra.mxu0 0
      %5098 = vmatprep.subr.bf16.mxu0 0
      %5099 = vmatpush1.bf16.msra.mxu0 0
      %5100 = vmatprep.subr.bf16.mxu0 0
      %5101 = vmatpush1.bf16.msra.mxu0 0
      %5102 = vmatprep.subr.bf16.mxu0 0
      %5103 = vmatpush1.bf16.msra.mxu0 0
      %5104 = vmatprep.subr.bf16.mxu0 0
      %5105 = vmatpush1.bf16.msra.mxu0 0
      %5106 = vmatprep.subr.bf16.mxu0 0
      %5107 = vmatpush1.bf16.msra.mxu0 0
      %5108 = vmatprep.subr.bf16.mxu0 0
      %5109 = vmatpush1.bf16.msra.mxu0 0
      %5110 = vmatprep.subr.bf16.mxu0 0
      %5111 = vmatpush1.bf16.msra.mxu0 0
      %5112 = vmatprep.mubr.bf16.mxu0 0
      %5113 = vmatmul.mubr.bf16.gmra.mrb[0].mxu0 %v5027
      %v5114 = vpop.f32.mrb[0].mxu0
      %v5115 = vadd.f32 0.0, %v5114
      %v5116 = vpop.f32.mrb[0].mxu0
      %v5117 = vpop.f32.mrb[0].mxu0
      %v5118 = vadd.f32 0.0, %v5117
      %v5119 = vpop.f32.mrb[0].mxu0
      %5120 = vmatprep.mubr.bf16.mxu0 0
      %5121 = vmatmul.mubr.bf16.gmra.mrb[0].mxu0 %v5030
      %v5122 = vpop.f32.mrb[0].mxu0
      %v5123 = vadd.f32 0.0, %v5122
      %v5124 = vpop.f32.mrb[0].mxu0
      %v5125 = vpop.f32.mrb[0].mxu0
      %v5126 = vadd.f32 0.0, %v5125
      %v5127 = vpop.f32.mrb[0].mxu0
      %5128 = vmatprep.mubr.bf16.mxu0 0
      %5129 = vmatmul.mubr.bf16.gmra.mrb[0].mxu0 %v5033
      %v5130 = vpop.f32.mrb[0].mxu0
      %v5131 = vadd.f32 0.0, %v5130
      %v5132 = vpop.f32.mrb[0].mxu0
      %v5133 = vpop.f32.mrb[0].mxu0
      %v5134 = vadd.f32 0.0, %v5133
      %v5135 = vpop.f32.mrb[0].mxu0
      %5136 = vmatprep.mubr.bf16.mxu0 0
      %5137 = vmatmul.mubr.bf16.gmra.mrb[0].mxu0 %v5036
      %v5138 = vpop.f32.mrb[0].mxu0
      %v5139 = vadd.f32 0.0, %v5138
      %v5140 = vpop.f32.mrb[0].mxu0
      %v5141 = vpop.f32.mrb[0].mxu0
      %v5142 = vadd.f32 0.0, %v5141
      %v5143 = vpop.f32.mrb[0].mxu0
      %5144 = vmatprep.mubr.bf16.mxu0 0
      %5145 = vmatmul.mubr.bf16.gmra.mrb[0].mxu0 %v5039
      %v5146 = vpop.f32.mrb[0].mxu0
      %v5147 = vadd.f32 0.0, %v5146
      %v5148 = vpop.f32.mrb[0].mxu0
      %v5149 = vpop.f32.mrb[0].mxu0
      %v5150 = vadd.f32 0.0, %v5149
      %v5151 = vpop.f32.mrb[0].mxu0
      %5152 = vmatprep.mubr.bf16.mxu0 0
      %5153 = vmatmul.mubr.bf16.gmra.mrb[0].mxu0 %v5042
      %v5154 = vpop.f32.mrb[0].mxu0
      %v5155 = vadd.f32 0.0, %v5154
      %v5156 = vpop.f32.mrb[0].mxu0
      %v5157 = vpop.f32.mrb[0].mxu0
      %v5158 = vadd.f32 0.0, %v5157
      %v5159 = vpop.f32.mrb[0].mxu0
      %5160 = vmatprep.mubr.bf16.mxu0 0
      %5161 = vmatmul.mubr.bf16.gmra.mrb[0].mxu0 %v5045
      %v5162 = vpop.f32.mrb[0].mxu0
      %v5163 = vadd.f32 0.0, %v5162
      %v5164 = vpop.f32.mrb[0].mxu0
      %v5165 = vpop.f32.mrb[0].mxu0
      %v5166 = vadd.f32 0.0, %v5165
      %v5167 = vpop.f32.mrb[0].mxu0
      %5168 = vmatprep.mubr.bf16.mxu0 0
      %5169 = vmatmul.mubr.bf16.gmra.mrb[0].mxu0 %v5048
      %v5170 = vpop.f32.mrb[0].mxu0
      %v5171 = vadd.f32 0.0, %v5170
      %v5172 = vpop.f32.mrb[0].mxu0
      %v5173 = vpop.f32.mrb[0].mxu0
      %v5174 = vadd.f32 0.0, %v5173
      %v5175 = vpop.f32.mrb[0].mxu0
      %5176 = vmatprep.mubr.bf16.mxu0 0
      %5177 = vmatmul.mubr.bf16.gmra.mrb[0].mxu0 %v5051
      %v5178 = vpop.f32.mrb[0].mxu0
      %v5179 = vadd.f32 0.0, %v5178
      %v5180 = vpop.f32.mrb[0].mxu0
      %v5181 = vpop.f32.mrb[0].mxu0
      %v5182 = vadd.f32 0.0, %v5181
      %v5183 = vpop.f32.mrb[0].mxu0
      %5184 = vmatprep.mubr.bf16.mxu0 0
      %5185 = vmatmul.mubr.bf16.gmra.mrb[0].mxu0 %v5054
      %v5186 = vpop.f32.mrb[0].mxu0
      %v5187 = vadd.f32 0.0, %v5186
      %v5188 = vpop.f32.mrb[0].mxu0
      %v5189 = vpop.f32.mrb[0].mxu0
      %v5190 = vadd.f32 0.0, %v5189
      %v5191 = vpop.f32.mrb[0].mxu0
      %5192 = vmatprep.mubr.bf16.mxu0 0
      %5193 = vmatmul.mubr.bf16.gmra.mrb[0].mxu0 %v5057
      %v5194 = vpop.f32.mrb[0].mxu0
      %v5195 = vadd.f32 0.0, %v5194
      %v5196 = vpop.f32.mrb[0].mxu0
      %v5197 = vpop.f32.mrb[0].mxu0
      %v5198 = vadd.f32 0.0, %v5197
      %v5199 = vpop.f32.mrb[0].mxu0
      %5200 = vmatprep.mubr.bf16.mxu0 0
      %5201 = vmatmul.mubr.bf16.gmra.mrb[0].mxu0 %v5060
      %v5202 = vpop.f32.mrb[0].mxu0
      %v5203 = vadd.f32 0.0, %v5202
      %v5204 = vpop.f32.mrb[0].mxu0
      %v5205 = vpop.f32.mrb[0].mxu0
      %v5206 = vadd.f32 0.0, %v5205
      %v5207 = vpop.f32.mrb[0].mxu0
      %5208 = vmatprep.mubr.bf16.mxu0 0
      %5209 = vmatmul.mubr.bf16.gmra.mrb[0].mxu0 %v5063
      %v5210 = vpop.f32.mrb[0].mxu0
      %v5211 = vadd.f32 0.0, %v5210
      %v5212 = vpop.f32.mrb[0].mxu0
      %v5213 = vpop.f32.mrb[0].mxu0
      %v5214 = vadd.f32 0.0, %v5213
      %v5215 = vpop.f32.mrb[0].mxu0
      %5216 = vmatprep.mubr.bf16.mxu0 0
      %5217 = vmatmul.mubr.bf16.gmra.mrb[0].mxu0 %v5066
      %v5218 = vpop.f32.mrb[0].mxu0
      %v5219 = vadd.f32 0.0, %v5218
      %v5220 = vpop.f32.mrb[0].mxu0
      %v5221 = vpop.f32.mrb[0].mxu0
      %v5222 = vadd.f32 0.0, %v5221
      %v5223 = vpop.f32.mrb[0].mxu0
      %5224 = vmatprep.mubr.bf16.mxu0 0
      %5225 = vmatmul.mubr.bf16.gmra.mrb[0].mxu0 %v5069
      %v5226 = vpop.f32.mrb[0].mxu0
      %v5227 = vadd.f32 0.0, %v5226
      %v5228 = vpop.f32.mrb[0].mxu0
      %v5229 = vpop.f32.mrb[0].mxu0
      %v5230 = vadd.f32 0.0, %v5229
      %v5231 = vpop.f32.mrb[0].mxu0
      %5232 = vmatprep.mubr.bf16.mxu0 0
      %5233 = vmatmul.mubr.bf16.gmra.mrb[0].mxu0 %v5072
      %v5234 = vpop.f32.mrb[0].mxu0
      %v5235 = vadd.f32 0.0, %v5234
      %v5236 = vpop.f32.mrb[0].mxu0
      %v5237 = vpop.f32.mrb[0].mxu0
      %v5238 = vadd.f32 0.0, %v5237
      %v5239 = vpop.f32.mrb[0].mxu0
      %5240 = vmatprep.mubr.bf16.mxu0 0
      %5241 = vmatmul.mubr.bf16.gmra.mrb[0].mxu0 %v5075
      %v5242 = vpop.f32.mrb[0].mxu0
      %v5243 = vadd.f32 0.0, %v5242
      %v5244 = vpop.f32.mrb[0].mxu0
      %v5245 = vpop.f32.mrb[0].mxu0
      %v5246 = vadd.f32 0.0, %v5245
      %v5247 = vpop.f32.mrb[0].mxu0
      %5248 = vmatprep.mubr.bf16.mxu0 0
      %5249 = vmatmul.mubr.bf16.gmra.mrb[0].mxu0 %v5078
      %v5250 = vpop.f32.mrb[0].mxu0
      %v5251 = vadd.f32 0.0, %v5250
      %v5252 = vpop.f32.mrb[0].mxu0
      %v5253 = vpop.f32.mrb[0].mxu0
      %v5254 = vadd.f32 0.0, %v5253
      %v5255 = vpop.f32.mrb[0].mxu0
      %5256 = vdwg.mxu0
      %v5257 = vadd.f32 %v4903, %v5115
      %v5258 = vadd.f32 %v4904, %v5118
      %v5259 = vadd.f32 %v4905, %v5123
      %v5260 = vadd.f32 %v4906, %v5126
      %v5261 = vadd.f32 %v4907, %v5131
      %v5262 = vadd.f32 %v4908, %v5134
      %v5263 = vadd.f32 %v4909, %v5139
      %v5264 = vadd.f32 %v4910, %v5142
      %v5265 = vadd.f32 %v4911, %v5147
      %v5266 = vadd.f32 %v4912, %v5150
      %v5267 = vadd.f32 %v4913, %v5155
      %v5268 = vadd.f32 %v4914, %v5158
      %v5269 = vadd.f32 %v4915, %v5163
      %v5270 = vadd.f32 %v4916, %v5166
      %v5271 = vadd.f32 %v4917, %v5171
      %v5272 = vadd.f32 %v4918, %v5174
      %v5273 = vadd.f32 %v4919, %v5179
      %v5274 = vadd.f32 %v4920, %v5182
      %v5275 = vadd.f32 %v4921, %v5187
      %v5276 = vadd.f32 %v4922, %v5190
      %v5277 = vadd.f32 %v4923, %v5195
      %v5278 = vadd.f32 %v4924, %v5198
      %v5279 = vadd.f32 %v4925, %v5203
      %v5280 = vadd.f32 %v4926, %v5206
      %v5281 = vadd.f32 %v4927, %v5211
      %v5282 = vadd.f32 %v4928, %v5214
      %v5283 = vadd.f32 %v4929, %v5219
      %v5284 = vadd.f32 %v4930, %v5222
      %v5285 = vadd.f32 %v4931, %v5227
      %v5286 = vadd.f32 %v4932, %v5230
      %v5287 = vadd.f32 %v4933, %v5235
      %v5288 = vadd.f32 %v4934, %v5238
      %v5289 = vadd.f32 %v4935, %v5243
      %v5290 = vadd.f32 %v4936, %v5246
      %v5291 = vadd.f32 %v4937, %v5251
      %v5292 = vadd.f32 %v4938, %v5254
      %v5293 = vld [vmem:[#allocation2 + $0x14] sm:$0xff]
      %v5294 = vld [vmem:[#allocation2 + $0x1c] sm:$0xff]
      %v5295 = vld [vmem:[#allocation2 + $0x24] sm:$0xff]
      %v5296 = vld [vmem:[#allocation2 + $0x2c] sm:$0xff]
      %v5297 = vld [vmem:[#allocation2 + $0x34] sm:$0xff]
      %v5298 = vld [vmem:[#allocation2 + $0x3c] sm:$0xff]
      %v5299 = vld [vmem:[#allocation2 + $0x44] sm:$0xff]
      %v5300 = vld [vmem:[#allocation2 + $0x4c] sm:$0xff]
      %v5301 = vld [vmem:[#allocation2 + $0x54] sm:$0xff]
      %v5302 = vld [vmem:[#allocation2 + $0x5c] sm:$0xff]
      %v5303 = vld [vmem:[#allocation2 + $0x64] sm:$0xff]
      %v5304 = vld [vmem:[#allocation2 + $0x6c] sm:$0xff]
      %v5305 = vld [vmem:[#allocation2 + $0x74] sm:$0xff]
      %v5306 = vld [vmem:[#allocation2 + $0x7c] sm:$0xff]
      %v5307 = vld [vmem:[#allocation2 + $0x84] sm:$0xff]
      %v5308 = vld [vmem:[#allocation2 + $0x8c] sm:$0xff]
      %v5309 = vld [vmem:[#allocation2 + $0x94] sm:$0xff]
      %v5310 = vld [vmem:[#allocation2 + $0x9c] sm:$0xff]
      %v5311 = vld [vmem:[#allocation2 + $0xa4] sm:$0xff]
      %v5312 = vld [vmem:[#allocation2 + $0xac] sm:$0xff]
      %v5313 = vld [vmem:[#allocation2 + $0xb4] sm:$0xff]
      %v5314 = vld [vmem:[#allocation2 + $0xbc] sm:$0xff]
      %v5315 = vld [vmem:[#allocation2 + $0xc4] sm:$0xff]
      %v5316 = vld [vmem:[#allocation2 + $0xcc] sm:$0xff]
      %v5317 = vld [vmem:[#allocation2 + $0xd4] sm:$0xff]
      %v5318 = vld [vmem:[#allocation2 + $0xdc] sm:$0xff]
      %v5319 = vld [vmem:[#allocation2 + $0xe4] sm:$0xff]
      %v5320 = vld [vmem:[#allocation2 + $0xec] sm:$0xff]
      %v5321 = vld [vmem:[#allocation2 + $0xf4] sm:$0xff]
      %v5322 = vld [vmem:[#allocation2 + $0xfc] sm:$0xff]
      %v5323 = vld [vmem:[#allocation2 + $0x104] sm:$0xff]
      %v5324 = vld [vmem:[#allocation2 + $0x10c] sm:$0xff]
      %v5325 = vld [vmem:[#allocation2 + $0x114] sm:$0xff]
      %v5326 = vld [vmem:[#allocation2 + $0x11c] sm:$0xff]
      %v5327 = vld [vmem:[#allocation2 + $0x124] sm:$0xff]
      %v5328 = vld [vmem:[#allocation2 + $0x12c] sm:$0xff]
      %v5329 = vpack.c.bf16 %v5294, %v5293
      %v5330 = vpack.c.bf16 %v5296, %v5295
      %v5331 = vpack.c.bf16 %v5298, %v5297
      %v5332 = vpack.c.bf16 %v5300, %v5299
      %v5333 = vpack.c.bf16 %v5302, %v5301
      %v5334 = vpack.c.bf16 %v5304, %v5303
      %v5335 = vpack.c.bf16 %v5306, %v5305
      %v5336 = vpack.c.bf16 %v5308, %v5307
      %v5337 = vpack.c.bf16 %v5310, %v5309
      %v5338 = vpack.c.bf16 %v5312, %v5311
      %v5339 = vpack.c.bf16 %v5314, %v5313
      %v5340 = vpack.c.bf16 %v5316, %v5315
      %v5341 = vpack.c.bf16 %v5318, %v5317
      %v5342 = vpack.c.bf16 %v5320, %v5319
      %v5343 = vpack.c.bf16 %v5322, %v5321
      %v5344 = vpack.c.bf16 %v5324, %v5323
      %v5345 = vpack.c.bf16 %v5326, %v5325
      %v5346 = vpack.c.bf16 %v5328, %v5327
      %s5347 = scalar_lea.vmem %s3, 160
      %v5348 = vld [vmem:[%s5347] sm:$0xf]
      %v5349 = vld [vmem:[%s5347 + $0x4] sm:$0xf]
      %v5350 = vld [vmem:[%s5347 + $0x8] sm:$0xf]
      %v5351 = vld [vmem:[%s5347 + $0xc] sm:$0xf]
      %v5352 = vld [vmem:[%s5347 + $0x10] sm:$0xf]
      %v5353 = vld [vmem:[%s5347 + $0x14] sm:$0xf]
      %v5354 = vld [vmem:[%s5347 + $0x18] sm:$0xf]
      %v5355 = vld [vmem:[%s5347 + $0x1c] sm:$0xf]
      %v5364 = vunpack.c.l.b16 %v5348
      %v5365 = vunpack.c.l.b16 %v5349
      %v5366 = vunpack.c.l.b16 %v5350
      %v5367 = vunpack.c.l.b16 %v5351
      %v5368 = vunpack.c.l.b16 %v5352
      %v5369 = vunpack.c.l.b16 %v5353
      %v5370 = vunpack.c.l.b16 %v5354
      %v5371 = vunpack.c.l.b16 %v5355
      %v5372 = vpack.c.b16 %v5365, %v5364
      %v5373 = vpack.c.b16 %v5367, %v5366
      %v5374 = vpack.c.b16 %v5369, %v5368
      %v5375 = vpack.c.b16 %v5371, %v5370
      %v5381 = vsel %vm316, %v5329, 0
      %v5384 = vsel %vm316, %v5330, 0
      %v5387 = vsel %vm316, %v5331, 0
      %v5390 = vsel %vm316, %v5332, 0
      %v5393 = vsel %vm316, %v5333, 0
      %v5396 = vsel %vm316, %v5334, 0
      %v5399 = vsel %vm316, %v5335, 0
      %v5402 = vsel %vm316, %v5336, 0
      %v5405 = vsel %vm316, %v5337, 0
      %v5408 = vsel %vm316, %v5338, 0
      %v5411 = vsel %vm316, %v5339, 0
      %v5414 = vsel %vm316, %v5340, 0
      %v5417 = vsel %vm316, %v5341, 0
      %v5420 = vsel %vm316, %v5342, 0
      %v5423 = vsel %vm316, %v5343, 0
      %v5426 = vsel %vm316, %v5344, 0
      %v5429 = vsel %vm316, %v5345, 0
      %v5432 = vsel %vm316, %v5346, 0
      %5434 = vmatprep.subr.bf16.mxu0 0
      %5435 = vmatpush1.bf16.msra.mxu0 %v5372
      %5436 = vmatprep.subr.bf16.mxu0 0
      %5437 = vmatpush1.bf16.msra.mxu0 %v5373
      %5438 = vmatprep.subr.bf16.mxu0 0
      %5439 = vmatpush1.bf16.msra.mxu0 %v5374
      %5440 = vmatprep.subr.bf16.mxu0 0
      %5441 = vmatpush1.bf16.msra.mxu0 %v5375
      %5442 = vmatprep.subr.bf16.mxu0 0
      %5443 = vmatpush1.bf16.msra.mxu0 0
      %5444 = vmatprep.subr.bf16.mxu0 0
      %5445 = vmatpush1.bf16.msra.mxu0 0
      %5446 = vmatprep.subr.bf16.mxu0 0
      %5447 = vmatpush1.bf16.msra.mxu0 0
      %5448 = vmatprep.subr.bf16.mxu0 0
      %5449 = vmatpush1.bf16.msra.mxu0 0
      %5450 = vmatprep.subr.bf16.mxu0 0
      %5451 = vmatpush1.bf16.msra.mxu0 0
      %5452 = vmatprep.subr.bf16.mxu0 0
      %5453 = vmatpush1.bf16.msra.mxu0 0
      %5454 = vmatprep.subr.bf16.mxu0 0
      %5455 = vmatpush1.bf16.msra.mxu0 0
      %5456 = vmatprep.subr.bf16.mxu0 0
      %5457 = vmatpush1.bf16.msra.mxu0 0
      %5458 = vmatprep.subr.bf16.mxu0 0
      %5459 = vmatpush1.bf16.msra.mxu0 0
      %5460 = vmatprep.subr.bf16.mxu0 0
      %5461 = vmatpush1.bf16.msra.mxu0 0
      %5462 = vmatprep.subr.bf16.mxu0 0
      %5463 = vmatpush1.bf16.msra.mxu0 0
      %5464 = vmatprep.subr.bf16.mxu0 0
      %5465 = vmatpush1.bf16.msra.mxu0 0
      %5466 = vmatprep.mubr.bf16.mxu0 0
      %5467 = vmatmul.mubr.bf16.gmra.mrb[0].mxu0 %v5381
      %v5468 = vpop.f32.mrb[0].mxu0
      %v5469 = vadd.f32 0.0, %v5468
      %v5470 = vpop.f32.mrb[0].mxu0
      %v5471 = vpop.f32.mrb[0].mxu0
      %v5472 = vadd.f32 0.0, %v5471
      %v5473 = vpop.f32.mrb[0].mxu0
      %5474 = vmatprep.mubr.bf16.mxu0 0
      %5475 = vmatmul.mubr.bf16.gmra.mrb[0].mxu0 %v5384
      %v5476 = vpop.f32.mrb[0].mxu0
      %v5477 = vadd.f32 0.0, %v5476
      %v5478 = vpop.f32.mrb[0].mxu0
      %v5479 = vpop.f32.mrb[0].mxu0
      %v5480 = vadd.f32 0.0, %v5479
      %v5481 = vpop.f32.mrb[0].mxu0
      %5482 = vmatprep.mubr.bf16.mxu0 0
      %5483 = vmatmul.mubr.bf16.gmra.mrb[0].mxu0 %v5387
      %v5484 = vpop.f32.mrb[0].mxu0
      %v5485 = vadd.f32 0.0, %v5484
      %v5486 = vpop.f32.mrb[0].mxu0
      %v5487 = vpop.f32.mrb[0].mxu0
      %v5488 = vadd.f32 0.0, %v5487
      %v5489 = vpop.f32.mrb[0].mxu0
      %5490 = vmatprep.mubr.bf16.mxu0 0
      %5491 = vmatmul.mubr.bf16.gmra.mrb[0].mxu0 %v5390
      %v5492 = vpop.f32.mrb[0].mxu0
      %v5493 = vadd.f32 0.0, %v5492
      %v5494 = vpop.f32.mrb[0].mxu0
      %v5495 = vpop.f32.mrb[0].mxu0
      %v5496 = vadd.f32 0.0, %v5495
      %v5497 = vpop.f32.mrb[0].mxu0
      %5498 = vmatprep.mubr.bf16.mxu0 0
      %5499 = vmatmul.mubr.bf16.gmra.mrb[0].mxu0 %v5393
      %v5500 = vpop.f32.mrb[0].mxu0
      %v5501 = vadd.f32 0.0, %v5500
      %v5502 = vpop.f32.mrb[0].mxu0
      %v5503 = vpop.f32.mrb[0].mxu0
      %v5504 = vadd.f32 0.0, %v5503
      %v5505 = vpop.f32.mrb[0].mxu0
      %5506 = vmatprep.mubr.bf16.mxu0 0
      %5507 = vmatmul.mubr.bf16.gmra.mrb[0].mxu0 %v5396
      %v5508 = vpop.f32.mrb[0].mxu0
      %v5509 = vadd.f32 0.0, %v5508
      %v5510 = vpop.f32.mrb[0].mxu0
      %v5511 = vpop.f32.mrb[0].mxu0
      %v5512 = vadd.f32 0.0, %v5511
      %v5513 = vpop.f32.mrb[0].mxu0
      %5514 = vmatprep.mubr.bf16.mxu0 0
      %5515 = vmatmul.mubr.bf16.gmra.mrb[0].mxu0 %v5399
      %v5516 = vpop.f32.mrb[0].mxu0
      %v5517 = vadd.f32 0.0, %v5516
      %v5518 = vpop.f32.mrb[0].mxu0
      %v5519 = vpop.f32.mrb[0].mxu0
      %v5520 = vadd.f32 0.0, %v5519
      %v5521 = vpop.f32.mrb[0].mxu0
      %5522 = vmatprep.mubr.bf16.mxu0 0
      %5523 = vmatmul.mubr.bf16.gmra.mrb[0].mxu0 %v5402
      %v5524 = vpop.f32.mrb[0].mxu0
      %v5525 = vadd.f32 0.0, %v5524
      %v5526 = vpop.f32.mrb[0].mxu0
      %v5527 = vpop.f32.mrb[0].mxu0
      %v5528 = vadd.f32 0.0, %v5527
      %v5529 = vpop.f32.mrb[0].mxu0
      %5530 = vmatprep.mubr.bf16.mxu0 0
      %5531 = vmatmul.mubr.bf16.gmra.mrb[0].mxu0 %v5405
      %v5532 = vpop.f32.mrb[0].mxu0
      %v5533 = vadd.f32 0.0, %v5532
      %v5534 = vpop.f32.mrb[0].mxu0
      %v5535 = vpop.f32.mrb[0].mxu0
      %v5536 = vadd.f32 0.0, %v5535
      %v5537 = vpop.f32.mrb[0].mxu0
      %5538 = vmatprep.mubr.bf16.mxu0 0
      %5539 = vmatmul.mubr.bf16.gmra.mrb[0].mxu0 %v5408
      %v5540 = vpop.f32.mrb[0].mxu0
      %v5541 = vadd.f32 0.0, %v5540
      %v5542 = vpop.f32.mrb[0].mxu0
      %v5543 = vpop.f32.mrb[0].mxu0
      %v5544 = vadd.f32 0.0, %v5543
      %v5545 = vpop.f32.mrb[0].mxu0
      %5546 = vmatprep.mubr.bf16.mxu0 0
      %5547 = vmatmul.mubr.bf16.gmra.mrb[0].mxu0 %v5411
      %v5548 = vpop.f32.mrb[0].mxu0
      %v5549 = vadd.f32 0.0, %v5548
      %v5550 = vpop.f32.mrb[0].mxu0
      %v5551 = vpop.f32.mrb[0].mxu0
      %v5552 = vadd.f32 0.0, %v5551
      %v5553 = vpop.f32.mrb[0].mxu0
      %5554 = vmatprep.mubr.bf16.mxu0 0
      %5555 = vmatmul.mubr.bf16.gmra.mrb[0].mxu0 %v5414
      %v5556 = vpop.f32.mrb[0].mxu0
      %v5557 = vadd.f32 0.0, %v5556
      %v5558 = vpop.f32.mrb[0].mxu0
      %v5559 = vpop.f32.mrb[0].mxu0
      %v5560 = vadd.f32 0.0, %v5559
      %v5561 = vpop.f32.mrb[0].mxu0
      %5562 = vmatprep.mubr.bf16.mxu0 0
      %5563 = vmatmul.mubr.bf16.gmra.mrb[0].mxu0 %v5417
      %v5564 = vpop.f32.mrb[0].mxu0
      %v5565 = vadd.f32 0.0, %v5564
      %v5566 = vpop.f32.mrb[0].mxu0
      %v5567 = vpop.f32.mrb[0].mxu0
      %v5568 = vadd.f32 0.0, %v5567
      %v5569 = vpop.f32.mrb[0].mxu0
      %5570 = vmatprep.mubr.bf16.mxu0 0
      %5571 = vmatmul.mubr.bf16.gmra.mrb[0].mxu0 %v5420
      %v5572 = vpop.f32.mrb[0].mxu0
      %v5573 = vadd.f32 0.0, %v5572
      %v5574 = vpop.f32.mrb[0].mxu0
      %v5575 = vpop.f32.mrb[0].mxu0
      %v5576 = vadd.f32 0.0, %v5575
      %v5577 = vpop.f32.mrb[0].mxu0
      %5578 = vmatprep.mubr.bf16.mxu0 0
      %5579 = vmatmul.mubr.bf16.gmra.mrb[0].mxu0 %v5423
      %v5580 = vpop.f32.mrb[0].mxu0
      %v5581 = vadd.f32 0.0, %v5580
      %v5582 = vpop.f32.mrb[0].mxu0
      %v5583 = vpop.f32.mrb[0].mxu0
      %v5584 = vadd.f32 0.0, %v5583
      %v5585 = vpop.f32.mrb[0].mxu0
      %5586 = vmatprep.mubr.bf16.mxu0 0
      %5587 = vmatmul.mubr.bf16.gmra.mrb[0].mxu0 %v5426
      %v5588 = vpop.f32.mrb[0].mxu0
      %v5589 = vadd.f32 0.0, %v5588
      %v5590 = vpop.f32.mrb[0].mxu0
      %v5591 = vpop.f32.mrb[0].mxu0
      %v5592 = vadd.f32 0.0, %v5591
      %v5593 = vpop.f32.mrb[0].mxu0
      %5594 = vmatprep.mubr.bf16.mxu0 0
      %5595 = vmatmul.mubr.bf16.gmra.mrb[0].mxu0 %v5429
      %v5596 = vpop.f32.mrb[0].mxu0
      %v5597 = vadd.f32 0.0, %v5596
      %v5598 = vpop.f32.mrb[0].mxu0
      %v5599 = vpop.f32.mrb[0].mxu0
      %v5600 = vadd.f32 0.0, %v5599
      %v5601 = vpop.f32.mrb[0].mxu0
      %5602 = vmatprep.mubr.bf16.mxu0 0
      %5603 = vmatmul.mubr.bf16.gmra.mrb[0].mxu0 %v5432
      %v5604 = vpop.f32.mrb[0].mxu0
      %v5605 = vadd.f32 0.0, %v5604
      %v5606 = vpop.f32.mrb[0].mxu0
      %v5607 = vpop.f32.mrb[0].mxu0
      %v5608 = vadd.f32 0.0, %v5607
      %v5609 = vpop.f32.mrb[0].mxu0
      %5610 = vdwg.mxu0
      %v5611 = vadd.f32 %v5257, %v5469
      %v5612 = vadd.f32 %v5258, %v5472
      %v5613 = vadd.f32 %v5259, %v5477
      %v5614 = vadd.f32 %v5260, %v5480
      %v5615 = vadd.f32 %v5261, %v5485
      %v5616 = vadd.f32 %v5262, %v5488
      %v5617 = vadd.f32 %v5263, %v5493
      %v5618 = vadd.f32 %v5264, %v5496
      %v5619 = vadd.f32 %v5265, %v5501
      %v5620 = vadd.f32 %v5266, %v5504
      %v5621 = vadd.f32 %v5267, %v5509
      %v5622 = vadd.f32 %v5268, %v5512
      %v5623 = vadd.f32 %v5269, %v5517
      %v5624 = vadd.f32 %v5270, %v5520
      %v5625 = vadd.f32 %v5271, %v5525
      %v5626 = vadd.f32 %v5272, %v5528
      %v5627 = vadd.f32 %v5273, %v5533
      %v5628 = vadd.f32 %v5274, %v5536
      %v5629 = vadd.f32 %v5275, %v5541
      %v5630 = vadd.f32 %v5276, %v5544
      %v5631 = vadd.f32 %v5277, %v5549
      %v5632 = vadd.f32 %v5278, %v5552
      %v5633 = vadd.f32 %v5279, %v5557
      %v5634 = vadd.f32 %v5280, %v5560
      %v5635 = vadd.f32 %v5281, %v5565
      %v5636 = vadd.f32 %v5282, %v5568
      %v5637 = vadd.f32 %v5283, %v5573
      %v5638 = vadd.f32 %v5284, %v5576
      %v5639 = vadd.f32 %v5285, %v5581
      %v5640 = vadd.f32 %v5286, %v5584
      %v5641 = vadd.f32 %v5287, %v5589
      %v5642 = vadd.f32 %v5288, %v5592
      %v5643 = vadd.f32 %v5289, %v5597
      %v5644 = vadd.f32 %v5290, %v5600
      %v5645 = vadd.f32 %v5291, %v5605
      %v5646 = vadd.f32 %v5292, %v5608
      %v5647 = vld [vmem:[#allocation2 + $0x24] sm:$0xff]
      %v5648 = vld [vmem:[#allocation2 + $0x2c] sm:$0xff]
      %v5649 = vld [vmem:[#allocation2 + $0x34] sm:$0xff]
      %v5650 = vld [vmem:[#allocation2 + $0x3c] sm:$0xff]
      %v5651 = vld [vmem:[#allocation2 + $0x44] sm:$0xff]
      %v5652 = vld [vmem:[#allocation2 + $0x4c] sm:$0xff]
      %v5653 = vld [vmem:[#allocation2 + $0x54] sm:$0xff]
      %v5654 = vld [vmem:[#allocation2 + $0x5c] sm:$0xff]
      %v5655 = vld [vmem:[#allocation2 + $0x64] sm:$0xff]
      %v5656 = vld [vmem:[#allocation2 + $0x6c] sm:$0xff]
      %v5657 = vld [vmem:[#allocation2 + $0x74] sm:$0xff]
      %v5658 = vld [vmem:[#allocation2 + $0x7c] sm:$0xff]
      %v5659 = vld [vmem:[#allocation2 + $0x84] sm:$0xff]
      %v5660 = vld [vmem:[#allocation2 + $0x8c] sm:$0xff]
      %v5661 = vld [vmem:[#allocation2 + $0x94] sm:$0xff]
      %v5662 = vld [vmem:[#allocation2 + $0x9c] sm:$0xff]
      %v5663 = vld [vmem:[#allocation2 + $0xa4] sm:$0xff]
      %v5664 = vld [vmem:[#allocation2 + $0xac] sm:$0xff]
      %v5665 = vld [vmem:[#allocation2 + $0xb4] sm:$0xff]
      %v5666 = vld [vmem:[#allocation2 + $0xbc] sm:$0xff]
      %v5667 = vld [vmem:[#allocation2 + $0xc4] sm:$0xff]
      %v5668 = vld [vmem:[#allocation2 + $0xcc] sm:$0xff]
      %v5669 = vld [vmem:[#allocation2 + $0xd4] sm:$0xff]
      %v5670 = vld [vmem:[#allocation2 + $0xdc] sm:$0xff]
      %v5671 = vld [vmem:[#allocation2 + $0xe4] sm:$0xff]
      %v5672 = vld [vmem:[#allocation2 + $0xec] sm:$0xff]
      %v5673 = vld [vmem:[#allocation2 + $0xf4] sm:$0xff]
      %v5674 = vld [vmem:[#allocation2 + $0xfc] sm:$0xff]
      %v5675 = vld [vmem:[#allocation2 + $0x104] sm:$0xff]
      %v5676 = vld [vmem:[#allocation2 + $0x10c] sm:$0xff]
      %v5677 = vld [vmem:[#allocation2 + $0x114] sm:$0xff]
      %v5678 = vld [vmem:[#allocation2 + $0x11c] sm:$0xff]
      %v5679 = vld [vmem:[#allocation2 + $0x124] sm:$0xff]
      %v5680 = vld [vmem:[#allocation2 + $0x12c] sm:$0xff]
      %v5681 = vld [vmem:[#allocation2 + $0x134] sm:$0xff]
      %v5682 = vld [vmem:[#allocation2 + $0x13c] sm:$0xff]
      %v5683 = vpack.c.bf16 %v5648, %v5647
      %v5684 = vpack.c.bf16 %v5650, %v5649
      %v5685 = vpack.c.bf16 %v5652, %v5651
      %v5686 = vpack.c.bf16 %v5654, %v5653
      %v5687 = vpack.c.bf16 %v5656, %v5655
      %v5688 = vpack.c.bf16 %v5658, %v5657
      %v5689 = vpack.c.bf16 %v5660, %v5659
      %v5690 = vpack.c.bf16 %v5662, %v5661
      %v5691 = vpack.c.bf16 %v5664, %v5663
      %v5692 = vpack.c.bf16 %v5666, %v5665
      %v5693 = vpack.c.bf16 %v5668, %v5667
      %v5694 = vpack.c.bf16 %v5670, %v5669
      %v5695 = vpack.c.bf16 %v5672, %v5671
      %v5696 = vpack.c.bf16 %v5674, %v5673
      %v5697 = vpack.c.bf16 %v5676, %v5675
      %v5698 = vpack.c.bf16 %v5678, %v5677
      %v5699 = vpack.c.bf16 %v5680, %v5679
      %v5700 = vpack.c.bf16 %v5682, %v5681
      %s5701 = scalar_lea.vmem %s3, 192
      %v5702 = vld [vmem:[%s5701] sm:$0xf]
      %v5703 = vld [vmem:[%s5701 + $0x4] sm:$0xf]
      %v5704 = vld [vmem:[%s5701 + $0x8] sm:$0xf]
      %v5705 = vld [vmem:[%s5701 + $0xc] sm:$0xf]
      %v5706 = vld [vmem:[%s5701 + $0x10] sm:$0xf]
      %v5707 = vld [vmem:[%s5701 + $0x14] sm:$0xf]
      %v5708 = vld [vmem:[%s5701 + $0x18] sm:$0xf]
      %v5709 = vld [vmem:[%s5701 + $0x1c] sm:$0xf]
      %v5718 = vunpack.c.l.b16 %v5702
      %v5719 = vunpack.c.l.b16 %v5703
      %v5720 = vunpack.c.l.b16 %v5704
      %v5721 = vunpack.c.l.b16 %v5705
      %v5722 = vunpack.c.l.b16 %v5706
      %v5723 = vunpack.c.l.b16 %v5707
      %v5724 = vunpack.c.l.b16 %v5708
      %v5725 = vunpack.c.l.b16 %v5709
      %v5726 = vpack.c.b16 %v5719, %v5718
      %v5727 = vpack.c.b16 %v5721, %v5720
      %v5728 = vpack.c.b16 %v5723, %v5722
      %v5729 = vpack.c.b16 %v5725, %v5724
      %v5735 = vsel %vm316, %v5683, 0
      %v5738 = vsel %vm316, %v5684, 0
      %v5741 = vsel %vm316, %v5685, 0
      %v5744 = vsel %vm316, %v5686, 0
      %v5747 = vsel %vm316, %v5687, 0
      %v5750 = vsel %vm316, %v5688, 0
      %v5753 = vsel %vm316, %v5689, 0
      %v5756 = vsel %vm316, %v5690, 0
      %v5759 = vsel %vm316, %v5691, 0
      %v5762 = vsel %vm316, %v5692, 0
      %v5765 = vsel %vm316, %v5693, 0
      %v5768 = vsel %vm316, %v5694, 0
      %v5771 = vsel %vm316, %v5695, 0
      %v5774 = vsel %vm316, %v5696, 0
      %v5777 = vsel %vm316, %v5697, 0
      %v5780 = vsel %vm316, %v5698, 0
      %v5783 = vsel %vm316, %v5699, 0
      %v5786 = vsel %vm316, %v5700, 0
      %5788 = vmatprep.subr.bf16.mxu0 0
      %5789 = vmatpush1.bf16.msra.mxu0 %v5726
      %5790 = vmatprep.subr.bf16.mxu0 0
      %5791 = vmatpush1.bf16.msra.mxu0 %v5727
      %5792 = vmatprep.subr.bf16.mxu0 0
      %5793 = vmatpush1.bf16.msra.mxu0 %v5728
      %5794 = vmatprep.subr.bf16.mxu0 0
      %5795 = vmatpush1.bf16.msra.mxu0 %v5729
      %5796 = vmatprep.subr.bf16.mxu0 0
      %5797 = vmatpush1.bf16.msra.mxu0 0
      %5798 = vmatprep.subr.bf16.mxu0 0
      %5799 = vmatpush1.bf16.msra.mxu0 0
      %5800 = vmatprep.subr.bf16.mxu0 0
      %5801 = vmatpush1.bf16.msra.mxu0 0
      %5802 = vmatprep.subr.bf16.mxu0 0
      %5803 = vmatpush1.bf16.msra.mxu0 0
      %5804 = vmatprep.subr.bf16.mxu0 0
      %5805 = vmatpush1.bf16.msra.mxu0 0
      %5806 = vmatprep.subr.bf16.mxu0 0
      %5807 = vmatpush1.bf16.msra.mxu0 0
      %5808 = vmatprep.subr.bf16.mxu0 0
      %5809 = vmatpush1.bf16.msra.mxu0 0
      %5810 = vmatprep.subr.bf16.mxu0 0
      %5811 = vmatpush1.bf16.msra.mxu0 0
      %5812 = vmatprep.subr.bf16.mxu0 0
      %5813 = vmatpush1.bf16.msra.mxu0 0
      %5814 = vmatprep.subr.bf16.mxu0 0
      %5815 = vmatpush1.bf16.msra.mxu0 0
      %5816 = vmatprep.subr.bf16.mxu0 0
      %5817 = vmatpush1.bf16.msra.mxu0 0
      %5818 = vmatprep.subr.bf16.mxu0 0
      %5819 = vmatpush1.bf16.msra.mxu0 0
      %5820 = vmatprep.mubr.bf16.mxu0 0
      %5821 = vmatmul.mubr.bf16.gmra.mrb[0].mxu0 %v5735
      %v5822 = vpop.f32.mrb[0].mxu0
      %v5823 = vadd.f32 0.0, %v5822
      %v5824 = vpop.f32.mrb[0].mxu0
      %v5825 = vpop.f32.mrb[0].mxu0
      %v5826 = vadd.f32 0.0, %v5825
      %v5827 = vpop.f32.mrb[0].mxu0
      %5828 = vmatprep.mubr.bf16.mxu0 0
      %5829 = vmatmul.mubr.bf16.gmra.mrb[0].mxu0 %v5738
      %v5830 = vpop.f32.mrb[0].mxu0
      %v5831 = vadd.f32 0.0, %v5830
      %v5832 = vpop.f32.mrb[0].mxu0
      %v5833 = vpop.f32.mrb[0].mxu0
      %v5834 = vadd.f32 0.0, %v5833
      %v5835 = vpop.f32.mrb[0].mxu0
      %5836 = vmatprep.mubr.bf16.mxu0 0
      %5837 = vmatmul.mubr.bf16.gmra.mrb[0].mxu0 %v5741
      %v5838 = vpop.f32.mrb[0].mxu0
      %v5839 = vadd.f32 0.0, %v5838
      %v5840 = vpop.f32.mrb[0].mxu0
      %v5841 = vpop.f32.mrb[0].mxu0
      %v5842 = vadd.f32 0.0, %v5841
      %v5843 = vpop.f32.mrb[0].mxu0
      %5844 = vmatprep.mubr.bf16.mxu0 0
      %5845 = vmatmul.mubr.bf16.gmra.mrb[0].mxu0 %v5744
      %v5846 = vpop.f32.mrb[0].mxu0
      %v5847 = vadd.f32 0.0, %v5846
      %v5848 = vpop.f32.mrb[0].mxu0
      %v5849 = vpop.f32.mrb[0].mxu0
      %v5850 = vadd.f32 0.0, %v5849
      %v5851 = vpop.f32.mrb[0].mxu0
      %5852 = vmatprep.mubr.bf16.mxu0 0
      %5853 = vmatmul.mubr.bf16.gmra.mrb[0].mxu0 %v5747
      %v5854 = vpop.f32.mrb[0].mxu0
      %v5855 = vadd.f32 0.0, %v5854
      %v5856 = vpop.f32.mrb[0].mxu0
      %v5857 = vpop.f32.mrb[0].mxu0
      %v5858 = vadd.f32 0.0, %v5857
      %v5859 = vpop.f32.mrb[0].mxu0
      %5860 = vmatprep.mubr.bf16.mxu0 0
      %5861 = vmatmul.mubr.bf16.gmra.mrb[0].mxu0 %v5750
      %v5862 = vpop.f32.mrb[0].mxu0
      %v5863 = vadd.f32 0.0, %v5862
      %v5864 = vpop.f32.mrb[0].mxu0
      %v5865 = vpop.f32.mrb[0].mxu0
      %v5866 = vadd.f32 0.0, %v5865
      %v5867 = vpop.f32.mrb[0].mxu0
      %5868 = vmatprep.mubr.bf16.mxu0 0
      %5869 = vmatmul.mubr.bf16.gmra.mrb[0].mxu0 %v5753
      %v5870 = vpop.f32.mrb[0].mxu0
      %v5871 = vadd.f32 0.0, %v5870
      %v5872 = vpop.f32.mrb[0].mxu0
      %v5873 = vpop.f32.mrb[0].mxu0
      %v5874 = vadd.f32 0.0, %v5873
      %v5875 = vpop.f32.mrb[0].mxu0
      %5876 = vmatprep.mubr.bf16.mxu0 0
      %5877 = vmatmul.mubr.bf16.gmra.mrb[0].mxu0 %v5756
      %v5878 = vpop.f32.mrb[0].mxu0
      %v5879 = vadd.f32 0.0, %v5878
      %v5880 = vpop.f32.mrb[0].mxu0
      %v5881 = vpop.f32.mrb[0].mxu0
      %v5882 = vadd.f32 0.0, %v5881
      %v5883 = vpop.f32.mrb[0].mxu0
      %5884 = vmatprep.mubr.bf16.mxu0 0
      %5885 = vmatmul.mubr.bf16.gmra.mrb[0].mxu0 %v5759
      %v5886 = vpop.f32.mrb[0].mxu0
      %v5887 = vadd.f32 0.0, %v5886
      %v5888 = vpop.f32.mrb[0].mxu0
      %v5889 = vpop.f32.mrb[0].mxu0
      %v5890 = vadd.f32 0.0, %v5889
      %v5891 = vpop.f32.mrb[0].mxu0
      %5892 = vmatprep.mubr.bf16.mxu0 0
      %5893 = vmatmul.mubr.bf16.gmra.mrb[0].mxu0 %v5762
      %v5894 = vpop.f32.mrb[0].mxu0
      %v5895 = vadd.f32 0.0, %v5894
      %v5896 = vpop.f32.mrb[0].mxu0
      %v5897 = vpop.f32.mrb[0].mxu0
      %v5898 = vadd.f32 0.0, %v5897
      %v5899 = vpop.f32.mrb[0].mxu0
      %5900 = vmatprep.mubr.bf16.mxu0 0
      %5901 = vmatmul.mubr.bf16.gmra.mrb[0].mxu0 %v5765
      %v5902 = vpop.f32.mrb[0].mxu0
      %v5903 = vadd.f32 0.0, %v5902
      %v5904 = vpop.f32.mrb[0].mxu0
      %v5905 = vpop.f32.mrb[0].mxu0
      %v5906 = vadd.f32 0.0, %v5905
      %v5907 = vpop.f32.mrb[0].mxu0
      %5908 = vmatprep.mubr.bf16.mxu0 0
      %5909 = vmatmul.mubr.bf16.gmra.mrb[0].mxu0 %v5768
      %v5910 = vpop.f32.mrb[0].mxu0
      %v5911 = vadd.f32 0.0, %v5910
      %v5912 = vpop.f32.mrb[0].mxu0
      %v5913 = vpop.f32.mrb[0].mxu0
      %v5914 = vadd.f32 0.0, %v5913
      %v5915 = vpop.f32.mrb[0].mxu0
      %5916 = vmatprep.mubr.bf16.mxu0 0
      %5917 = vmatmul.mubr.bf16.gmra.mrb[0].mxu0 %v5771
      %v5918 = vpop.f32.mrb[0].mxu0
      %v5919 = vadd.f32 0.0, %v5918
      %v5920 = vpop.f32.mrb[0].mxu0
      %v5921 = vpop.f32.mrb[0].mxu0
      %v5922 = vadd.f32 0.0, %v5921
      %v5923 = vpop.f32.mrb[0].mxu0
      %5924 = vmatprep.mubr.bf16.mxu0 0
      %5925 = vmatmul.mubr.bf16.gmra.mrb[0].mxu0 %v5774
      %v5926 = vpop.f32.mrb[0].mxu0
      %v5927 = vadd.f32 0.0, %v5926
      %v5928 = vpop.f32.mrb[0].mxu0
      %v5929 = vpop.f32.mrb[0].mxu0
      %v5930 = vadd.f32 0.0, %v5929
      %v5931 = vpop.f32.mrb[0].mxu0
      %5932 = vmatprep.mubr.bf16.mxu0 0
      %5933 = vmatmul.mubr.bf16.gmra.mrb[0].mxu0 %v5777
      %v5934 = vpop.f32.mrb[0].mxu0
      %v5935 = vadd.f32 0.0, %v5934
      %v5936 = vpop.f32.mrb[0].mxu0
      %v5937 = vpop.f32.mrb[0].mxu0
      %v5938 = vadd.f32 0.0, %v5937
      %v5939 = vpop.f32.mrb[0].mxu0
      %5940 = vmatprep.mubr.bf16.mxu0 0
      %5941 = vmatmul.mubr.bf16.gmra.mrb[0].mxu0 %v5780
      %v5942 = vpop.f32.mrb[0].mxu0
      %v5943 = vadd.f32 0.0, %v5942
      %v5944 = vpop.f32.mrb[0].mxu0
      %v5945 = vpop.f32.mrb[0].mxu0
      %v5946 = vadd.f32 0.0, %v5945
      %v5947 = vpop.f32.mrb[0].mxu0
      %5948 = vmatprep.mubr.bf16.mxu0 0
      %5949 = vmatmul.mubr.bf16.gmra.mrb[0].mxu0 %v5783
      %v5950 = vpop.f32.mrb[0].mxu0
      %v5951 = vadd.f32 0.0, %v5950
      %v5952 = vpop.f32.mrb[0].mxu0
      %v5953 = vpop.f32.mrb[0].mxu0
      %v5954 = vadd.f32 0.0, %v5953
      %v5955 = vpop.f32.mrb[0].mxu0
      %5956 = vmatprep.mubr.bf16.mxu0 0
      %5957 = vmatmul.mubr.bf16.gmra.mrb[0].mxu0 %v5786
      %v5958 = vpop.f32.mrb[0].mxu0
      %v5959 = vadd.f32 0.0, %v5958
      %v5960 = vpop.f32.mrb[0].mxu0
      %v5961 = vpop.f32.mrb[0].mxu0
      %v5962 = vadd.f32 0.0, %v5961
      %v5963 = vpop.f32.mrb[0].mxu0
      %5964 = vdwg.mxu0
      %v5965 = vadd.f32 %v5611, %v5823
      %v5966 = vadd.f32 %v5612, %v5826
      %v5967 = vadd.f32 %v5613, %v5831
      %v5968 = vadd.f32 %v5614, %v5834
      %v5969 = vadd.f32 %v5615, %v5839
      %v5970 = vadd.f32 %v5616, %v5842
      %v5971 = vadd.f32 %v5617, %v5847
      %v5972 = vadd.f32 %v5618, %v5850
      %v5973 = vadd.f32 %v5619, %v5855
      %v5974 = vadd.f32 %v5620, %v5858
      %v5975 = vadd.f32 %v5621, %v5863
      %v5976 = vadd.f32 %v5622, %v5866
      %v5977 = vadd.f32 %v5623, %v5871
      %v5978 = vadd.f32 %v5624, %v5874
      %v5979 = vadd.f32 %v5625, %v5879
      %v5980 = vadd.f32 %v5626, %v5882
      %v5981 = vadd.f32 %v5627, %v5887
      %v5982 = vadd.f32 %v5628, %v5890
      %v5983 = vadd.f32 %v5629, %v5895
      %v5984 = vadd.f32 %v5630, %v5898
      %v5985 = vadd.f32 %v5631, %v5903
      %v5986 = vadd.f32 %v5632, %v5906
      %v5987 = vadd.f32 %v5633, %v5911
      %v5988 = vadd.f32 %v5634, %v5914
      %v5989 = vadd.f32 %v5635, %v5919
      %v5990 = vadd.f32 %v5636, %v5922
      %v5991 = vadd.f32 %v5637, %v5927
      %v5992 = vadd.f32 %v5638, %v5930
      %v5993 = vadd.f32 %v5639, %v5935
      %v5994 = vadd.f32 %v5640, %v5938
      %v5995 = vadd.f32 %v5641, %v5943
      %v5996 = vadd.f32 %v5642, %v5946
      %v5997 = vadd.f32 %v5643, %v5951
      %v5998 = vadd.f32 %v5644, %v5954
      %v5999 = vadd.f32 %v5645, %v5959
      %v6000 = vadd.f32 %v5646, %v5962
      %v6001 = vld [vmem:[#allocation2 + $0x25] sm:$0xff]
      %v6002 = vld [vmem:[#allocation2 + $0x2d] sm:$0xff]
      %v6003 = vld [vmem:[#allocation2 + $0x35] sm:$0xff]
      %v6004 = vld [vmem:[#allocation2 + $0x3d] sm:$0xff]
      %v6005 = vld [vmem:[#allocation2 + $0x45] sm:$0xff]
      %v6006 = vld [vmem:[#allocation2 + $0x4d] sm:$0xff]
      %v6007 = vld [vmem:[#allocation2 + $0x55] sm:$0xff]
      %v6008 = vld [vmem:[#allocation2 + $0x5d] sm:$0xff]
      %v6009 = vld [vmem:[#allocation2 + $0x65] sm:$0xff]
      %v6010 = vld [vmem:[#allocation2 + $0x6d] sm:$0xff]
      %v6011 = vld [vmem:[#allocation2 + $0x75] sm:$0xff]
      %v6012 = vld [vmem:[#allocation2 + $0x7d] sm:$0xff]
      %v6013 = vld [vmem:[#allocation2 + $0x85] sm:$0xff]
      %v6014 = vld [vmem:[#allocation2 + $0x8d] sm:$0xff]
      %v6015 = vld [vmem:[#allocation2 + $0x95] sm:$0xff]
      %v6016 = vld [vmem:[#allocation2 + $0x9d] sm:$0xff]
      %v6017 = vld [vmem:[#allocation2 + $0xa5] sm:$0xff]
      %v6018 = vld [vmem:[#allocation2 + $0xad] sm:$0xff]
      %v6019 = vld [vmem:[#allocation2 + $0xb5] sm:$0xff]
      %v6020 = vld [vmem:[#allocation2 + $0xbd] sm:$0xff]
      %v6021 = vld [vmem:[#allocation2 + $0xc5] sm:$0xff]
      %v6022 = vld [vmem:[#allocation2 + $0xcd] sm:$0xff]
      %v6023 = vld [vmem:[#allocation2 + $0xd5] sm:$0xff]
      %v6024 = vld [vmem:[#allocation2 + $0xdd] sm:$0xff]
      %v6025 = vld [vmem:[#allocation2 + $0xe5] sm:$0xff]
      %v6026 = vld [vmem:[#allocation2 + $0xed] sm:$0xff]
      %v6027 = vld [vmem:[#allocation2 + $0xf5] sm:$0xff]
      %v6028 = vld [vmem:[#allocation2 + $0xfd] sm:$0xff]
      %v6029 = vld [vmem:[#allocation2 + $0x105] sm:$0xff]
      %v6030 = vld [vmem:[#allocation2 + $0x10d] sm:$0xff]
      %v6031 = vld [vmem:[#allocation2 + $0x115] sm:$0xff]
      %v6032 = vld [vmem:[#allocation2 + $0x11d] sm:$0xff]
      %v6033 = vld [vmem:[#allocation2 + $0x125] sm:$0xff]
      %v6034 = vld [vmem:[#allocation2 + $0x12d] sm:$0xff]
      %v6035 = vld [vmem:[#allocation2 + $0x135] sm:$0xff]
      %v6036 = vld [vmem:[#allocation2 + $0x13d] sm:$0xff]
      %v6037 = vpack.c.bf16 %v6002, %v6001
      %v6038 = vpack.c.bf16 %v6004, %v6003
      %v6039 = vpack.c.bf16 %v6006, %v6005
      %v6040 = vpack.c.bf16 %v6008, %v6007
      %v6041 = vpack.c.bf16 %v6010, %v6009
      %v6042 = vpack.c.bf16 %v6012, %v6011
      %v6043 = vpack.c.bf16 %v6014, %v6013
      %v6044 = vpack.c.bf16 %v6016, %v6015
      %v6045 = vpack.c.bf16 %v6018, %v6017
      %v6046 = vpack.c.bf16 %v6020, %v6019
      %v6047 = vpack.c.bf16 %v6022, %v6021
      %v6048 = vpack.c.bf16 %v6024, %v6023
      %v6049 = vpack.c.bf16 %v6026, %v6025
      %v6050 = vpack.c.bf16 %v6028, %v6027
      %v6051 = vpack.c.bf16 %v6030, %v6029
      %v6052 = vpack.c.bf16 %v6032, %v6031
      %v6053 = vpack.c.bf16 %v6034, %v6033
      %v6054 = vpack.c.bf16 %v6036, %v6035
      %s6055 = scalar_lea.vmem %s3, 224
      %v6056 = vld [vmem:[%s6055] sm:$0xf]
      %v6057 = vld [vmem:[%s6055 + $0x4] sm:$0xf]
      %v6058 = vld [vmem:[%s6055 + $0x8] sm:$0xf]
      %v6059 = vld [vmem:[%s6055 + $0xc] sm:$0xf]
      %v6060 = vld [vmem:[%s6055 + $0x10] sm:$0xf]
      %v6061 = vld [vmem:[%s6055 + $0x14] sm:$0xf]
      %v6062 = vld [vmem:[%s6055 + $0x18] sm:$0xf]
      %v6063 = vld [vmem:[%s6055 + $0x1c] sm:$0xf]
      %v6072 = vunpack.c.l.b16 %v6056
      %v6073 = vunpack.c.l.b16 %v6057
      %v6074 = vunpack.c.l.b16 %v6058
      %v6075 = vunpack.c.l.b16 %v6059
      %v6076 = vunpack.c.l.b16 %v6060
      %v6077 = vunpack.c.l.b16 %v6061
      %v6078 = vunpack.c.l.b16 %v6062
      %v6079 = vunpack.c.l.b16 %v6063
      %v6080 = vpack.c.b16 %v6073, %v6072
      %v6081 = vpack.c.b16 %v6075, %v6074
      %v6082 = vpack.c.b16 %v6077, %v6076
      %v6083 = vpack.c.b16 %v6079, %v6078
      %v6089 = vsel %vm316, %v6037, 0
      %v6092 = vsel %vm316, %v6038, 0
      %v6095 = vsel %vm316, %v6039, 0
      %v6098 = vsel %vm316, %v6040, 0
      %v6101 = vsel %vm316, %v6041, 0
      %v6104 = vsel %vm316, %v6042, 0
      %v6107 = vsel %vm316, %v6043, 0
      %v6110 = vsel %vm316, %v6044, 0
      %v6113 = vsel %vm316, %v6045, 0
      %v6116 = vsel %vm316, %v6046, 0
      %v6119 = vsel %vm316, %v6047, 0
      %v6122 = vsel %vm316, %v6048, 0
      %v6125 = vsel %vm316, %v6049, 0
      %v6128 = vsel %vm316, %v6050, 0
      %v6131 = vsel %vm316, %v6051, 0
      %v6134 = vsel %vm316, %v6052, 0
      %v6137 = vsel %vm316, %v6053, 0
      %v6140 = vsel %vm316, %v6054, 0
      %6142 = vmatprep.subr.bf16.mxu0 0
      %6143 = vmatpush1.bf16.msra.mxu0 %v6080
      %6144 = vmatprep.subr.bf16.mxu0 0
      %6145 = vmatpush1.bf16.msra.mxu0 %v6081
      %6146 = vmatprep.subr.bf16.mxu0 0
      %6147 = vmatpush1.bf16.msra.mxu0 %v6082
      %6148 = vmatprep.subr.bf16.mxu0 0
      %6149 = vmatpush1.bf16.msra.mxu0 %v6083
      %6150 = vmatprep.subr.bf16.mxu0 0
      %6151 = vmatpush1.bf16.msra.mxu0 0
      %6152 = vmatprep.subr.bf16.mxu0 0
      %6153 = vmatpush1.bf16.msra.mxu0 0
      %6154 = vmatprep.subr.bf16.mxu0 0
      %6155 = vmatpush1.bf16.msra.mxu0 0
      %6156 = vmatprep.subr.bf16.mxu0 0
      %6157 = vmatpush1.bf16.msra.mxu0 0
      %6158 = vmatprep.subr.bf16.mxu0 0
      %6159 = vmatpush1.bf16.msra.mxu0 0
      %6160 = vmatprep.subr.bf16.mxu0 0
      %6161 = vmatpush1.bf16.msra.mxu0 0
      %6162 = vmatprep.subr.bf16.mxu0 0
      %6163 = vmatpush1.bf16.msra.mxu0 0
      %6164 = vmatprep.subr.bf16.mxu0 0
      %6165 = vmatpush1.bf16.msra.mxu0 0
      %6166 = vmatprep.subr.bf16.mxu0 0
      %6167 = vmatpush1.bf16.msra.mxu0 0
      %6168 = vmatprep.subr.bf16.mxu0 0
      %6169 = vmatpush1.bf16.msra.mxu0 0
      %6170 = vmatprep.subr.bf16.mxu0 0
      %6171 = vmatpush1.bf16.msra.mxu0 0
      %6172 = vmatprep.subr.bf16.mxu0 0
      %6173 = vmatpush1.bf16.msra.mxu0 0
      %6174 = vmatprep.mubr.bf16.mxu0 0
      %6175 = vmatmul.mubr.bf16.gmra.mrb[0].mxu0 %v6089
      %v6176 = vpop.f32.mrb[0].mxu0
      %v6177 = vadd.f32 0.0, %v6176
      %v6178 = vpop.f32.mrb[0].mxu0
      %v6179 = vpop.f32.mrb[0].mxu0
      %v6180 = vadd.f32 0.0, %v6179
      %v6181 = vpop.f32.mrb[0].mxu0
      %6182 = vmatprep.mubr.bf16.mxu0 0
      %6183 = vmatmul.mubr.bf16.gmra.mrb[0].mxu0 %v6092
      %v6184 = vpop.f32.mrb[0].mxu0
      %v6185 = vadd.f32 0.0, %v6184
      %v6186 = vpop.f32.mrb[0].mxu0
      %v6187 = vpop.f32.mrb[0].mxu0
      %v6188 = vadd.f32 0.0, %v6187
      %v6189 = vpop.f32.mrb[0].mxu0
      %6190 = vmatprep.mubr.bf16.mxu0 0
      %6191 = vmatmul.mubr.bf16.gmra.mrb[0].mxu0 %v6095
      %v6192 = vpop.f32.mrb[0].mxu0
      %v6193 = vadd.f32 0.0, %v6192
      %v6194 = vpop.f32.mrb[0].mxu0
      %v6195 = vpop.f32.mrb[0].mxu0
      %v6196 = vadd.f32 0.0, %v6195
      %v6197 = vpop.f32.mrb[0].mxu0
      %6198 = vmatprep.mubr.bf16.mxu0 0
      %6199 = vmatmul.mubr.bf16.gmra.mrb[0].mxu0 %v6098
      %v6200 = vpop.f32.mrb[0].mxu0
      %v6201 = vadd.f32 0.0, %v6200
      %v6202 = vpop.f32.mrb[0].mxu0
      %v6203 = vpop.f32.mrb[0].mxu0
      %v6204 = vadd.f32 0.0, %v6203
      %v6205 = vpop.f32.mrb[0].mxu0
      %6206 = vmatprep.mubr.bf16.mxu0 0
      %6207 = vmatmul.mubr.bf16.gmra.mrb[0].mxu0 %v6101
      %v6208 = vpop.f32.mrb[0].mxu0
      %v6209 = vadd.f32 0.0, %v6208
      %v6210 = vpop.f32.mrb[0].mxu0
      %v6211 = vpop.f32.mrb[0].mxu0
      %v6212 = vadd.f32 0.0, %v6211
      %v6213 = vpop.f32.mrb[0].mxu0
      %6214 = vmatprep.mubr.bf16.mxu0 0
      %6215 = vmatmul.mubr.bf16.gmra.mrb[0].mxu0 %v6104
      %v6216 = vpop.f32.mrb[0].mxu0
      %v6217 = vadd.f32 0.0, %v6216
      %v6218 = vpop.f32.mrb[0].mxu0
      %v6219 = vpop.f32.mrb[0].mxu0
      %v6220 = vadd.f32 0.0, %v6219
      %v6221 = vpop.f32.mrb[0].mxu0
      %6222 = vmatprep.mubr.bf16.mxu0 0
      %6223 = vmatmul.mubr.bf16.gmra.mrb[0].mxu0 %v6107
      %v6224 = vpop.f32.mrb[0].mxu0
      %v6225 = vadd.f32 0.0, %v6224
      %v6226 = vpop.f32.mrb[0].mxu0
      %v6227 = vpop.f32.mrb[0].mxu0
      %v6228 = vadd.f32 0.0, %v6227
      %v6229 = vpop.f32.mrb[0].mxu0
      %6230 = vmatprep.mubr.bf16.mxu0 0
      %6231 = vmatmul.mubr.bf16.gmra.mrb[0].mxu0 %v6110
      %v6232 = vpop.f32.mrb[0].mxu0
      %v6233 = vadd.f32 0.0, %v6232
      %v6234 = vpop.f32.mrb[0].mxu0
      %v6235 = vpop.f32.mrb[0].mxu0
      %v6236 = vadd.f32 0.0, %v6235
      %v6237 = vpop.f32.mrb[0].mxu0
      %6238 = vmatprep.mubr.bf16.mxu0 0
      %6239 = vmatmul.mubr.bf16.gmra.mrb[0].mxu0 %v6113
      %v6240 = vpop.f32.mrb[0].mxu0
      %v6241 = vadd.f32 0.0, %v6240
      %v6242 = vpop.f32.mrb[0].mxu0
      %v6243 = vpop.f32.mrb[0].mxu0
      %v6244 = vadd.f32 0.0, %v6243
      %v6245 = vpop.f32.mrb[0].mxu0
      %6246 = vmatprep.mubr.bf16.mxu0 0
      %6247 = vmatmul.mubr.bf16.gmra.mrb[0].mxu0 %v6116
      %v6248 = vpop.f32.mrb[0].mxu0
      %v6249 = vadd.f32 0.0, %v6248
      %v6250 = vpop.f32.mrb[0].mxu0
      %v6251 = vpop.f32.mrb[0].mxu0
      %v6252 = vadd.f32 0.0, %v6251
      %v6253 = vpop.f32.mrb[0].mxu0
      %6254 = vmatprep.mubr.bf16.mxu0 0
      %6255 = vmatmul.mubr.bf16.gmra.mrb[0].mxu0 %v6119
      %v6256 = vpop.f32.mrb[0].mxu0
      %v6257 = vadd.f32 0.0, %v6256
      %v6258 = vpop.f32.mrb[0].mxu0
      %v6259 = vpop.f32.mrb[0].mxu0
      %v6260 = vadd.f32 0.0, %v6259
      %v6261 = vpop.f32.mrb[0].mxu0
      %6262 = vmatprep.mubr.bf16.mxu0 0
      %6263 = vmatmul.mubr.bf16.gmra.mrb[0].mxu0 %v6122
      %v6264 = vpop.f32.mrb[0].mxu0
      %v6265 = vadd.f32 0.0, %v6264
      %v6266 = vpop.f32.mrb[0].mxu0
      %v6267 = vpop.f32.mrb[0].mxu0
      %v6268 = vadd.f32 0.0, %v6267
      %v6269 = vpop.f32.mrb[0].mxu0
      %6270 = vmatprep.mubr.bf16.mxu0 0
      %6271 = vmatmul.mubr.bf16.gmra.mrb[0].mxu0 %v6125
      %v6272 = vpop.f32.mrb[0].mxu0
      %v6273 = vadd.f32 0.0, %v6272
      %v6274 = vpop.f32.mrb[0].mxu0
      %v6275 = vpop.f32.mrb[0].mxu0
      %v6276 = vadd.f32 0.0, %v6275
      %v6277 = vpop.f32.mrb[0].mxu0
      %6278 = vmatprep.mubr.bf16.mxu0 0
      %6279 = vmatmul.mubr.bf16.gmra.mrb[0].mxu0 %v6128
      %v6280 = vpop.f32.mrb[0].mxu0
      %v6281 = vadd.f32 0.0, %v6280
      %v6282 = vpop.f32.mrb[0].mxu0
      %v6283 = vpop.f32.mrb[0].mxu0
      %v6284 = vadd.f32 0.0, %v6283
      %v6285 = vpop.f32.mrb[0].mxu0
      %6286 = vmatprep.mubr.bf16.mxu0 0
      %6287 = vmatmul.mubr.bf16.gmra.mrb[0].mxu0 %v6131
      %v6288 = vpop.f32.mrb[0].mxu0
      %v6289 = vadd.f32 0.0, %v6288
      %v6290 = vpop.f32.mrb[0].mxu0
      %v6291 = vpop.f32.mrb[0].mxu0
      %v6292 = vadd.f32 0.0, %v6291
      %v6293 = vpop.f32.mrb[0].mxu0
      %6294 = vmatprep.mubr.bf16.mxu0 0
      %6295 = vmatmul.mubr.bf16.gmra.mrb[0].mxu0 %v6134
      %v6296 = vpop.f32.mrb[0].mxu0
      %v6297 = vadd.f32 0.0, %v6296
      %v6298 = vpop.f32.mrb[0].mxu0
      %v6299 = vpop.f32.mrb[0].mxu0
      %v6300 = vadd.f32 0.0, %v6299
      %v6301 = vpop.f32.mrb[0].mxu0
      %6302 = vmatprep.mubr.bf16.mxu0 0
      %6303 = vmatmul.mubr.bf16.gmra.mrb[0].mxu0 %v6137
      %v6304 = vpop.f32.mrb[0].mxu0
      %v6305 = vadd.f32 0.0, %v6304
      %v6306 = vpop.f32.mrb[0].mxu0
      %v6307 = vpop.f32.mrb[0].mxu0
      %v6308 = vadd.f32 0.0, %v6307
      %v6309 = vpop.f32.mrb[0].mxu0
      %6310 = vmatprep.mubr.bf16.mxu0 0
      %6311 = vmatmul.mubr.bf16.gmra.mrb[0].mxu0 %v6140
      %v6312 = vpop.f32.mrb[0].mxu0
      %v6313 = vadd.f32 0.0, %v6312
      %v6314 = vpop.f32.mrb[0].mxu0
      %v6315 = vpop.f32.mrb[0].mxu0
      %v6316 = vadd.f32 0.0, %v6315
      %v6317 = vpop.f32.mrb[0].mxu0
      %6318 = vdwg.mxu0
      %v6319 = vadd.f32 %v5965, %v6177
      %v6320 = vadd.f32 %v5966, %v6180
      %v6321 = vadd.f32 %v5967, %v6185
      %v6322 = vadd.f32 %v5968, %v6188
      %v6323 = vadd.f32 %v5969, %v6193
      %v6324 = vadd.f32 %v5970, %v6196
      %v6325 = vadd.f32 %v5971, %v6201
      %v6326 = vadd.f32 %v5972, %v6204
      %v6327 = vadd.f32 %v5973, %v6209
      %v6328 = vadd.f32 %v5974, %v6212
      %v6329 = vadd.f32 %v5975, %v6217
      %v6330 = vadd.f32 %v5976, %v6220
      %v6331 = vadd.f32 %v5977, %v6225
      %v6332 = vadd.f32 %v5978, %v6228
      %v6333 = vadd.f32 %v5979, %v6233
      %v6334 = vadd.f32 %v5980, %v6236
      %v6335 = vadd.f32 %v5981, %v6241
      %v6336 = vadd.f32 %v5982, %v6244
      %v6337 = vadd.f32 %v5983, %v6249
      %v6338 = vadd.f32 %v5984, %v6252
      %v6339 = vadd.f32 %v5985, %v6257
      %v6340 = vadd.f32 %v5986, %v6260
      %v6341 = vadd.f32 %v5987, %v6265
      %v6342 = vadd.f32 %v5988, %v6268
      %v6343 = vadd.f32 %v5989, %v6273
      %v6344 = vadd.f32 %v5990, %v6276
      %v6345 = vadd.f32 %v5991, %v6281
      %v6346 = vadd.f32 %v5992, %v6284
      %v6347 = vadd.f32 %v5993, %v6289
      %v6348 = vadd.f32 %v5994, %v6292
      %v6349 = vadd.f32 %v5995, %v6297
      %v6350 = vadd.f32 %v5996, %v6300
      %v6351 = vadd.f32 %v5997, %v6305
      %v6352 = vadd.f32 %v5998, %v6308
      %v6353 = vadd.f32 %v5999, %v6313
      %v6354 = vadd.f32 %v6000, %v6316
      %v6355 = vld [vmem:[#allocation2 + $0x26] sm:$0xff]
      %v6356 = vld [vmem:[#allocation2 + $0x2e] sm:$0xff]
      %v6357 = vld [vmem:[#allocation2 + $0x36] sm:$0xff]
      %v6358 = vld [vmem:[#allocation2 + $0x3e] sm:$0xff]
      %v6359 = vld [vmem:[#allocation2 + $0x46] sm:$0xff]
      %v6360 = vld [vmem:[#allocation2 + $0x4e] sm:$0xff]
      %v6361 = vld [vmem:[#allocation2 + $0x56] sm:$0xff]
      %v6362 = vld [vmem:[#allocation2 + $0x5e] sm:$0xff]
      %v6363 = vld [vmem:[#allocation2 + $0x66] sm:$0xff]
      %v6364 = vld [vmem:[#allocation2 + $0x6e] sm:$0xff]
      %v6365 = vld [vmem:[#allocation2 + $0x76] sm:$0xff]
      %v6366 = vld [vmem:[#allocation2 + $0x7e] sm:$0xff]
      %v6367 = vld [vmem:[#allocation2 + $0x86] sm:$0xff]
      %v6368 = vld [vmem:[#allocation2 + $0x8e] sm:$0xff]
      %v6369 = vld [vmem:[#allocation2 + $0x96] sm:$0xff]
      %v6370 = vld [vmem:[#allocation2 + $0x9e] sm:$0xff]
      %v6371 = vld [vmem:[#allocation2 + $0xa6] sm:$0xff]
      %v6372 = vld [vmem:[#allocation2 + $0xae] sm:$0xff]
      %v6373 = vld [vmem:[#allocation2 + $0xb6] sm:$0xff]
      %v6374 = vld [vmem:[#allocation2 + $0xbe] sm:$0xff]
      %v6375 = vld [vmem:[#allocation2 + $0xc6] sm:$0xff]
      %v6376 = vld [vmem:[#allocation2 + $0xce] sm:$0xff]
      %v6377 = vld [vmem:[#allocation2 + $0xd6] sm:$0xff]
      %v6378 = vld [vmem:[#allocation2 + $0xde] sm:$0xff]
      %v6379 = vld [vmem:[#allocation2 + $0xe6] sm:$0xff]
      %v6380 = vld [vmem:[#allocation2 + $0xee] sm:$0xff]
      %v6381 = vld [vmem:[#allocation2 + $0xf6] sm:$0xff]
      %v6382 = vld [vmem:[#allocation2 + $0xfe] sm:$0xff]
      %v6383 = vld [vmem:[#allocation2 + $0x106] sm:$0xff]
      %v6384 = vld [vmem:[#allocation2 + $0x10e] sm:$0xff]
      %v6385 = vld [vmem:[#allocation2 + $0x116] sm:$0xff]
      %v6386 = vld [vmem:[#allocation2 + $0x11e] sm:$0xff]
      %v6387 = vld [vmem:[#allocation2 + $0x126] sm:$0xff]
      %v6388 = vld [vmem:[#allocation2 + $0x12e] sm:$0xff]
      %v6389 = vld [vmem:[#allocation2 + $0x136] sm:$0xff]
      %v6390 = vld [vmem:[#allocation2 + $0x13e] sm:$0xff]
      %v6391 = vpack.c.bf16 %v6356, %v6355
      %v6392 = vpack.c.bf16 %v6358, %v6357
      %v6393 = vpack.c.bf16 %v6360, %v6359
      %v6394 = vpack.c.bf16 %v6362, %v6361
      %v6395 = vpack.c.bf16 %v6364, %v6363
      %v6396 = vpack.c.bf16 %v6366, %v6365
      %v6397 = vpack.c.bf16 %v6368, %v6367
      %v6398 = vpack.c.bf16 %v6370, %v6369
      %v6399 = vpack.c.bf16 %v6372, %v6371
      %v6400 = vpack.c.bf16 %v6374, %v6373
      %v6401 = vpack.c.bf16 %v6376, %v6375
      %v6402 = vpack.c.bf16 %v6378, %v6377
      %v6403 = vpack.c.bf16 %v6380, %v6379
      %v6404 = vpack.c.bf16 %v6382, %v6381
      %v6405 = vpack.c.bf16 %v6384, %v6383
      %v6406 = vpack.c.bf16 %v6386, %v6385
      %v6407 = vpack.c.bf16 %v6388, %v6387
      %v6408 = vpack.c.bf16 %v6390, %v6389
      %s6409 = scalar_lea.vmem %s3, 256
      %v6410 = vld [vmem:[%s6409] sm:$0xf]
      %v6411 = vld [vmem:[%s6409 + $0x4] sm:$0xf]
      %v6412 = vld [vmem:[%s6409 + $0x8] sm:$0xf]
      %v6413 = vld [vmem:[%s6409 + $0xc] sm:$0xf]
      %v6414 = vld [vmem:[%s6409 + $0x10] sm:$0xf]
      %v6415 = vld [vmem:[%s6409 + $0x14] sm:$0xf]
      %v6416 = vld [vmem:[%s6409 + $0x18] sm:$0xf]
      %v6417 = vld [vmem:[%s6409 + $0x1c] sm:$0xf]
      %v6426 = vunpack.c.l.b16 %v6410
      %v6427 = vunpack.c.l.b16 %v6411
      %v6428 = vunpack.c.l.b16 %v6412
      %v6429 = vunpack.c.l.b16 %v6413
      %v6430 = vunpack.c.l.b16 %v6414
      %v6431 = vunpack.c.l.b16 %v6415
      %v6432 = vunpack.c.l.b16 %v6416
      %v6433 = vunpack.c.l.b16 %v6417
      %v6434 = vpack.c.b16 %v6427, %v6426
      %v6435 = vpack.c.b16 %v6429, %v6428
      %v6436 = vpack.c.b16 %v6431, %v6430
      %v6437 = vpack.c.b16 %v6433, %v6432
      %v6443 = vsel %vm316, %v6391, 0
      %v6446 = vsel %vm316, %v6392, 0
      %v6449 = vsel %vm316, %v6393, 0
      %v6452 = vsel %vm316, %v6394, 0
      %v6455 = vsel %vm316, %v6395, 0
      %v6458 = vsel %vm316, %v6396, 0
      %v6461 = vsel %vm316, %v6397, 0
      %v6464 = vsel %vm316, %v6398, 0
      %v6467 = vsel %vm316, %v6399, 0
      %v6470 = vsel %vm316, %v6400, 0
      %v6473 = vsel %vm316, %v6401, 0
      %v6476 = vsel %vm316, %v6402, 0
      %v6479 = vsel %vm316, %v6403, 0
      %v6482 = vsel %vm316, %v6404, 0
      %v6485 = vsel %vm316, %v6405, 0
      %v6488 = vsel %vm316, %v6406, 0
      %v6491 = vsel %vm316, %v6407, 0
      %v6494 = vsel %vm316, %v6408, 0
      %6496 = vmatprep.subr.bf16.mxu0 0
      %6497 = vmatpush1.bf16.msra.mxu0 %v6434
      %6498 = vmatprep.subr.bf16.mxu0 0
      %6499 = vmatpush1.bf16.msra.mxu0 %v6435
      %6500 = vmatprep.subr.bf16.mxu0 0
      %6501 = vmatpush1.bf16.msra.mxu0 %v6436
      %6502 = vmatprep.subr.bf16.mxu0 0
      %6503 = vmatpush1.bf16.msra.mxu0 %v6437
      %6504 = vmatprep.subr.bf16.mxu0 0
      %6505 = vmatpush1.bf16.msra.mxu0 0
      %6506 = vmatprep.subr.bf16.mxu0 0
      %6507 = vmatpush1.bf16.msra.mxu0 0
      %6508 = vmatprep.subr.bf16.mxu0 0
      %6509 = vmatpush1.bf16.msra.mxu0 0
      %6510 = vmatprep.subr.bf16.mxu0 0
      %6511 = vmatpush1.bf16.msra.mxu0 0
      %6512 = vmatprep.subr.bf16.mxu0 0
      %6513 = vmatpush1.bf16.msra.mxu0 0
      %6514 = vmatprep.subr.bf16.mxu0 0
      %6515 = vmatpush1.bf16.msra.mxu0 0
      %6516 = vmatprep.subr.bf16.mxu0 0
      %6517 = vmatpush1.bf16.msra.mxu0 0
      %6518 = vmatprep.subr.bf16.mxu0 0
      %6519 = vmatpush1.bf16.msra.mxu0 0
      %6520 = vmatprep.subr.bf16.mxu0 0
      %6521 = vmatpush1.bf16.msra.mxu0 0
      %6522 = vmatprep.subr.bf16.mxu0 0
      %6523 = vmatpush1.bf16.msra.mxu0 0
      %6524 = vmatprep.subr.bf16.mxu0 0
      %6525 = vmatpush1.bf16.msra.mxu0 0
      %6526 = vmatprep.subr.bf16.mxu0 0
      %6527 = vmatpush1.bf16.msra.mxu0 0
      %6528 = vmatprep.mubr.bf16.mxu0 0
      %6529 = vmatmul.mubr.bf16.gmra.mrb[0].mxu0 %v6443
      %v6530 = vpop.f32.mrb[0].mxu0
      %v6531 = vadd.f32 0.0, %v6530
      %v6532 = vpop.f32.mrb[0].mxu0
      %v6533 = vpop.f32.mrb[0].mxu0
      %v6534 = vadd.f32 0.0, %v6533
      %v6535 = vpop.f32.mrb[0].mxu0
      %6536 = vmatprep.mubr.bf16.mxu0 0
      %6537 = vmatmul.mubr.bf16.gmra.mrb[0].mxu0 %v6446
      %v6538 = vpop.f32.mrb[0].mxu0
      %v6539 = vadd.f32 0.0, %v6538
      %v6540 = vpop.f32.mrb[0].mxu0
      %v6541 = vpop.f32.mrb[0].mxu0
      %v6542 = vadd.f32 0.0, %v6541
      %v6543 = vpop.f32.mrb[0].mxu0
      %6544 = vmatprep.mubr.bf16.mxu0 0
      %6545 = vmatmul.mubr.bf16.gmra.mrb[0].mxu0 %v6449
      %v6546 = vpop.f32.mrb[0].mxu0
      %v6547 = vadd.f32 0.0, %v6546
      %v6548 = vpop.f32.mrb[0].mxu0
      %v6549 = vpop.f32.mrb[0].mxu0
      %v6550 = vadd.f32 0.0, %v6549
      %v6551 = vpop.f32.mrb[0].mxu0
      %6552 = vmatprep.mubr.bf16.mxu0 0
      %6553 = vmatmul.mubr.bf16.gmra.mrb[0].mxu0 %v6452
      %v6554 = vpop.f32.mrb[0].mxu0
      %v6555 = vadd.f32 0.0, %v6554
      %v6556 = vpop.f32.mrb[0].mxu0
      %v6557 = vpop.f32.mrb[0].mxu0
      %v6558 = vadd.f32 0.0, %v6557
      %v6559 = vpop.f32.mrb[0].mxu0
      %6560 = vmatprep.mubr.bf16.mxu0 0
      %6561 = vmatmul.mubr.bf16.gmra.mrb[0].mxu0 %v6455
      %v6562 = vpop.f32.mrb[0].mxu0
      %v6563 = vadd.f32 0.0, %v6562
      %v6564 = vpop.f32.mrb[0].mxu0
      %v6565 = vpop.f32.mrb[0].mxu0
      %v6566 = vadd.f32 0.0, %v6565
      %v6567 = vpop.f32.mrb[0].mxu0
      %6568 = vmatprep.mubr.bf16.mxu0 0
      %6569 = vmatmul.mubr.bf16.gmra.mrb[0].mxu0 %v6458
      %v6570 = vpop.f32.mrb[0].mxu0
      %v6571 = vadd.f32 0.0, %v6570
      %v6572 = vpop.f32.mrb[0].mxu0
      %v6573 = vpop.f32.mrb[0].mxu0
      %v6574 = vadd.f32 0.0, %v6573
      %v6575 = vpop.f32.mrb[0].mxu0
      %6576 = vmatprep.mubr.bf16.mxu0 0
      %6577 = vmatmul.mubr.bf16.gmra.mrb[0].mxu0 %v6461
      %v6578 = vpop.f32.mrb[0].mxu0
      %v6579 = vadd.f32 0.0, %v6578
      %v6580 = vpop.f32.mrb[0].mxu0
      %v6581 = vpop.f32.mrb[0].mxu0
      %v6582 = vadd.f32 0.0, %v6581
      %v6583 = vpop.f32.mrb[0].mxu0
      %6584 = vmatprep.mubr.bf16.mxu0 0
      %6585 = vmatmul.mubr.bf16.gmra.mrb[0].mxu0 %v6464
      %v6586 = vpop.f32.mrb[0].mxu0
      %v6587 = vadd.f32 0.0, %v6586
      %v6588 = vpop.f32.mrb[0].mxu0
      %v6589 = vpop.f32.mrb[0].mxu0
      %v6590 = vadd.f32 0.0, %v6589
      %v6591 = vpop.f32.mrb[0].mxu0
      %6592 = vmatprep.mubr.bf16.mxu0 0
      %6593 = vmatmul.mubr.bf16.gmra.mrb[0].mxu0 %v6467
      %v6594 = vpop.f32.mrb[0].mxu0
      %v6595 = vadd.f32 0.0, %v6594
      %v6596 = vpop.f32.mrb[0].mxu0
      %v6597 = vpop.f32.mrb[0].mxu0
      %v6598 = vadd.f32 0.0, %v6597
      %v6599 = vpop.f32.mrb[0].mxu0
      %6600 = vmatprep.mubr.bf16.mxu0 0
      %6601 = vmatmul.mubr.bf16.gmra.mrb[0].mxu0 %v6470
      %v6602 = vpop.f32.mrb[0].mxu0
      %v6603 = vadd.f32 0.0, %v6602
      %v6604 = vpop.f32.mrb[0].mxu0
      %v6605 = vpop.f32.mrb[0].mxu0
      %v6606 = vadd.f32 0.0, %v6605
      %v6607 = vpop.f32.mrb[0].mxu0
      %6608 = vmatprep.mubr.bf16.mxu0 0
      %6609 = vmatmul.mubr.bf16.gmra.mrb[0].mxu0 %v6473
      %v6610 = vpop.f32.mrb[0].mxu0
      %v6611 = vadd.f32 0.0, %v6610
      %v6612 = vpop.f32.mrb[0].mxu0
      %v6613 = vpop.f32.mrb[0].mxu0
      %v6614 = vadd.f32 0.0, %v6613
      %v6615 = vpop.f32.mrb[0].mxu0
      %6616 = vmatprep.mubr.bf16.mxu0 0
      %6617 = vmatmul.mubr.bf16.gmra.mrb[0].mxu0 %v6476
      %v6618 = vpop.f32.mrb[0].mxu0
      %v6619 = vadd.f32 0.0, %v6618
      %v6620 = vpop.f32.mrb[0].mxu0
      %v6621 = vpop.f32.mrb[0].mxu0
      %v6622 = vadd.f32 0.0, %v6621
      %v6623 = vpop.f32.mrb[0].mxu0
      %6624 = vmatprep.mubr.bf16.mxu0 0
      %6625 = vmatmul.mubr.bf16.gmra.mrb[0].mxu0 %v6479
      %v6626 = vpop.f32.mrb[0].mxu0
      %v6627 = vadd.f32 0.0, %v6626
      %v6628 = vpop.f32.mrb[0].mxu0
      %v6629 = vpop.f32.mrb[0].mxu0
      %v6630 = vadd.f32 0.0, %v6629
      %v6631 = vpop.f32.mrb[0].mxu0
      %6632 = vmatprep.mubr.bf16.mxu0 0
      %6633 = vmatmul.mubr.bf16.gmra.mrb[0].mxu0 %v6482
      %v6634 = vpop.f32.mrb[0].mxu0
      %v6635 = vadd.f32 0.0, %v6634
      %v6636 = vpop.f32.mrb[0].mxu0
      %v6637 = vpop.f32.mrb[0].mxu0
      %v6638 = vadd.f32 0.0, %v6637
      %v6639 = vpop.f32.mrb[0].mxu0
      %6640 = vmatprep.mubr.bf16.mxu0 0
      %6641 = vmatmul.mubr.bf16.gmra.mrb[0].mxu0 %v6485
      %v6642 = vpop.f32.mrb[0].mxu0
      %v6643 = vadd.f32 0.0, %v6642
      %v6644 = vpop.f32.mrb[0].mxu0
      %v6645 = vpop.f32.mrb[0].mxu0
      %v6646 = vadd.f32 0.0, %v6645
      %v6647 = vpop.f32.mrb[0].mxu0
      %6648 = vmatprep.mubr.bf16.mxu0 0
      %6649 = vmatmul.mubr.bf16.gmra.mrb[0].mxu0 %v6488
      %v6650 = vpop.f32.mrb[0].mxu0
      %v6651 = vadd.f32 0.0, %v6650
      %v6652 = vpop.f32.mrb[0].mxu0
      %v6653 = vpop.f32.mrb[0].mxu0
      %v6654 = vadd.f32 0.0, %v6653
      %v6655 = vpop.f32.mrb[0].mxu0
      %6656 = vmatprep.mubr.bf16.mxu0 0
      %6657 = vmatmul.mubr.bf16.gmra.mrb[0].mxu0 %v6491
      %v6658 = vpop.f32.mrb[0].mxu0
      %v6659 = vadd.f32 0.0, %v6658
      %v6660 = vpop.f32.mrb[0].mxu0
      %v6661 = vpop.f32.mrb[0].mxu0
      %v6662 = vadd.f32 0.0, %v6661
      %v6663 = vpop.f32.mrb[0].mxu0
      %6664 = vmatprep.mubr.bf16.mxu0 0
      %6665 = vmatmul.mubr.bf16.gmra.mrb[0].mxu0 %v6494
      %v6666 = vpop.f32.mrb[0].mxu0
      %v6667 = vadd.f32 0.0, %v6666
      %v6668 = vpop.f32.mrb[0].mxu0
      %v6669 = vpop.f32.mrb[0].mxu0
      %v6670 = vadd.f32 0.0, %v6669
      %v6671 = vpop.f32.mrb[0].mxu0
      %6672 = vdwg.mxu0
      %v6673 = vadd.f32 %v6319, %v6531
      %v6674 = vadd.f32 %v6320, %v6534
      %v6675 = vadd.f32 %v6321, %v6539
      %v6676 = vadd.f32 %v6322, %v6542
      %v6677 = vadd.f32 %v6323, %v6547
      %v6678 = vadd.f32 %v6324, %v6550
      %v6679 = vadd.f32 %v6325, %v6555
      %v6680 = vadd.f32 %v6326, %v6558
      %v6681 = vadd.f32 %v6327, %v6563
      %v6682 = vadd.f32 %v6328, %v6566
      %v6683 = vadd.f32 %v6329, %v6571
      %v6684 = vadd.f32 %v6330, %v6574
      %v6685 = vadd.f32 %v6331, %v6579
      %v6686 = vadd.f32 %v6332, %v6582
      %v6687 = vadd.f32 %v6333, %v6587
      %v6688 = vadd.f32 %v6334, %v6590
      %v6689 = vadd.f32 %v6335, %v6595
      %v6690 = vadd.f32 %v6336, %v6598
      %v6691 = vadd.f32 %v6337, %v6603
      %v6692 = vadd.f32 %v6338, %v6606
      %v6693 = vadd.f32 %v6339, %v6611
      %v6694 = vadd.f32 %v6340, %v6614
      %v6695 = vadd.f32 %v6341, %v6619
      %v6696 = vadd.f32 %v6342, %v6622
      %v6697 = vadd.f32 %v6343, %v6627
      %v6698 = vadd.f32 %v6344, %v6630
      %v6699 = vadd.f32 %v6345, %v6635
      %v6700 = vadd.f32 %v6346, %v6638
      %v6701 = vadd.f32 %v6347, %v6643
      %v6702 = vadd.f32 %v6348, %v6646
      %v6703 = vadd.f32 %v6349, %v6651
      %v6704 = vadd.f32 %v6350, %v6654
      %v6705 = vadd.f32 %v6351, %v6659
      %v6706 = vadd.f32 %v6352, %v6662
      %v6707 = vadd.f32 %v6353, %v6667
      %v6708 = vadd.f32 %v6354, %v6670
      %v6709 = vld [vmem:[%s4] sm:$0x1]
      %v6711 = vlaneseq
      %v6712 = vshrl.u32 %v6711, 7
      %v6713 = vsub.s32 0, %v6712
      %v6714 = vrot.slane %v6709, %v6713
      %v6716 = vadd.f32 %v6673, %v6714
      %v6717 = vadd.f32 %v6674, %v6714
      %v6718 = vadd.f32 %v6675, %v6714
      %v6719 = vadd.f32 %v6676, %v6714
      %v6720 = vadd.f32 %v6677, %v6714
      %v6721 = vadd.f32 %v6678, %v6714
      %v6722 = vadd.f32 %v6679, %v6714
      %v6723 = vadd.f32 %v6680, %v6714
      %v6724 = vadd.f32 %v6681, %v6714
      %v6725 = vadd.f32 %v6682, %v6714
      %v6726 = vadd.f32 %v6683, %v6714
      %v6727 = vadd.f32 %v6684, %v6714
      %v6728 = vadd.f32 %v6685, %v6714
      %v6729 = vadd.f32 %v6686, %v6714
      %v6730 = vadd.f32 %v6687, %v6714
      %v6731 = vadd.f32 %v6688, %v6714
      %v6732 = vadd.f32 %v6689, %v6714
      %v6733 = vadd.f32 %v6690, %v6714
      %v6734 = vadd.f32 %v6691, %v6714
      %v6735 = vadd.f32 %v6692, %v6714
      %v6736 = vadd.f32 %v6693, %v6714
      %v6737 = vadd.f32 %v6694, %v6714
      %v6738 = vadd.f32 %v6695, %v6714
      %v6739 = vadd.f32 %v6696, %v6714
      %v6740 = vadd.f32 %v6697, %v6714
      %v6741 = vadd.f32 %v6698, %v6714
      %v6742 = vadd.f32 %v6699, %v6714
      %v6743 = vadd.f32 %v6700, %v6714
      %v6744 = vadd.f32 %v6701, %v6714
      %v6745 = vadd.f32 %v6702, %v6714
      %v6746 = vadd.f32 %v6703, %v6714
      %v6747 = vadd.f32 %v6704, %v6714
      %v6748 = vadd.f32 %v6705, %v6714
      %v6749 = vadd.f32 %v6706, %v6714
      %v6750 = vadd.f32 %v6707, %v6714
      %v6751 = vadd.f32 %v6708, %v6714
      %v6752 = vmax.f32 %v6716, 0.0
      %v6753 = vmax.f32 %v6717, 0.0
      %v6754 = vmax.f32 %v6718, 0.0
      %v6755 = vmax.f32 %v6719, 0.0
      %v6756 = vmax.f32 %v6720, 0.0
      %v6757 = vmax.f32 %v6721, 0.0
      %v6758 = vmax.f32 %v6722, 0.0
      %v6759 = vmax.f32 %v6723, 0.0
      %v6760 = vmax.f32 %v6724, 0.0
      %v6761 = vmax.f32 %v6725, 0.0
      %v6762 = vmax.f32 %v6726, 0.0
      %v6763 = vmax.f32 %v6727, 0.0
      %v6764 = vmax.f32 %v6728, 0.0
      %v6765 = vmax.f32 %v6729, 0.0
      %v6766 = vmax.f32 %v6730, 0.0
      %v6767 = vmax.f32 %v6731, 0.0
      %v6768 = vmax.f32 %v6732, 0.0
      %v6769 = vmax.f32 %v6733, 0.0
      %v6770 = vmax.f32 %v6734, 0.0
      %v6771 = vmax.f32 %v6735, 0.0
      %v6772 = vmax.f32 %v6736, 0.0
      %v6773 = vmax.f32 %v6737, 0.0
      %v6774 = vmax.f32 %v6738, 0.0
      %v6775 = vmax.f32 %v6739, 0.0
      %v6776 = vmax.f32 %v6740, 0.0
      %v6777 = vmax.f32 %v6741, 0.0
      %v6778 = vmax.f32 %v6742, 0.0
      %v6779 = vmax.f32 %v6743, 0.0
      %v6780 = vmax.f32 %v6744, 0.0
      %v6781 = vmax.f32 %v6745, 0.0
      %v6782 = vmax.f32 %v6746, 0.0
      %v6783 = vmax.f32 %v6747, 0.0
      %v6784 = vmax.f32 %v6748, 0.0
      %v6785 = vmax.f32 %v6749, 0.0
      %v6786 = vmax.f32 %v6750, 0.0
      %v6787 = vmax.f32 %v6751, 0.0
      %6788 = vst.msk [vmem:[#allocation3] sm:$0xff] %vm316, %v6752
      %6789 = vst.msk [vmem:[#allocation3 + $0x8] sm:$0xff] %vm316, %v6753
      %6790 = vst.msk [vmem:[#allocation3 + $0x10] sm:$0xff] %vm316, %v6754
      %6791 = vst.msk [vmem:[#allocation3 + $0x18] sm:$0xff] %vm316, %v6755
      %6792 = vst.msk [vmem:[#allocation3 + $0x20] sm:$0xff] %vm316, %v6756
      %6793 = vst.msk [vmem:[#allocation3 + $0x28] sm:$0xff] %vm316, %v6757
      %6794 = vst.msk [vmem:[#allocation3 + $0x30] sm:$0xff] %vm316, %v6758
      %6795 = vst.msk [vmem:[#allocation3 + $0x38] sm:$0xff] %vm316, %v6759
      %6796 = vst.msk [vmem:[#allocation3 + $0x40] sm:$0xff] %vm316, %v6760
      %6797 = vst.msk [vmem:[#allocation3 + $0x48] sm:$0xff] %vm316, %v6761
      %6798 = vst.msk [vmem:[#allocation3 + $0x50] sm:$0xff] %vm316, %v6762
      %6799 = vst.msk [vmem:[#allocation3 + $0x58] sm:$0xff] %vm316, %v6763
      %6800 = vst.msk [vmem:[#allocation3 + $0x60] sm:$0xff] %vm316, %v6764
      %6801 = vst.msk [vmem:[#allocation3 + $0x68] sm:$0xff] %vm316, %v6765
      %6802 = vst.msk [vmem:[#allocation3 + $0x70] sm:$0xff] %vm316, %v6766
      %6803 = vst.msk [vmem:[#allocation3 + $0x78] sm:$0xff] %vm316, %v6767
      %6804 = vst.msk [vmem:[#allocation3 + $0x80] sm:$0xff] %vm316, %v6768
      %6805 = vst.msk [vmem:[#allocation3 + $0x88] sm:$0xff] %vm316, %v6769
      %6806 = vst.msk [vmem:[#allocation3 + $0x90] sm:$0xff] %vm316, %v6770
      %6807 = vst.msk [vmem:[#allocation3 + $0x98] sm:$0xff] %vm316, %v6771
      %6808 = vst.msk [vmem:[#allocation3 + $0xa0] sm:$0xff] %vm316, %v6772
      %6809 = vst.msk [vmem:[#allocation3 + $0xa8] sm:$0xff] %vm316, %v6773
      %6810 = vst.msk [vmem:[#allocation3 + $0xb0] sm:$0xff] %vm316, %v6774
      %6811 = vst.msk [vmem:[#allocation3 + $0xb8] sm:$0xff] %vm316, %v6775
      %6812 = vst.msk [vmem:[#allocation3 + $0xc0] sm:$0xff] %vm316, %v6776
      %6813 = vst.msk [vmem:[#allocation3 + $0xc8] sm:$0xff] %vm316, %v6777
      %6814 = vst.msk [vmem:[#allocation3 + $0xd0] sm:$0xff] %vm316, %v6778
      %6815 = vst.msk [vmem:[#allocation3 + $0xd8] sm:$0xff] %vm316, %v6779
      %6816 = vst.msk [vmem:[#allocation3 + $0xe0] sm:$0xff] %vm316, %v6780
      %6817 = vst.msk [vmem:[#allocation3 + $0xe8] sm:$0xff] %vm316, %v6781
      %6818 = vst.msk [vmem:[#allocation3 + $0xf0] sm:$0xff] %vm316, %v6782
      %6819 = vst.msk [vmem:[#allocation3 + $0xf8] sm:$0xff] %vm316, %v6783
      %6820 = vst.msk [vmem:[#allocation3 + $0x100] sm:$0xff] %vm316, %v6784
      %6821 = vst.msk [vmem:[#allocation3 + $0x108] sm:$0xff] %vm316, %v6785
      %6822 = vst.msk [vmem:[#allocation3 + $0x110] sm:$0xff] %vm316, %v6786
      %6823 = vst.msk [vmem:[#allocation3 + $0x118] sm:$0xff] %vm316, %v6787
      %v6824 = vld [vmem:[#allocation3] sm:$0xff]
      %v6825 = vld [vmem:[#allocation3 + $0x8] sm:$0xff]
      %v6826 = vld [vmem:[#allocation3 + $0x10] sm:$0xff]
      %v6827 = vld [vmem:[#allocation3 + $0x18] sm:$0xff]
      %v6828 = vld [vmem:[#allocation3 + $0x20] sm:$0xff]
      %v6829 = vld [vmem:[#allocation3 + $0x28] sm:$0xff]
      %v6830 = vld [vmem:[#allocation3 + $0x30] sm:$0xff]
      %v6831 = vld [vmem:[#allocation3 + $0x38] sm:$0xff]
      %v6832 = vld [vmem:[#allocation3 + $0x40] sm:$0xff]
      %v6833 = vld [vmem:[#allocation3 + $0x48] sm:$0xff]
      %v6834 = vld [vmem:[#allocation3 + $0x50] sm:$0xff]
      %v6835 = vld [vmem:[#allocation3 + $0x58] sm:$0xff]
      %v6836 = vld [vmem:[#allocation3 + $0x60] sm:$0xff]
      %v6837 = vld [vmem:[#allocation3 + $0x68] sm:$0xff]
      %v6838 = vld [vmem:[#allocation3 + $0x70] sm:$0xff]
      %v6839 = vld [vmem:[#allocation3 + $0x78] sm:$0xff]
      %v6840 = vld [vmem:[#allocation3 + $0x80] sm:$0xff]
      %v6841 = vld [vmem:[#allocation3 + $0x88] sm:$0xff]
      %v6842 = vld [vmem:[#allocation3 + $0x90] sm:$0xff]
      %v6843 = vld [vmem:[#allocation3 + $0x98] sm:$0xff]
      %v6844 = vld [vmem:[#allocation3 + $0xa0] sm:$0xff]
      %v6845 = vld [vmem:[#allocation3 + $0xa8] sm:$0xff]
      %v6846 = vld [vmem:[#allocation3 + $0xb0] sm:$0xff]
      %v6847 = vld [vmem:[#allocation3 + $0xb8] sm:$0xff]
      %v6848 = vld [vmem:[#allocation3 + $0xc0] sm:$0xff]
      %v6849 = vld [vmem:[#allocation3 + $0xc8] sm:$0xff]
      %v6850 = vld [vmem:[#allocation3 + $0xd0] sm:$0xff]
      %v6851 = vld [vmem:[#allocation3 + $0xd8] sm:$0xff]
      %v6852 = vld [vmem:[#allocation3 + $0xe0] sm:$0xff]
      %v6853 = vld [vmem:[#allocation3 + $0xe8] sm:$0xff]
      %v6854 = vld [vmem:[#allocation3 + $0xf0] sm:$0xff]
      %v6855 = vld [vmem:[#allocation3 + $0xf8] sm:$0xff]
      %v6856 = vld [vmem:[#allocation3 + $0x100] sm:$0xff]
      %v6857 = vld [vmem:[#allocation3 + $0x108] sm:$0xff]
      %v6858 = vld [vmem:[#allocation3 + $0x110] sm:$0xff]
      %v6859 = vld [vmem:[#allocation3 + $0x118] sm:$0xff]
      %v6860 = vld [vmem:[#allocation3 + $0x1] sm:$0xff]
      %v6861 = vld [vmem:[#allocation3 + $0x9] sm:$0xff]
      %v6862 = vld [vmem:[#allocation3 + $0x11] sm:$0xff]
      %v6863 = vld [vmem:[#allocation3 + $0x19] sm:$0xff]
      %v6864 = vld [vmem:[#allocation3 + $0x21] sm:$0xff]
      %v6865 = vld [vmem:[#allocation3 + $0x29] sm:$0xff]
      %v6866 = vld [vmem:[#allocation3 + $0x31] sm:$0xff]
      %v6867 = vld [vmem:[#allocation3 + $0x39] sm:$0xff]
      %v6868 = vld [vmem:[#allocation3 + $0x41] sm:$0xff]
      %v6869 = vld [vmem:[#allocation3 + $0x49] sm:$0xff]
      %v6870 = vld [vmem:[#allocation3 + $0x51] sm:$0xff]
      %v6871 = vld [vmem:[#allocation3 + $0x59] sm:$0xff]
      %v6872 = vld [vmem:[#allocation3 + $0x61] sm:$0xff]
      %v6873 = vld [vmem:[#allocation3 + $0x69] sm:$0xff]
      %v6874 = vld [vmem:[#allocation3 + $0x71] sm:$0xff]
      %v6875 = vld [vmem:[#allocation3 + $0x79] sm:$0xff]
      %v6876 = vld [vmem:[#allocation3 + $0x81] sm:$0xff]
      %v6877 = vld [vmem:[#allocation3 + $0x89] sm:$0xff]
      %v6878 = vld [vmem:[#allocation3 + $0x91] sm:$0xff]
      %v6879 = vld [vmem:[#allocation3 + $0x99] sm:$0xff]
      %v6880 = vld [vmem:[#allocation3 + $0xa1] sm:$0xff]
      %v6881 = vld [vmem:[#allocation3 + $0xa9] sm:$0xff]
      %v6882 = vld [vmem:[#allocation3 + $0xb1] sm:$0xff]
      %v6883 = vld [vmem:[#allocation3 + $0xb9] sm:$0xff]
      %v6884 = vld [vmem:[#allocation3 + $0xc1] sm:$0xff]
      %v6885 = vld [vmem:[#allocation3 + $0xc9] sm:$0xff]
      %v6886 = vld [vmem:[#allocation3 + $0xd1] sm:$0xff]
      %v6887 = vld [vmem:[#allocation3 + $0xd9] sm:$0xff]
      %v6888 = vld [vmem:[#allocation3 + $0xe1] sm:$0xff]
      %v6889 = vld [vmem:[#allocation3 + $0xe9] sm:$0xff]
      %v6890 = vld [vmem:[#allocation3 + $0xf1] sm:$0xff]
      %v6891 = vld [vmem:[#allocation3 + $0xf9] sm:$0xff]
      %v6892 = vld [vmem:[#allocation3 + $0x101] sm:$0xff]
      %v6893 = vld [vmem:[#allocation3 + $0x109] sm:$0xff]
      %v6894 = vld [vmem:[#allocation3 + $0x111] sm:$0xff]
      %v6895 = vld [vmem:[#allocation3 + $0x119] sm:$0xff]
      %v6896 = vmax.f32 %v6824, %v6860
      %v6897 = vmax.f32 %v6825, %v6861
      %v6898 = vmax.f32 %v6826, %v6862
      %v6899 = vmax.f32 %v6827, %v6863
      %v6900 = vmax.f32 %v6828, %v6864
      %v6901 = vmax.f32 %v6829, %v6865
      %v6902 = vmax.f32 %v6830, %v6866
      %v6903 = vmax.f32 %v6831, %v6867
      %v6904 = vmax.f32 %v6832, %v6868
      %v6905 = vmax.f32 %v6833, %v6869
      %v6906 = vmax.f32 %v6834, %v6870
      %v6907 = vmax.f32 %v6835, %v6871
      %v6908 = vmax.f32 %v6836, %v6872
      %v6909 = vmax.f32 %v6837, %v6873
      %v6910 = vmax.f32 %v6838, %v6874
      %v6911 = vmax.f32 %v6839, %v6875
      %v6912 = vmax.f32 %v6840, %v6876
      %v6913 = vmax.f32 %v6841, %v6877
      %v6914 = vmax.f32 %v6842, %v6878
      %v6915 = vmax.f32 %v6843, %v6879
      %v6916 = vmax.f32 %v6844, %v6880
      %v6917 = vmax.f32 %v6845, %v6881
      %v6918 = vmax.f32 %v6846, %v6882
      %v6919 = vmax.f32 %v6847, %v6883
      %v6920 = vmax.f32 %v6848, %v6884
      %v6921 = vmax.f32 %v6849, %v6885
      %v6922 = vmax.f32 %v6850, %v6886
      %v6923 = vmax.f32 %v6851, %v6887
      %v6924 = vmax.f32 %v6852, %v6888
      %v6925 = vmax.f32 %v6853, %v6889
      %v6926 = vmax.f32 %v6854, %v6890
      %v6927 = vmax.f32 %v6855, %v6891
      %v6928 = vmax.f32 %v6856, %v6892
      %v6929 = vmax.f32 %v6857, %v6893
      %v6930 = vmax.f32 %v6858, %v6894
      %v6931 = vmax.f32 %v6859, %v6895
      %v6932 = vld [vmem:[#allocation3 + $0x12] sm:$0xff]
      %v6933 = vld [vmem:[#allocation3 + $0x1a] sm:$0xff]
      %v6934 = vld [vmem:[#allocation3 + $0x22] sm:$0xff]
      %v6935 = vld [vmem:[#allocation3 + $0x2a] sm:$0xff]
      %v6936 = vld [vmem:[#allocation3 + $0x32] sm:$0xff]
      %v6937 = vld [vmem:[#allocation3 + $0x3a] sm:$0xff]
      %v6938 = vld [vmem:[#allocation3 + $0x42] sm:$0xff]
      %v6939 = vld [vmem:[#allocation3 + $0x4a] sm:$0xff]
      %v6940 = vld [vmem:[#allocation3 + $0x52] sm:$0xff]
      %v6941 = vld [vmem:[#allocation3 + $0x5a] sm:$0xff]
      %v6942 = vld [vmem:[#allocation3 + $0x62] sm:$0xff]
      %v6943 = vld [vmem:[#allocation3 + $0x6a] sm:$0xff]
      %v6944 = vld [vmem:[#allocation3 + $0x72] sm:$0xff]
      %v6945 = vld [vmem:[#allocation3 + $0x7a] sm:$0xff]
      %v6946 = vld [vmem:[#allocation3 + $0x82] sm:$0xff]
      %v6947 = vld [vmem:[#allocation3 + $0x8a] sm:$0xff]
      %v6948 = vld [vmem:[#allocation3 + $0x92] sm:$0xff]
      %v6949 = vld [vmem:[#allocation3 + $0x9a] sm:$0xff]
      %v6950 = vld [vmem:[#allocation3 + $0xa2] sm:$0xff]
      %v6951 = vld [vmem:[#allocation3 + $0xaa] sm:$0xff]
      %v6952 = vld [vmem:[#allocation3 + $0xb2] sm:$0xff]
      %v6953 = vld [vmem:[#allocation3 + $0xba] sm:$0xff]
      %v6954 = vld [vmem:[#allocation3 + $0xc2] sm:$0xff]
      %v6955 = vld [vmem:[#allocation3 + $0xca] sm:$0xff]
      %v6956 = vld [vmem:[#allocation3 + $0xd2] sm:$0xff]
      %v6957 = vld [vmem:[#allocation3 + $0xda] sm:$0xff]
      %v6958 = vld [vmem:[#allocation3 + $0xe2] sm:$0xff]
      %v6959 = vld [vmem:[#allocation3 + $0xea] sm:$0xff]
      %v6960 = vld [vmem:[#allocation3 + $0xf2] sm:$0xff]
      %v6961 = vld [vmem:[#allocation3 + $0xfa] sm:$0xff]
      %v6962 = vld [vmem:[#allocation3 + $0x102] sm:$0xff]
      %v6963 = vld [vmem:[#allocation3 + $0x10a] sm:$0xff]
      %v6964 = vld [vmem:[#allocation3 + $0x112] sm:$0xff]
      %v6965 = vld [vmem:[#allocation3 + $0x11a] sm:$0xff]
      %v6966 = vld [vmem:[#allocation3 + $0x122] sm:$0xff]
      %v6967 = vld [vmem:[#allocation3 + $0x12a] sm:$0xff]
      %v6968 = vld [vmem:[#allocation3 + $0x13] sm:$0xff]
      %v6969 = vld [vmem:[#allocation3 + $0x1b] sm:$0xff]
      %v6970 = vld [vmem:[#allocation3 + $0x23] sm:$0xff]
      %v6971 = vld [vmem:[#allocation3 + $0x2b] sm:$0xff]
      %v6972 = vld [vmem:[#allocation3 + $0x33] sm:$0xff]
      %v6973 = vld [vmem:[#allocation3 + $0x3b] sm:$0xff]
      %v6974 = vld [vmem:[#allocation3 + $0x43] sm:$0xff]
      %v6975 = vld [vmem:[#allocation3 + $0x4b] sm:$0xff]
      %v6976 = vld [vmem:[#allocation3 + $0x53] sm:$0xff]
      %v6977 = vld [vmem:[#allocation3 + $0x5b] sm:$0xff]
      %v6978 = vld [vmem:[#allocation3 + $0x63] sm:$0xff]
      %v6979 = vld [vmem:[#allocation3 + $0x6b] sm:$0xff]
      %v6980 = vld [vmem:[#allocation3 + $0x73] sm:$0xff]
      %v6981 = vld [vmem:[#allocation3 + $0x7b] sm:$0xff]
      %v6982 = vld [vmem:[#allocation3 + $0x83] sm:$0xff]
      %v6983 = vld [vmem:[#allocation3 + $0x8b] sm:$0xff]
      %v6984 = vld [vmem:[#allocation3 + $0x93] sm:$0xff]
      %v6985 = vld [vmem:[#allocation3 + $0x9b] sm:$0xff]
      %v6986 = vld [vmem:[#allocation3 + $0xa3] sm:$0xff]
      %v6987 = vld [vmem:[#allocation3 + $0xab] sm:$0xff]
      %v6988 = vld [vmem:[#allocation3 + $0xb3] sm:$0xff]
      %v6989 = vld [vmem:[#allocation3 + $0xbb] sm:$0xff]
      %v6990 = vld [vmem:[#allocation3 + $0xc3] sm:$0xff]
      %v6991 = vld [vmem:[#allocation3 + $0xcb] sm:$0xff]
      %v6992 = vld [vmem:[#allocation3 + $0xd3] sm:$0xff]
      %v6993 = vld [vmem:[#allocation3 + $0xdb] sm:$0xff]
      %v6994 = vld [vmem:[#allocation3 + $0xe3] sm:$0xff]
      %v6995 = vld [vmem:[#allocation3 + $0xeb] sm:$0xff]
      %v6996 = vld [vmem:[#allocation3 + $0xf3] sm:$0xff]
      %v6997 = vld [vmem:[#allocation3 + $0xfb] sm:$0xff]
      %v6998 = vld [vmem:[#allocation3 + $0x103] sm:$0xff]
      %v6999 = vld [vmem:[#allocation3 + $0x10b] sm:$0xff]
      %v7000 = vld [vmem:[#allocation3 + $0x113] sm:$0xff]
      %v7001 = vld [vmem:[#allocation3 + $0x11b] sm:$0xff]
      %v7002 = vld [vmem:[#allocation3 + $0x123] sm:$0xff]
      %v7003 = vld [vmem:[#allocation3 + $0x12b] sm:$0xff]
      %v7004 = vmax.f32 %v6932, %v6968
      %v7005 = vmax.f32 %v6933, %v6969
      %v7006 = vmax.f32 %v6934, %v6970
      %v7007 = vmax.f32 %v6935, %v6971
      %v7008 = vmax.f32 %v6936, %v6972
      %v7009 = vmax.f32 %v6937, %v6973
      %v7010 = vmax.f32 %v6938, %v6974
      %v7011 = vmax.f32 %v6939, %v6975
      %v7012 = vmax.f32 %v6940, %v6976
      %v7013 = vmax.f32 %v6941, %v6977
      %v7014 = vmax.f32 %v6942, %v6978
      %v7015 = vmax.f32 %v6943, %v6979
      %v7016 = vmax.f32 %v6944, %v6980
      %v7017 = vmax.f32 %v6945, %v6981
      %v7018 = vmax.f32 %v6946, %v6982
      %v7019 = vmax.f32 %v6947, %v6983
      %v7020 = vmax.f32 %v6948, %v6984
      %v7021 = vmax.f32 %v6949, %v6985
      %v7022 = vmax.f32 %v6950, %v6986
      %v7023 = vmax.f32 %v6951, %v6987
      %v7024 = vmax.f32 %v6952, %v6988
      %v7025 = vmax.f32 %v6953, %v6989
      %v7026 = vmax.f32 %v6954, %v6990
      %v7027 = vmax.f32 %v6955, %v6991
      %v7028 = vmax.f32 %v6956, %v6992
      %v7029 = vmax.f32 %v6957, %v6993
      %v7030 = vmax.f32 %v6958, %v6994
      %v7031 = vmax.f32 %v6959, %v6995
      %v7032 = vmax.f32 %v6960, %v6996
      %v7033 = vmax.f32 %v6961, %v6997
      %v7034 = vmax.f32 %v6962, %v6998
      %v7035 = vmax.f32 %v6963, %v6999
      %v7036 = vmax.f32 %v6964, %v7000
      %v7037 = vmax.f32 %v6965, %v7001
      %v7038 = vmax.f32 %v6966, %v7002
      %v7039 = vmax.f32 %v6967, %v7003
      %v7040 = vmax.f32 %v6896, %v7004
      %v7041 = vmax.f32 %v6897, %v7005
      %v7042 = vmax.f32 %v6898, %v7006
      %v7043 = vmax.f32 %v6899, %v7007
      %v7044 = vmax.f32 %v6900, %v7008
      %v7045 = vmax.f32 %v6901, %v7009
      %v7046 = vmax.f32 %v6902, %v7010
      %v7047 = vmax.f32 %v6903, %v7011
      %v7048 = vmax.f32 %v6904, %v7012
      %v7049 = vmax.f32 %v6905, %v7013
      %v7050 = vmax.f32 %v6906, %v7014
      %v7051 = vmax.f32 %v6907, %v7015
      %v7052 = vmax.f32 %v6908, %v7016
      %v7053 = vmax.f32 %v6909, %v7017
      %v7054 = vmax.f32 %v6910, %v7018
      %v7055 = vmax.f32 %v6911, %v7019
      %v7056 = vmax.f32 %v6912, %v7020
      %v7057 = vmax.f32 %v6913, %v7021
      %v7058 = vmax.f32 %v6914, %v7022
      %v7059 = vmax.f32 %v6915, %v7023
      %v7060 = vmax.f32 %v6916, %v7024
      %v7061 = vmax.f32 %v6917, %v7025
      %v7062 = vmax.f32 %v6918, %v7026
      %v7063 = vmax.f32 %v6919, %v7027
      %v7064 = vmax.f32 %v6920, %v7028
      %v7065 = vmax.f32 %v6921, %v7029
      %v7066 = vmax.f32 %v6922, %v7030
      %v7067 = vmax.f32 %v6923, %v7031
      %v7068 = vmax.f32 %v6924, %v7032
      %v7069 = vmax.f32 %v6925, %v7033
      %v7070 = vmax.f32 %v6926, %v7034
      %v7071 = vmax.f32 %v6927, %v7035
      %v7072 = vmax.f32 %v6928, %v7036
      %v7073 = vmax.f32 %v6929, %v7037
      %v7074 = vmax.f32 %v6930, %v7038
      %v7075 = vmax.f32 %v6931, %v7039
      %v7076 = vld [vmem:[%s6] sm:$0xff]
      %v7077 = vld [vmem:[%s6 + $0x8] sm:$0xff]
      %v7078 = vld [vmem:[%s6 + $0x10] sm:$0xff]
      %v7079 = vld [vmem:[%s6 + $0x18] sm:$0xff]
      %v7080 = vld [vmem:[%s6 + $0x20] sm:$0xff]
      %v7081 = vld [vmem:[%s6 + $0x28] sm:$0xff]
      %v7082 = vld [vmem:[%s6 + $0x30] sm:$0xff]
      %v7083 = vld [vmem:[%s6 + $0x38] sm:$0xff]
      %v7084 = vld [vmem:[%s6 + $0x40] sm:$0xff]
      %v7085 = vld [vmem:[%s6 + $0x48] sm:$0xff]
      %v7086 = vld [vmem:[%s6 + $0x50] sm:$0xff]
      %v7087 = vld [vmem:[%s6 + $0x58] sm:$0xff]
      %v7088 = vld [vmem:[%s6 + $0x60] sm:$0xff]
      %v7089 = vld [vmem:[%s6 + $0x68] sm:$0xff]
      %v7090 = vld [vmem:[%s6 + $0x70] sm:$0xff]
      %v7091 = vld [vmem:[%s6 + $0x78] sm:$0xff]
      %v7092 = vld [vmem:[%s6 + $0x80] sm:$0xff]
      %v7093 = vld [vmem:[%s6 + $0x88] sm:$0xff]
      %v7094 = vld [vmem:[%s6 + $0x90] sm:$0xff]
      %v7095 = vld [vmem:[%s6 + $0x98] sm:$0xff]
      %v7096 = vld [vmem:[%s6 + $0xa0] sm:$0xff]
      %v7097 = vld [vmem:[%s6 + $0xa8] sm:$0xff]
      %v7098 = vld [vmem:[%s6 + $0xb0] sm:$0xff]
      %v7099 = vld [vmem:[%s6 + $0xb8] sm:$0xff]
      %v7100 = vld [vmem:[%s6 + $0xc0] sm:$0xff]
      %v7101 = vld [vmem:[%s6 + $0xc8] sm:$0xff]
      %v7102 = vld [vmem:[%s6 + $0xd0] sm:$0xff]
      %v7103 = vld [vmem:[%s6 + $0xd8] sm:$0xff]
      %v7104 = vld [vmem:[%s6 + $0xe0] sm:$0xff]
      %v7105 = vld [vmem:[%s6 + $0xe8] sm:$0xff]
      %v7106 = vld [vmem:[%s6 + $0xf0] sm:$0xff]
      %v7107 = vld [vmem:[%s6 + $0xf8] sm:$0xff]
      %v7108 = vld [vmem:[%s6 + $0x100] sm:$0xff]
      %v7109 = vld [vmem:[%s6 + $0x108] sm:$0xff]
      %v7110 = vld [vmem:[%s6 + $0x110] sm:$0xff]
      %v7111 = vld [vmem:[%s6 + $0x118] sm:$0xff]
      %v7112 = vld [vmem:[%s6 + $0x120] sm:$0xff]
      %v7113 = vld [vmem:[%s6 + $0x128] sm:$0xff]
      %v7114 = vld [vmem:[%s6 + $0x130] sm:$0xff]
      %vm7115 = vcmask 261120
      %v7117 = vsel %vm7115, %v7078, 0
      %v7120 = vsel %vm7115, %v7081, 0
      %v7123 = vsel %vm7115, %v7084, 0
      %v7126 = vsel %vm7115, %v7087, 0
      %v7129 = vsel %vm7115, %v7090, 0
      %v7132 = vsel %vm7115, %v7093, 0
      %v7135 = vsel %vm7115, %v7096, 0
      %v7138 = vsel %vm7115, %v7099, 0
      %v7141 = vsel %vm7115, %v7102, 0
      %v7144 = vsel %vm7115, %v7105, 0
      %v7147 = vsel %vm7115, %v7108, 0
      %v7150 = vsel %vm7115, %v7111, 0
      %v7153 = vsel %vm7115, %v7114, 0
      %7155 = vmatprep.subr.mxu0 0.0
      %7156 = vmatpush1.msra.mxu0 %v7040
      %7157 = vmatprep.subr.mxu0 0.0
      %7158 = vmatpush1.msra.mxu0 %v7041
      %7159 = vmatprep.subr.mxu0 0.0
      %7160 = vmatpush1.msra.mxu0 %v7042
      %7161 = vmatprep.subr.mxu0 0.0
      %7162 = vmatpush1.msra.mxu0 %v7043
      %7163 = vmatprep.subr.mxu0 0.0
      %7164 = vmatpush1.msra.mxu0 %v7044
      %7165 = vmatprep.subr.mxu0 0.0
      %7166 = vmatpush1.msra.mxu0 %v7045
      %7167 = vmatprep.subr.mxu0 0.0
      %7168 = vmatpush1.msra.mxu0 %v7046
      %7169 = vmatprep.subr.mxu0 0.0
      %7170 = vmatpush1.msra.mxu0 %v7047
      %7171 = vmatprep.subr.mxu0 0.0
      %7172 = vmatpush1.msra.mxu0 %v7048
      %7173 = vmatprep.subr.mxu0 0.0
      %7174 = vmatpush1.msra.mxu0 %v7049
      %7175 = vmatprep.subr.mxu0 0.0
      %7176 = vmatpush1.msra.mxu0 %v7050
      %7177 = vmatprep.subr.mxu0 0.0
      %7178 = vmatpush1.msra.mxu0 %v7051
      %7179 = vmatprep.subr.mxu0 0.0
      %7180 = vmatpush1.msra.mxu0 %v7052
      %7181 = vmatprep.subr.mxu0 0.0
      %7182 = vmatpush1.msra.mxu0 %v7053
      %7183 = vmatprep.subr.mxu0 0.0
      %7184 = vmatpush1.msra.mxu0 %v7054
      %7185 = vmatprep.subr.mxu0 0.0
      %7186 = vmatpush1.msra.mxu0 %v7055
      %7187 = vmatprep.subr.mxu0 0.0
      %7188 = vmatpush1.msra.mxu0 %v7056
      %7189 = vmatprep.subr.mxu0 0.0
      %7190 = vmatpush1.msra.mxu0 %v7057
      %7191 = vmatprep.subr.mxu0 0.0
      %7192 = vmatpush1.msra.mxu0 %v7058
      %7193 = vmatprep.subr.mxu0 0.0
      %7194 = vmatpush1.msra.mxu0 %v7059
      %7195 = vmatprep.subr.mxu0 0.0
      %7196 = vmatpush1.msra.mxu0 %v7060
      %7197 = vmatprep.subr.mxu0 0.0
      %7198 = vmatpush1.msra.mxu0 %v7061
      %7199 = vmatprep.subr.mxu0 0.0
      %7200 = vmatpush1.msra.mxu0 %v7062
      %7201 = vmatprep.subr.mxu0 0.0
      %7202 = vmatpush1.msra.mxu0 %v7063
      %7203 = vmatprep.subr.mxu0 0.0
      %7204 = vmatpush1.msra.mxu0 %v7064
      %7205 = vmatprep.subr.mxu0 0.0
      %7206 = vmatpush1.msra.mxu0 %v7065
      %7207 = vmatprep.subr.mxu0 0.0
      %7208 = vmatpush1.msra.mxu0 %v7066
      %7209 = vmatprep.subr.mxu0 0.0
      %7210 = vmatpush1.msra.mxu0 %v7067
      %7211 = vmatprep.subr.mxu0 0.0
      %7212 = vmatpush1.msra.mxu0 %v7068
      %7213 = vmatprep.subr.mxu0 0.0
      %7214 = vmatpush1.msra.mxu0 %v7069
      %7215 = vmatprep.subr.mxu0 0.0
      %7216 = vmatpush1.msra.mxu0 %v7070
      %7217 = vmatprep.subr.mxu0 0.0
      %7218 = vmatpush1.msra.mxu0 %v7071
      %7219 = vmatprep.mubr.f32.mxu0 %v7077
      %7220 = vmatmul.mubr.f32.gmra.mrb[0].mxu0 %v7076
      %v7221 = vpop.f32.mrb[0].mxu0
      %v7222 = vadd.f32 0.0, %v7221
      %v7223 = vpop.f32.mrb[0].mxu0
      %7224 = vmatprep.mubr.f32.mxu0 %v7080
      %7225 = vmatmul.mubr.f32.gmra.mrb[0].mxu0 %v7079
      %v7226 = vpop.f32.mrb[0].mxu0
      %v7227 = vadd.f32 0.0, %v7226
      %v7228 = vpop.f32.mrb[0].mxu0
      %7229 = vmatprep.mubr.f32.mxu0 %v7083
      %7230 = vmatmul.mubr.f32.gmra.mrb[0].mxu0 %v7082
      %v7231 = vpop.f32.mrb[0].mxu0
      %v7232 = vadd.f32 0.0, %v7231
      %v7233 = vpop.f32.mrb[0].mxu0
      %7234 = vmatprep.mubr.f32.mxu0 %v7086
      %7235 = vmatmul.mubr.f32.gmra.mrb[0].mxu0 %v7085
      %v7236 = vpop.f32.mrb[0].mxu0
      %v7237 = vadd.f32 0.0, %v7236
      %v7238 = vpop.f32.mrb[0].mxu0
      %7239 = vmatprep.mubr.f32.mxu0 %v7089
      %7240 = vmatmul.mubr.f32.gmra.mrb[0].mxu0 %v7088
      %v7241 = vpop.f32.mrb[0].mxu0
      %v7242 = vadd.f32 0.0, %v7241
      %v7243 = vpop.f32.mrb[0].mxu0
      %7244 = vmatprep.mubr.f32.mxu0 %v7092
      %7245 = vmatmul.mubr.f32.gmra.mrb[0].mxu0 %v7091
      %v7246 = vpop.f32.mrb[0].mxu0
      %v7247 = vadd.f32 0.0, %v7246
      %v7248 = vpop.f32.mrb[0].mxu0
      %7249 = vmatprep.mubr.f32.mxu0 %v7095
      %7250 = vmatmul.mubr.f32.gmra.mrb[0].mxu0 %v7094
      %v7251 = vpop.f32.mrb[0].mxu0
      %v7252 = vadd.f32 0.0, %v7251
      %v7253 = vpop.f32.mrb[0].mxu0
      %7254 = vmatprep.mubr.f32.mxu0 %v7098
      %7255 = vmatmul.mubr.f32.gmra.mrb[0].mxu0 %v7097
      %v7256 = vpop.f32.mrb[0].mxu0
      %v7257 = vadd.f32 0.0, %v7256
      %v7258 = vpop.f32.mrb[0].mxu0
      %7259 = vmatprep.mubr.f32.mxu0 %v7101
      %7260 = vmatmul.mubr.f32.gmra.mrb[0].mxu0 %v7100
      %v7261 = vpop.f32.mrb[0].mxu0
      %v7262 = vadd.f32 0.0, %v7261
      %v7263 = vpop.f32.mrb[0].mxu0
      %7264 = vmatprep.mubr.f32.mxu0 %v7104
      %7265 = vmatmul.mubr.f32.gmra.mrb[0].mxu0 %v7103
      %v7266 = vpop.f32.mrb[0].mxu0
      %v7267 = vadd.f32 0.0, %v7266
      %v7268 = vpop.f32.mrb[0].mxu0
      %7269 = vmatprep.mubr.f32.mxu0 %v7107
      %7270 = vmatmul.mubr.f32.gmra.mrb[0].mxu0 %v7106
      %v7271 = vpop.f32.mrb[0].mxu0
      %v7272 = vadd.f32 0.0, %v7271
      %v7273 = vpop.f32.mrb[0].mxu0
      %7274 = vmatprep.mubr.f32.mxu0 %v7110
      %7275 = vmatmul.mubr.f32.gmra.mrb[0].mxu0 %v7109
      %v7276 = vpop.f32.mrb[0].mxu0
      %v7277 = vadd.f32 0.0, %v7276
      %v7278 = vpop.f32.mrb[0].mxu0
      %7279 = vmatprep.mubr.f32.mxu0 %v7113
      %7280 = vmatmul.mubr.f32.gmra.mrb[0].mxu0 %v7112
      %v7281 = vpop.f32.mrb[0].mxu0
      %v7282 = vadd.f32 0.0, %v7281
      %v7283 = vpop.f32.mrb[0].mxu0
      %7284 = vdwg.mxu0
      %7285 = vmatprep.subr.mxu0 0.0
      %7286 = vmatpush1.msra.mxu0 %v7072
      %7287 = vmatprep.subr.mxu0 0.0
      %7288 = vmatpush1.msra.mxu0 %v7073
      %7289 = vmatprep.subr.mxu0 0.0
      %7290 = vmatpush1.msra.mxu0 %v7074
      %7291 = vmatprep.subr.mxu0 0.0
      %7292 = vmatpush1.msra.mxu0 %v7075
      %7293 = vmatprep.subr.mxu0 0.0
      %7294 = vmatpush1.msra.mxu0 0.0
      %7295 = vmatprep.subr.mxu0 0.0
      %7296 = vmatpush1.msra.mxu0 0.0
      %7297 = vmatprep.subr.mxu0 0.0
      %7298 = vmatpush1.msra.mxu0 0.0
      %7299 = vmatprep.subr.mxu0 0.0
      %7300 = vmatpush1.msra.mxu0 0.0
      %7301 = vmatprep.subr.mxu0 0.0
      %7302 = vmatpush1.msra.mxu0 0.0
      %7303 = vmatprep.subr.mxu0 0.0
      %7304 = vmatpush1.msra.mxu0 0.0
      %7305 = vmatprep.subr.mxu0 0.0
      %7306 = vmatpush1.msra.mxu0 0.0
      %7307 = vmatprep.subr.mxu0 0.0
      %7308 = vmatpush1.msra.mxu0 0.0
      %7309 = vmatprep.subr.mxu0 0.0
      %7310 = vmatpush1.msra.mxu0 0.0
      %7311 = vmatprep.subr.mxu0 0.0
      %7312 = vmatpush1.msra.mxu0 0.0
      %7313 = vmatprep.subr.mxu0 0.0
      %7314 = vmatpush1.msra.mxu0 0.0
      %7315 = vmatprep.subr.mxu0 0.0
      %7316 = vmatpush1.msra.mxu0 0.0
      %7317 = vmatprep.subr.mxu0 0.0
      %7318 = vmatpush1.msra.mxu0 0.0
      %7319 = vmatprep.subr.mxu0 0.0
      %7320 = vmatpush1.msra.mxu0 0.0
      %7321 = vmatprep.subr.mxu0 0.0
      %7322 = vmatpush1.msra.mxu0 0.0
      %7323 = vmatprep.subr.mxu0 0.0
      %7324 = vmatpush1.msra.mxu0 0.0
      %7325 = vmatprep.subr.mxu0 0.0
      %7326 = vmatpush1.msra.mxu0 0.0
      %7327 = vmatprep.subr.mxu0 0.0
      %7328 = vmatpush1.msra.mxu0 0.0
      %7329 = vmatprep.subr.mxu0 0.0
      %7330 = vmatpush1.msra.mxu0 0.0
      %7331 = vmatprep.subr.mxu0 0.0
      %7332 = vmatpush1.msra.mxu0 0.0
      %7333 = vmatprep.subr.mxu0 0.0
      %7334 = vmatpush1.msra.mxu0 0.0
      %7335 = vmatprep.subr.mxu0 0.0
      %7336 = vmatpush1.msra.mxu0 0.0
      %7337 = vmatprep.subr.mxu0 0.0
      %7338 = vmatpush1.msra.mxu0 0.0
      %7339 = vmatprep.subr.mxu0 0.0
      %7340 = vmatpush1.msra.mxu0 0.0
      %7341 = vmatprep.subr.mxu0 0.0
      %7342 = vmatpush1.msra.mxu0 0.0
      %7343 = vmatprep.subr.mxu0 0.0
      %7344 = vmatpush1.msra.mxu0 0.0
      %7345 = vmatprep.subr.mxu0 0.0
      %7346 = vmatpush1.msra.mxu0 0.0
      %7347 = vmatprep.subr.mxu0 0.0
      %7348 = vmatpush1.msra.mxu0 0.0
      %7349 = vmatprep.mubr.f32.mxu0 0.0
      %7350 = vmatmul.mubr.f32.gmra.mrb[0].mxu0 %v7117
      %v7351 = vpop.f32.mrb[0].mxu0
      %v7352 = vadd.f32 %v7222, %v7351
      %v7353 = vpop.f32.mrb[0].mxu0
      %7354 = vmatprep.mubr.f32.mxu0 0.0
      %7355 = vmatmul.mubr.f32.gmra.mrb[0].mxu0 %v7120
      %v7356 = vpop.f32.mrb[0].mxu0
      %v7357 = vadd.f32 %v7227, %v7356
      %v7358 = vpop.f32.mrb[0].mxu0
      %7359 = vmatprep.mubr.f32.mxu0 0.0
      %7360 = vmatmul.mubr.f32.gmra.mrb[0].mxu0 %v7123
      %v7361 = vpop.f32.mrb[0].mxu0
      %v7362 = vadd.f32 %v7232, %v7361
      %v7363 = vpop.f32.mrb[0].mxu0
      %7364 = vmatprep.mubr.f32.mxu0 0.0
      %7365 = vmatmul.mubr.f32.gmra.mrb[0].mxu0 %v7126
      %v7366 = vpop.f32.mrb[0].mxu0
      %v7367 = vadd.f32 %v7237, %v7366
      %v7368 = vpop.f32.mrb[0].mxu0
      %7369 = vmatprep.mubr.f32.mxu0 0.0
      %7370 = vmatmul.mubr.f32.gmra.mrb[0].mxu0 %v7129
      %v7371 = vpop.f32.mrb[0].mxu0
      %v7372 = vadd.f32 %v7242, %v7371
      %v7373 = vpop.f32.mrb[0].mxu0
      %7374 = vmatprep.mubr.f32.mxu0 0.0
      %7375 = vmatmul.mubr.f32.gmra.mrb[0].mxu0 %v7132
      %v7376 = vpop.f32.mrb[0].mxu0
      %v7377 = vadd.f32 %v7247, %v7376
      %v7378 = vpop.f32.mrb[0].mxu0
      %7379 = vmatprep.mubr.f32.mxu0 0.0
      %7380 = vmatmul.mubr.f32.gmra.mrb[0].mxu0 %v7135
      %v7381 = vpop.f32.mrb[0].mxu0
      %v7382 = vadd.f32 %v7252, %v7381
      %v7383 = vpop.f32.mrb[0].mxu0
      %7384 = vmatprep.mubr.f32.mxu0 0.0
      %7385 = vmatmul.mubr.f32.gmra.mrb[0].mxu0 %v7138
      %v7386 = vpop.f32.mrb[0].mxu0
      %v7387 = vadd.f32 %v7257, %v7386
      %v7388 = vpop.f32.mrb[0].mxu0
      %7389 = vmatprep.mubr.f32.mxu0 0.0
      %7390 = vmatmul.mubr.f32.gmra.mrb[0].mxu0 %v7141
      %v7391 = vpop.f32.mrb[0].mxu0
      %v7392 = vadd.f32 %v7262, %v7391
      %v7393 = vpop.f32.mrb[0].mxu0
      %7394 = vmatprep.mubr.f32.mxu0 0.0
      %7395 = vmatmul.mubr.f32.gmra.mrb[0].mxu0 %v7144
      %v7396 = vpop.f32.mrb[0].mxu0
      %v7397 = vadd.f32 %v7267, %v7396
      %v7398 = vpop.f32.mrb[0].mxu0
      %7399 = vmatprep.mubr.f32.mxu0 0.0
      %7400 = vmatmul.mubr.f32.gmra.mrb[0].mxu0 %v7147
      %v7401 = vpop.f32.mrb[0].mxu0
      %v7402 = vadd.f32 %v7272, %v7401
      %v7403 = vpop.f32.mrb[0].mxu0
      %7404 = vmatprep.mubr.f32.mxu0 0.0
      %7405 = vmatmul.mubr.f32.gmra.mrb[0].mxu0 %v7150
      %v7406 = vpop.f32.mrb[0].mxu0
      %v7407 = vadd.f32 %v7277, %v7406
      %v7408 = vpop.f32.mrb[0].mxu0
      %7409 = vmatprep.mubr.f32.mxu0 0.0
      %7410 = vmatmul.mubr.f32.gmra.mrb[0].mxu0 %v7153
      %v7411 = vpop.f32.mrb[0].mxu0
      %v7412 = vadd.f32 %v7282, %v7411
      %v7413 = vpop.f32.mrb[0].mxu0
      %7414 = vdwg.mxu0
      %7415 = vst.msk [vmem:[%s278] sm:$0xff] %vm316, %v7352
      %7416 = vst.msk [vmem:[%s278 + $0x8] sm:$0xff] %vm316, %v7357
      %7417 = vst.msk [vmem:[%s278 + $0x10] sm:$0xff] %vm316, %v7362
      %7418 = vst.msk [vmem:[%s278 + $0x18] sm:$0xff] %vm316, %v7367
      %7419 = vst.msk [vmem:[%s278 + $0x20] sm:$0xff] %vm316, %v7372
      %7420 = vst.msk [vmem:[%s278 + $0x28] sm:$0xff] %vm316, %v7377
      %7421 = vst.msk [vmem:[%s278 + $0x30] sm:$0xff] %vm316, %v7382
      %7422 = vst.msk [vmem:[%s278 + $0x38] sm:$0xff] %vm316, %v7387
      %7423 = vst.msk [vmem:[%s278 + $0x40] sm:$0xff] %vm316, %v7392
      %7424 = vst.msk [vmem:[%s278 + $0x48] sm:$0xff] %vm316, %v7397
      %7425 = vst.msk [vmem:[%s278 + $0x50] sm:$0xff] %vm316, %v7402
      %7426 = vst.msk [vmem:[%s278 + $0x58] sm:$0xff] %vm316, %v7407
      %7427 = vst.msk [vmem:[%s278 + $0x60] sm:$0xff] %vm316, %v7412
      %p7428 = scmp.lt.s32.totalorder %s18, 1
      %s7429 = scalar_select %p7428, %s18, 1
      %s7430 = smul.addr %s7429, 13
      %s7431 = smul.addr %s7430, 8
      %s7432 = scalar_lea.vmem %s7, %s7431
      // Predicated region
      $region49: #{tpu_custom_call.1} parent=47 // pred_check
        %p7433 = pneg %p188
      $region50: #{tpu_custom_call.1} parent=47 // pred_check_branch
        %7435 = sbr.rel (%p7433) target = $region52
      $region51: #{tpu_custom_call.1} parent=47 // pred_region
        _
      $region52: #{tpu_custom_call.1} parent=47 // pred_fallthru
        _
    $region48: #{tpu_custom_call.1} parent=5 // pred_fallthru
      _
    %p7436 = scmp.le.s32.totalorder 2, %s13
    // Predicated region
    $region53: #{tpu_custom_call.1} parent=5 // pred_check
      %p7437 = pneg %p7436
    $region54: #{tpu_custom_call.1} parent=5 // pred_check_branch
      %7439 = sbr.rel (%p7437) target = $region56
    $region55: #{tpu_custom_call.1} parent=5 // pred_region
      %s7440 = ssub.s32 %s13, 2
      // Predicated region
      $region57: #{tpu_custom_call.1} parent=55 // pred_check
        %p7441 = pneg %p194
      $region58: #{tpu_custom_call.1} parent=55 // pred_check_branch
        %7443 = sbr.rel (%p7441) target = $region60
      $region59: #{tpu_custom_call.1} parent=55 // pred_region
        %p7444 = scmp.lt.s32.totalorder %s19, 1
        %s7445 = scalar_select %p7444, %s19, 1
        %s7446 = smul.addr %s7445, 13
        %s7447 = smul.addr %s7446, 8
        %s7448 = scalar_lea.vmem %s7, %s7447
      $region60: #{tpu_custom_call.1} parent=55 // pred_fallthru
        _
    $region56: #{tpu_custom_call.1} parent=5 // pred_fallthru
      _
  $region6: #{tpu_custom_call.1} parent=0 // loop_footer
    %s17 = sadd.s32 1, %s13
  $region7: #{tpu_custom_call.1} parent=0 // loop_footer_branch
    %12 = sbr.rel target = $region3
  $region8: #{tpu_custom_call.1} parent=0 // loop_exit
    _

</llo_original>
